<compile_context>
chip_gen: v7x
topology: tpu7x:2x2x1
jax: 0.10.0
libtpu: 0.0.40
codegen_flags: <defaults>
</compile_context>

<pallas_src>
import functools
import math

import jax
import jax.numpy as jnp
from jax.experimental import pallas as pl
from jax.experimental.pallas import tpu as pltpu

LANE = 128
VMEM_LIMIT = 48 * 1024 * 1024  # headroom under v7x's 64 MiB physical VMEM


def _round_up(x, m):
    return ((x + m - 1) // m) * m


def _pick_row_tile(n, target=16):
    """Largest divisor of n that is <= target (output rows per conv tile)."""
    for d in range(min(n, target), 0, -1):
        if n % d == 0:
            return d
    return n


def _pick_k_tile(F):
    """Large K tiles for the head GEMM (fewer grid steps); prefer >=2 steps."""
    for cand in (2048, 1024, 512, 256, 128):
        if F % cand == 0 and F // cand >= 2:
            return cand
    for cand in (2048, 1024, 512, 256, 128):
        if F % cand == 0:
            return cand
    return F


# ----------------------------------------------------------------------------
# Kernels
# ----------------------------------------------------------------------------
def _conv_leaky_pool_kernel(xt_ref, w_ref, b_ref, o_ref, *,
                            ksize, stride, negative_slope, pool, th, Wo):
    """Conv2d + bias + LeakyReLU (+ fused 2x2/2 max-pool) on one row tile.

    xt_ref: (1, th_in, Wp, Cpi)  halo row slab, channels padded to 128 (bf16)
    w_ref : (KH*KW*Cpi, Cpo)     flattened, channel-padded weights (bf16)
    b_ref : (1, Cpo)             bias (f32)
    o_ref : (1, th_out, Wo_o, Cpo)  output rows (bf16), pooled if `pool`
    """
    Cpi = xt_ref.shape[-1]
    Cpo = o_ref.shape[-1]
    Wp = xt_ref.shape[2]
    xt = xt_ref[0]  # (th_in, Wp, Cpi)

    # Per-kernel-row accumulation: each kh contributes one (th*Wo, ksize*Cpi) matmul.
    acc = jnp.zeros((th * Wo, Cpo), jnp.float32)
    for kh in range(ksize):
        band = jax.lax.slice(xt, (kh, 0, 0), (kh + th * stride, Wp, Cpi))
        if stride > 1:
            band = band.reshape(th, stride, Wp, Cpi)[:, 0]  # row decimation
        subs = []
        for kw in range(ksize):
            s = jax.lax.slice(band, (0, kw, 0), (th, kw + Wo * stride, Cpi))
            if stride > 1:
                s = s.reshape(th, Wo, stride, Cpi)[:, :, 0, :]  # col decimation
            subs.append(s)
        sub_patch = jnp.concatenate(subs, axis=-1).reshape(th * Wo, ksize * Cpi)
        w_kh = w_ref[kh * ksize * Cpi:(kh + 1) * ksize * Cpi, :]
        acc = acc + jnp.dot(sub_patch, w_kh, preferred_element_type=jnp.float32)

    acc = acc + b_ref[...]
    acc = jnp.where(acc > 0, acc, negative_slope * acc)  # LeakyReLU

    if pool:
        Wc = (Wo // 2) * 2
        y = acc.reshape(th, Wo, Cpo)[:, :Wc, :]
        y = jnp.max(y.reshape(th, Wc // 2, 2, Cpo), axis=2)       # pool along W
        y = jnp.max(y.reshape(th // 2, 2, Wc // 2, Cpo), axis=1)  # pool along H
        o_ref[0] = y.astype(o_ref.dtype)
    else:
        o_ref[0] = acc.reshape(th, Wo, Cpo).astype(o_ref.dtype)


def _head_kernel(x_ref, w1_ref, b1_ref, w2_ref, b2_ref, o_ref, acc_ref, *,
                 negative_slope):
    """Fused head: fc1 (accumulated over K tiles) -> LeakyReLU -> fc2 -> bias.

    x_ref : (N, tk) bf16          w1_ref: (tk, mlp_pad) bf16
    b1_ref: (1, mlp_pad) f32      w2_ref: (mlp_pad, out_pad) bf16
    b2_ref: (1, out_pad) f32      o_ref : (N, out_pad) f32
    acc_ref: (N, mlp_pad) f32 VMEM scratch (mlp activation accumulator)
    """
    k = pl.program_id(0)

    @pl.when(k == 0)
    def _():
        acc_ref[...] = jnp.zeros_like(acc_ref)

    acc_ref[...] += jnp.dot(x_ref[...], w1_ref[...],
                            preferred_element_type=jnp.float32)

    @pl.when(k == pl.num_programs(0) - 1)
    def _():
        y1 = acc_ref[...] + b1_ref[...]
        y1 = jnp.where(y1 > 0, y1, negative_slope * y1)
        y2 = jnp.dot(y1.astype(jnp.bfloat16), w2_ref[...],
                     preferred_element_type=jnp.float32)
        o_ref[...] = (y2 + b2_ref[...]).astype(o_ref.dtype)


# ----------------------------------------------------------------------------
# Pallas wrappers
# ----------------------------------------------------------------------------
def conv2d_leaky_pool(x, w_flat, b, *, ksize, stride, negative_slope, pool):
    """x: (N, H, W, Cpi) bf16 (channels padded to 128);
    w_flat: (ksize*ksize*Cpi, Cpo) bf16; b: (1, Cpo) f32."""
    N, H, W, Cpi = x.shape
    Cpo = w_flat.shape[1]
    pad = ksize // 2  # matches padding=kernel_size//2 in the PyTorch module
    Ho = (H + 2 * pad - ksize) // stride + 1
    Wo = (W + 2 * pad - ksize) // stride + 1
    Ho_o = Ho // 2 if pool else Ho
    Wo_o = Wo // 2 if pool else Wo

    th_out = _pick_row_tile(Ho_o)            # output rows per grid step
    th = th_out * (2 if pool else 1)         # pre-pool conv rows per grid step
    ntiles = Ho_o // th_out
    th_in = th * stride + ksize - 1          # input rows (with halo) per grid step
    extra = stride - 1                       # avoids strided loads inside the kernel

    xp = jnp.pad(x, ((0, 0), (pad, pad + extra), (pad, pad + extra), (0, 0)))
    Wp = W + 2 * pad + extra

    # Materialize row tiles + halos once (wrapper-side) so every Pallas block is a
    # clean, non-overlapping Blocked block -> bounded VMEM, pipelined DMA.
    x_tiles = jnp.stack(
        [xp[:, r * th * stride: r * th * stride + th_in] for r in range(ntiles)],
        axis=1,
    ).reshape(N * ntiles, th_in, Wp, Cpi)

    kernel = functools.partial(
        _conv_leaky_pool_kernel, ksize=ksize, stride=stride,
        negative_slope=negative_slope, pool=pool, th=th, Wo=Wo)

    K = ksize * ksize * Cpi
    return pl.pallas_call(
        kernel,
        out_shape=jax.ShapeDtypeStruct((N, Ho_o, Wo_o, Cpo), jnp.bfloat16),
        grid=(N, ntiles),
        in_specs=[
            pl.BlockSpec((1, th_in, Wp, Cpi),
                         lambda n, r: (n * ntiles + r, 0, 0, 0)),
            # weights / bias: full-array blocks with constant index map (kept
            # resident across the grid; pipeliner skips re-copies).
            pl.BlockSpec((K, Cpo), lambda n, r: (0, 0)),
            pl.BlockSpec((1, Cpo), lambda n, r: (0, 0)),
        ],
        out_specs=pl.BlockSpec((1, th_out, Wo_o, Cpo), lambda n, r: (n, r, 0, 0)),
        compiler_params=pltpu.CompilerParams(
            dimension_semantics=("parallel", "parallel"),
            vmem_limit_bytes=VMEM_LIMIT),
    )(x_tiles, w_flat, b)


def yolo_head(x_flat, w1, b1, w2, b2, *, negative_slope):
    """Fused fc1 -> LeakyReLU -> fc2 head.  x_flat: (N, F1) bf16."""
    N, F1 = x_flat.shape
    mlp_pad = w1.shape[1]
    out_pad = w2.shape[1]
    tk = _pick_k_tile(F1)
    grid = (F1 // tk,)

    kernel = functools.partial(_head_kernel, negative_slope=negative_slope)
    return pl.pallas_call(
        kernel,
        out_shape=jax.ShapeDtypeStruct((N, out_pad), jnp.float32),
        grid=grid,
        in_specs=[
            pl.BlockSpec((N, tk), lambda k: (0, k)),
            pl.BlockSpec((tk, mlp_pad), lambda k: (k, 0)),
            pl.BlockSpec((1, mlp_pad), lambda k: (0, 0)),
            pl.BlockSpec((mlp_pad, out_pad), lambda k: (0, 0)),
            pl.BlockSpec((1, out_pad), lambda k: (0, 0)),
        ],
        out_specs=pl.BlockSpec((N, out_pad), lambda k: (0, 0)),
        scratch_shapes=[pltpu.VMEM((N, mlp_pad), jnp.float32)],
        compiler_params=pltpu.CompilerParams(
            dimension_semantics=("arbitrary",),
            vmem_limit_bytes=VMEM_LIMIT),
    )(x_flat, w1, b1, w2, b2)


# ----------------------------------------------------------------------------
# Parameter construction (deterministic PyTorch-style uniform init) + layout prep.
# ----------------------------------------------------------------------------
def _uniform(key, shape, fan_in):
    bound = 1.0 / math.sqrt(fan_in)
    return jax.random.uniform(key, shape, jnp.float32, -bound, bound)


def _prep_conv(w, b):
    """w: (KH, KW, Cin, Cout) f32; b: (Cout,) f32 ->
    flattened, channel-padded bf16 weight + padded f32 bias."""
    KH, KW, Cin, Cout = w.shape
    Cpi = _round_up(Cin, LANE)
    Cpo = _round_up(Cout, LANE)
    wp = jnp.zeros((KH, KW, Cpi, Cpo), jnp.float32).at[:, :, :Cin, :Cout].set(w)
    w_flat = wp.reshape(KH * KW * Cpi, Cpo).astype(jnp.bfloat16)
    bp = jnp.zeros((1, Cpo), jnp.float32).at[0, :Cout].set(b)
    return w_flat, bp


def _prep_head(fc1_w, fc1_b, fc2_w, fc2_b, S, c_real, c_pad):
    """Fold the NCHW-flatten permutation and channel padding into fc1's rows and
    pad both linears to lane-dense (multiple of 128) widths."""
    _, mlp = fc1_w.shape
    out_dim = fc2_w.shape[1]
    mlp_pad = _round_up(mlp, LANE)
    out_pad = _round_up(out_dim, LANE)

    # fc1_w rows are ordered (c, h, w) in PyTorch flatten; re-order to (h, w, c_pad)
    w1 = fc1_w.reshape(c_real, S, S, mlp).transpose(1, 2, 0, 3)          # (S,S,c,mlp)
    w1 = jnp.pad(w1, ((0, 0), (0, 0), (0, c_pad - c_real), (0, mlp_pad - mlp)))
    fc1_w_eff = w1.reshape(S * S * c_pad, mlp_pad).astype(jnp.bfloat16)
    fc1_b_eff = jnp.zeros((1, mlp_pad), jnp.float32).at[0, :mlp].set(fc1_b)

    w2 = jnp.pad(fc2_w, ((0, mlp_pad - mlp), (0, out_pad - out_dim))).astype(jnp.bfloat16)
    fc2_b_eff = jnp.zeros((1, out_pad), jnp.float32).at[0, :out_dim].set(fc2_b)
    return fc1_w_eff, fc1_b_eff, w2, fc2_b_eff


def init_yolo_params(key, cfg):
    """Params hold ONLY arrays (ksize/stride stay static in cfg -> no tracers)."""
    params = {"layers": [], "head": {}}
    in_channels = cfg["in_channels"]

    for li, layer_dim in enumerate(cfg["dims"]):
        layer_params = []
        for i, dim_out in enumerate(layer_dim):
            dim_in = (
                (in_channels if li == 0 else cfg["dims"][li - 1][-1])
                if i == 0
                else layer_dim[i - 1]
            )
            ksize = cfg["kernel_size"][li][i]
            key, kw_, kb_ = jax.random.split(key, 3)
            fan_in = dim_in * ksize * ksize
            w = _uniform(kw_, (ksize, ksize, dim_in, dim_out), fan_in)
            b = _uniform(kb_, (dim_out,), fan_in)
            w_flat, bp = _prep_conv(w, b)
            layer_params.append({"w": w_flat, "b": bp})
        params["layers"].append(layer_params)

    feat_c = cfg["dims"][-1][-1]
    feat_c_pad = _round_up(feat_c, LANE)
    S = cfg["grid_size"]
    flat = feat_c * S * S
    mlp = cfg["mlp_size"]
    out_dim = S * S * (cfg["num_classes"] + 5 * cfg["num_bounding_boxes"])
    key, k1w, k1b, k2w, k2b = jax.random.split(key, 5)
    fc1_w = _uniform(k1w, (flat, mlp), flat)
    fc1_b = _uniform(k1b, (mlp,), flat)
    fc2_w = _uniform(k2w, (mlp, out_dim), mlp)
    fc2_b = _uniform(k2b, (out_dim,), mlp)
    w1, b1, w2, b2 = _prep_head(fc1_w, fc1_b, fc2_w, fc2_b, S, feat_c, feat_c_pad)
    params["head"] = {"fc1_w": w1, "fc1_b": b1, "fc2_w": w2, "fc2_b": b2}
    return params


# ----------------------------------------------------------------------------
# Forward pass (layout glue in plain JAX; compute in Pallas kernels)
# ----------------------------------------------------------------------------
def yolo_v1_forward(params, x_nchw, cfg):
    ns = cfg["negative_slope"]
    N, Cin, H, W = x_nchw.shape
    Cin_pad = _round_up(Cin, LANE)

    # NCHW (PyTorch) -> NHWC bf16, channels padded to a lane-dense width.
    x = jnp.transpose(x_nchw, (0, 2, 3, 1)).astype(jnp.bfloat16)
    x = jnp.pad(x, ((0, 0), (0, 0), (0, 0), (0, Cin_pad - Cin)))

    for li, layer_params in enumerate(params["layers"]):
        pool_layer = cfg["max_pools"][li]
        n_convs = len(cfg["dims"][li])
        for ci in range(n_convs):
            conv = layer_params[ci]
            fuse_pool = pool_layer and (ci == n_convs - 1)
            x = conv2d_leaky_pool(
                x, conv["w"], conv["b"],
                ksize=cfg["kernel_size"][li][ci],     # static Python ints from cfg
                stride=cfg["stride"][li][ci],
                negative_slope=ns, pool=fuse_pool)

    S = cfg["grid_size"]
    assert x.shape[1] == S and x.shape[2] == S, x.shape

    # NHWC flatten feeds fc1 directly: the NCHW permutation was folded into fc1_w.
    x_flat = x.reshape(N, -1)

    h = params["head"]
    y = yolo_head(x_flat, h["fc1_w"], h["fc1_b"], h["fc2_w"], h["fc2_b"],
                  negative_slope=ns)

    depth = cfg["num_classes"] + 5 * cfg["num_bounding_boxes"]
    return y[:, :S * S * depth].reshape(N, S, S, depth)


# ----------------------------------------------------------------------------
# Main
# ----------------------------------------------------------------------------
if __name__ == "__main__":
    cfg = {
        "in_channels": 4,
        "num_classes": 3,
        "dims": [[8], [16]],
        "kernel_size": [[3], [3]],
        "stride": [[1], [1]],
        "max_pools": [True, True],
        "num_bounding_boxes": 2,
        "grid_size": 4,          # 16 -> maxpool -> 8 -> maxpool -> 4
        "negative_slope": 0.1,
        "mlp_size": 32,
    }

    key = jax.random.PRNGKey(0)
    key, kx = jax.random.split(key)
    x = jax.random.normal(kx, (2, cfg["in_channels"], 16, 16), jnp.float32)  # NCHW

    params = init_yolo_params(key, cfg)

    fwd = jax.jit(lambda p, xx: yolo_v1_forward(p, xx, cfg))
    out = fwd(params, x)
    out = jax.block_until_ready(out)

    expected = (2, cfg["grid_size"], cfg["grid_size"],
                cfg["num_classes"] + 5 * cfg["num_bounding_boxes"])
    assert out.shape == expected, (out.shape, expected)
    assert bool(jnp.all(jnp.isfinite(out)))
    print("KERNEL_OK")
</pallas_src>

<mosaic_0001>
module attributes {stable_mosaic.version = 11 : i64} {
  func.func @_conv_leaky_pool_kernel(%arg0: i32, %arg1: i32, %arg2: memref<1x18x18x128xbf16, #tpu.memory_space<vmem>>, %arg3: memref<1152x128xbf16, #tpu.memory_space<vmem>>, %arg4: memref<1x128xf32, #tpu.memory_space<vmem>>, %arg5: memref<1x8x8x128xbf16, #tpu.memory_space<vmem>>) attributes {dimension_semantics = [#tpu.dimension_semantics<parallel>, #tpu.dimension_semantics<parallel>], iteration_bounds = array<i64: 2, 1>, scalar_prefetch = 0 : i64, scratch_operands = 0 : i64, tpu.core_type = #tpu.core_type<tc>, window_params = [{transform_indices = @transform_0, window_bounds = array<i64: 1, 18, 18, 128>}, {pipeline_mode = #tpu.pipeline_mode<synchronous>, transform_indices = @transform_1, window_bounds = array<i64: 1152, 128>}, {pipeline_mode = #tpu.pipeline_mode<synchronous>, transform_indices = @transform_2, window_bounds = array<i64: 1, 128>}, {transform_indices = @transform_3, window_bounds = array<i64: 1, 8, 8, 128>}]} {
    %c0 = arith.constant 0 : index
    %c0_0 = arith.constant 0 : index
    %c0_1 = arith.constant 0 : index
    %c0_2 = arith.constant 0 : index
    %0 = vector.load %arg2[%c0, %c0_0, %c0_1, %c0_2] : memref<1x18x18x128xbf16, #tpu.memory_space<vmem>>, vector<1x18x18x128xbf16>
    %1 = vector.shape_cast %0 : vector<1x18x18x128xbf16> to vector<18x18x128xbf16>
    %cst = arith.constant 0.000000e+00 : f32
    %2 = vector.broadcast %cst : f32 to vector<256x128xf32>
    %3 = vector.extract_strided_slice %1 {offsets = [0, 0, 0], sizes = [16, 18, 128], strides = [1, 1, 1]} : vector<18x18x128xbf16> to vector<16x18x128xbf16>
    %4 = vector.extract_strided_slice %3 {offsets = [0, 0, 0], sizes = [16, 16, 128], strides = [1, 1, 1]} : vector<16x18x128xbf16> to vector<16x16x128xbf16>
    %5 = vector.extract_strided_slice %3 {offsets = [0, 1, 0], sizes = [16, 16, 128], strides = [1, 1, 1]} : vector<16x18x128xbf16> to vector<16x16x128xbf16>
    %6 = vector.extract_strided_slice %3 {offsets = [0, 2, 0], sizes = [16, 16, 128], strides = [1, 1, 1]} : vector<16x18x128xbf16> to vector<16x16x128xbf16>
    %7 = tpu.concatenate %4, %5, %6 in 2 : vector<16x16x128xbf16>, vector<16x16x128xbf16>, vector<16x16x128xbf16> -> vector<16x16x384xbf16>
    %8 = vector.shape_cast %7 : vector<16x16x384xbf16> to vector<256x384xbf16>
    %c0_3 = arith.constant 0 : index
    %c0_4 = arith.constant 0 : index
    %9 = vector.load %arg3[%c0_3, %c0_4] : memref<1152x128xbf16, #tpu.memory_space<vmem>>, vector<384x128xbf16>
    %cst_5 = arith.constant dense<0.000000e+00> : vector<256x128xf32>
    %10 = tpu.matmul %8, %9, %cst_5 {dimension_numbers = #tpu.dot_dimension_numbers<[1], [0], [0], [1], [0, 0, 1, 1], [], []>} : vector<256x384xbf16>, vector<384x128xbf16>, vector<256x128xf32> -> vector<256x128xf32>
    %11 = arith.addf %2, %10 : vector<256x128xf32>
    %12 = vector.extract_strided_slice %1 {offsets = [1, 0, 0], sizes = [16, 18, 128], strides = [1, 1, 1]} : vector<18x18x128xbf16> to vector<16x18x128xbf16>
    %13 = vector.extract_strided_slice %12 {offsets = [0, 0, 0], sizes = [16, 16, 128], strides = [1, 1, 1]} : vector<16x18x128xbf16> to vector<16x16x128xbf16>
    %14 = vector.extract_strided_slice %12 {offsets = [0, 1, 0], sizes = [16, 16, 128], strides = [1, 1, 1]} : vector<16x18x128xbf16> to vector<16x16x128xbf16>
    %15 = vector.extract_strided_slice %12 {offsets = [0, 2, 0], sizes = [16, 16, 128], strides = [1, 1, 1]} : vector<16x18x128xbf16> to vector<16x16x128xbf16>
    %16 = tpu.concatenate %13, %14, %15 in 2 : vector<16x16x128xbf16>, vector<16x16x128xbf16>, vector<16x16x128xbf16> -> vector<16x16x384xbf16>
    %17 = vector.shape_cast %16 : vector<16x16x384xbf16> to vector<256x384xbf16>
    %c384 = arith.constant 384 : index
    %c0_6 = arith.constant 0 : index
    %18 = vector.load %arg3[%c384, %c0_6] : memref<1152x128xbf16, #tpu.memory_space<vmem>>, vector<384x128xbf16>
    %cst_7 = arith.constant dense<0.000000e+00> : vector<256x128xf32>
    %19 = tpu.matmul %17, %18, %cst_7 {dimension_numbers = #tpu.dot_dimension_numbers<[1], [0], [0], [1], [0, 0, 1, 1], [], []>} : vector<256x384xbf16>, vector<384x128xbf16>, vector<256x128xf32> -> vector<256x128xf32>
    %20 = arith.addf %11, %19 : vector<256x128xf32>
    %21 = vector.extract_strided_slice %1 {offsets = [2, 0, 0], sizes = [16, 18, 128], strides = [1, 1, 1]} : vector<18x18x128xbf16> to vector<16x18x128xbf16>
    %22 = vector.extract_strided_slice %21 {offsets = [0, 0, 0], sizes = [16, 16, 128], strides = [1, 1, 1]} : vector<16x18x128xbf16> to vector<16x16x128xbf16>
    %23 = vector.extract_strided_slice %21 {offsets = [0, 1, 0], sizes = [16, 16, 128], strides = [1, 1, 1]} : vector<16x18x128xbf16> to vector<16x16x128xbf16>
    %24 = vector.extract_strided_slice %21 {offsets = [0, 2, 0], sizes = [16, 16, 128], strides = [1, 1, 1]} : vector<16x18x128xbf16> to vector<16x16x128xbf16>
    %25 = tpu.concatenate %22, %23, %24 in 2 : vector<16x16x128xbf16>, vector<16x16x128xbf16>, vector<16x16x128xbf16> -> vector<16x16x384xbf16>
    %26 = vector.shape_cast %25 : vector<16x16x384xbf16> to vector<256x384xbf16>
    %c768 = arith.constant 768 : index
    %c0_8 = arith.constant 0 : index
    %27 = vector.load %arg3[%c768, %c0_8] : memref<1152x128xbf16, #tpu.memory_space<vmem>>, vector<384x128xbf16>
    %cst_9 = arith.constant dense<0.000000e+00> : vector<256x128xf32>
    %28 = tpu.matmul %26, %27, %cst_9 {dimension_numbers = #tpu.dot_dimension_numbers<[1], [0], [0], [1], [0, 0, 1, 1], [], []>} : vector<256x384xbf16>, vector<384x128xbf16>, vector<256x128xf32> -> vector<256x128xf32>
    %29 = arith.addf %20, %28 : vector<256x128xf32>
    %c0_10 = arith.constant 0 : index
    %c0_11 = arith.constant 0 : index
    %30 = vector.load %arg4[%c0_10, %c0_11] : memref<1x128xf32, #tpu.memory_space<vmem>>, vector<1x128xf32>
    %31 = vector.broadcast %30 : vector<1x128xf32> to vector<256x128xf32>
    %32 = arith.addf %29, %31 : vector<256x128xf32>
    %cst_12 = arith.constant 0.000000e+00 : f32
    %33 = vector.broadcast %cst_12 : f32 to vector<256x128xf32>
    %34 = arith.cmpf ogt, %32, %33 : vector<256x128xf32>
    %cst_13 = arith.constant 1.000000e-01 : f32
    %35 = vector.broadcast %cst_13 : f32 to vector<256x128xf32>
    %36 = arith.mulf %35, %32 : vector<256x128xf32>
    %37 = arith.select %34, %32, %36 : vector<256x128xi1>, vector<256x128xf32>
    %38 = vector.shape_cast %37 : vector<256x128xf32> to vector<16x16x128xf32>
    %39 = vector.shape_cast %38 : vector<16x16x128xf32> to vector<16x8x2x128xf32>
    %cst_14 = arith.constant dense<0xFF800000> : vector<16x8x128xf32>
    %40 = vector.multi_reduction <maximumf>, %39, %cst_14 [2] : vector<16x8x2x128xf32> to vector<16x8x128xf32>
    %41 = vector.shape_cast %40 : vector<16x8x128xf32> to vector<8x2x8x128xf32>
    %cst_15 = arith.constant dense<0xFF800000> : vector<8x8x128xf32>
    %42 = vector.multi_reduction <maximumf>, %41, %cst_15 [1] : vector<8x2x8x128xf32> to vector<8x8x128xf32>
    %43 = arith.truncf %42 : vector<8x8x128xf32> to vector<8x8x128xbf16>
    %c0_16 = arith.constant 0 : index
    %c0_17 = arith.constant 0 : index
    %c0_18 = arith.constant 0 : index
    %c0_19 = arith.constant 0 : index
    %44 = vector.load %arg5[%c0_16, %c0_17, %c0_18, %c0_19] : memref<1x8x8x128xbf16, #tpu.memory_space<vmem>>, vector<1x8x8x128xbf16>
    %45 = vector.shape_cast %44 : vector<1x8x8x128xbf16> to vector<8x8x128xbf16>
    %46 = vector.shape_cast %43 : vector<8x8x128xbf16> to vector<1x8x8x128xbf16>
    tpu.vector_store %arg5[%c0_16, %c0_17, %c0_18, %c0_19], %46 {strides = array<i32>} : memref<1x8x8x128xbf16, #tpu.memory_space<vmem>>, vector<1x8x8x128xbf16>,
    return
  }
  func.func @transform_0(%arg0: i32, %arg1: i32) -> (i32, i32, i32, i32) {
    %c1_i32 = arith.constant 1 : i32
    %0 = arith.muli %arg0, %c1_i32 : i32
    %1 = arith.addi %0, %arg1 : i32
    %c0_i32 = arith.constant 0 : i32
    %c0_i32_0 = arith.constant 0 : i32
    %c0_i32_1 = arith.constant 0 : i32
    %c0_i32_2 = arith.constant 0 : i32
    return %1, %c0_i32, %c0_i32_0, %c0_i32_1 : i32, i32, i32, i32
  }
  func.func @transform_1(%arg0: i32, %arg1: i32) -> (i32, i32) {
    %c0_i32 = arith.constant 0 : i32
    %c0_i32_0 = arith.constant 0 : i32
    %c0_i32_1 = arith.constant 0 : i32
    return %c0_i32, %c0_i32_0 : i32, i32
  }
  func.func @transform_2(%arg0: i32, %arg1: i32) -> (i32, i32) {
    %c0_i32 = arith.constant 0 : i32
    %c0_i32_0 = arith.constant 0 : i32
    %c0_i32_1 = arith.constant 0 : i32
    return %c0_i32, %c0_i32_0 : i32, i32
  }
  func.func @transform_3(%arg0: i32, %arg1: i32) -> (i32, i32, i32, i32) {
    %c0_i32 = arith.constant 0 : i32
    %c0_i32_0 = arith.constant 0 : i32
    %c0_i32_1 = arith.constant 0 : i32
    return %arg0, %arg1, %c0_i32, %c0_i32_0 : i32, i32, i32, i32
  }
}

module attributes {stable_mosaic.version = 11 : i64} {
  func.func @_conv_leaky_pool_kernel(%arg0: i32, %arg1: i32, %arg2: memref<1x10x10x128xbf16, #tpu.memory_space<vmem>>, %arg3: memref<1152x128xbf16, #tpu.memory_space<vmem>>, %arg4: memref<1x128xf32, #tpu.memory_space<vmem>>, %arg5: memref<1x4x4x128xbf16, #tpu.memory_space<vmem>>) attributes {dimension_semantics = [#tpu.dimension_semantics<parallel>, #tpu.dimension_semantics<parallel>], iteration_bounds = array<i64: 2, 1>, scalar_prefetch = 0 : i64, scratch_operands = 0 : i64, tpu.core_type = #tpu.core_type<tc>, window_params = [{transform_indices = @transform_0, window_bounds = array<i64: 1, 10, 10, 128>}, {pipeline_mode = #tpu.pipeline_mode<synchronous>, transform_indices = @transform_1, window_bounds = array<i64: 1152, 128>}, {pipeline_mode = #tpu.pipeline_mode<synchronous>, transform_indices = @transform_2, window_bounds = array<i64: 1, 128>}, {transform_indices = @transform_3, window_bounds = array<i64: 1, 4, 4, 128>}]} {
    %c0 = arith.constant 0 : index
    %c0_0 = arith.constant 0 : index
    %c0_1 = arith.constant 0 : index
    %c0_2 = arith.constant 0 : index
    %0 = vector.load %arg2[%c0, %c0_0, %c0_1, %c0_2] : memref<1x10x10x128xbf16, #tpu.memory_space<vmem>>, vector<1x10x10x128xbf16>
    %1 = vector.shape_cast %0 : vector<1x10x10x128xbf16> to vector<10x10x128xbf16>
    %cst = arith.constant 0.000000e+00 : f32
    %2 = vector.broadcast %cst : f32 to vector<64x128xf32>
    %3 = vector.extract_strided_slice %1 {offsets = [0, 0, 0], sizes = [8, 10, 128], strides = [1, 1, 1]} : vector<10x10x128xbf16> to vector<8x10x128xbf16>
    %4 = vector.extract_strided_slice %3 {offsets = [0, 0, 0], sizes = [8, 8, 128], strides = [1, 1, 1]} : vector<8x10x128xbf16> to vector<8x8x128xbf16>
    %5 = vector.extract_strided_slice %3 {offsets = [0, 1, 0], sizes = [8, 8, 128], strides = [1, 1, 1]} : vector<8x10x128xbf16> to vector<8x8x128xbf16>
    %6 = vector.extract_strided_slice %3 {offsets = [0, 2, 0], sizes = [8, 8, 128], strides = [1, 1, 1]} : vector<8x10x128xbf16> to vector<8x8x128xbf16>
    %7 = tpu.concatenate %4, %5, %6 in 2 : vector<8x8x128xbf16>, vector<8x8x128xbf16>, vector<8x8x128xbf16> -> vector<8x8x384xbf16>
    %8 = vector.shape_cast %7 : vector<8x8x384xbf16> to vector<64x384xbf16>
    %c0_3 = arith.constant 0 : index
    %c0_4 = arith.constant 0 : index
    %9 = vector.load %arg3[%c0_3, %c0_4] : memref<1152x128xbf16, #tpu.memory_space<vmem>>, vector<384x128xbf16>
    %cst_5 = arith.constant dense<0.000000e+00> : vector<64x128xf32>
    %10 = tpu.matmul %8, %9, %cst_5 {dimension_numbers = #tpu.dot_dimension_numbers<[1], [0], [0], [1], [0, 0, 1, 1], [], []>} : vector<64x384xbf16>, vector<384x128xbf16>, vector<64x128xf32> -> vector<64x128xf32>
    %11 = arith.addf %2, %10 : vector<64x128xf32>
    %12 = vector.extract_strided_slice %1 {offsets = [1, 0, 0], sizes = [8, 10, 128], strides = [1, 1, 1]} : vector<10x10x128xbf16> to vector<8x10x128xbf16>
    %13 = vector.extract_strided_slice %12 {offsets = [0, 0, 0], sizes = [8, 8, 128], strides = [1, 1, 1]} : vector<8x10x128xbf16> to vector<8x8x128xbf16>
    %14 = vector.extract_strided_slice %12 {offsets = [0, 1, 0], sizes = [8, 8, 128], strides = [1, 1, 1]} : vector<8x10x128xbf16> to vector<8x8x128xbf16>
    %15 = vector.extract_strided_slice %12 {offsets = [0, 2, 0], sizes = [8, 8, 128], strides = [1, 1, 1]} : vector<8x10x128xbf16> to vector<8x8x128xbf16>
    %16 = tpu.concatenate %13, %14, %15 in 2 : vector<8x8x128xbf16>, vector<8x8x128xbf16>, vector<8x8x128xbf16> -> vector<8x8x384xbf16>
    %17 = vector.shape_cast %16 : vector<8x8x384xbf16> to vector<64x384xbf16>
    %c384 = arith.constant 384 : index
    %c0_6 = arith.constant 0 : index
    %18 = vector.load %arg3[%c384, %c0_6] : memref<1152x128xbf16, #tpu.memory_space<vmem>>, vector<384x128xbf16>
    %cst_7 = arith.constant dense<0.000000e+00> : vector<64x128xf32>
    %19 = tpu.matmul %17, %18, %cst_7 {dimension_numbers = #tpu.dot_dimension_numbers<[1], [0], [0], [1], [0, 0, 1, 1], [], []>} : vector<64x384xbf16>, vector<384x128xbf16>, vector<64x128xf32> -> vector<64x128xf32>
    %20 = arith.addf %11, %19 : vector<64x128xf32>
    %21 = vector.extract_strided_slice %1 {offsets = [2, 0, 0], sizes = [8, 10, 128], strides = [1, 1, 1]} : vector<10x10x128xbf16> to vector<8x10x128xbf16>
    %22 = vector.extract_strided_slice %21 {offsets = [0, 0, 0], sizes = [8, 8, 128], strides = [1, 1, 1]} : vector<8x10x128xbf16> to vector<8x8x128xbf16>
    %23 = vector.extract_strided_slice %21 {offsets = [0, 1, 0], sizes = [8, 8, 128], strides = [1, 1, 1]} : vector<8x10x128xbf16> to vector<8x8x128xbf16>
    %24 = vector.extract_strided_slice %21 {offsets = [0, 2, 0], sizes = [8, 8, 128], strides = [1, 1, 1]} : vector<8x10x128xbf16> to vector<8x8x128xbf16>
    %25 = tpu.concatenate %22, %23, %24 in 2 : vector<8x8x128xbf16>, vector<8x8x128xbf16>, vector<8x8x128xbf16> -> vector<8x8x384xbf16>
    %26 = vector.shape_cast %25 : vector<8x8x384xbf16> to vector<64x384xbf16>
    %c768 = arith.constant 768 : index
    %c0_8 = arith.constant 0 : index
    %27 = vector.load %arg3[%c768, %c0_8] : memref<1152x128xbf16, #tpu.memory_space<vmem>>, vector<384x128xbf16>
    %cst_9 = arith.constant dense<0.000000e+00> : vector<64x128xf32>
    %28 = tpu.matmul %26, %27, %cst_9 {dimension_numbers = #tpu.dot_dimension_numbers<[1], [0], [0], [1], [0, 0, 1, 1], [], []>} : vector<64x384xbf16>, vector<384x128xbf16>, vector<64x128xf32> -> vector<64x128xf32>
    %29 = arith.addf %20, %28 : vector<64x128xf32>
    %c0_10 = arith.constant 0 : index
    %c0_11 = arith.constant 0 : index
    %30 = vector.load %arg4[%c0_10, %c0_11] : memref<1x128xf32, #tpu.memory_space<vmem>>, vector<1x128xf32>
    %31 = vector.broadcast %30 : vector<1x128xf32> to vector<64x128xf32>
    %32 = arith.addf %29, %31 : vector<64x128xf32>
    %cst_12 = arith.constant 0.000000e+00 : f32
    %33 = vector.broadcast %cst_12 : f32 to vector<64x128xf32>
    %34 = arith.cmpf ogt, %32, %33 : vector<64x128xf32>
    %cst_13 = arith.constant 1.000000e-01 : f32
    %35 = vector.broadcast %cst_13 : f32 to vector<64x128xf32>
    %36 = arith.mulf %35, %32 : vector<64x128xf32>
    %37 = arith.select %34, %32, %36 : vector<64x128xi1>, vector<64x128xf32>
    %38 = vector.shape_cast %37 : vector<64x128xf32> to vector<8x8x128xf32>
    %39 = vector.shape_cast %38 : vector<8x8x128xf32> to vector<8x4x2x128xf32>
    %cst_14 = arith.constant dense<0xFF800000> : vector<8x4x128xf32>
    %40 = vector.multi_reduction <maximumf>, %39, %cst_14 [2] : vector<8x4x2x128xf32> to vector<8x4x128xf32>
    %41 = vector.shape_cast %40 : vector<8x4x128xf32> to vector<4x2x4x128xf32>
    %cst_15 = arith.constant dense<0xFF800000> : vector<4x4x128xf32>
    %42 = vector.multi_reduction <maximumf>, %41, %cst_15 [1] : vector<4x2x4x128xf32> to vector<4x4x128xf32>
    %43 = arith.truncf %42 : vector<4x4x128xf32> to vector<4x4x128xbf16>
    %c0_16 = arith.constant 0 : index
    %c0_17 = arith.constant 0 : index
    %c0_18 = arith.constant 0 : index
    %c0_19 = arith.constant 0 : index
    %44 = vector.load %arg5[%c0_16, %c0_17, %c0_18, %c0_19] : memref<1x4x4x128xbf16, #tpu.memory_space<vmem>>, vector<1x4x4x128xbf16>
    %45 = vector.shape_cast %44 : vector<1x4x4x128xbf16> to vector<4x4x128xbf16>
    %46 = vector.shape_cast %43 : vector<4x4x128xbf16> to vector<1x4x4x128xbf16>
    tpu.vector_store %arg5[%c0_16, %c0_17, %c0_18, %c0_19], %46 {strides = array<i32>} : memref<1x4x4x128xbf16, #tpu.memory_space<vmem>>, vector<1x4x4x128xbf16>,
    return
  }
  func.func @transform_0(%arg0: i32, %arg1: i32) -> (i32, i32, i32, i32) {
    %c1_i32 = arith.constant 1 : i32
    %0 = arith.muli %arg0, %c1_i32 : i32
    %1 = arith.addi %0, %arg1 : i32
    %c0_i32 = arith.constant 0 : i32
    %c0_i32_0 = arith.constant 0 : i32
    %c0_i32_1 = arith.constant 0 : i32
    %c0_i32_2 = arith.constant 0 : i32
    return %1, %c0_i32, %c0_i32_0, %c0_i32_1 : i32, i32, i32, i32
  }
  func.func @transform_1(%arg0: i32, %arg1: i32) -> (i32, i32) {
    %c0_i32 = arith.constant 0 : i32
    %c0_i32_0 = arith.constant 0 : i32
    %c0_i32_1 = arith.constant 0 : i32
    return %c0_i32, %c0_i32_0 : i32, i32
  }
  func.func @transform_2(%arg0: i32, %arg1: i32) -> (i32, i32) {
    %c0_i32 = arith.constant 0 : i32
    %c0_i32_0 = arith.constant 0 : i32
    %c0_i32_1 = arith.constant 0 : i32
    return %c0_i32, %c0_i32_0 : i32, i32
  }
  func.func @transform_3(%arg0: i32, %arg1: i32) -> (i32, i32, i32, i32) {
    %c0_i32 = arith.constant 0 : i32
    %c0_i32_0 = arith.constant 0 : i32
    %c0_i32_1 = arith.constant 0 : i32
    return %arg0, %arg1, %c0_i32, %c0_i32_0 : i32, i32, i32, i32
  }
}

module attributes {stable_mosaic.version = 11 : i64} {
  func.func @_head_kernel(%arg0: i32, %arg1: memref<2x1024xbf16, #tpu.memory_space<vmem>>, %arg2: memref<1024x128xbf16, #tpu.memory_space<vmem>>, %arg3: memref<1x128xf32, #tpu.memory_space<vmem>>, %arg4: memref<128x256xbf16, #tpu.memory_space<vmem>>, %arg5: memref<1x256xf32, #tpu.memory_space<vmem>>, %arg6: memref<2x256xf32, #tpu.memory_space<vmem>>, %arg7: memref<2x128xf32, #tpu.memory_space<vmem>>) attributes {dimension_semantics = [#tpu.dimension_semantics<arbitrary>], iteration_bounds = array<i64: 2>, scalar_prefetch = 0 : i64, scratch_operands = 1 : i64, tpu.core_type = #tpu.core_type<tc>, window_params = [{transform_indices = @transform_0, window_bounds = array<i64: 2, 1024>}, {transform_indices = @transform_1, window_bounds = array<i64: 1024, 128>}, {pipeline_mode = #tpu.pipeline_mode<synchronous>, transform_indices = @transform_2, window_bounds = array<i64: 1, 128>}, {pipeline_mode = #tpu.pipeline_mode<synchronous>, transform_indices = @transform_3, window_bounds = array<i64: 128, 256>}, {pipeline_mode = #tpu.pipeline_mode<synchronous>, transform_indices = @transform_4, window_bounds = array<i64: 1, 256>}, {pipeline_mode = #tpu.pipeline_mode<synchronous>, transform_indices = @transform_5, window_bounds = array<i64: 2, 256>}]} {
    %c0_i32 = arith.constant 0 : i32
    %0 = arith.cmpi eq, %arg0, %c0_i32 : i32
    %1 = arith.extui %0 : i1 to i32
    %c0_i32_0 = arith.constant 0 : i32
    %2 = arith.cmpi ne, %1, %c0_i32_0 : i32
    scf.if %2 {
      %cst_9 = arith.constant 0.000000e+00 : f32
      %12 = vector.broadcast %cst_9 : f32 to vector<2x128xf32>
      %c0_10 = arith.constant 0 : index
      %c0_11 = arith.constant 0 : index
      %13 = vector.load %arg7[%c0_10, %c0_11] : memref<2x128xf32, #tpu.memory_space<vmem>>, vector<2x128xf32>
      tpu.vector_store %arg7[%c0_10, %c0_11], %12 {strides = array<i32>} : memref<2x128xf32, #tpu.memory_space<vmem>>, vector<2x128xf32>,
    } else {
    }
    %c0 = arith.constant 0 : index
    %c0_1 = arith.constant 0 : index
    %3 = vector.load %arg7[%c0, %c0_1] : memref<2x128xf32, #tpu.memory_space<vmem>>, vector<2x128xf32>
    %c0_2 = arith.constant 0 : index
    %c0_3 = arith.constant 0 : index
    %4 = vector.load %arg1[%c0_2, %c0_3] : memref<2x1024xbf16, #tpu.memory_space<vmem>>, vector<2x1024xbf16>
    %c0_4 = arith.constant 0 : index
    %c0_5 = arith.constant 0 : index
    %5 = vector.load %arg2[%c0_4, %c0_5] : memref<1024x128xbf16, #tpu.memory_space<vmem>>, vector<1024x128xbf16>
    %cst = arith.constant dense<0.000000e+00> : vector<2x128xf32>
    %6 = tpu.matmul %4, %5, %cst {dimension_numbers = #tpu.dot_dimension_numbers<[1], [0], [0], [1], [0, 0, 1, 1], [], []>} : vector<2x1024xbf16>, vector<1024x128xbf16>, vector<2x128xf32> -> vector<2x128xf32>
    %7 = arith.addf %3, %6 : vector<2x128xf32>
    %c0_6 = arith.constant 0 : index
    %c0_7 = arith.constant 0 : index
    %8 = vector.load %arg7[%c0_6, %c0_7] : memref<2x128xf32, #tpu.memory_space<vmem>>, vector<2x128xf32>
    tpu.vector_store %arg7[%c0_6, %c0_7], %7 {strides = array<i32>} : memref<2x128xf32, #tpu.memory_space<vmem>>, vector<2x128xf32>,
    %c1_i32 = arith.constant 1 : i32
    %9 = arith.cmpi eq, %arg0, %c1_i32 : i32
    %10 = arith.extui %9 : i1 to i32
    %c0_i32_8 = arith.constant 0 : i32
    %11 = arith.cmpi ne, %10, %c0_i32_8 : i32
    scf.if %11 {
      %c0_9 = arith.constant 0 : index
      %c0_10 = arith.constant 0 : index
      %12 = vector.load %arg7[%c0_9, %c0_10] : memref<2x128xf32, #tpu.memory_space<vmem>>, vector<2x128xf32>
      %c0_11 = arith.constant 0 : index
      %c0_12 = arith.constant 0 : index
      %13 = vector.load %arg3[%c0_11, %c0_12] : memref<1x128xf32, #tpu.memory_space<vmem>>, vector<1x128xf32>
      %14 = vector.broadcast %13 : vector<1x128xf32> to vector<2x128xf32>
      %15 = arith.addf %12, %14 : vector<2x128xf32>
      %cst_13 = arith.constant 0.000000e+00 : f32
      %16 = vector.broadcast %cst_13 : f32 to vector<2x128xf32>
      %17 = arith.cmpf ogt, %15, %16 : vector<2x128xf32>
      %cst_14 = arith.constant 1.000000e-01 : f32
      %18 = vector.broadcast %cst_14 : f32 to vector<2x128xf32>
      %19 = arith.mulf %18, %15 : vector<2x128xf32>
      %20 = arith.select %17, %15, %19 : vector<2x128xi1>, vector<2x128xf32>
      %21 = arith.truncf %20 : vector<2x128xf32> to vector<2x128xbf16>
      %c0_15 = arith.constant 0 : index
      %c0_16 = arith.constant 0 : index
      %22 = vector.load %arg4[%c0_15, %c0_16] : memref<128x256xbf16, #tpu.memory_space<vmem>>, vector<128x256xbf16>
      %cst_17 = arith.constant dense<0.000000e+00> : vector<2x256xf32>
      %23 = tpu.matmul %21, %22, %cst_17 {dimension_numbers = #tpu.dot_dimension_numbers<[1], [0], [0], [1], [0, 0, 1, 1], [], []>} : vector<2x128xbf16>, vector<128x256xbf16>, vector<2x256xf32> -> vector<2x256xf32>
      %c0_18 = arith.constant 0 : index
      %c0_19 = arith.constant 0 : index
      %24 = vector.load %arg5[%c0_18, %c0_19] : memref<1x256xf32, #tpu.memory_space<vmem>>, vector<1x256xf32>
      %25 = vector.broadcast %24 : vector<1x256xf32> to vector<2x256xf32>
      %26 = arith.addf %23, %25 : vector<2x256xf32>
      %c0_20 = arith.constant 0 : index
      %c0_21 = arith.constant 0 : index
      %27 = vector.load %arg6[%c0_20, %c0_21] : memref<2x256xf32, #tpu.memory_space<vmem>>, vector<2x256xf32>
      tpu.vector_store %arg6[%c0_20, %c0_21], %26 {strides = array<i32>} : memref<2x256xf32, #tpu.memory_space<vmem>>, vector<2x256xf32>,
    } else {
    }
    return
  }
  func.func @transform_0(%arg0: i32) -> (i32, i32) {
    %c0_i32 = arith.constant 0 : i32
    %c0_i32_0 = arith.constant 0 : i32
    return %c0_i32, %arg0 : i32, i32
  }
  func.func @transform_1(%arg0: i32) -> (i32, i32) {
    %c0_i32 = arith.constant 0 : i32
    %c0_i32_0 = arith.constant 0 : i32
    return %arg0, %c0_i32 : i32, i32
  }
  func.func @transform_2(%arg0: i32) -> (i32, i32) {
    %c0_i32 = arith.constant 0 : i32
    %c0_i32_0 = arith.constant 0 : i32
    %c0_i32_1 = arith.constant 0 : i32
    return %c0_i32, %c0_i32_0 : i32, i32
  }
  func.func @transform_3(%arg0: i32) -> (i32, i32) {
    %c0_i32 = arith.constant 0 : i32
    %c0_i32_0 = arith.constant 0 : i32
    %c0_i32_1 = arith.constant 0 : i32
    return %c0_i32, %c0_i32_0 : i32, i32
  }
  func.func @transform_4(%arg0: i32) -> (i32, i32) {
    %c0_i32 = arith.constant 0 : i32
    %c0_i32_0 = arith.constant 0 : i32
    %c0_i32_1 = arith.constant 0 : i32
    return %c0_i32, %c0_i32_0 : i32, i32
  }
  func.func @transform_5(%arg0: i32) -> (i32, i32) {
    %c0_i32 = arith.constant 0 : i32
    %c0_i32_0 = arith.constant 0 : i32
    %c0_i32_1 = arith.constant 0 : i32
    return %c0_i32, %c0_i32_0 : i32, i32
  }
}

</mosaic_0001>

<llo_original>
// kernel: _lambda_.5
$region0: #{_lambda_.5}
  #allocation0 [shape = 'u32[]', space=smem, size = 0x4, offset = 0x4, fixed_abs, tag = 'smem constant byte address 0x4 - core index']
  #allocation1 [shape = 'u32[144,128]{1,0:T(1,128)}', space=vmem, size = 0x12000, scoped, tag = 'internal scratch']
  #allocation2 [shape = 'f32[2,128]{1,0:T(2,128)}', space=vmem, size = 0x400, scoped, tag = 'scratch operand']
  %s0 = inlined_call_operand.vmem [shape: bf16[2,2048], index: 0, kind: input, shape index: {}]
  %s1 = inlined_call_operand.vmem [shape: bf16[2048,128], index: 1, kind: input, shape index: {}]
  %s2 = inlined_call_operand.vmem [shape: f32[1,128], index: 2, kind: input, shape index: {}]
  %s3 = inlined_call_operand.vmem [shape: bf16[128,256], index: 3, kind: input, shape index: {}]
  %s4 = inlined_call_operand.vmem [shape: f32[1,256], index: 4, kind: input, shape index: {}]
  %s5 = inlined_call_operand.vmem [shape: f32[2,256], index: 5, kind: output, shape index: {}]
  %s6 = sld [smem:[#allocation0]]
  $region61: #{_lambda_.5} parent=0
    _
  %s8 = ssub.s32 1, %s6
  %s9 = scalar_select 0, %s8, %s6
  loop: start=0, step=1, limit=4
  $region2: #{_lambda_.5} parent=0 // loop_pre_header
    _
  $region3: #{_lambda_.5} parent=0 // loop_header
    %s11 = sphi 0, %s15
    %p12 = scmp.ge.s32.totalorder %s11, 4
    %s21 = sphi 0, %s23
    %s24 = sphi 0, %s21
    %s25 = sphi 0, %s24
    %s41 = sphi 0, %s25
    %s47 = sphi 0, %s49
    %s50 = sphi 0, %s47
    %s51 = sphi 0, %s50
    %s67 = sphi 0, %s51
    %s71 = sphi 0, %s71
    %s73 = sphi 0, %s71
    %s74 = sphi 0, %s73
    %s88 = sphi 0, %s74
    %s92 = sphi 0, %s92
    %s94 = sphi 0, %s92
    %s95 = sphi 0, %s94
    %s109 = sphi 0, %s95
    %s113 = sphi 0, %s113
    %s115 = sphi 0, %s113
    %s116 = sphi 0, %s115
    %s130 = sphi 0, %s116
    %s134 = sphi 0, %s134
    %s136 = sphi 0, %s134
    %s137 = sphi 0, %s136
    %s151 = sphi 0, %s137
  $region4: #{_lambda_.5} parent=0 // loop_header_branch
    %14 = sbr.rel (%p12) target = $region8
  $region5: #{_lambda_.5} parent=0 // loop_body
    %s16 = ssub.s32 %s11, 1
    %s17 = ssub.s32 %s11, 2
    %s18 = sadd.s32 %s11, 1
    %s19 = ssub.s32 %s11, %s18
    %p20 = scmp.eq.s32.totalorder %s19, 0
    %s22 = sadd.s32 %s21, 1
    %s23 = scalar_select %p20, %s21, %s22
    %p26 = pneg %p20
    %p27 = scmp.eq.s32.totalorder %s11, 1
    %p28 = por %p26, %p27
    %p29 = scmp.ne.s32.totalorder %s21, %s24
    %p30 = scmp.eq.s32.totalorder %s11, 0
    %p31 = por %p29, %p30
    %p32 = scmp.ne.s32.totalorder %s21, %s24
    %p33 = scmp.eq.s32.totalorder %s16, 1
    %p34 = por %p32, %p33
    %p35 = scmp.ne.s32.totalorder %s24, %s25
    %p36 = scmp.eq.s32.totalorder %s16, 0
    %p37 = por %p35, %p36
    %p38 = scmp.ne.s32.totalorder %s24, %s25
    %p39 = scmp.eq.s32.totalorder %s17, 1
    %p40 = por %p38, %p39
    %p42 = scmp.ne.s32.totalorder %s25, %s41
    %p43 = scmp.eq.s32.totalorder %s17, 0
    %p44 = por %p42, %p43
    %s45 = ssub.s32 %s11, %s18
    %p46 = scmp.eq.s32.totalorder %s45, 0
    %s48 = sadd.s32 %s47, 1
    %s49 = scalar_select %p46, %s47, %s48
    %p52 = pneg %p46
    %p53 = scmp.eq.s32.totalorder %s11, 1
    %p54 = por %p52, %p53
    %p55 = scmp.ne.s32.totalorder %s47, %s50
    %p56 = scmp.eq.s32.totalorder %s11, 0
    %p57 = por %p55, %p56
    %p58 = scmp.ne.s32.totalorder %s47, %s50
    %p59 = scmp.eq.s32.totalorder %s16, 1
    %p60 = por %p58, %p59
    %p61 = scmp.ne.s32.totalorder %s50, %s51
    %p62 = scmp.eq.s32.totalorder %s16, 0
    %p63 = por %p61, %p62
    %p64 = scmp.ne.s32.totalorder %s50, %s51
    %p65 = scmp.eq.s32.totalorder %s17, 1
    %p66 = por %p64, %p65
    %p68 = scmp.ne.s32.totalorder %s51, %s67
    %p69 = scmp.eq.s32.totalorder %s17, 0
    %p70 = por %p68, %p69
    %s72 = sadd.s32 %s71, 1
    %p75 = scmp.eq.s32.totalorder %s11, 1
    %p76 = scmp.ne.s32.totalorder %s71, %s73
    %p77 = scmp.eq.s32.totalorder %s11, 0
    %p78 = por %p76, %p77
    %p79 = scmp.ne.s32.totalorder %s71, %s73
    %p80 = scmp.eq.s32.totalorder %s16, 1
    %p81 = por %p79, %p80
    %p82 = scmp.ne.s32.totalorder %s73, %s74
    %p83 = scmp.eq.s32.totalorder %s16, 0
    %p84 = por %p82, %p83
    %p85 = scmp.ne.s32.totalorder %s73, %s74
    %p86 = scmp.eq.s32.totalorder %s17, 1
    %p87 = por %p85, %p86
    %p89 = scmp.ne.s32.totalorder %s74, %s88
    %p90 = scmp.eq.s32.totalorder %s17, 0
    %p91 = por %p89, %p90
    %s93 = sadd.s32 %s92, 1
    %p96 = scmp.eq.s32.totalorder %s11, 1
    %p97 = scmp.ne.s32.totalorder %s92, %s94
    %p98 = scmp.eq.s32.totalorder %s11, 0
    %p99 = por %p97, %p98
    %p100 = scmp.ne.s32.totalorder %s92, %s94
    %p101 = scmp.eq.s32.totalorder %s16, 1
    %p102 = por %p100, %p101
    %p103 = scmp.ne.s32.totalorder %s94, %s95
    %p104 = scmp.eq.s32.totalorder %s16, 0
    %p105 = por %p103, %p104
    %p106 = scmp.ne.s32.totalorder %s94, %s95
    %p107 = scmp.eq.s32.totalorder %s17, 1
    %p108 = por %p106, %p107
    %p110 = scmp.ne.s32.totalorder %s95, %s109
    %p111 = scmp.eq.s32.totalorder %s17, 0
    %p112 = por %p110, %p111
    %s114 = sadd.s32 %s113, 1
    %p117 = scmp.eq.s32.totalorder %s11, 1
    %p118 = scmp.ne.s32.totalorder %s113, %s115
    %p119 = scmp.eq.s32.totalorder %s11, 0
    %p120 = por %p118, %p119
    %p121 = scmp.ne.s32.totalorder %s113, %s115
    %p122 = scmp.eq.s32.totalorder %s16, 1
    %p123 = por %p121, %p122
    %p124 = scmp.ne.s32.totalorder %s115, %s116
    %p125 = scmp.eq.s32.totalorder %s16, 0
    %p126 = por %p124, %p125
    %p127 = scmp.ne.s32.totalorder %s115, %s116
    %p128 = scmp.eq.s32.totalorder %s17, 1
    %p129 = por %p127, %p128
    %p131 = scmp.ne.s32.totalorder %s116, %s130
    %p132 = scmp.eq.s32.totalorder %s17, 0
    %p133 = por %p131, %p132
    %s135 = sadd.s32 %s134, 1
    %p138 = scmp.eq.s32.totalorder %s11, 1
    %p139 = scmp.ne.s32.totalorder %s134, %s136
    %p140 = scmp.eq.s32.totalorder %s11, 0
    %p141 = por %p139, %p140
    %p142 = scmp.ne.s32.totalorder %s134, %s136
    %p143 = scmp.eq.s32.totalorder %s16, 1
    %p144 = por %p142, %p143
    %p145 = scmp.ne.s32.totalorder %s136, %s137
    %p146 = scmp.eq.s32.totalorder %s16, 0
    %p147 = por %p145, %p146
    %p148 = scmp.ne.s32.totalorder %s136, %s137
    %p149 = scmp.eq.s32.totalorder %s17, 1
    %p150 = por %p148, %p149
    %p152 = scmp.ne.s32.totalorder %s137, %s151
    %p153 = scmp.eq.s32.totalorder %s17, 0
    %p154 = por %p152, %p153
    %p155 = scmp.le.s32.totalorder 1, %s11
    %p156 = scmp.lt.s32.totalorder %s11, 3
    %p157 = pnand %p155, %p156
    %p158 = pneg %p157
    // Predicated region
    $region9: #{_lambda_.5} parent=5 // pred_check
      _
    $region10: #{_lambda_.5} parent=5 // pred_check_branch
      %160 = sbr.rel (%p157) target = $region12
    $region11: #{_lambda_.5} parent=5 // pred_region
      %s161 = ssub.s32 %s11, 1
      // Predicated region
      $region13: #{_lambda_.5} parent=11 // pred_check
        %p162 = pneg %p84
      $region14: #{_lambda_.5} parent=11 // pred_check_branch
        %164 = sbr.rel (%p162) target = $region16
      $region15: #{_lambda_.5} parent=11 // pred_region
        _
      $region16: #{_lambda_.5} parent=11 // pred_fallthru
        _
      // Predicated region
      $region17: #{_lambda_.5} parent=11 // pred_check
        %p165 = pneg %p105
      $region18: #{_lambda_.5} parent=11 // pred_check_branch
        %167 = sbr.rel (%p165) target = $region20
      $region19: #{_lambda_.5} parent=11 // pred_region
        _
      $region20: #{_lambda_.5} parent=11 // pred_fallthru
        _
      // Predicated region
      $region21: #{_lambda_.5} parent=11 // pred_check
        %p168 = pneg %p126
      $region22: #{_lambda_.5} parent=11 // pred_check_branch
        %170 = sbr.rel (%p168) target = $region24
      $region23: #{_lambda_.5} parent=11 // pred_region
        _
      $region24: #{_lambda_.5} parent=11 // pred_fallthru
        _
    $region12: #{_lambda_.5} parent=5 // pred_fallthru
      _
    %p171 = scmp.lt.s32.totalorder %s11, 2
    // Predicated region
    $region25: #{_lambda_.5} parent=5 // pred_check
      %p172 = pneg %p171
    $region26: #{_lambda_.5} parent=5 // pred_check_branch
      %174 = sbr.rel (%p172) target = $region28
    $region27: #{_lambda_.5} parent=5 // pred_region
      // Predicated region
      $region29: #{_lambda_.5} parent=27 // pred_check
        %p175 = pneg %p31
      $region30: #{_lambda_.5} parent=27 // pred_check_branch
        %177 = sbr.rel (%p175) target = $region32
      $region31: #{_lambda_.5} parent=27 // pred_region
        %s178 = smul.u32 8, %s11
        %p179 = scmp.lt.s32.totalorder %s178, 15
        %s180 = scalar_select %p179, %s178, 15
        %s181 = scalar_lea.vmem %s0, %s180
        %s182 = smul.u32 8, %s11
      $region32: #{_lambda_.5} parent=27 // pred_fallthru
        _
      // Predicated region
      $region33: #{_lambda_.5} parent=27 // pred_check
        %p183 = pneg %p57
      $region34: #{_lambda_.5} parent=27 // pred_check_branch
        %185 = sbr.rel (%p183) target = $region36
      $region35: #{_lambda_.5} parent=27 // pred_region
        %s186 = smul.u32 128, %s11
        %p187 = scmp.lt.s32.totalorder %s186, 255
        %s188 = scalar_select %p187, %s186, 255
        %s189 = smul.addr %s188, 4
        %s190 = scalar_lea.vmem %s1, %s189
        %s191 = smul.u32 128, %s11
      $region36: #{_lambda_.5} parent=27 // pred_fallthru
        _
    $region28: #{_lambda_.5} parent=5 // pred_fallthru
      _
    %p192 = scmp.le.s32.totalorder 1, %s11
    %p193 = scmp.lt.s32.totalorder %s11, 3
    %p194 = pnand %p192, %p193
    %p195 = pneg %p194
    // Predicated region
    $region37: #{_lambda_.5} parent=5 // pred_check
      _
    $region38: #{_lambda_.5} parent=5 // pred_check_branch
      %197 = sbr.rel (%p194) target = $region40
    $region39: #{_lambda_.5} parent=5 // pred_region
      %s198 = ssub.s32 %s11, 1
      %s199 = smul.u32 8, %s16
      %p200 = scmp.lt.s32.totalorder %s199, 15
      %s201 = scalar_select %p200, %s199, 15
      %s202 = scalar_lea.vmem %s0, %s201
      %p203 = pneg %p37
      %p204 = pneg %p34
      %s205 = smul.u32 128, %s16
      %p206 = scmp.lt.s32.totalorder %s205, 255
      %s207 = scalar_select %p206, %s205, 255
      %s208 = smul.addr %s207, 4
      %s209 = scalar_lea.vmem %s1, %s208
      %p210 = pneg %p63
      %p211 = pneg %p60
      %p212 = pneg %p84
      %p213 = pneg %p81
      %p214 = pneg %p105
      %p215 = pneg %p102
      %p216 = pneg %p126
      %p217 = pneg %p123
      %p218 = pneg %p147
      %p219 = pneg %p144
      %s220 = smul.u32 8, %s16
      %p221 = scmp.lt.s32.totalorder %s220, 15
      %s222 = scalar_select %p221, %s220, 15
      %s223 = scalar_lea.vmem %s0, %s222
      %s224 = smul.u32 8, %s16
      %s225 = smul.u32 128, %s16
      %p226 = scmp.lt.s32.totalorder %s225, 255
      %s227 = scalar_select %p226, %s225, 255
      %s228 = smul.addr %s227, 4
      %s229 = scalar_lea.vmem %s1, %s228
      %s230 = smul.u32 128, %s16
      %p232 = scmp.eq.s32.totalorder %s16, 0
      // Predicated region
      $region41: #{_lambda_.5} parent=39 // pred_check
        %p233 = pneg %p232
      $region42: #{_lambda_.5} parent=39 // pred_check_branch
        %235 = sbr.rel (%p233) target = $region44
      $region43: #{_lambda_.5} parent=39 // pred_region
        %236 = vst [vmem:[#allocation2] sm:$0x3] 0.0
      $region44: #{_lambda_.5} parent=39 // pred_fallthru
        _
      %v237 = vld [vmem:[#allocation2] sm:$0x3]
      %v238 = vld [vmem:[%s223] sm:$0xff]
      %v239 = vld [vmem:[%s229] sm:$0xf]
      %v240 = vld [vmem:[%s229 + $0x4] sm:$0xf]
      %v241 = vld [vmem:[%s229 + $0x8] sm:$0xf]
      %v242 = vld [vmem:[%s229 + $0xc] sm:$0xf]
      %v243 = vld [vmem:[%s229 + $0x10] sm:$0xf]
      %v244 = vld [vmem:[%s229 + $0x14] sm:$0xf]
      %v245 = vld [vmem:[%s229 + $0x18] sm:$0xf]
      %v246 = vld [vmem:[%s229 + $0x1c] sm:$0xf]
      %v247 = vld [vmem:[%s229 + $0x20] sm:$0xf]
      %v248 = vld [vmem:[%s229 + $0x24] sm:$0xf]
      %v249 = vld [vmem:[%s229 + $0x28] sm:$0xf]
      %v250 = vld [vmem:[%s229 + $0x2c] sm:$0xf]
      %v251 = vld [vmem:[%s229 + $0x30] sm:$0xf]
      %v252 = vld [vmem:[%s229 + $0x34] sm:$0xf]
      %v253 = vld [vmem:[%s229 + $0x38] sm:$0xf]
      %v254 = vld [vmem:[%s229 + $0x3c] sm:$0xf]
      %v255 = vld [vmem:[%s229 + $0x40] sm:$0xf]
      %v256 = vld [vmem:[%s229 + $0x44] sm:$0xf]
      %v257 = vld [vmem:[%s229 + $0x48] sm:$0xf]
      %v258 = vld [vmem:[%s229 + $0x4c] sm:$0xf]
      %v259 = vld [vmem:[%s229 + $0x50] sm:$0xf]
      %v260 = vld [vmem:[%s229 + $0x54] sm:$0xf]
      %v261 = vld [vmem:[%s229 + $0x58] sm:$0xf]
      %v262 = vld [vmem:[%s229 + $0x5c] sm:$0xf]
      %v263 = vld [vmem:[%s229 + $0x60] sm:$0xf]
      %v264 = vld [vmem:[%s229 + $0x64] sm:$0xf]
      %v265 = vld [vmem:[%s229 + $0x68] sm:$0xf]
      %v266 = vld [vmem:[%s229 + $0x6c] sm:$0xf]
      %v267 = vld [vmem:[%s229 + $0x70] sm:$0xf]
      %v268 = vld [vmem:[%s229 + $0x74] sm:$0xf]
      %v269 = vld [vmem:[%s229 + $0x78] sm:$0xf]
      %v270 = vld [vmem:[%s229 + $0x7c] sm:$0xf]
      %v271 = vld [vmem:[%s229 + $0x80] sm:$0xf]
      %v272 = vld [vmem:[%s229 + $0x84] sm:$0xf]
      %v273 = vld [vmem:[%s229 + $0x88] sm:$0xf]
      %v274 = vld [vmem:[%s229 + $0x8c] sm:$0xf]
      %v275 = vld [vmem:[%s229 + $0x90] sm:$0xf]
      %v276 = vld [vmem:[%s229 + $0x94] sm:$0xf]
      %v277 = vld [vmem:[%s229 + $0x98] sm:$0xf]
      %v278 = vld [vmem:[%s229 + $0x9c] sm:$0xf]
      %v279 = vld [vmem:[%s229 + $0xa0] sm:$0xf]
      %v280 = vld [vmem:[%s229 + $0xa4] sm:$0xf]
      %v281 = vld [vmem:[%s229 + $0xa8] sm:$0xf]
      %v282 = vld [vmem:[%s229 + $0xac] sm:$0xf]
      %v283 = vld [vmem:[%s229 + $0xb0] sm:$0xf]
      %v284 = vld [vmem:[%s229 + $0xb4] sm:$0xf]
      %v285 = vld [vmem:[%s229 + $0xb8] sm:$0xf]
      %v286 = vld [vmem:[%s229 + $0xbc] sm:$0xf]
      %v287 = vld [vmem:[%s229 + $0xc0] sm:$0xf]
      %v288 = vld [vmem:[%s229 + $0xc4] sm:$0xf]
      %v289 = vld [vmem:[%s229 + $0xc8] sm:$0xf]
      %v290 = vld [vmem:[%s229 + $0xcc] sm:$0xf]
      %v291 = vld [vmem:[%s229 + $0xd0] sm:$0xf]
      %v292 = vld [vmem:[%s229 + $0xd4] sm:$0xf]
      %v293 = vld [vmem:[%s229 + $0xd8] sm:$0xf]
      %v294 = vld [vmem:[%s229 + $0xdc] sm:$0xf]
      %v295 = vld [vmem:[%s229 + $0xe0] sm:$0xf]
      %v296 = vld [vmem:[%s229 + $0xe4] sm:$0xf]
      %v297 = vld [vmem:[%s229 + $0xe8] sm:$0xf]
      %v298 = vld [vmem:[%s229 + $0xec] sm:$0xf]
      %v299 = vld [vmem:[%s229 + $0xf0] sm:$0xf]
      %v300 = vld [vmem:[%s229 + $0xf4] sm:$0xf]
      %v301 = vld [vmem:[%s229 + $0xf8] sm:$0xf]
      %v302 = vld [vmem:[%s229 + $0xfc] sm:$0xf]
      %v303 = vld [vmem:[%s229 + $0x100] sm:$0xf]
      %v304 = vld [vmem:[%s229 + $0x104] sm:$0xf]
      %v305 = vld [vmem:[%s229 + $0x108] sm:$0xf]
      %v306 = vld [vmem:[%s229 + $0x10c] sm:$0xf]
      %v307 = vld [vmem:[%s229 + $0x110] sm:$0xf]
      %v308 = vld [vmem:[%s229 + $0x114] sm:$0xf]
      %v309 = vld [vmem:[%s229 + $0x118] sm:$0xf]
      %v310 = vld [vmem:[%s229 + $0x11c] sm:$0xf]
      %v311 = vld [vmem:[%s229 + $0x120] sm:$0xf]
      %v312 = vld [vmem:[%s229 + $0x124] sm:$0xf]
      %v313 = vld [vmem:[%s229 + $0x128] sm:$0xf]
      %v314 = vld [vmem:[%s229 + $0x12c] sm:$0xf]
      %v315 = vld [vmem:[%s229 + $0x130] sm:$0xf]
      %v316 = vld [vmem:[%s229 + $0x134] sm:$0xf]
      %v317 = vld [vmem:[%s229 + $0x138] sm:$0xf]
      %v318 = vld [vmem:[%s229 + $0x13c] sm:$0xf]
      %v319 = vld [vmem:[%s229 + $0x140] sm:$0xf]
      %v320 = vld [vmem:[%s229 + $0x144] sm:$0xf]
      %v321 = vld [vmem:[%s229 + $0x148] sm:$0xf]
      %v322 = vld [vmem:[%s229 + $0x14c] sm:$0xf]
      %v323 = vld [vmem:[%s229 + $0x150] sm:$0xf]
      %v324 = vld [vmem:[%s229 + $0x154] sm:$0xf]
      %v325 = vld [vmem:[%s229 + $0x158] sm:$0xf]
      %v326 = vld [vmem:[%s229 + $0x15c] sm:$0xf]
      %v327 = vld [vmem:[%s229 + $0x160] sm:$0xf]
      %v328 = vld [vmem:[%s229 + $0x164] sm:$0xf]
      %v329 = vld [vmem:[%s229 + $0x168] sm:$0xf]
      %v330 = vld [vmem:[%s229 + $0x16c] sm:$0xf]
      %v331 = vld [vmem:[%s229 + $0x170] sm:$0xf]
      %v332 = vld [vmem:[%s229 + $0x174] sm:$0xf]
      %v333 = vld [vmem:[%s229 + $0x178] sm:$0xf]
      %v334 = vld [vmem:[%s229 + $0x17c] sm:$0xf]
      %v335 = vld [vmem:[%s229 + $0x180] sm:$0xf]
      %v336 = vld [vmem:[%s229 + $0x184] sm:$0xf]
      %v337 = vld [vmem:[%s229 + $0x188] sm:$0xf]
      %v338 = vld [vmem:[%s229 + $0x18c] sm:$0xf]
      %v339 = vld [vmem:[%s229 + $0x190] sm:$0xf]
      %v340 = vld [vmem:[%s229 + $0x194] sm:$0xf]
      %v341 = vld [vmem:[%s229 + $0x198] sm:$0xf]
      %v342 = vld [vmem:[%s229 + $0x19c] sm:$0xf]
      %v343 = vld [vmem:[%s229 + $0x1a0] sm:$0xf]
      %v344 = vld [vmem:[%s229 + $0x1a4] sm:$0xf]
      %v345 = vld [vmem:[%s229 + $0x1a8] sm:$0xf]
      %v346 = vld [vmem:[%s229 + $0x1ac] sm:$0xf]
      %v347 = vld [vmem:[%s229 + $0x1b0] sm:$0xf]
      %v348 = vld [vmem:[%s229 + $0x1b4] sm:$0xf]
      %v349 = vld [vmem:[%s229 + $0x1b8] sm:$0xf]
      %v350 = vld [vmem:[%s229 + $0x1bc] sm:$0xf]
      %v351 = vld [vmem:[%s229 + $0x1c0] sm:$0xf]
      %v352 = vld [vmem:[%s229 + $0x1c4] sm:$0xf]
      %v353 = vld [vmem:[%s229 + $0x1c8] sm:$0xf]
      %v354 = vld [vmem:[%s229 + $0x1cc] sm:$0xf]
      %v355 = vld [vmem:[%s229 + $0x1d0] sm:$0xf]
      %v356 = vld [vmem:[%s229 + $0x1d4] sm:$0xf]
      %v357 = vld [vmem:[%s229 + $0x1d8] sm:$0xf]
      %v358 = vld [vmem:[%s229 + $0x1dc] sm:$0xf]
      %v359 = vld [vmem:[%s229 + $0x1e0] sm:$0xf]
      %v360 = vld [vmem:[%s229 + $0x1e4] sm:$0xf]
      %v361 = vld [vmem:[%s229 + $0x1e8] sm:$0xf]
      %v362 = vld [vmem:[%s229 + $0x1ec] sm:$0xf]
      %v363 = vld [vmem:[%s229 + $0x1f0] sm:$0xf]
      %v364 = vld [vmem:[%s229 + $0x1f4] sm:$0xf]
      %v365 = vld [vmem:[%s229 + $0x1f8] sm:$0xf]
      %v366 = vld [vmem:[%s229 + $0x1fc] sm:$0xf]
      %v368 = vcombine.high %v238, %v238
      %v370 = vunpack.c.l.s4 1966171168
      %v371 = vunpack.c.0.s8 %v370
      %v372 = vlaneseq
      %v373 = vshrl.u32 %v372, 7
      %v374 = vsub.s32 %v371, %v373
      %v375 = vrot.slane %v238, %v374
      %v377 = vunpack.c.l.s4 1966171168
      %v378 = vunpack.c.0.s8 %v377
      %v379 = vlaneseq
      %v380 = vshrl.u32 %v379, 7
      %v381 = vsub.s32 %v378, %v380
      %v382 = vrot.slane %v368, %v381
      %v383 = vcombine.high %v375, %v375
      %v384 = vcombine.high %v382, %v382
      %v386 = vunpack.c.l.s4 1966171168
      %v387 = vunpack.c.0.s8 %v386
      %v388 = vlaneseq
      %v389 = vshrl.u32 %v388, 7
      %v390 = vsub.s32 %v387, %v389
      %v391 = vrot.slane %v375, %v390
      %v393 = vunpack.c.l.s4 1966171168
      %v394 = vunpack.c.0.s8 %v393
      %v395 = vlaneseq
      %v396 = vshrl.u32 %v395, 7
      %v397 = vsub.s32 %v394, %v396
      %v398 = vrot.slane %v382, %v397
      %v400 = vunpack.c.l.s4 1966171168
      %v401 = vunpack.c.0.s8 %v400
      %v402 = vlaneseq
      %v403 = vshrl.u32 %v402, 7
      %v404 = vsub.s32 %v401, %v403
      %v405 = vrot.slane %v383, %v404
      %v407 = vunpack.c.l.s4 1966171168
      %v408 = vunpack.c.0.s8 %v407
      %v409 = vlaneseq
      %v410 = vshrl.u32 %v409, 7
      %v411 = vsub.s32 %v408, %v410
      %v412 = vrot.slane %v384, %v411
      %v413 = vcombine.high %v391, %v391
      %v414 = vcombine.high %v398, %v398
      %v415 = vcombine.high %v405, %v405
      %v416 = vcombine.high %v412, %v412
      %v553 = vunpack.c.l.b16 %v239
      %v554 = vunpack.c.l.b16 %v240
      %v555 = vunpack.c.l.b16 %v241
      %v556 = vunpack.c.l.b16 %v242
      %v557 = vunpack.c.l.b16 %v243
      %v558 = vunpack.c.l.b16 %v244
      %v559 = vunpack.c.l.b16 %v245
      %v560 = vunpack.c.l.b16 %v246
      %v561 = vunpack.c.l.b16 %v247
      %v562 = vunpack.c.l.b16 %v248
      %v563 = vunpack.c.l.b16 %v249
      %v564 = vunpack.c.l.b16 %v250
      %v565 = vunpack.c.l.b16 %v251
      %v566 = vunpack.c.l.b16 %v252
      %v567 = vunpack.c.l.b16 %v253
      %v568 = vunpack.c.l.b16 %v254
      %v569 = vunpack.c.l.b16 %v255
      %v570 = vunpack.c.l.b16 %v256
      %v571 = vunpack.c.l.b16 %v257
      %v572 = vunpack.c.l.b16 %v258
      %v573 = vunpack.c.l.b16 %v259
      %v574 = vunpack.c.l.b16 %v260
      %v575 = vunpack.c.l.b16 %v261
      %v576 = vunpack.c.l.b16 %v262
      %v577 = vunpack.c.l.b16 %v263
      %v578 = vunpack.c.l.b16 %v264
      %v579 = vunpack.c.l.b16 %v265
      %v580 = vunpack.c.l.b16 %v266
      %v581 = vunpack.c.l.b16 %v267
      %v582 = vunpack.c.l.b16 %v268
      %v583 = vunpack.c.l.b16 %v269
      %v584 = vunpack.c.l.b16 %v270
      %v585 = vunpack.c.l.b16 %v271
      %v586 = vunpack.c.l.b16 %v272
      %v587 = vunpack.c.l.b16 %v273
      %v588 = vunpack.c.l.b16 %v274
      %v589 = vunpack.c.l.b16 %v275
      %v590 = vunpack.c.l.b16 %v276
      %v591 = vunpack.c.l.b16 %v277
      %v592 = vunpack.c.l.b16 %v278
      %v593 = vunpack.c.l.b16 %v279
      %v594 = vunpack.c.l.b16 %v280
      %v595 = vunpack.c.l.b16 %v281
      %v596 = vunpack.c.l.b16 %v282
      %v597 = vunpack.c.l.b16 %v283
      %v598 = vunpack.c.l.b16 %v284
      %v599 = vunpack.c.l.b16 %v285
      %v600 = vunpack.c.l.b16 %v286
      %v601 = vunpack.c.l.b16 %v287
      %v602 = vunpack.c.l.b16 %v288
      %v603 = vunpack.c.l.b16 %v289
      %v604 = vunpack.c.l.b16 %v290
      %v605 = vunpack.c.l.b16 %v291
      %v606 = vunpack.c.l.b16 %v292
      %v607 = vunpack.c.l.b16 %v293
      %v608 = vunpack.c.l.b16 %v294
      %v609 = vunpack.c.l.b16 %v295
      %v610 = vunpack.c.l.b16 %v296
      %v611 = vunpack.c.l.b16 %v297
      %v612 = vunpack.c.l.b16 %v298
      %v613 = vunpack.c.l.b16 %v299
      %v614 = vunpack.c.l.b16 %v300
      %v615 = vunpack.c.l.b16 %v301
      %v616 = vunpack.c.l.b16 %v302
      %v617 = vunpack.c.l.b16 %v303
      %v618 = vunpack.c.l.b16 %v304
      %v619 = vunpack.c.l.b16 %v305
      %v620 = vunpack.c.l.b16 %v306
      %v621 = vunpack.c.l.b16 %v307
      %v622 = vunpack.c.l.b16 %v308
      %v623 = vunpack.c.l.b16 %v309
      %v624 = vunpack.c.l.b16 %v310
      %v625 = vunpack.c.l.b16 %v311
      %v626 = vunpack.c.l.b16 %v312
      %v627 = vunpack.c.l.b16 %v313
      %v628 = vunpack.c.l.b16 %v314
      %v629 = vunpack.c.l.b16 %v315
      %v630 = vunpack.c.l.b16 %v316
      %v631 = vunpack.c.l.b16 %v317
      %v632 = vunpack.c.l.b16 %v318
      %v633 = vunpack.c.l.b16 %v319
      %v634 = vunpack.c.l.b16 %v320
      %v635 = vunpack.c.l.b16 %v321
      %v636 = vunpack.c.l.b16 %v322
      %v637 = vunpack.c.l.b16 %v323
      %v638 = vunpack.c.l.b16 %v324
      %v639 = vunpack.c.l.b16 %v325
      %v640 = vunpack.c.l.b16 %v326
      %v641 = vunpack.c.l.b16 %v327
      %v642 = vunpack.c.l.b16 %v328
      %v643 = vunpack.c.l.b16 %v329
      %v644 = vunpack.c.l.b16 %v330
      %v645 = vunpack.c.l.b16 %v331
      %v646 = vunpack.c.l.b16 %v332
      %v647 = vunpack.c.l.b16 %v333
      %v648 = vunpack.c.l.b16 %v334
      %v649 = vunpack.c.l.b16 %v335
      %v650 = vunpack.c.l.b16 %v336
      %v651 = vunpack.c.l.b16 %v337
      %v652 = vunpack.c.l.b16 %v338
      %v653 = vunpack.c.l.b16 %v339
      %v654 = vunpack.c.l.b16 %v340
      %v655 = vunpack.c.l.b16 %v341
      %v656 = vunpack.c.l.b16 %v342
      %v657 = vunpack.c.l.b16 %v343
      %v658 = vunpack.c.l.b16 %v344
      %v659 = vunpack.c.l.b16 %v345
      %v660 = vunpack.c.l.b16 %v346
      %v661 = vunpack.c.l.b16 %v347
      %v662 = vunpack.c.l.b16 %v348
      %v663 = vunpack.c.l.b16 %v349
      %v664 = vunpack.c.l.b16 %v350
      %v665 = vunpack.c.l.b16 %v351
      %v666 = vunpack.c.l.b16 %v352
      %v667 = vunpack.c.l.b16 %v353
      %v668 = vunpack.c.l.b16 %v354
      %v669 = vunpack.c.l.b16 %v355
      %v670 = vunpack.c.l.b16 %v356
      %v671 = vunpack.c.l.b16 %v357
      %v672 = vunpack.c.l.b16 %v358
      %v673 = vunpack.c.l.b16 %v359
      %v674 = vunpack.c.l.b16 %v360
      %v675 = vunpack.c.l.b16 %v361
      %v676 = vunpack.c.l.b16 %v362
      %v677 = vunpack.c.l.b16 %v363
      %v678 = vunpack.c.l.b16 %v364
      %v679 = vunpack.c.l.b16 %v365
      %v680 = vunpack.c.l.b16 %v366
      %v681 = vpack.c.b16 %v554, %v553
      %v682 = vpack.c.b16 %v556, %v555
      %v683 = vpack.c.b16 %v558, %v557
      %v684 = vpack.c.b16 %v560, %v559
      %v685 = vpack.c.b16 %v562, %v561
      %v686 = vpack.c.b16 %v564, %v563
      %v687 = vpack.c.b16 %v566, %v565
      %v688 = vpack.c.b16 %v568, %v567
      %v689 = vpack.c.b16 %v570, %v569
      %v690 = vpack.c.b16 %v572, %v571
      %v691 = vpack.c.b16 %v574, %v573
      %v692 = vpack.c.b16 %v576, %v575
      %v693 = vpack.c.b16 %v578, %v577
      %v694 = vpack.c.b16 %v580, %v579
      %v695 = vpack.c.b16 %v582, %v581
      %v696 = vpack.c.b16 %v584, %v583
      %v697 = vpack.c.b16 %v586, %v585
      %v698 = vpack.c.b16 %v588, %v587
      %v699 = vpack.c.b16 %v590, %v589
      %v700 = vpack.c.b16 %v592, %v591
      %v701 = vpack.c.b16 %v594, %v593
      %v702 = vpack.c.b16 %v596, %v595
      %v703 = vpack.c.b16 %v598, %v597
      %v704 = vpack.c.b16 %v600, %v599
      %v705 = vpack.c.b16 %v602, %v601
      %v706 = vpack.c.b16 %v604, %v603
      %v707 = vpack.c.b16 %v606, %v605
      %v708 = vpack.c.b16 %v608, %v607
      %v709 = vpack.c.b16 %v610, %v609
      %v710 = vpack.c.b16 %v612, %v611
      %v711 = vpack.c.b16 %v614, %v613
      %v712 = vpack.c.b16 %v616, %v615
      %v713 = vpack.c.b16 %v618, %v617
      %v714 = vpack.c.b16 %v620, %v619
      %v715 = vpack.c.b16 %v622, %v621
      %v716 = vpack.c.b16 %v624, %v623
      %v717 = vpack.c.b16 %v626, %v625
      %v718 = vpack.c.b16 %v628, %v627
      %v719 = vpack.c.b16 %v630, %v629
      %v720 = vpack.c.b16 %v632, %v631
      %v721 = vpack.c.b16 %v634, %v633
      %v722 = vpack.c.b16 %v636, %v635
      %v723 = vpack.c.b16 %v638, %v637
      %v724 = vpack.c.b16 %v640, %v639
      %v725 = vpack.c.b16 %v642, %v641
      %v726 = vpack.c.b16 %v644, %v643
      %v727 = vpack.c.b16 %v646, %v645
      %v728 = vpack.c.b16 %v648, %v647
      %v729 = vpack.c.b16 %v650, %v649
      %v730 = vpack.c.b16 %v652, %v651
      %v731 = vpack.c.b16 %v654, %v653
      %v732 = vpack.c.b16 %v656, %v655
      %v733 = vpack.c.b16 %v658, %v657
      %v734 = vpack.c.b16 %v660, %v659
      %v735 = vpack.c.b16 %v662, %v661
      %v736 = vpack.c.b16 %v664, %v663
      %v737 = vpack.c.b16 %v666, %v665
      %v738 = vpack.c.b16 %v668, %v667
      %v739 = vpack.c.b16 %v670, %v669
      %v740 = vpack.c.b16 %v672, %v671
      %v741 = vpack.c.b16 %v674, %v673
      %v742 = vpack.c.b16 %v676, %v675
      %v743 = vpack.c.b16 %v678, %v677
      %v744 = vpack.c.b16 %v680, %v679
      %809 = vmatprep.subr.bf16.mxu0 0
      %810 = vmatpush1.bf16.msra.mxu0 %v681
      %811 = vmatprep.subr.bf16.mxu0 0
      %812 = vmatpush1.bf16.msra.mxu0 %v682
      %813 = vmatprep.subr.bf16.mxu0 0
      %814 = vmatpush1.bf16.msra.mxu0 %v683
      %815 = vmatprep.subr.bf16.mxu0 0
      %816 = vmatpush1.bf16.msra.mxu0 %v684
      %817 = vmatprep.subr.bf16.mxu0 0
      %818 = vmatpush1.bf16.msra.mxu0 %v685
      %819 = vmatprep.subr.bf16.mxu0 0
      %820 = vmatpush1.bf16.msra.mxu0 %v686
      %821 = vmatprep.subr.bf16.mxu0 0
      %822 = vmatpush1.bf16.msra.mxu0 %v687
      %823 = vmatprep.subr.bf16.mxu0 0
      %824 = vmatpush1.bf16.msra.mxu0 %v688
      %825 = vmatprep.subr.bf16.mxu0 0
      %826 = vmatpush1.bf16.msra.mxu0 %v689
      %827 = vmatprep.subr.bf16.mxu0 0
      %828 = vmatpush1.bf16.msra.mxu0 %v690
      %829 = vmatprep.subr.bf16.mxu0 0
      %830 = vmatpush1.bf16.msra.mxu0 %v691
      %831 = vmatprep.subr.bf16.mxu0 0
      %832 = vmatpush1.bf16.msra.mxu0 %v692
      %833 = vmatprep.subr.bf16.mxu0 0
      %834 = vmatpush1.bf16.msra.mxu0 %v693
      %835 = vmatprep.subr.bf16.mxu0 0
      %836 = vmatpush1.bf16.msra.mxu0 %v694
      %837 = vmatprep.subr.bf16.mxu0 0
      %838 = vmatpush1.bf16.msra.mxu0 %v695
      %839 = vmatprep.subr.bf16.mxu0 0
      %840 = vmatpush1.bf16.msra.mxu0 %v696
      %841 = vmatprep.mubr.bf16.mxu0 %v405
      %842 = vmatmul.mubr.bf16.gmra.mrb[0].mxu0 %v391
      %v843 = vpop.f32.mrb[0].mxu0
      %v844 = vadd.f32 0.0, %v843
      %v845 = vpop.f32.mrb[0].mxu0
      %v846 = vpop.f32.mrb[0].mxu0
      %v847 = vpop.f32.mrb[0].mxu0
      %848 = vdwg.mxu0
      %849 = vmatprep.subr.bf16.mxu0 0
      %850 = vmatpush1.bf16.msra.mxu0 %v697
      %851 = vmatprep.subr.bf16.mxu0 0
      %852 = vmatpush1.bf16.msra.mxu0 %v698
      %853 = vmatprep.subr.bf16.mxu0 0
      %854 = vmatpush1.bf16.msra.mxu0 %v699
      %855 = vmatprep.subr.bf16.mxu0 0
      %856 = vmatpush1.bf16.msra.mxu0 %v700
      %857 = vmatprep.subr.bf16.mxu0 0
      %858 = vmatpush1.bf16.msra.mxu0 %v701
      %859 = vmatprep.subr.bf16.mxu0 0
      %860 = vmatpush1.bf16.msra.mxu0 %v702
      %861 = vmatprep.subr.bf16.mxu0 0
      %862 = vmatpush1.bf16.msra.mxu0 %v703
      %863 = vmatprep.subr.bf16.mxu0 0
      %864 = vmatpush1.bf16.msra.mxu0 %v704
      %865 = vmatprep.subr.bf16.mxu0 0
      %866 = vmatpush1.bf16.msra.mxu0 %v705
      %867 = vmatprep.subr.bf16.mxu0 0
      %868 = vmatpush1.bf16.msra.mxu0 %v706
      %869 = vmatprep.subr.bf16.mxu0 0
      %870 = vmatpush1.bf16.msra.mxu0 %v707
      %871 = vmatprep.subr.bf16.mxu0 0
      %872 = vmatpush1.bf16.msra.mxu0 %v708
      %873 = vmatprep.subr.bf16.mxu0 0
      %874 = vmatpush1.bf16.msra.mxu0 %v709
      %875 = vmatprep.subr.bf16.mxu0 0
      %876 = vmatpush1.bf16.msra.mxu0 %v710
      %877 = vmatprep.subr.bf16.mxu0 0
      %878 = vmatpush1.bf16.msra.mxu0 %v711
      %879 = vmatprep.subr.bf16.mxu0 0
      %880 = vmatpush1.bf16.msra.mxu0 %v712
      %881 = vmatprep.mubr.bf16.mxu0 %v415
      %882 = vmatmul.mubr.bf16.gmra.mrb[0].mxu0 %v413
      %v883 = vpop.f32.mrb[0].mxu0
      %v884 = vadd.f32 %v844, %v883
      %v885 = vpop.f32.mrb[0].mxu0
      %v886 = vpop.f32.mrb[0].mxu0
      %v887 = vpop.f32.mrb[0].mxu0
      %888 = vdwg.mxu0
      %889 = vmatprep.subr.bf16.mxu0 0
      %890 = vmatpush1.bf16.msra.mxu0 %v713
      %891 = vmatprep.subr.bf16.mxu0 0
      %892 = vmatpush1.bf16.msra.mxu0 %v714
      %893 = vmatprep.subr.bf16.mxu0 0
      %894 = vmatpush1.bf16.msra.mxu0 %v715
      %895 = vmatprep.subr.bf16.mxu0 0
      %896 = vmatpush1.bf16.msra.mxu0 %v716
      %897 = vmatprep.subr.bf16.mxu0 0
      %898 = vmatpush1.bf16.msra.mxu0 %v717
      %899 = vmatprep.subr.bf16.mxu0 0
      %900 = vmatpush1.bf16.msra.mxu0 %v718
      %901 = vmatprep.subr.bf16.mxu0 0
      %902 = vmatpush1.bf16.msra.mxu0 %v719
      %903 = vmatprep.subr.bf16.mxu0 0
      %904 = vmatpush1.bf16.msra.mxu0 %v720
      %905 = vmatprep.subr.bf16.mxu0 0
      %906 = vmatpush1.bf16.msra.mxu0 %v721
      %907 = vmatprep.subr.bf16.mxu0 0
      %908 = vmatpush1.bf16.msra.mxu0 %v722
      %909 = vmatprep.subr.bf16.mxu0 0
      %910 = vmatpush1.bf16.msra.mxu0 %v723
      %911 = vmatprep.subr.bf16.mxu0 0
      %912 = vmatpush1.bf16.msra.mxu0 %v724
      %913 = vmatprep.subr.bf16.mxu0 0
      %914 = vmatpush1.bf16.msra.mxu0 %v725
      %915 = vmatprep.subr.bf16.mxu0 0
      %916 = vmatpush1.bf16.msra.mxu0 %v726
      %917 = vmatprep.subr.bf16.mxu0 0
      %918 = vmatpush1.bf16.msra.mxu0 %v727
      %919 = vmatprep.subr.bf16.mxu0 0
      %920 = vmatpush1.bf16.msra.mxu0 %v728
      %921 = vmatprep.mubr.bf16.mxu0 %v412
      %922 = vmatmul.mubr.bf16.gmra.mrb[0].mxu0 %v398
      %v923 = vpop.f32.mrb[0].mxu0
      %v924 = vadd.f32 %v884, %v923
      %v925 = vpop.f32.mrb[0].mxu0
      %v926 = vpop.f32.mrb[0].mxu0
      %v927 = vpop.f32.mrb[0].mxu0
      %928 = vdwg.mxu0
      %929 = vmatprep.subr.bf16.mxu0 0
      %930 = vmatpush1.bf16.msra.mxu0 %v729
      %931 = vmatprep.subr.bf16.mxu0 0
      %932 = vmatpush1.bf16.msra.mxu0 %v730
      %933 = vmatprep.subr.bf16.mxu0 0
      %934 = vmatpush1.bf16.msra.mxu0 %v731
      %935 = vmatprep.subr.bf16.mxu0 0
      %936 = vmatpush1.bf16.msra.mxu0 %v732
      %937 = vmatprep.subr.bf16.mxu0 0
      %938 = vmatpush1.bf16.msra.mxu0 %v733
      %939 = vmatprep.subr.bf16.mxu0 0
      %940 = vmatpush1.bf16.msra.mxu0 %v734
      %941 = vmatprep.subr.bf16.mxu0 0
      %942 = vmatpush1.bf16.msra.mxu0 %v735
      %943 = vmatprep.subr.bf16.mxu0 0
      %944 = vmatpush1.bf16.msra.mxu0 %v736
      %945 = vmatprep.subr.bf16.mxu0 0
      %946 = vmatpush1.bf16.msra.mxu0 %v737
      %947 = vmatprep.subr.bf16.mxu0 0
      %948 = vmatpush1.bf16.msra.mxu0 %v738
      %949 = vmatprep.subr.bf16.mxu0 0
      %950 = vmatpush1.bf16.msra.mxu0 %v739
      %951 = vmatprep.subr.bf16.mxu0 0
      %952 = vmatpush1.bf16.msra.mxu0 %v740
      %953 = vmatprep.subr.bf16.mxu0 0
      %954 = vmatpush1.bf16.msra.mxu0 %v741
      %955 = vmatprep.subr.bf16.mxu0 0
      %956 = vmatpush1.bf16.msra.mxu0 %v742
      %957 = vmatprep.subr.bf16.mxu0 0
      %958 = vmatpush1.bf16.msra.mxu0 %v743
      %959 = vmatprep.subr.bf16.mxu0 0
      %960 = vmatpush1.bf16.msra.mxu0 %v744
      %961 = vmatprep.mubr.bf16.mxu0 %v416
      %962 = vmatmul.mubr.bf16.gmra.mrb[0].mxu0 %v414
      %v963 = vpop.f32.mrb[0].mxu0
      %v964 = vadd.f32 %v924, %v963
      %v965 = vpop.f32.mrb[0].mxu0
      %v966 = vpop.f32.mrb[0].mxu0
      %v967 = vpop.f32.mrb[0].mxu0
      %968 = vdwg.mxu0
      %v969 = vadd.f32 %v237, %v964
      %970 = vst [vmem:[#allocation2] sm:$0x3] %v969
      %p971 = scmp.eq.s32.totalorder %s16, 1
      // Predicated region
      $region45: #{_lambda_.5} parent=39 // pred_check
        %p972 = pneg %p971
      $region46: #{_lambda_.5} parent=39 // pred_check_branch
        %974 = sbr.rel (%p972) target = $region48
      $region47: #{_lambda_.5} parent=39 // pred_region
        %v975 = vld [vmem:[#allocation2] sm:$0x3]
        %v976 = vld [vmem:[%s2] sm:$0x1]
        %v978 = vlaneseq
        %v979 = vshrl.u32 %v978, 7
        %v980 = vsub.s32 0, %v979
        %v981 = vrot.slane %v976, %v980
        %v983 = vadd.f32 %v975, %v981
        %vm984 = vcmp.gt.f32.partialorder %v983, 0.0
        %v985 = vmul.f32 %v983, 0.1
        %v986 = vsel %vm984, %v983, %v985
        %v987 = vpack.c.bf16 %v986, %v986
        %v988 = vld [vmem:[%s3] sm:$0xff]
        %v989 = vld [vmem:[%s3 + $0x8] sm:$0xff]
        %v990 = vld [vmem:[%s3 + $0x10] sm:$0xff]
        %v991 = vld [vmem:[%s3 + $0x18] sm:$0xff]
        %v992 = vld [vmem:[%s3 + $0x20] sm:$0xff]
        %v993 = vld [vmem:[%s3 + $0x28] sm:$0xff]
        %v994 = vld [vmem:[%s3 + $0x30] sm:$0xff]
        %v995 = vld [vmem:[%s3 + $0x38] sm:$0xff]
        %v996 = vld [vmem:[%s3 + $0x40] sm:$0xff]
        %v997 = vld [vmem:[%s3 + $0x48] sm:$0xff]
        %v998 = vld [vmem:[%s3 + $0x50] sm:$0xff]
        %v999 = vld [vmem:[%s3 + $0x58] sm:$0xff]
        %v1000 = vld [vmem:[%s3 + $0x60] sm:$0xff]
        %v1001 = vld [vmem:[%s3 + $0x68] sm:$0xff]
        %v1002 = vld [vmem:[%s3 + $0x70] sm:$0xff]
        %v1003 = vld [vmem:[%s3 + $0x78] sm:$0xff]
        %v1004 = vld [vmem:[%s4] sm:$0x3]
        %v1006 = vlaneseq
        %v1007 = vshrl.u32 %v1006, 7
        %v1008 = vsub.s32 0, %v1007
        %v1009 = vrot.slane %v1004, %v1008
        %v1010 = vlaneseq
        %v1011 = vshrl.u32 %v1010, 7
        %v1012 = vsub.s32 1, %v1011
        %v1013 = vrot.slane %v1004, %v1012
        %v1032 = vunpack.c.l.b16 %v988
        %v1033 = vunpack.c.h.b16 %v988
        %v1034 = vunpack.c.l.b16 %v989
        %v1035 = vunpack.c.h.b16 %v989
        %v1036 = vunpack.c.l.b16 %v990
        %v1037 = vunpack.c.h.b16 %v990
        %v1038 = vunpack.c.l.b16 %v991
        %v1039 = vunpack.c.h.b16 %v991
        %v1040 = vunpack.c.l.b16 %v992
        %v1041 = vunpack.c.h.b16 %v992
        %v1042 = vunpack.c.l.b16 %v993
        %v1043 = vunpack.c.h.b16 %v993
        %v1044 = vunpack.c.l.b16 %v994
        %v1045 = vunpack.c.h.b16 %v994
        %v1046 = vunpack.c.l.b16 %v995
        %v1047 = vunpack.c.h.b16 %v995
        %v1048 = vunpack.c.l.b16 %v996
        %v1049 = vunpack.c.h.b16 %v996
        %v1050 = vunpack.c.l.b16 %v997
        %v1051 = vunpack.c.h.b16 %v997
        %v1052 = vunpack.c.l.b16 %v998
        %v1053 = vunpack.c.h.b16 %v998
        %v1054 = vunpack.c.l.b16 %v999
        %v1055 = vunpack.c.h.b16 %v999
        %v1056 = vunpack.c.l.b16 %v1000
        %v1057 = vunpack.c.h.b16 %v1000
        %v1058 = vunpack.c.l.b16 %v1001
        %v1059 = vunpack.c.h.b16 %v1001
        %v1060 = vunpack.c.l.b16 %v1002
        %v1061 = vunpack.c.h.b16 %v1002
        %v1062 = vunpack.c.l.b16 %v1003
        %v1063 = vunpack.c.h.b16 %v1003
        %v1064 = vpack.c.b16 %v1034, %v1032
        %v1065 = vpack.c.b16 %v1035, %v1033
        %v1066 = vpack.c.b16 %v1038, %v1036
        %v1067 = vpack.c.b16 %v1039, %v1037
        %v1068 = vpack.c.b16 %v1042, %v1040
        %v1069 = vpack.c.b16 %v1043, %v1041
        %v1070 = vpack.c.b16 %v1046, %v1044
        %v1071 = vpack.c.b16 %v1047, %v1045
        %v1072 = vpack.c.b16 %v1050, %v1048
        %v1073 = vpack.c.b16 %v1051, %v1049
        %v1074 = vpack.c.b16 %v1054, %v1052
        %v1075 = vpack.c.b16 %v1055, %v1053
        %v1076 = vpack.c.b16 %v1058, %v1056
        %v1077 = vpack.c.b16 %v1059, %v1057
        %v1078 = vpack.c.b16 %v1062, %v1060
        %v1079 = vpack.c.b16 %v1063, %v1061
        %1096 = vmatprep.subr.bf16.mxu0 %v1065
        %1097 = vmatpush1.bf16.msra.mxu0 %v1064
        %1098 = vmatprep.subr.bf16.mxu0 %v1067
        %1099 = vmatpush1.bf16.msra.mxu0 %v1066
        %1100 = vmatprep.subr.bf16.mxu0 %v1069
        %1101 = vmatpush1.bf16.msra.mxu0 %v1068
        %1102 = vmatprep.subr.bf16.mxu0 %v1071
        %1103 = vmatpush1.bf16.msra.mxu0 %v1070
        %1104 = vmatprep.subr.bf16.mxu0 %v1073
        %1105 = vmatpush1.bf16.msra.mxu0 %v1072
        %1106 = vmatprep.subr.bf16.mxu0 %v1075
        %1107 = vmatpush1.bf16.msra.mxu0 %v1074
        %1108 = vmatprep.subr.bf16.mxu0 %v1077
        %1109 = vmatpush1.bf16.msra.mxu0 %v1076
        %1110 = vmatprep.subr.bf16.mxu0 %v1079
        %1111 = vmatpush1.bf16.msra.mxu0 %v1078
        %1112 = vmatprep.subr.bf16.mxu0 0
        %1113 = vmatpush1.bf16.msra.mxu0 0
        %1114 = vmatprep.subr.bf16.mxu0 0
        %1115 = vmatpush1.bf16.msra.mxu0 0
        %1116 = vmatprep.subr.bf16.mxu0 0
        %1117 = vmatpush1.bf16.msra.mxu0 0
        %1118 = vmatprep.subr.bf16.mxu0 0
        %1119 = vmatpush1.bf16.msra.mxu0 0
        %1120 = vmatprep.subr.bf16.mxu0 0
        %1121 = vmatpush1.bf16.msra.mxu0 0
        %1122 = vmatprep.subr.bf16.mxu0 0
        %1123 = vmatpush1.bf16.msra.mxu0 0
        %1124 = vmatprep.subr.bf16.mxu0 0
        %1125 = vmatpush1.bf16.msra.mxu0 0
        %1126 = vmatprep.subr.bf16.mxu0 0
        %1127 = vmatpush1.bf16.msra.mxu0 0
        %1128 = vmatprep.mubr.bf16.mxu0 0
        %1129 = vmatmul.mubr.bf16.gmra.mrb[0].mxu0 %v987
        %v1130 = vpop.f32.mrb[0].mxu0
        %v1131 = vadd.f32 %v1009, %v1130
        %v1132 = vpop.f32.mrb[0].mxu0
        %v1133 = vadd.f32 %v1013, %v1132
        %v1134 = vpop.f32.mrb[0].mxu0
        %v1135 = vpop.f32.mrb[0].mxu0
        %1136 = vdwg.mxu0
        %v1139 = vcombine.low %v1131, %v1133
        %v1141 = vunpack.c.l.s4 1983009808
        %v1142 = vunpack.c.0.s8 %v1141
        %v1143 = vlaneseq
        %v1144 = vshrl.u32 %v1143, 7
        %v1145 = vsub.s32 %v1142, %v1144
        %v1146 = vrot.slane %v1139, %v1145
        %1148 = vst [vmem:[%s5] sm:$0xf] %v1146
      $region48: #{_lambda_.5} parent=39 // pred_fallthru
        _
      // Predicated region
      $region49: #{_lambda_.5} parent=39 // pred_check
        %p1149 = pneg %p144
      $region50: #{_lambda_.5} parent=39 // pred_check_branch
        %1151 = sbr.rel (%p1149) target = $region52
      $region51: #{_lambda_.5} parent=39 // pred_region
        _
      $region52: #{_lambda_.5} parent=39 // pred_fallthru
        _
      // Predicated region
      $region53: #{_lambda_.5} parent=39 // pred_check
        %p1152 = pneg %p144
      $region54: #{_lambda_.5} parent=39 // pred_check_branch
        %1154 = sbr.rel (%p1152) target = $region56
      $region55: #{_lambda_.5} parent=39 // pred_region
        _
      $region56: #{_lambda_.5} parent=39 // pred_fallthru
        _
    $region40: #{_lambda_.5} parent=5 // pred_fallthru
      _
    %p1155 = scmp.le.s32.totalorder 2, %s11
    // Predicated region
    $region57: #{_lambda_.5} parent=5 // pred_check
      %p1156 = pneg %p1155
    $region58: #{_lambda_.5} parent=5 // pred_check_branch
      %1158 = sbr.rel (%p1156) target = $region60
    $region59: #{_lambda_.5} parent=5 // pred_region
      %s1159 = ssub.s32 %s11, 2
    $region60: #{_lambda_.5} parent=5 // pred_fallthru
      _
  $region6: #{_lambda_.5} parent=0 // loop_footer
    %s15 = sadd.s32 1, %s11
  $region7: #{_lambda_.5} parent=0 // loop_footer_branch
    %10 = sbr.rel target = $region3
  $region8: #{_lambda_.5} parent=0 // loop_exit
    _

// kernel: _lambda_.4
$region0: #{_lambda_.4}
  #allocation0 [shape = 'u32[]', space=smem, size = 0x4, offset = 0x4, fixed_abs, tag = 'smem constant byte address 0x4 - core index']
  #allocation1 [shape = 'u32[144,128]{1,0:T(1,128)}', space=vmem, size = 0x12000, scoped, tag = 'internal scratch']
  %s0 = inlined_call_operand.vmem [shape: bf16[2,10,10,128], index: 0, kind: input, shape index: {}]
  %s1 = inlined_call_operand.vmem [shape: bf16[1152,128], index: 1, kind: input, shape index: {}]
  %s2 = inlined_call_operand.vmem [shape: f32[1,128], index: 2, kind: input, shape index: {}]
  %s3 = inlined_call_operand.vmem [shape: bf16[2,4,4,128], index: 3, kind: output, shape index: {}]
  %s4 = sld [smem:[#allocation0]]
  $region45: #{_lambda_.4} parent=0
    _
  %s6 = ssub.s32 1, %s4
  %s7 = scalar_select 0, %s6, %s4
  loop: start=0, step=1, limit=4
  $region2: #{_lambda_.4} parent=0 // loop_pre_header
    _
  $region3: #{_lambda_.4} parent=0 // loop_header
    %s9 = sphi 0, %s13
    %p10 = scmp.ge.s32.totalorder %s9, 4
    %s16 = sphi 0, %s28
    %s17 = sphi 0, %s24
    %s18 = sphi 0, %s16
    %s19 = sphi 0, %s17
    %s20 = sphi 0, %s18
    %s21 = sphi 0, %s19
    %s33 = sphi 0, %s35
    %s36 = sphi 0, %s33
    %s37 = sphi 0, %s36
    %s53 = sphi 0, %s37
    %s57 = sphi 0, %s57
    %s59 = sphi 0, %s57
    %s60 = sphi 0, %s59
    %s74 = sphi 0, %s60
    %s78 = sphi 0, %s78
    %s80 = sphi 0, %s78
    %s81 = sphi 0, %s80
    %s95 = sphi 0, %s81
    %s103 = sphi 0, %s105
    %s106 = sphi 0, %s103
    %s107 = sphi 0, %s106
    %s123 = sphi 0, %s107
  $region4: #{_lambda_.4} parent=0 // loop_header_branch
    %12 = sbr.rel (%p10) target = $region8
  $region5: #{_lambda_.4} parent=0 // loop_body
    %s14 = ssub.s32 %s9, 1
    %s15 = ssub.s32 %s9, 2
    %s22 = sadd.s32 1, %s17
    %p23 = scmp.ge.s32.totalorder %s22, 1
    %s24 = scalar_select %p23, 0, %s22
    %s25 = sadd.s32 1, %s16
    %s26 = scalar_select %p23, %s25, %s16
    %p27 = scmp.ge.s32.totalorder %s26, 2
    %s28 = scalar_select %p27, 0, %s26
    %s29 = sadd.s32 %s16, %s17
    %s30 = sadd.s32 %s28, %s24
    %s31 = ssub.s32 %s29, %s30
    %p32 = scmp.eq.s32.totalorder %s31, 0
    %s34 = sadd.s32 %s33, 1
    %s35 = scalar_select %p32, %s33, %s34
    %p38 = pneg %p32
    %p39 = scmp.eq.s32.totalorder %s9, 1
    %p40 = por %p38, %p39
    %p41 = scmp.ne.s32.totalorder %s33, %s36
    %p42 = scmp.eq.s32.totalorder %s9, 0
    %p43 = por %p41, %p42
    %p44 = scmp.ne.s32.totalorder %s33, %s36
    %p45 = scmp.eq.s32.totalorder %s14, 1
    %p46 = por %p44, %p45
    %p47 = scmp.ne.s32.totalorder %s36, %s37
    %p48 = scmp.eq.s32.totalorder %s14, 0
    %p49 = por %p47, %p48
    %p50 = scmp.ne.s32.totalorder %s36, %s37
    %p51 = scmp.eq.s32.totalorder %s15, 1
    %p52 = por %p50, %p51
    %p54 = scmp.ne.s32.totalorder %s37, %s53
    %p55 = scmp.eq.s32.totalorder %s15, 0
    %p56 = por %p54, %p55
    %s58 = sadd.s32 %s57, 1
    %p61 = scmp.eq.s32.totalorder %s9, 1
    %p62 = scmp.ne.s32.totalorder %s57, %s59
    %p63 = scmp.eq.s32.totalorder %s9, 0
    %p64 = por %p62, %p63
    %p65 = scmp.ne.s32.totalorder %s57, %s59
    %p66 = scmp.eq.s32.totalorder %s14, 1
    %p67 = por %p65, %p66
    %p68 = scmp.ne.s32.totalorder %s59, %s60
    %p69 = scmp.eq.s32.totalorder %s14, 0
    %p70 = por %p68, %p69
    %p71 = scmp.ne.s32.totalorder %s59, %s60
    %p72 = scmp.eq.s32.totalorder %s15, 1
    %p73 = por %p71, %p72
    %p75 = scmp.ne.s32.totalorder %s60, %s74
    %p76 = scmp.eq.s32.totalorder %s15, 0
    %p77 = por %p75, %p76
    %s79 = sadd.s32 %s78, 1
    %p82 = scmp.eq.s32.totalorder %s9, 1
    %p83 = scmp.ne.s32.totalorder %s78, %s80
    %p84 = scmp.eq.s32.totalorder %s9, 0
    %p85 = por %p83, %p84
    %p86 = scmp.ne.s32.totalorder %s78, %s80
    %p87 = scmp.eq.s32.totalorder %s14, 1
    %p88 = por %p86, %p87
    %p89 = scmp.ne.s32.totalorder %s80, %s81
    %p90 = scmp.eq.s32.totalorder %s14, 0
    %p91 = por %p89, %p90
    %p92 = scmp.ne.s32.totalorder %s80, %s81
    %p93 = scmp.eq.s32.totalorder %s15, 1
    %p94 = por %p92, %p93
    %p96 = scmp.ne.s32.totalorder %s81, %s95
    %p97 = scmp.eq.s32.totalorder %s15, 0
    %p98 = por %p96, %p97
    %s99 = ssub.s32 %s16, %s28
    %s100 = ssub.s32 %s17, %s24
    %s101 = sor.u32 %s99, %s100
    %p102 = scmp.eq.s32.totalorder %s101, 0
    %s104 = sadd.s32 %s103, 1
    %s105 = scalar_select %p102, %s103, %s104
    %p108 = pneg %p102
    %p109 = scmp.eq.s32.totalorder %s9, 1
    %p110 = por %p108, %p109
    %p111 = scmp.ne.s32.totalorder %s103, %s106
    %p112 = scmp.eq.s32.totalorder %s9, 0
    %p113 = por %p111, %p112
    %p114 = scmp.ne.s32.totalorder %s103, %s106
    %p115 = scmp.eq.s32.totalorder %s14, 1
    %p116 = por %p114, %p115
    %p117 = scmp.ne.s32.totalorder %s106, %s107
    %p118 = scmp.eq.s32.totalorder %s14, 0
    %p119 = por %p117, %p118
    %p120 = scmp.ne.s32.totalorder %s106, %s107
    %p121 = scmp.eq.s32.totalorder %s15, 1
    %p122 = por %p120, %p121
    %p124 = scmp.ne.s32.totalorder %s107, %s123
    %p125 = scmp.eq.s32.totalorder %s15, 0
    %p126 = por %p124, %p125
    %p127 = scmp.le.s32.totalorder 1, %s9
    %p128 = scmp.lt.s32.totalorder %s9, 3
    %p129 = pnand %p127, %p128
    %p130 = pneg %p129
    // Predicated region
    $region9: #{_lambda_.4} parent=5 // pred_check
      _
    $region10: #{_lambda_.4} parent=5 // pred_check_branch
      %132 = sbr.rel (%p129) target = $region12
    $region11: #{_lambda_.4} parent=5 // pred_region
      %s133 = ssub.s32 %s9, 1
      // Predicated region
      $region13: #{_lambda_.4} parent=11 // pred_check
        %p134 = pneg %p70
      $region14: #{_lambda_.4} parent=11 // pred_check_branch
        %136 = sbr.rel (%p134) target = $region16
      $region15: #{_lambda_.4} parent=11 // pred_region
        _
      $region16: #{_lambda_.4} parent=11 // pred_fallthru
        _
      // Predicated region
      $region17: #{_lambda_.4} parent=11 // pred_check
        %p137 = pneg %p91
      $region18: #{_lambda_.4} parent=11 // pred_check_branch
        %139 = sbr.rel (%p137) target = $region20
      $region19: #{_lambda_.4} parent=11 // pred_region
        _
      $region20: #{_lambda_.4} parent=11 // pred_fallthru
        _
    $region12: #{_lambda_.4} parent=5 // pred_fallthru
      _
    %p140 = scmp.lt.s32.totalorder %s9, 2
    // Predicated region
    $region21: #{_lambda_.4} parent=5 // pred_check
      %p141 = pneg %p140
    $region22: #{_lambda_.4} parent=5 // pred_check_branch
      %143 = sbr.rel (%p141) target = $region24
    $region23: #{_lambda_.4} parent=5 // pred_region
      // Predicated region
      $region25: #{_lambda_.4} parent=23 // pred_check
        %p144 = pneg %p43
      $region26: #{_lambda_.4} parent=23 // pred_check_branch
        %146 = sbr.rel (%p144) target = $region28
      $region27: #{_lambda_.4} parent=23 // pred_region
        %s147 = sadd.s32 %s16, %s17
        %p148 = scmp.lt.s32.totalorder %s147, 1
        %s149 = scalar_select %p148, %s147, 1
        %s150 = smul.addr %s149, 20
        %s151 = smul.addr %s150, 4
        %s152 = scalar_lea.vmem %s0, %s151
        %s153 = sadd.s32 %s16, %s17
      $region28: #{_lambda_.4} parent=23 // pred_fallthru
        _
    $region24: #{_lambda_.4} parent=5 // pred_fallthru
      _
    %p154 = scmp.le.s32.totalorder 1, %s9
    %p155 = scmp.lt.s32.totalorder %s9, 3
    %p156 = pnand %p154, %p155
    %p157 = pneg %p156
    // Predicated region
    $region29: #{_lambda_.4} parent=5 // pred_check
      _
    $region30: #{_lambda_.4} parent=5 // pred_check_branch
      %159 = sbr.rel (%p156) target = $region32
    $region31: #{_lambda_.4} parent=5 // pred_region
      %s160 = ssub.s32 %s9, 1
      %s161 = sadd.s32 %s18, %s19
      %p162 = scmp.lt.s32.totalorder %s161, 1
      %s163 = scalar_select %p162, %s161, 1
      %s164 = smul.addr %s163, 20
      %s165 = smul.addr %s164, 4
      %s166 = scalar_lea.vmem %s0, %s165
      %p167 = pneg %p49
      %p168 = pneg %p46
      %p169 = pneg %p70
      %p170 = pneg %p67
      %p171 = pneg %p91
      %p172 = pneg %p88
      %p173 = pneg %p119
      %p174 = pneg %p116
      %s175 = smul.u32 4, %s19
      %p176 = scmp.lt.s32.totalorder %s18, 1
      %s177 = scalar_select %p176, %s18, 1
      %p178 = scmp.lt.s32.totalorder %s175, 3
      %s179 = scalar_select %p178, %s175, 3
      %s180 = smul.addr %s177, 4
      %s181 = sadd.s32 %s179, %s180
      %s182 = smul.addr %s181, 2
      %s183 = scalar_lea.vmem %s3, %s182
      %s184 = sadd.s32 %s18, %s19
      %p185 = scmp.lt.s32.totalorder %s184, 1
      %s186 = scalar_select %p185, %s184, 1
      %s187 = smul.addr %s186, 20
      %s188 = smul.addr %s187, 4
      %s189 = scalar_lea.vmem %s0, %s188
      %s190 = sadd.s32 %s18, %s19
      %s191 = smul.u32 4, %s19
      %p192 = scmp.lt.s32.totalorder %s18, 1
      %s193 = scalar_select %p192, %s18, 1
      %p194 = scmp.lt.s32.totalorder %s191, 3
      %s195 = scalar_select %p194, %s191, 3
      %s196 = smul.addr %s193, 4
      %s197 = sadd.s32 %s195, %s196
      %s198 = smul.addr %s197, 2
      %s199 = scalar_lea.vmem %s3, %s198
      %s200 = smul.u32 4, %s19
      %v202 = vld [vmem:[%s189] sm:$0xf]
      %v203 = vld [vmem:[%s189 + $0x4] sm:$0x1]
      %v204 = vld [vmem:[%s189 + $0x8] sm:$0xf]
      %v205 = vld [vmem:[%s189 + $0xc] sm:$0x1]
      %v206 = vld [vmem:[%s189 + $0x10] sm:$0xf]
      %v207 = vld [vmem:[%s189 + $0x14] sm:$0x1]
      %v208 = vld [vmem:[%s189 + $0x18] sm:$0xf]
      %v209 = vld [vmem:[%s189 + $0x1c] sm:$0x1]
      %v210 = vld [vmem:[%s189 + $0x20] sm:$0xf]
      %v211 = vld [vmem:[%s189 + $0x24] sm:$0x1]
      %v212 = vld [vmem:[%s189 + $0x28] sm:$0xf]
      %v213 = vld [vmem:[%s189 + $0x2c] sm:$0x1]
      %v214 = vld [vmem:[%s189 + $0x30] sm:$0xf]
      %v215 = vld [vmem:[%s189 + $0x34] sm:$0x1]
      %v216 = vld [vmem:[%s189 + $0x38] sm:$0xf]
      %v217 = vld [vmem:[%s189 + $0x3c] sm:$0x1]
      %v218 = vld [vmem:[%s189 + $0x40] sm:$0xf]
      %v219 = vld [vmem:[%s189 + $0x44] sm:$0x1]
      %v220 = vld [vmem:[%s189 + $0x48] sm:$0xf]
      %v221 = vld [vmem:[%s189 + $0x4c] sm:$0x1]
      %v238 = vunpack.c.l.b16 %v202
      %v239 = vunpack.c.l.b16 %v203
      %v240 = vunpack.c.l.b16 %v204
      %v241 = vunpack.c.l.b16 %v205
      %v242 = vunpack.c.l.b16 %v206
      %v243 = vunpack.c.l.b16 %v207
      %v244 = vunpack.c.l.b16 %v208
      %v245 = vunpack.c.l.b16 %v209
      %v246 = vunpack.c.l.b16 %v210
      %v247 = vunpack.c.l.b16 %v211
      %v248 = vunpack.c.l.b16 %v212
      %v249 = vunpack.c.l.b16 %v213
      %v250 = vunpack.c.l.b16 %v214
      %v251 = vunpack.c.l.b16 %v215
      %v252 = vunpack.c.l.b16 %v216
      %v253 = vunpack.c.l.b16 %v217
      %v254 = vpack.c.b16 %v239, %v238
      %v255 = vpack.c.b16 %v241, %v240
      %v256 = vpack.c.b16 %v243, %v242
      %v257 = vpack.c.b16 %v245, %v244
      %v258 = vpack.c.b16 %v247, %v246
      %v259 = vpack.c.b16 %v249, %v248
      %v260 = vpack.c.b16 %v251, %v250
      %v261 = vpack.c.b16 %v253, %v252
      %v263 = vshrl.u32 %v254, 16
      %v265 = vshll.u32 %v254, 16
      %v267 = vrot.slane %v265, 1
      %v268 = vor.u32 %v263, %v267
      %v270 = vshrl.u32 %v255, 16
      %v272 = vshll.u32 %v255, 16
      %v274 = vrot.slane %v272, 1
      %v275 = vor.u32 %v270, %v274
      %v277 = vshrl.u32 %v256, 16
      %v279 = vshll.u32 %v256, 16
      %v281 = vrot.slane %v279, 1
      %v282 = vor.u32 %v277, %v281
      %v284 = vshrl.u32 %v257, 16
      %v286 = vshll.u32 %v257, 16
      %v288 = vrot.slane %v286, 1
      %v289 = vor.u32 %v284, %v288
      %v291 = vshrl.u32 %v258, 16
      %v293 = vshll.u32 %v258, 16
      %v295 = vrot.slane %v293, 1
      %v296 = vor.u32 %v291, %v295
      %v298 = vshrl.u32 %v259, 16
      %v300 = vshll.u32 %v259, 16
      %v302 = vrot.slane %v300, 1
      %v303 = vor.u32 %v298, %v302
      %v305 = vshrl.u32 %v260, 16
      %v307 = vshll.u32 %v260, 16
      %v309 = vrot.slane %v307, 1
      %v310 = vor.u32 %v305, %v309
      %v312 = vshrl.u32 %v261, 16
      %v314 = vshll.u32 %v261, 16
      %v316 = vrot.slane %v314, 1
      %v317 = vor.u32 %v312, %v316
      %v318 = vrot.slane %v254, 1
      %v319 = vrot.slane %v255, 1
      %v320 = vrot.slane %v256, 1
      %v321 = vrot.slane %v257, 1
      %v322 = vrot.slane %v258, 1
      %v323 = vrot.slane %v259, 1
      %v324 = vrot.slane %v260, 1
      %v325 = vrot.slane %v261, 1
      %v326 = vunpack.c.l.b16 %v268
      %v327 = vunpack.c.l.b16 %v318
      %v328 = vunpack.c.l.b16 %v275
      %v329 = vunpack.c.l.b16 %v319
      %v330 = vunpack.c.l.b16 %v282
      %v331 = vunpack.c.l.b16 %v320
      %v332 = vunpack.c.l.b16 %v289
      %v333 = vunpack.c.l.b16 %v321
      %v334 = vunpack.c.l.b16 %v296
      %v335 = vunpack.c.l.b16 %v322
      %v336 = vunpack.c.l.b16 %v303
      %v337 = vunpack.c.l.b16 %v323
      %v338 = vunpack.c.l.b16 %v310
      %v339 = vunpack.c.l.b16 %v324
      %v340 = vunpack.c.l.b16 %v317
      %v341 = vunpack.c.l.b16 %v325
      %v342 = vld [vmem:[%s1] sm:$0xf]
      %v343 = vld [vmem:[%s1 + $0x4] sm:$0xf]
      %v344 = vld [vmem:[%s1 + $0x8] sm:$0xf]
      %v345 = vld [vmem:[%s1 + $0xc] sm:$0xf]
      %v346 = vld [vmem:[%s1 + $0x10] sm:$0xf]
      %v347 = vld [vmem:[%s1 + $0x14] sm:$0xf]
      %v348 = vld [vmem:[%s1 + $0x18] sm:$0xf]
      %v349 = vld [vmem:[%s1 + $0x1c] sm:$0xf]
      %v350 = vld [vmem:[%s1 + $0x20] sm:$0xf]
      %v351 = vld [vmem:[%s1 + $0x24] sm:$0xf]
      %v352 = vld [vmem:[%s1 + $0x28] sm:$0xf]
      %v353 = vld [vmem:[%s1 + $0x2c] sm:$0xf]
      %v354 = vld [vmem:[%s1 + $0x30] sm:$0xf]
      %v355 = vld [vmem:[%s1 + $0x34] sm:$0xf]
      %v356 = vld [vmem:[%s1 + $0x38] sm:$0xf]
      %v357 = vld [vmem:[%s1 + $0x3c] sm:$0xf]
      %v358 = vld [vmem:[%s1 + $0x40] sm:$0xf]
      %v359 = vld [vmem:[%s1 + $0x44] sm:$0xf]
      %v360 = vld [vmem:[%s1 + $0x48] sm:$0xf]
      %v361 = vld [vmem:[%s1 + $0x4c] sm:$0xf]
      %v362 = vld [vmem:[%s1 + $0x50] sm:$0xf]
      %v363 = vld [vmem:[%s1 + $0x54] sm:$0xf]
      %v364 = vld [vmem:[%s1 + $0x58] sm:$0xf]
      %v365 = vld [vmem:[%s1 + $0x5c] sm:$0xf]
      %v366 = vld [vmem:[%s1 + $0x60] sm:$0xf]
      %v367 = vld [vmem:[%s1 + $0x64] sm:$0xf]
      %v368 = vld [vmem:[%s1 + $0x68] sm:$0xf]
      %v369 = vld [vmem:[%s1 + $0x6c] sm:$0xf]
      %v370 = vld [vmem:[%s1 + $0x70] sm:$0xf]
      %v371 = vld [vmem:[%s1 + $0x74] sm:$0xf]
      %v372 = vld [vmem:[%s1 + $0x78] sm:$0xf]
      %v373 = vld [vmem:[%s1 + $0x7c] sm:$0xf]
      %v374 = vld [vmem:[%s1 + $0x80] sm:$0xf]
      %v375 = vld [vmem:[%s1 + $0x84] sm:$0xf]
      %v376 = vld [vmem:[%s1 + $0x88] sm:$0xf]
      %v377 = vld [vmem:[%s1 + $0x8c] sm:$0xf]
      %v378 = vld [vmem:[%s1 + $0x90] sm:$0xf]
      %v379 = vld [vmem:[%s1 + $0x94] sm:$0xf]
      %v380 = vld [vmem:[%s1 + $0x98] sm:$0xf]
      %v381 = vld [vmem:[%s1 + $0x9c] sm:$0xf]
      %v382 = vld [vmem:[%s1 + $0xa0] sm:$0xf]
      %v383 = vld [vmem:[%s1 + $0xa4] sm:$0xf]
      %v384 = vld [vmem:[%s1 + $0xa8] sm:$0xf]
      %v385 = vld [vmem:[%s1 + $0xac] sm:$0xf]
      %v386 = vld [vmem:[%s1 + $0xb0] sm:$0xf]
      %v387 = vld [vmem:[%s1 + $0xb4] sm:$0xf]
      %v388 = vld [vmem:[%s1 + $0xb8] sm:$0xf]
      %v389 = vld [vmem:[%s1 + $0xbc] sm:$0xf]
      %v392 = vunpack.c.l.b16 %v218
      %v393 = vunpack.c.l.b16 %v219
      %v394 = vpack.c.b16 %v393, %v392
      %v396 = vshrl.u32 %v394, 16
      %v398 = vshll.u32 %v394, 16
      %v400 = vrot.slane %v398, 1
      %v401 = vor.u32 %v396, %v400
      %v402 = vrot.slane %v394, 1
      %v403 = vunpack.c.l.b16 %v401
      %v404 = vunpack.c.l.b16 %v402
      %v405 = vld [vmem:[%s1 + $0xc0] sm:$0xf]
      %v406 = vld [vmem:[%s1 + $0xc4] sm:$0xf]
      %v407 = vld [vmem:[%s1 + $0xc8] sm:$0xf]
      %v408 = vld [vmem:[%s1 + $0xcc] sm:$0xf]
      %v409 = vld [vmem:[%s1 + $0xd0] sm:$0xf]
      %v410 = vld [vmem:[%s1 + $0xd4] sm:$0xf]
      %v411 = vld [vmem:[%s1 + $0xd8] sm:$0xf]
      %v412 = vld [vmem:[%s1 + $0xdc] sm:$0xf]
      %v413 = vld [vmem:[%s1 + $0xe0] sm:$0xf]
      %v414 = vld [vmem:[%s1 + $0xe4] sm:$0xf]
      %v415 = vld [vmem:[%s1 + $0xe8] sm:$0xf]
      %v416 = vld [vmem:[%s1 + $0xec] sm:$0xf]
      %v417 = vld [vmem:[%s1 + $0xf0] sm:$0xf]
      %v418 = vld [vmem:[%s1 + $0xf4] sm:$0xf]
      %v419 = vld [vmem:[%s1 + $0xf8] sm:$0xf]
      %v420 = vld [vmem:[%s1 + $0xfc] sm:$0xf]
      %v421 = vld [vmem:[%s1 + $0x100] sm:$0xf]
      %v422 = vld [vmem:[%s1 + $0x104] sm:$0xf]
      %v423 = vld [vmem:[%s1 + $0x108] sm:$0xf]
      %v424 = vld [vmem:[%s1 + $0x10c] sm:$0xf]
      %v425 = vld [vmem:[%s1 + $0x110] sm:$0xf]
      %v426 = vld [vmem:[%s1 + $0x114] sm:$0xf]
      %v427 = vld [vmem:[%s1 + $0x118] sm:$0xf]
      %v428 = vld [vmem:[%s1 + $0x11c] sm:$0xf]
      %v429 = vld [vmem:[%s1 + $0x120] sm:$0xf]
      %v430 = vld [vmem:[%s1 + $0x124] sm:$0xf]
      %v431 = vld [vmem:[%s1 + $0x128] sm:$0xf]
      %v432 = vld [vmem:[%s1 + $0x12c] sm:$0xf]
      %v433 = vld [vmem:[%s1 + $0x130] sm:$0xf]
      %v434 = vld [vmem:[%s1 + $0x134] sm:$0xf]
      %v435 = vld [vmem:[%s1 + $0x138] sm:$0xf]
      %v436 = vld [vmem:[%s1 + $0x13c] sm:$0xf]
      %v437 = vld [vmem:[%s1 + $0x140] sm:$0xf]
      %v438 = vld [vmem:[%s1 + $0x144] sm:$0xf]
      %v439 = vld [vmem:[%s1 + $0x148] sm:$0xf]
      %v440 = vld [vmem:[%s1 + $0x14c] sm:$0xf]
      %v441 = vld [vmem:[%s1 + $0x150] sm:$0xf]
      %v442 = vld [vmem:[%s1 + $0x154] sm:$0xf]
      %v443 = vld [vmem:[%s1 + $0x158] sm:$0xf]
      %v444 = vld [vmem:[%s1 + $0x15c] sm:$0xf]
      %v445 = vld [vmem:[%s1 + $0x160] sm:$0xf]
      %v446 = vld [vmem:[%s1 + $0x164] sm:$0xf]
      %v447 = vld [vmem:[%s1 + $0x168] sm:$0xf]
      %v448 = vld [vmem:[%s1 + $0x16c] sm:$0xf]
      %v449 = vld [vmem:[%s1 + $0x170] sm:$0xf]
      %v450 = vld [vmem:[%s1 + $0x174] sm:$0xf]
      %v451 = vld [vmem:[%s1 + $0x178] sm:$0xf]
      %v452 = vld [vmem:[%s1 + $0x17c] sm:$0xf]
      %v453 = vpack.c.b16 %v242, %v240
      %v454 = vpack.c.b16 %v330, %v328
      %v455 = vpack.c.b16 %v331, %v329
      %v456 = vpack.c.b16 %v246, %v244
      %v457 = vpack.c.b16 %v334, %v332
      %v458 = vpack.c.b16 %v335, %v333
      %v459 = vpack.c.b16 %v250, %v248
      %v460 = vpack.c.b16 %v338, %v336
      %v461 = vpack.c.b16 %v339, %v337
      %v462 = vpack.c.b16 %v392, %v252
      %v463 = vpack.c.b16 %v403, %v340
      %v464 = vpack.c.b16 %v404, %v341
      %v525 = vunpack.c.l.b16 %v405
      %v526 = vunpack.c.l.b16 %v406
      %v527 = vunpack.c.l.b16 %v407
      %v528 = vunpack.c.l.b16 %v408
      %v529 = vunpack.c.l.b16 %v409
      %v530 = vunpack.c.l.b16 %v410
      %v531 = vunpack.c.l.b16 %v411
      %v532 = vunpack.c.l.b16 %v412
      %v533 = vunpack.c.l.b16 %v413
      %v534 = vunpack.c.l.b16 %v414
      %v535 = vunpack.c.l.b16 %v415
      %v536 = vunpack.c.l.b16 %v416
      %v537 = vunpack.c.l.b16 %v417
      %v538 = vunpack.c.l.b16 %v418
      %v539 = vunpack.c.l.b16 %v419
      %v540 = vunpack.c.l.b16 %v420
      %v541 = vunpack.c.l.b16 %v421
      %v542 = vunpack.c.l.b16 %v422
      %v543 = vunpack.c.l.b16 %v423
      %v544 = vunpack.c.l.b16 %v424
      %v545 = vunpack.c.l.b16 %v425
      %v546 = vunpack.c.l.b16 %v426
      %v547 = vunpack.c.l.b16 %v427
      %v548 = vunpack.c.l.b16 %v428
      %v549 = vunpack.c.l.b16 %v429
      %v550 = vunpack.c.l.b16 %v430
      %v551 = vunpack.c.l.b16 %v431
      %v552 = vunpack.c.l.b16 %v432
      %v553 = vunpack.c.l.b16 %v433
      %v554 = vunpack.c.l.b16 %v434
      %v555 = vunpack.c.l.b16 %v435
      %v556 = vunpack.c.l.b16 %v436
      %v557 = vunpack.c.l.b16 %v437
      %v558 = vunpack.c.l.b16 %v438
      %v559 = vunpack.c.l.b16 %v439
      %v560 = vunpack.c.l.b16 %v440
      %v561 = vunpack.c.l.b16 %v441
      %v562 = vunpack.c.l.b16 %v442
      %v563 = vunpack.c.l.b16 %v443
      %v564 = vunpack.c.l.b16 %v444
      %v565 = vunpack.c.l.b16 %v445
      %v566 = vunpack.c.l.b16 %v446
      %v567 = vunpack.c.l.b16 %v447
      %v568 = vunpack.c.l.b16 %v448
      %v569 = vunpack.c.l.b16 %v449
      %v570 = vunpack.c.l.b16 %v450
      %v571 = vunpack.c.l.b16 %v451
      %v572 = vunpack.c.l.b16 %v452
      %v573 = vpack.c.b16 %v526, %v525
      %v574 = vpack.c.b16 %v528, %v527
      %v575 = vpack.c.b16 %v530, %v529
      %v576 = vpack.c.b16 %v532, %v531
      %v577 = vpack.c.b16 %v534, %v533
      %v578 = vpack.c.b16 %v536, %v535
      %v579 = vpack.c.b16 %v538, %v537
      %v580 = vpack.c.b16 %v540, %v539
      %v581 = vpack.c.b16 %v542, %v541
      %v582 = vpack.c.b16 %v544, %v543
      %v583 = vpack.c.b16 %v546, %v545
      %v584 = vpack.c.b16 %v548, %v547
      %v585 = vpack.c.b16 %v550, %v549
      %v586 = vpack.c.b16 %v552, %v551
      %v587 = vpack.c.b16 %v554, %v553
      %v588 = vpack.c.b16 %v556, %v555
      %v589 = vpack.c.b16 %v558, %v557
      %v590 = vpack.c.b16 %v560, %v559
      %v591 = vpack.c.b16 %v562, %v561
      %v592 = vpack.c.b16 %v564, %v563
      %v593 = vpack.c.b16 %v566, %v565
      %v594 = vpack.c.b16 %v568, %v567
      %v595 = vpack.c.b16 %v570, %v569
      %v596 = vpack.c.b16 %v572, %v571
      %621 = vmatprep.subr.bf16.mxu0 0
      %622 = vmatpush1.bf16.msra.mxu0 %v573
      %623 = vmatprep.subr.bf16.mxu0 0
      %624 = vmatpush1.bf16.msra.mxu0 %v574
      %625 = vmatprep.subr.bf16.mxu0 0
      %626 = vmatpush1.bf16.msra.mxu0 %v575
      %627 = vmatprep.subr.bf16.mxu0 0
      %628 = vmatpush1.bf16.msra.mxu0 %v576
      %629 = vmatprep.subr.bf16.mxu0 0
      %630 = vmatpush1.bf16.msra.mxu0 %v577
      %631 = vmatprep.subr.bf16.mxu0 0
      %632 = vmatpush1.bf16.msra.mxu0 %v578
      %633 = vmatprep.subr.bf16.mxu0 0
      %634 = vmatpush1.bf16.msra.mxu0 %v579
      %635 = vmatprep.subr.bf16.mxu0 0
      %636 = vmatpush1.bf16.msra.mxu0 %v580
      %637 = vmatprep.subr.bf16.mxu0 0
      %638 = vmatpush1.bf16.msra.mxu0 %v581
      %639 = vmatprep.subr.bf16.mxu0 0
      %640 = vmatpush1.bf16.msra.mxu0 %v582
      %641 = vmatprep.subr.bf16.mxu0 0
      %642 = vmatpush1.bf16.msra.mxu0 %v583
      %643 = vmatprep.subr.bf16.mxu0 0
      %644 = vmatpush1.bf16.msra.mxu0 %v584
      %645 = vmatprep.subr.bf16.mxu0 0
      %646 = vmatpush1.bf16.msra.mxu0 %v585
      %647 = vmatprep.subr.bf16.mxu0 0
      %648 = vmatpush1.bf16.msra.mxu0 %v586
      %649 = vmatprep.subr.bf16.mxu0 0
      %650 = vmatpush1.bf16.msra.mxu0 %v587
      %651 = vmatprep.subr.bf16.mxu0 0
      %652 = vmatpush1.bf16.msra.mxu0 %v588
      %653 = vmatprep.mubr.bf16.mxu0 %v454
      %654 = vmatmul.mubr.bf16.gmra.mrb[0].mxu0 %v453
      %v655 = vpop.f32.mrb[0].mxu0
      %v656 = vadd.f32 0.0, %v655
      %v657 = vpop.f32.mrb[0].mxu0
      %v658 = vpop.f32.mrb[0].mxu0
      %v659 = vadd.f32 0.0, %v658
      %v660 = vpop.f32.mrb[0].mxu0
      %661 = vmatprep.mubr.bf16.mxu0 %v457
      %662 = vmatmul.mubr.bf16.gmra.mrb[0].mxu0 %v456
      %v663 = vpop.f32.mrb[0].mxu0
      %v664 = vadd.f32 0.0, %v663
      %v665 = vpop.f32.mrb[0].mxu0
      %v666 = vpop.f32.mrb[0].mxu0
      %v667 = vadd.f32 0.0, %v666
      %v668 = vpop.f32.mrb[0].mxu0
      %669 = vmatprep.mubr.bf16.mxu0 %v460
      %670 = vmatmul.mubr.bf16.gmra.mrb[0].mxu0 %v459
      %v671 = vpop.f32.mrb[0].mxu0
      %v672 = vadd.f32 0.0, %v671
      %v673 = vpop.f32.mrb[0].mxu0
      %v674 = vpop.f32.mrb[0].mxu0
      %v675 = vadd.f32 0.0, %v674
      %v676 = vpop.f32.mrb[0].mxu0
      %677 = vmatprep.mubr.bf16.mxu0 %v463
      %678 = vmatmul.mubr.bf16.gmra.mrb[0].mxu0 %v462
      %v679 = vpop.f32.mrb[0].mxu0
      %v680 = vadd.f32 0.0, %v679
      %v681 = vpop.f32.mrb[0].mxu0
      %v682 = vpop.f32.mrb[0].mxu0
      %v683 = vadd.f32 0.0, %v682
      %v684 = vpop.f32.mrb[0].mxu0
      %685 = vdwg.mxu0
      %686 = vmatprep.subr.bf16.mxu0 0
      %687 = vmatpush1.bf16.msra.mxu0 %v589
      %688 = vmatprep.subr.bf16.mxu0 0
      %689 = vmatpush1.bf16.msra.mxu0 %v590
      %690 = vmatprep.subr.bf16.mxu0 0
      %691 = vmatpush1.bf16.msra.mxu0 %v591
      %692 = vmatprep.subr.bf16.mxu0 0
      %693 = vmatpush1.bf16.msra.mxu0 %v592
      %694 = vmatprep.subr.bf16.mxu0 0
      %695 = vmatpush1.bf16.msra.mxu0 %v593
      %696 = vmatprep.subr.bf16.mxu0 0
      %697 = vmatpush1.bf16.msra.mxu0 %v594
      %698 = vmatprep.subr.bf16.mxu0 0
      %699 = vmatpush1.bf16.msra.mxu0 %v595
      %700 = vmatprep.subr.bf16.mxu0 0
      %701 = vmatpush1.bf16.msra.mxu0 %v596
      %702 = vmatprep.subr.bf16.mxu0 0
      %703 = vmatpush1.bf16.msra.mxu0 0
      %704 = vmatprep.subr.bf16.mxu0 0
      %705 = vmatpush1.bf16.msra.mxu0 0
      %706 = vmatprep.subr.bf16.mxu0 0
      %707 = vmatpush1.bf16.msra.mxu0 0
      %708 = vmatprep.subr.bf16.mxu0 0
      %709 = vmatpush1.bf16.msra.mxu0 0
      %710 = vmatprep.subr.bf16.mxu0 0
      %711 = vmatpush1.bf16.msra.mxu0 0
      %712 = vmatprep.subr.bf16.mxu0 0
      %713 = vmatpush1.bf16.msra.mxu0 0
      %714 = vmatprep.subr.bf16.mxu0 0
      %715 = vmatpush1.bf16.msra.mxu0 0
      %716 = vmatprep.subr.bf16.mxu0 0
      %717 = vmatpush1.bf16.msra.mxu0 0
      %718 = vmatprep.mubr.bf16.mxu0 0
      %719 = vmatmul.mubr.bf16.gmra.mrb[0].mxu0 %v455
      %v720 = vpop.f32.mrb[0].mxu0
      %v721 = vadd.f32 %v656, %v720
      %v722 = vpop.f32.mrb[0].mxu0
      %v723 = vpop.f32.mrb[0].mxu0
      %v724 = vadd.f32 %v659, %v723
      %v725 = vpop.f32.mrb[0].mxu0
      %726 = vmatprep.mubr.bf16.mxu0 0
      %727 = vmatmul.mubr.bf16.gmra.mrb[0].mxu0 %v458
      %v728 = vpop.f32.mrb[0].mxu0
      %v729 = vadd.f32 %v664, %v728
      %v730 = vpop.f32.mrb[0].mxu0
      %v731 = vpop.f32.mrb[0].mxu0
      %v732 = vadd.f32 %v667, %v731
      %v733 = vpop.f32.mrb[0].mxu0
      %734 = vmatprep.mubr.bf16.mxu0 0
      %735 = vmatmul.mubr.bf16.gmra.mrb[0].mxu0 %v461
      %v736 = vpop.f32.mrb[0].mxu0
      %v737 = vadd.f32 %v672, %v736
      %v738 = vpop.f32.mrb[0].mxu0
      %v739 = vpop.f32.mrb[0].mxu0
      %v740 = vadd.f32 %v675, %v739
      %v741 = vpop.f32.mrb[0].mxu0
      %742 = vmatprep.mubr.bf16.mxu0 0
      %743 = vmatmul.mubr.bf16.gmra.mrb[0].mxu0 %v464
      %v744 = vpop.f32.mrb[0].mxu0
      %v745 = vadd.f32 %v680, %v744
      %v746 = vpop.f32.mrb[0].mxu0
      %v747 = vpop.f32.mrb[0].mxu0
      %v748 = vadd.f32 %v683, %v747
      %v749 = vpop.f32.mrb[0].mxu0
      %750 = vdwg.mxu0
      %v751 = vpack.c.b16 %v240, %v238
      %v752 = vpack.c.b16 %v328, %v326
      %v753 = vpack.c.b16 %v329, %v327
      %v754 = vpack.c.b16 %v244, %v242
      %v755 = vpack.c.b16 %v332, %v330
      %v756 = vpack.c.b16 %v333, %v331
      %v757 = vpack.c.b16 %v248, %v246
      %v758 = vpack.c.b16 %v336, %v334
      %v759 = vpack.c.b16 %v337, %v335
      %v760 = vpack.c.b16 %v252, %v250
      %v761 = vpack.c.b16 %v340, %v338
      %v762 = vpack.c.b16 %v341, %v339
      %v823 = vunpack.c.l.b16 %v342
      %v824 = vunpack.c.l.b16 %v343
      %v825 = vunpack.c.l.b16 %v344
      %v826 = vunpack.c.l.b16 %v345
      %v827 = vunpack.c.l.b16 %v346
      %v828 = vunpack.c.l.b16 %v347
      %v829 = vunpack.c.l.b16 %v348
      %v830 = vunpack.c.l.b16 %v349
      %v831 = vunpack.c.l.b16 %v350
      %v832 = vunpack.c.l.b16 %v351
      %v833 = vunpack.c.l.b16 %v352
      %v834 = vunpack.c.l.b16 %v353
      %v835 = vunpack.c.l.b16 %v354
      %v836 = vunpack.c.l.b16 %v355
      %v837 = vunpack.c.l.b16 %v356
      %v838 = vunpack.c.l.b16 %v357
      %v839 = vunpack.c.l.b16 %v358
      %v840 = vunpack.c.l.b16 %v359
      %v841 = vunpack.c.l.b16 %v360
      %v842 = vunpack.c.l.b16 %v361
      %v843 = vunpack.c.l.b16 %v362
      %v844 = vunpack.c.l.b16 %v363
      %v845 = vunpack.c.l.b16 %v364
      %v846 = vunpack.c.l.b16 %v365
      %v847 = vunpack.c.l.b16 %v366
      %v848 = vunpack.c.l.b16 %v367
      %v849 = vunpack.c.l.b16 %v368
      %v850 = vunpack.c.l.b16 %v369
      %v851 = vunpack.c.l.b16 %v370
      %v852 = vunpack.c.l.b16 %v371
      %v853 = vunpack.c.l.b16 %v372
      %v854 = vunpack.c.l.b16 %v373
      %v855 = vunpack.c.l.b16 %v374
      %v856 = vunpack.c.l.b16 %v375
      %v857 = vunpack.c.l.b16 %v376
      %v858 = vunpack.c.l.b16 %v377
      %v859 = vunpack.c.l.b16 %v378
      %v860 = vunpack.c.l.b16 %v379
      %v861 = vunpack.c.l.b16 %v380
      %v862 = vunpack.c.l.b16 %v381
      %v863 = vunpack.c.l.b16 %v382
      %v864 = vunpack.c.l.b16 %v383
      %v865 = vunpack.c.l.b16 %v384
      %v866 = vunpack.c.l.b16 %v385
      %v867 = vunpack.c.l.b16 %v386
      %v868 = vunpack.c.l.b16 %v387
      %v869 = vunpack.c.l.b16 %v388
      %v870 = vunpack.c.l.b16 %v389
      %v871 = vpack.c.b16 %v824, %v823
      %v872 = vpack.c.b16 %v826, %v825
      %v873 = vpack.c.b16 %v828, %v827
      %v874 = vpack.c.b16 %v830, %v829
      %v875 = vpack.c.b16 %v832, %v831
      %v876 = vpack.c.b16 %v834, %v833
      %v877 = vpack.c.b16 %v836, %v835
      %v878 = vpack.c.b16 %v838, %v837
      %v879 = vpack.c.b16 %v840, %v839
      %v880 = vpack.c.b16 %v842, %v841
      %v881 = vpack.c.b16 %v844, %v843
      %v882 = vpack.c.b16 %v846, %v845
      %v883 = vpack.c.b16 %v848, %v847
      %v884 = vpack.c.b16 %v850, %v849
      %v885 = vpack.c.b16 %v852, %v851
      %v886 = vpack.c.b16 %v854, %v853
      %v887 = vpack.c.b16 %v856, %v855
      %v888 = vpack.c.b16 %v858, %v857
      %v889 = vpack.c.b16 %v860, %v859
      %v890 = vpack.c.b16 %v862, %v861
      %v891 = vpack.c.b16 %v864, %v863
      %v892 = vpack.c.b16 %v866, %v865
      %v893 = vpack.c.b16 %v868, %v867
      %v894 = vpack.c.b16 %v870, %v869
      %919 = vmatprep.subr.bf16.mxu0 0
      %920 = vmatpush1.bf16.msra.mxu0 %v871
      %921 = vmatprep.subr.bf16.mxu0 0
      %922 = vmatpush1.bf16.msra.mxu0 %v872
      %923 = vmatprep.subr.bf16.mxu0 0
      %924 = vmatpush1.bf16.msra.mxu0 %v873
      %925 = vmatprep.subr.bf16.mxu0 0
      %926 = vmatpush1.bf16.msra.mxu0 %v874
      %927 = vmatprep.subr.bf16.mxu0 0
      %928 = vmatpush1.bf16.msra.mxu0 %v875
      %929 = vmatprep.subr.bf16.mxu0 0
      %930 = vmatpush1.bf16.msra.mxu0 %v876
      %931 = vmatprep.subr.bf16.mxu0 0
      %932 = vmatpush1.bf16.msra.mxu0 %v877
      %933 = vmatprep.subr.bf16.mxu0 0
      %934 = vmatpush1.bf16.msra.mxu0 %v878
      %935 = vmatprep.subr.bf16.mxu0 0
      %936 = vmatpush1.bf16.msra.mxu0 %v879
      %937 = vmatprep.subr.bf16.mxu0 0
      %938 = vmatpush1.bf16.msra.mxu0 %v880
      %939 = vmatprep.subr.bf16.mxu0 0
      %940 = vmatpush1.bf16.msra.mxu0 %v881
      %941 = vmatprep.subr.bf16.mxu0 0
      %942 = vmatpush1.bf16.msra.mxu0 %v882
      %943 = vmatprep.subr.bf16.mxu0 0
      %944 = vmatpush1.bf16.msra.mxu0 %v883
      %945 = vmatprep.subr.bf16.mxu0 0
      %946 = vmatpush1.bf16.msra.mxu0 %v884
      %947 = vmatprep.subr.bf16.mxu0 0
      %948 = vmatpush1.bf16.msra.mxu0 %v885
      %949 = vmatprep.subr.bf16.mxu0 0
      %950 = vmatpush1.bf16.msra.mxu0 %v886
      %951 = vmatprep.mubr.bf16.mxu0 %v752
      %952 = vmatmul.mubr.bf16.gmra.mrb[0].mxu0 %v751
      %v953 = vpop.f32.mrb[0].mxu0
      %v954 = vadd.f32 %v721, %v953
      %v955 = vpop.f32.mrb[0].mxu0
      %v956 = vpop.f32.mrb[0].mxu0
      %v957 = vadd.f32 %v724, %v956
      %v958 = vpop.f32.mrb[0].mxu0
      %959 = vmatprep.mubr.bf16.mxu0 %v755
      %960 = vmatmul.mubr.bf16.gmra.mrb[0].mxu0 %v754
      %v961 = vpop.f32.mrb[0].mxu0
      %v962 = vadd.f32 %v729, %v961
      %v963 = vpop.f32.mrb[0].mxu0
      %v964 = vpop.f32.mrb[0].mxu0
      %v965 = vadd.f32 %v732, %v964
      %v966 = vpop.f32.mrb[0].mxu0
      %967 = vmatprep.mubr.bf16.mxu0 %v758
      %968 = vmatmul.mubr.bf16.gmra.mrb[0].mxu0 %v757
      %v969 = vpop.f32.mrb[0].mxu0
      %v970 = vadd.f32 %v737, %v969
      %v971 = vpop.f32.mrb[0].mxu0
      %v972 = vpop.f32.mrb[0].mxu0
      %v973 = vadd.f32 %v740, %v972
      %v974 = vpop.f32.mrb[0].mxu0
      %975 = vmatprep.mubr.bf16.mxu0 %v761
      %976 = vmatmul.mubr.bf16.gmra.mrb[0].mxu0 %v760
      %v977 = vpop.f32.mrb[0].mxu0
      %v978 = vadd.f32 %v745, %v977
      %v979 = vpop.f32.mrb[0].mxu0
      %v980 = vpop.f32.mrb[0].mxu0
      %v981 = vadd.f32 %v748, %v980
      %v982 = vpop.f32.mrb[0].mxu0
      %983 = vdwg.mxu0
      %984 = vmatprep.subr.bf16.mxu0 0
      %985 = vmatpush1.bf16.msra.mxu0 %v887
      %986 = vmatprep.subr.bf16.mxu0 0
      %987 = vmatpush1.bf16.msra.mxu0 %v888
      %988 = vmatprep.subr.bf16.mxu0 0
      %989 = vmatpush1.bf16.msra.mxu0 %v889
      %990 = vmatprep.subr.bf16.mxu0 0
      %991 = vmatpush1.bf16.msra.mxu0 %v890
      %992 = vmatprep.subr.bf16.mxu0 0
      %993 = vmatpush1.bf16.msra.mxu0 %v891
      %994 = vmatprep.subr.bf16.mxu0 0
      %995 = vmatpush1.bf16.msra.mxu0 %v892
      %996 = vmatprep.subr.bf16.mxu0 0
      %997 = vmatpush1.bf16.msra.mxu0 %v893
      %998 = vmatprep.subr.bf16.mxu0 0
      %999 = vmatpush1.bf16.msra.mxu0 %v894
      %1000 = vmatprep.subr.bf16.mxu0 0
      %1001 = vmatpush1.bf16.msra.mxu0 0
      %1002 = vmatprep.subr.bf16.mxu0 0
      %1003 = vmatpush1.bf16.msra.mxu0 0
      %1004 = vmatprep.subr.bf16.mxu0 0
      %1005 = vmatpush1.bf16.msra.mxu0 0
      %1006 = vmatprep.subr.bf16.mxu0 0
      %1007 = vmatpush1.bf16.msra.mxu0 0
      %1008 = vmatprep.subr.bf16.mxu0 0
      %1009 = vmatpush1.bf16.msra.mxu0 0
      %1010 = vmatprep.subr.bf16.mxu0 0
      %1011 = vmatpush1.bf16.msra.mxu0 0
      %1012 = vmatprep.subr.bf16.mxu0 0
      %1013 = vmatpush1.bf16.msra.mxu0 0
      %1014 = vmatprep.subr.bf16.mxu0 0
      %1015 = vmatpush1.bf16.msra.mxu0 0
      %1016 = vmatprep.mubr.bf16.mxu0 0
      %1017 = vmatmul.mubr.bf16.gmra.mrb[0].mxu0 %v753
      %v1018 = vpop.f32.mrb[0].mxu0
      %v1019 = vadd.f32 %v954, %v1018
      %v1020 = vpop.f32.mrb[0].mxu0
      %v1021 = vpop.f32.mrb[0].mxu0
      %v1022 = vadd.f32 %v957, %v1021
      %v1023 = vpop.f32.mrb[0].mxu0
      %1024 = vmatprep.mubr.bf16.mxu0 0
      %1025 = vmatmul.mubr.bf16.gmra.mrb[0].mxu0 %v756
      %v1026 = vpop.f32.mrb[0].mxu0
      %v1027 = vadd.f32 %v962, %v1026
      %v1028 = vpop.f32.mrb[0].mxu0
      %v1029 = vpop.f32.mrb[0].mxu0
      %v1030 = vadd.f32 %v965, %v1029
      %v1031 = vpop.f32.mrb[0].mxu0
      %1032 = vmatprep.mubr.bf16.mxu0 0
      %1033 = vmatmul.mubr.bf16.gmra.mrb[0].mxu0 %v759
      %v1034 = vpop.f32.mrb[0].mxu0
      %v1035 = vadd.f32 %v970, %v1034
      %v1036 = vpop.f32.mrb[0].mxu0
      %v1037 = vpop.f32.mrb[0].mxu0
      %v1038 = vadd.f32 %v973, %v1037
      %v1039 = vpop.f32.mrb[0].mxu0
      %1040 = vmatprep.mubr.bf16.mxu0 0
      %1041 = vmatmul.mubr.bf16.gmra.mrb[0].mxu0 %v762
      %v1042 = vpop.f32.mrb[0].mxu0
      %v1043 = vadd.f32 %v978, %v1042
      %v1044 = vpop.f32.mrb[0].mxu0
      %v1045 = vpop.f32.mrb[0].mxu0
      %v1046 = vadd.f32 %v981, %v1045
      %v1047 = vpop.f32.mrb[0].mxu0
      %1048 = vdwg.mxu0
      %v1051 = vunpack.c.l.b16 %v220
      %v1052 = vunpack.c.l.b16 %v221
      %v1053 = vpack.c.b16 %v1052, %v1051
      %v1055 = vshrl.u32 %v1053, 16
      %v1057 = vshll.u32 %v1053, 16
      %v1059 = vrot.slane %v1057, 1
      %v1060 = vor.u32 %v1055, %v1059
      %v1061 = vrot.slane %v1053, 1
      %v1062 = vunpack.c.l.b16 %v1060
      %v1063 = vunpack.c.l.b16 %v1061
      %v1064 = vld [vmem:[%s1 + $0x180] sm:$0xf]
      %v1065 = vld [vmem:[%s1 + $0x184] sm:$0xf]
      %v1066 = vld [vmem:[%s1 + $0x188] sm:$0xf]
      %v1067 = vld [vmem:[%s1 + $0x18c] sm:$0xf]
      %v1068 = vld [vmem:[%s1 + $0x190] sm:$0xf]
      %v1069 = vld [vmem:[%s1 + $0x194] sm:$0xf]
      %v1070 = vld [vmem:[%s1 + $0x198] sm:$0xf]
      %v1071 = vld [vmem:[%s1 + $0x19c] sm:$0xf]
      %v1072 = vld [vmem:[%s1 + $0x1a0] sm:$0xf]
      %v1073 = vld [vmem:[%s1 + $0x1a4] sm:$0xf]
      %v1074 = vld [vmem:[%s1 + $0x1a8] sm:$0xf]
      %v1075 = vld [vmem:[%s1 + $0x1ac] sm:$0xf]
      %v1076 = vld [vmem:[%s1 + $0x1b0] sm:$0xf]
      %v1077 = vld [vmem:[%s1 + $0x1b4] sm:$0xf]
      %v1078 = vld [vmem:[%s1 + $0x1b8] sm:$0xf]
      %v1079 = vld [vmem:[%s1 + $0x1bc] sm:$0xf]
      %v1080 = vld [vmem:[%s1 + $0x1c0] sm:$0xf]
      %v1081 = vld [vmem:[%s1 + $0x1c4] sm:$0xf]
      %v1082 = vld [vmem:[%s1 + $0x1c8] sm:$0xf]
      %v1083 = vld [vmem:[%s1 + $0x1cc] sm:$0xf]
      %v1084 = vld [vmem:[%s1 + $0x1d0] sm:$0xf]
      %v1085 = vld [vmem:[%s1 + $0x1d4] sm:$0xf]
      %v1086 = vld [vmem:[%s1 + $0x1d8] sm:$0xf]
      %v1087 = vld [vmem:[%s1 + $0x1dc] sm:$0xf]
      %v1088 = vld [vmem:[%s1 + $0x1e0] sm:$0xf]
      %v1089 = vld [vmem:[%s1 + $0x1e4] sm:$0xf]
      %v1090 = vld [vmem:[%s1 + $0x1e8] sm:$0xf]
      %v1091 = vld [vmem:[%s1 + $0x1ec] sm:$0xf]
      %v1092 = vld [vmem:[%s1 + $0x1f0] sm:$0xf]
      %v1093 = vld [vmem:[%s1 + $0x1f4] sm:$0xf]
      %v1094 = vld [vmem:[%s1 + $0x1f8] sm:$0xf]
      %v1095 = vld [vmem:[%s1 + $0x1fc] sm:$0xf]
      %v1096 = vld [vmem:[%s1 + $0x200] sm:$0xf]
      %v1097 = vld [vmem:[%s1 + $0x204] sm:$0xf]
      %v1098 = vld [vmem:[%s1 + $0x208] sm:$0xf]
      %v1099 = vld [vmem:[%s1 + $0x20c] sm:$0xf]
      %v1100 = vld [vmem:[%s1 + $0x210] sm:$0xf]
      %v1101 = vld [vmem:[%s1 + $0x214] sm:$0xf]
      %v1102 = vld [vmem:[%s1 + $0x218] sm:$0xf]
      %v1103 = vld [vmem:[%s1 + $0x21c] sm:$0xf]
      %v1104 = vld [vmem:[%s1 + $0x220] sm:$0xf]
      %v1105 = vld [vmem:[%s1 + $0x224] sm:$0xf]
      %v1106 = vld [vmem:[%s1 + $0x228] sm:$0xf]
      %v1107 = vld [vmem:[%s1 + $0x22c] sm:$0xf]
      %v1108 = vld [vmem:[%s1 + $0x230] sm:$0xf]
      %v1109 = vld [vmem:[%s1 + $0x234] sm:$0xf]
      %v1110 = vld [vmem:[%s1 + $0x238] sm:$0xf]
      %v1111 = vld [vmem:[%s1 + $0x23c] sm:$0xf]
      %v1112 = vpack.c.b16 %v1051, %v392
      %v1113 = vpack.c.b16 %v1062, %v403
      %v1114 = vpack.c.b16 %v1063, %v404
      %v1166 = vunpack.c.l.b16 %v1064
      %v1167 = vunpack.c.l.b16 %v1065
      %v1168 = vunpack.c.l.b16 %v1066
      %v1169 = vunpack.c.l.b16 %v1067
      %v1170 = vunpack.c.l.b16 %v1068
      %v1171 = vunpack.c.l.b16 %v1069
      %v1172 = vunpack.c.l.b16 %v1070
      %v1173 = vunpack.c.l.b16 %v1071
      %v1174 = vunpack.c.l.b16 %v1072
      %v1175 = vunpack.c.l.b16 %v1073
      %v1176 = vunpack.c.l.b16 %v1074
      %v1177 = vunpack.c.l.b16 %v1075
      %v1178 = vunpack.c.l.b16 %v1076
      %v1179 = vunpack.c.l.b16 %v1077
      %v1180 = vunpack.c.l.b16 %v1078
      %v1181 = vunpack.c.l.b16 %v1079
      %v1182 = vunpack.c.l.b16 %v1080
      %v1183 = vunpack.c.l.b16 %v1081
      %v1184 = vunpack.c.l.b16 %v1082
      %v1185 = vunpack.c.l.b16 %v1083
      %v1186 = vunpack.c.l.b16 %v1084
      %v1187 = vunpack.c.l.b16 %v1085
      %v1188 = vunpack.c.l.b16 %v1086
      %v1189 = vunpack.c.l.b16 %v1087
      %v1190 = vunpack.c.l.b16 %v1088
      %v1191 = vunpack.c.l.b16 %v1089
      %v1192 = vunpack.c.l.b16 %v1090
      %v1193 = vunpack.c.l.b16 %v1091
      %v1194 = vunpack.c.l.b16 %v1092
      %v1195 = vunpack.c.l.b16 %v1093
      %v1196 = vunpack.c.l.b16 %v1094
      %v1197 = vunpack.c.l.b16 %v1095
      %v1198 = vunpack.c.l.b16 %v1096
      %v1199 = vunpack.c.l.b16 %v1097
      %v1200 = vunpack.c.l.b16 %v1098
      %v1201 = vunpack.c.l.b16 %v1099
      %v1202 = vunpack.c.l.b16 %v1100
      %v1203 = vunpack.c.l.b16 %v1101
      %v1204 = vunpack.c.l.b16 %v1102
      %v1205 = vunpack.c.l.b16 %v1103
      %v1206 = vunpack.c.l.b16 %v1104
      %v1207 = vunpack.c.l.b16 %v1105
      %v1208 = vunpack.c.l.b16 %v1106
      %v1209 = vunpack.c.l.b16 %v1107
      %v1210 = vunpack.c.l.b16 %v1108
      %v1211 = vunpack.c.l.b16 %v1109
      %v1212 = vunpack.c.l.b16 %v1110
      %v1213 = vunpack.c.l.b16 %v1111
      %v1214 = vpack.c.b16 %v1167, %v1166
      %v1215 = vpack.c.b16 %v1169, %v1168
      %v1216 = vpack.c.b16 %v1171, %v1170
      %v1217 = vpack.c.b16 %v1173, %v1172
      %v1218 = vpack.c.b16 %v1175, %v1174
      %v1219 = vpack.c.b16 %v1177, %v1176
      %v1220 = vpack.c.b16 %v1179, %v1178
      %v1221 = vpack.c.b16 %v1181, %v1180
      %v1222 = vpack.c.b16 %v1183, %v1182
      %v1223 = vpack.c.b16 %v1185, %v1184
      %v1224 = vpack.c.b16 %v1187, %v1186
      %v1225 = vpack.c.b16 %v1189, %v1188
      %v1226 = vpack.c.b16 %v1191, %v1190
      %v1227 = vpack.c.b16 %v1193, %v1192
      %v1228 = vpack.c.b16 %v1195, %v1194
      %v1229 = vpack.c.b16 %v1197, %v1196
      %v1230 = vpack.c.b16 %v1199, %v1198
      %v1231 = vpack.c.b16 %v1201, %v1200
      %v1232 = vpack.c.b16 %v1203, %v1202
      %v1233 = vpack.c.b16 %v1205, %v1204
      %v1234 = vpack.c.b16 %v1207, %v1206
      %v1235 = vpack.c.b16 %v1209, %v1208
      %v1236 = vpack.c.b16 %v1211, %v1210
      %v1237 = vpack.c.b16 %v1213, %v1212
      %1262 = vmatprep.subr.bf16.mxu0 0
      %1263 = vmatpush1.bf16.msra.mxu0 %v1214
      %1264 = vmatprep.subr.bf16.mxu0 0
      %1265 = vmatpush1.bf16.msra.mxu0 %v1215
      %1266 = vmatprep.subr.bf16.mxu0 0
      %1267 = vmatpush1.bf16.msra.mxu0 %v1216
      %1268 = vmatprep.subr.bf16.mxu0 0
      %1269 = vmatpush1.bf16.msra.mxu0 %v1217
      %1270 = vmatprep.subr.bf16.mxu0 0
      %1271 = vmatpush1.bf16.msra.mxu0 %v1218
      %1272 = vmatprep.subr.bf16.mxu0 0
      %1273 = vmatpush1.bf16.msra.mxu0 %v1219
      %1274 = vmatprep.subr.bf16.mxu0 0
      %1275 = vmatpush1.bf16.msra.mxu0 %v1220
      %1276 = vmatprep.subr.bf16.mxu0 0
      %1277 = vmatpush1.bf16.msra.mxu0 %v1221
      %1278 = vmatprep.subr.bf16.mxu0 0
      %1279 = vmatpush1.bf16.msra.mxu0 %v1222
      %1280 = vmatprep.subr.bf16.mxu0 0
      %1281 = vmatpush1.bf16.msra.mxu0 %v1223
      %1282 = vmatprep.subr.bf16.mxu0 0
      %1283 = vmatpush1.bf16.msra.mxu0 %v1224
      %1284 = vmatprep.subr.bf16.mxu0 0
      %1285 = vmatpush1.bf16.msra.mxu0 %v1225
      %1286 = vmatprep.subr.bf16.mxu0 0
      %1287 = vmatpush1.bf16.msra.mxu0 %v1226
      %1288 = vmatprep.subr.bf16.mxu0 0
      %1289 = vmatpush1.bf16.msra.mxu0 %v1227
      %1290 = vmatprep.subr.bf16.mxu0 0
      %1291 = vmatpush1.bf16.msra.mxu0 %v1228
      %1292 = vmatprep.subr.bf16.mxu0 0
      %1293 = vmatpush1.bf16.msra.mxu0 %v1229
      %1294 = vmatprep.mubr.bf16.mxu0 %v755
      %1295 = vmatmul.mubr.bf16.gmra.mrb[0].mxu0 %v754
      %v1296 = vpop.f32.mrb[0].mxu0
      %v1297 = vadd.f32 0.0, %v1296
      %v1298 = vpop.f32.mrb[0].mxu0
      %v1299 = vpop.f32.mrb[0].mxu0
      %v1300 = vadd.f32 0.0, %v1299
      %v1301 = vpop.f32.mrb[0].mxu0
      %1302 = vmatprep.mubr.bf16.mxu0 %v758
      %1303 = vmatmul.mubr.bf16.gmra.mrb[0].mxu0 %v757
      %v1304 = vpop.f32.mrb[0].mxu0
      %v1305 = vadd.f32 0.0, %v1304
      %v1306 = vpop.f32.mrb[0].mxu0
      %v1307 = vpop.f32.mrb[0].mxu0
      %v1308 = vadd.f32 0.0, %v1307
      %v1309 = vpop.f32.mrb[0].mxu0
      %1310 = vmatprep.mubr.bf16.mxu0 %v761
      %1311 = vmatmul.mubr.bf16.gmra.mrb[0].mxu0 %v760
      %v1312 = vpop.f32.mrb[0].mxu0
      %v1313 = vadd.f32 0.0, %v1312
      %v1314 = vpop.f32.mrb[0].mxu0
      %v1315 = vpop.f32.mrb[0].mxu0
      %v1316 = vadd.f32 0.0, %v1315
      %v1317 = vpop.f32.mrb[0].mxu0
      %1318 = vmatprep.mubr.bf16.mxu0 %v1113
      %1319 = vmatmul.mubr.bf16.gmra.mrb[0].mxu0 %v1112
      %v1320 = vpop.f32.mrb[0].mxu0
      %v1321 = vadd.f32 0.0, %v1320
      %v1322 = vpop.f32.mrb[0].mxu0
      %v1323 = vpop.f32.mrb[0].mxu0
      %v1324 = vadd.f32 0.0, %v1323
      %v1325 = vpop.f32.mrb[0].mxu0
      %1326 = vdwg.mxu0
      %1327 = vmatprep.subr.bf16.mxu0 0
      %1328 = vmatpush1.bf16.msra.mxu0 %v1230
      %1329 = vmatprep.subr.bf16.mxu0 0
      %1330 = vmatpush1.bf16.msra.mxu0 %v1231
      %1331 = vmatprep.subr.bf16.mxu0 0
      %1332 = vmatpush1.bf16.msra.mxu0 %v1232
      %1333 = vmatprep.subr.bf16.mxu0 0
      %1334 = vmatpush1.bf16.msra.mxu0 %v1233
      %1335 = vmatprep.subr.bf16.mxu0 0
      %1336 = vmatpush1.bf16.msra.mxu0 %v1234
      %1337 = vmatprep.subr.bf16.mxu0 0
      %1338 = vmatpush1.bf16.msra.mxu0 %v1235
      %1339 = vmatprep.subr.bf16.mxu0 0
      %1340 = vmatpush1.bf16.msra.mxu0 %v1236
      %1341 = vmatprep.subr.bf16.mxu0 0
      %1342 = vmatpush1.bf16.msra.mxu0 %v1237
      %1343 = vmatprep.subr.bf16.mxu0 0
      %1344 = vmatpush1.bf16.msra.mxu0 0
      %1345 = vmatprep.subr.bf16.mxu0 0
      %1346 = vmatpush1.bf16.msra.mxu0 0
      %1347 = vmatprep.subr.bf16.mxu0 0
      %1348 = vmatpush1.bf16.msra.mxu0 0
      %1349 = vmatprep.subr.bf16.mxu0 0
      %1350 = vmatpush1.bf16.msra.mxu0 0
      %1351 = vmatprep.subr.bf16.mxu0 0
      %1352 = vmatpush1.bf16.msra.mxu0 0
      %1353 = vmatprep.subr.bf16.mxu0 0
      %1354 = vmatpush1.bf16.msra.mxu0 0
      %1355 = vmatprep.subr.bf16.mxu0 0
      %1356 = vmatpush1.bf16.msra.mxu0 0
      %1357 = vmatprep.subr.bf16.mxu0 0
      %1358 = vmatpush1.bf16.msra.mxu0 0
      %1359 = vmatprep.mubr.bf16.mxu0 0
      %1360 = vmatmul.mubr.bf16.gmra.mrb[0].mxu0 %v756
      %v1361 = vpop.f32.mrb[0].mxu0
      %v1362 = vadd.f32 %v1297, %v1361
      %v1363 = vpop.f32.mrb[0].mxu0
      %v1364 = vpop.f32.mrb[0].mxu0
      %v1365 = vadd.f32 %v1300, %v1364
      %v1366 = vpop.f32.mrb[0].mxu0
      %1367 = vmatprep.mubr.bf16.mxu0 0
      %1368 = vmatmul.mubr.bf16.gmra.mrb[0].mxu0 %v759
      %v1369 = vpop.f32.mrb[0].mxu0
      %v1370 = vadd.f32 %v1305, %v1369
      %v1371 = vpop.f32.mrb[0].mxu0
      %v1372 = vpop.f32.mrb[0].mxu0
      %v1373 = vadd.f32 %v1308, %v1372
      %v1374 = vpop.f32.mrb[0].mxu0
      %1375 = vmatprep.mubr.bf16.mxu0 0
      %1376 = vmatmul.mubr.bf16.gmra.mrb[0].mxu0 %v762
      %v1377 = vpop.f32.mrb[0].mxu0
      %v1378 = vadd.f32 %v1313, %v1377
      %v1379 = vpop.f32.mrb[0].mxu0
      %v1380 = vpop.f32.mrb[0].mxu0
      %v1381 = vadd.f32 %v1316, %v1380
      %v1382 = vpop.f32.mrb[0].mxu0
      %1383 = vmatprep.mubr.bf16.mxu0 0
      %1384 = vmatmul.mubr.bf16.gmra.mrb[0].mxu0 %v1114
      %v1385 = vpop.f32.mrb[0].mxu0
      %v1386 = vadd.f32 %v1321, %v1385
      %v1387 = vpop.f32.mrb[0].mxu0
      %v1388 = vpop.f32.mrb[0].mxu0
      %v1389 = vadd.f32 %v1324, %v1388
      %v1390 = vpop.f32.mrb[0].mxu0
      %1391 = vdwg.mxu0
      %v1392 = vadd.f32 %v1019, %v1362
      %v1393 = vadd.f32 %v1022, %v1365
      %v1394 = vadd.f32 %v1027, %v1370
      %v1395 = vadd.f32 %v1030, %v1373
      %v1396 = vadd.f32 %v1035, %v1378
      %v1397 = vadd.f32 %v1038, %v1381
      %v1398 = vadd.f32 %v1043, %v1386
      %v1399 = vadd.f32 %v1046, %v1389
      %v1400 = vld [vmem:[%s2] sm:$0x1]
      %v1402 = vlaneseq
      %v1403 = vshrl.u32 %v1402, 7
      %v1404 = vsub.s32 0, %v1403
      %v1405 = vrot.slane %v1400, %v1404
      %v1407 = vadd.f32 %v1392, %v1405
      %v1408 = vadd.f32 %v1393, %v1405
      %v1409 = vadd.f32 %v1394, %v1405
      %v1410 = vadd.f32 %v1395, %v1405
      %v1411 = vadd.f32 %v1396, %v1405
      %v1412 = vadd.f32 %v1397, %v1405
      %v1413 = vadd.f32 %v1398, %v1405
      %v1414 = vadd.f32 %v1399, %v1405
      %vm1415 = vcmp.gt.f32.partialorder %v1407, 0.0
      %vm1416 = vcmp.gt.f32.partialorder %v1408, 0.0
      %vm1417 = vcmp.gt.f32.partialorder %v1409, 0.0
      %vm1418 = vcmp.gt.f32.partialorder %v1410, 0.0
      %vm1419 = vcmp.gt.f32.partialorder %v1411, 0.0
      %vm1420 = vcmp.gt.f32.partialorder %v1412, 0.0
      %vm1421 = vcmp.gt.f32.partialorder %v1413, 0.0
      %vm1422 = vcmp.gt.f32.partialorder %v1414, 0.0
      %v1423 = vmul.f32 %v1407, 0.1
      %v1424 = vmul.f32 %v1408, 0.1
      %v1425 = vmul.f32 %v1409, 0.1
      %v1426 = vmul.f32 %v1410, 0.1
      %v1427 = vmul.f32 %v1411, 0.1
      %v1428 = vmul.f32 %v1412, 0.1
      %v1429 = vmul.f32 %v1413, 0.1
      %v1430 = vmul.f32 %v1414, 0.1
      %v1431 = vsel %vm1415, %v1407, %v1423
      %v1432 = vsel %vm1416, %v1408, %v1424
      %v1433 = vsel %vm1417, %v1409, %v1425
      %v1434 = vsel %vm1418, %v1410, %v1426
      %v1435 = vsel %vm1419, %v1411, %v1427
      %v1436 = vsel %vm1420, %v1412, %v1428
      %v1437 = vsel %vm1421, %v1413, %v1429
      %v1438 = vsel %vm1422, %v1414, %v1430
      %v1447 = vcombine.high %v1431, %v1431
      %v1449 = vunpack.c.l.s4 1983009808
      %v1450 = vunpack.c.0.s8 %v1449
      %v1451 = vlaneseq
      %v1452 = vshrl.u32 %v1451, 7
      %v1453 = vsub.s32 %v1450, %v1452
      %v1454 = vrot.slane %v1431, %v1453
      %v1456 = vunpack.c.l.s4 1983009808
      %v1457 = vunpack.c.0.s8 %v1456
      %v1458 = vlaneseq
      %v1459 = vshrl.u32 %v1458, 7
      %v1460 = vsub.s32 %v1457, %v1459
      %v1461 = vrot.slane %v1447, %v1460
      %v1462 = vcombine.high %v1454, %v1454
      %v1463 = vcombine.high %v1461, %v1461
      %v1464 = vcombine.high %v1432, %v1432
      %v1466 = vunpack.c.l.s4 1983009808
      %v1467 = vunpack.c.0.s8 %v1466
      %v1468 = vlaneseq
      %v1469 = vshrl.u32 %v1468, 7
      %v1470 = vsub.s32 %v1467, %v1469
      %v1471 = vrot.slane %v1432, %v1470
      %v1473 = vunpack.c.l.s4 1983009808
      %v1474 = vunpack.c.0.s8 %v1473
      %v1475 = vlaneseq
      %v1476 = vshrl.u32 %v1475, 7
      %v1477 = vsub.s32 %v1474, %v1476
      %v1478 = vrot.slane %v1464, %v1477
      %v1479 = vcombine.high %v1471, %v1471
      %v1480 = vcombine.high %v1478, %v1478
      %v1481 = vcombine.high %v1433, %v1433
      %v1483 = vunpack.c.l.s4 1983009808
      %v1484 = vunpack.c.0.s8 %v1483
      %v1485 = vlaneseq
      %v1486 = vshrl.u32 %v1485, 7
      %v1487 = vsub.s32 %v1484, %v1486
      %v1488 = vrot.slane %v1433, %v1487
      %v1490 = vunpack.c.l.s4 1983009808
      %v1491 = vunpack.c.0.s8 %v1490
      %v1492 = vlaneseq
      %v1493 = vshrl.u32 %v1492, 7
      %v1494 = vsub.s32 %v1491, %v1493
      %v1495 = vrot.slane %v1481, %v1494
      %v1496 = vcombine.high %v1488, %v1488
      %v1497 = vcombine.high %v1495, %v1495
      %v1498 = vcombine.high %v1434, %v1434
      %v1500 = vunpack.c.l.s4 1983009808
      %v1501 = vunpack.c.0.s8 %v1500
      %v1502 = vlaneseq
      %v1503 = vshrl.u32 %v1502, 7
      %v1504 = vsub.s32 %v1501, %v1503
      %v1505 = vrot.slane %v1434, %v1504
      %v1507 = vunpack.c.l.s4 1983009808
      %v1508 = vunpack.c.0.s8 %v1507
      %v1509 = vlaneseq
      %v1510 = vshrl.u32 %v1509, 7
      %v1511 = vsub.s32 %v1508, %v1510
      %v1512 = vrot.slane %v1498, %v1511
      %v1513 = vcombine.high %v1505, %v1505
      %v1514 = vcombine.high %v1512, %v1512
      %v1515 = vcombine.high %v1435, %v1435
      %v1517 = vunpack.c.l.s4 1983009808
      %v1518 = vunpack.c.0.s8 %v1517
      %v1519 = vlaneseq
      %v1520 = vshrl.u32 %v1519, 7
      %v1521 = vsub.s32 %v1518, %v1520
      %v1522 = vrot.slane %v1435, %v1521
      %v1524 = vunpack.c.l.s4 1983009808
      %v1525 = vunpack.c.0.s8 %v1524
      %v1526 = vlaneseq
      %v1527 = vshrl.u32 %v1526, 7
      %v1528 = vsub.s32 %v1525, %v1527
      %v1529 = vrot.slane %v1515, %v1528
      %v1530 = vcombine.high %v1522, %v1522
      %v1531 = vcombine.high %v1529, %v1529
      %v1532 = vcombine.high %v1436, %v1436
      %v1534 = vunpack.c.l.s4 1983009808
      %v1535 = vunpack.c.0.s8 %v1534
      %v1536 = vlaneseq
      %v1537 = vshrl.u32 %v1536, 7
      %v1538 = vsub.s32 %v1535, %v1537
      %v1539 = vrot.slane %v1436, %v1538
      %v1541 = vunpack.c.l.s4 1983009808
      %v1542 = vunpack.c.0.s8 %v1541
      %v1543 = vlaneseq
      %v1544 = vshrl.u32 %v1543, 7
      %v1545 = vsub.s32 %v1542, %v1544
      %v1546 = vrot.slane %v1532, %v1545
      %v1547 = vcombine.high %v1539, %v1539
      %v1548 = vcombine.high %v1546, %v1546
      %v1549 = vcombine.high %v1437, %v1437
      %v1551 = vunpack.c.l.s4 1983009808
      %v1552 = vunpack.c.0.s8 %v1551
      %v1553 = vlaneseq
      %v1554 = vshrl.u32 %v1553, 7
      %v1555 = vsub.s32 %v1552, %v1554
      %v1556 = vrot.slane %v1437, %v1555
      %v1558 = vunpack.c.l.s4 1983009808
      %v1559 = vunpack.c.0.s8 %v1558
      %v1560 = vlaneseq
      %v1561 = vshrl.u32 %v1560, 7
      %v1562 = vsub.s32 %v1559, %v1561
      %v1563 = vrot.slane %v1549, %v1562
      %v1564 = vcombine.high %v1556, %v1556
      %v1565 = vcombine.high %v1563, %v1563
      %v1566 = vcombine.high %v1438, %v1438
      %v1568 = vunpack.c.l.s4 1983009808
      %v1569 = vunpack.c.0.s8 %v1568
      %v1570 = vlaneseq
      %v1571 = vshrl.u32 %v1570, 7
      %v1572 = vsub.s32 %v1569, %v1571
      %v1573 = vrot.slane %v1438, %v1572
      %v1575 = vunpack.c.l.s4 1983009808
      %v1576 = vunpack.c.0.s8 %v1575
      %v1577 = vlaneseq
      %v1578 = vshrl.u32 %v1577, 7
      %v1579 = vsub.s32 %v1576, %v1578
      %v1580 = vrot.slane %v1566, %v1579
      %v1581 = vcombine.high %v1573, %v1573
      %v1582 = vcombine.high %v1580, %v1580
      %vm1615 = vcmask 1041408
      %v1616 = vsel %vm1615, %v1454, -inf
      %v1617 = vrot.slane %v1616, 4
      %v1618 = vmax.f32 %v1616, %v1617
      %v1619 = vrot.slane %v1618, 2
      %v1620 = vmax.f32 %v1618, %v1619
      %v1621 = vrot.slane %v1620, 1
      %v1622 = vmax.f32 %v1620, %v1621
      %v1623 = vsel %vm1615, %v1462, -inf
      %v1624 = vrot.slane %v1623, 4
      %v1625 = vmax.f32 %v1623, %v1624
      %v1626 = vrot.slane %v1625, 2
      %v1627 = vmax.f32 %v1625, %v1626
      %v1628 = vrot.slane %v1627, 1
      %v1629 = vmax.f32 %v1627, %v1628
      %v1630 = vsel %vm1615, %v1461, -inf
      %v1631 = vrot.slane %v1630, 4
      %v1632 = vmax.f32 %v1630, %v1631
      %v1633 = vrot.slane %v1632, 2
      %v1634 = vmax.f32 %v1632, %v1633
      %v1635 = vrot.slane %v1634, 1
      %v1636 = vmax.f32 %v1634, %v1635
      %v1637 = vsel %vm1615, %v1463, -inf
      %v1638 = vrot.slane %v1637, 4
      %v1639 = vmax.f32 %v1637, %v1638
      %v1640 = vrot.slane %v1639, 2
      %v1641 = vmax.f32 %v1639, %v1640
      %v1642 = vrot.slane %v1641, 1
      %v1643 = vmax.f32 %v1641, %v1642
      %v1644 = vsel %vm1615, %v1471, -inf
      %v1645 = vrot.slane %v1644, 4
      %v1646 = vmax.f32 %v1644, %v1645
      %v1647 = vrot.slane %v1646, 2
      %v1648 = vmax.f32 %v1646, %v1647
      %v1649 = vrot.slane %v1648, 1
      %v1650 = vmax.f32 %v1648, %v1649
      %v1651 = vsel %vm1615, %v1479, -inf
      %v1652 = vrot.slane %v1651, 4
      %v1653 = vmax.f32 %v1651, %v1652
      %v1654 = vrot.slane %v1653, 2
      %v1655 = vmax.f32 %v1653, %v1654
      %v1656 = vrot.slane %v1655, 1
      %v1657 = vmax.f32 %v1655, %v1656
      %v1658 = vsel %vm1615, %v1478, -inf
      %v1659 = vrot.slane %v1658, 4
      %v1660 = vmax.f32 %v1658, %v1659
      %v1661 = vrot.slane %v1660, 2
      %v1662 = vmax.f32 %v1660, %v1661
      %v1663 = vrot.slane %v1662, 1
      %v1664 = vmax.f32 %v1662, %v1663
      %v1665 = vsel %vm1615, %v1480, -inf
      %v1666 = vrot.slane %v1665, 4
      %v1667 = vmax.f32 %v1665, %v1666
      %v1668 = vrot.slane %v1667, 2
      %v1669 = vmax.f32 %v1667, %v1668
      %v1670 = vrot.slane %v1669, 1
      %v1671 = vmax.f32 %v1669, %v1670
      %v1672 = vsel %vm1615, %v1488, -inf
      %v1673 = vrot.slane %v1672, 4
      %v1674 = vmax.f32 %v1672, %v1673
      %v1675 = vrot.slane %v1674, 2
      %v1676 = vmax.f32 %v1674, %v1675
      %v1677 = vrot.slane %v1676, 1
      %v1678 = vmax.f32 %v1676, %v1677
      %v1679 = vsel %vm1615, %v1496, -inf
      %v1680 = vrot.slane %v1679, 4
      %v1681 = vmax.f32 %v1679, %v1680
      %v1682 = vrot.slane %v1681, 2
      %v1683 = vmax.f32 %v1681, %v1682
      %v1684 = vrot.slane %v1683, 1
      %v1685 = vmax.f32 %v1683, %v1684
      %v1686 = vsel %vm1615, %v1495, -inf
      %v1687 = vrot.slane %v1686, 4
      %v1688 = vmax.f32 %v1686, %v1687
      %v1689 = vrot.slane %v1688, 2
      %v1690 = vmax.f32 %v1688, %v1689
      %v1691 = vrot.slane %v1690, 1
      %v1692 = vmax.f32 %v1690, %v1691
      %v1693 = vsel %vm1615, %v1497, -inf
      %v1694 = vrot.slane %v1693, 4
      %v1695 = vmax.f32 %v1693, %v1694
      %v1696 = vrot.slane %v1695, 2
      %v1697 = vmax.f32 %v1695, %v1696
      %v1698 = vrot.slane %v1697, 1
      %v1699 = vmax.f32 %v1697, %v1698
      %v1700 = vsel %vm1615, %v1505, -inf
      %v1701 = vrot.slane %v1700, 4
      %v1702 = vmax.f32 %v1700, %v1701
      %v1703 = vrot.slane %v1702, 2
      %v1704 = vmax.f32 %v1702, %v1703
      %v1705 = vrot.slane %v1704, 1
      %v1706 = vmax.f32 %v1704, %v1705
      %v1707 = vsel %vm1615, %v1513, -inf
      %v1708 = vrot.slane %v1707, 4
      %v1709 = vmax.f32 %v1707, %v1708
      %v1710 = vrot.slane %v1709, 2
      %v1711 = vmax.f32 %v1709, %v1710
      %v1712 = vrot.slane %v1711, 1
      %v1713 = vmax.f32 %v1711, %v1712
      %v1714 = vsel %vm1615, %v1512, -inf
      %v1715 = vrot.slane %v1714, 4
      %v1716 = vmax.f32 %v1714, %v1715
      %v1717 = vrot.slane %v1716, 2
      %v1718 = vmax.f32 %v1716, %v1717
      %v1719 = vrot.slane %v1718, 1
      %v1720 = vmax.f32 %v1718, %v1719
      %v1721 = vsel %vm1615, %v1514, -inf
      %v1722 = vrot.slane %v1721, 4
      %v1723 = vmax.f32 %v1721, %v1722
      %v1724 = vrot.slane %v1723, 2
      %v1725 = vmax.f32 %v1723, %v1724
      %v1726 = vrot.slane %v1725, 1
      %v1727 = vmax.f32 %v1725, %v1726
      %v1728 = vsel %vm1615, %v1522, -inf
      %v1729 = vrot.slane %v1728, 4
      %v1730 = vmax.f32 %v1728, %v1729
      %v1731 = vrot.slane %v1730, 2
      %v1732 = vmax.f32 %v1730, %v1731
      %v1733 = vrot.slane %v1732, 1
      %v1734 = vmax.f32 %v1732, %v1733
      %v1735 = vsel %vm1615, %v1530, -inf
      %v1736 = vrot.slane %v1735, 4
      %v1737 = vmax.f32 %v1735, %v1736
      %v1738 = vrot.slane %v1737, 2
      %v1739 = vmax.f32 %v1737, %v1738
      %v1740 = vrot.slane %v1739, 1
      %v1741 = vmax.f32 %v1739, %v1740
      %v1742 = vsel %vm1615, %v1529, -inf
      %v1743 = vrot.slane %v1742, 4
      %v1744 = vmax.f32 %v1742, %v1743
      %v1745 = vrot.slane %v1744, 2
      %v1746 = vmax.f32 %v1744, %v1745
      %v1747 = vrot.slane %v1746, 1
      %v1748 = vmax.f32 %v1746, %v1747
      %v1749 = vsel %vm1615, %v1531, -inf
      %v1750 = vrot.slane %v1749, 4
      %v1751 = vmax.f32 %v1749, %v1750
      %v1752 = vrot.slane %v1751, 2
      %v1753 = vmax.f32 %v1751, %v1752
      %v1754 = vrot.slane %v1753, 1
      %v1755 = vmax.f32 %v1753, %v1754
      %v1756 = vsel %vm1615, %v1539, -inf
      %v1757 = vrot.slane %v1756, 4
      %v1758 = vmax.f32 %v1756, %v1757
      %v1759 = vrot.slane %v1758, 2
      %v1760 = vmax.f32 %v1758, %v1759
      %v1761 = vrot.slane %v1760, 1
      %v1762 = vmax.f32 %v1760, %v1761
      %v1763 = vsel %vm1615, %v1547, -inf
      %v1764 = vrot.slane %v1763, 4
      %v1765 = vmax.f32 %v1763, %v1764
      %v1766 = vrot.slane %v1765, 2
      %v1767 = vmax.f32 %v1765, %v1766
      %v1768 = vrot.slane %v1767, 1
      %v1769 = vmax.f32 %v1767, %v1768
      %v1770 = vsel %vm1615, %v1546, -inf
      %v1771 = vrot.slane %v1770, 4
      %v1772 = vmax.f32 %v1770, %v1771
      %v1773 = vrot.slane %v1772, 2
      %v1774 = vmax.f32 %v1772, %v1773
      %v1775 = vrot.slane %v1774, 1
      %v1776 = vmax.f32 %v1774, %v1775
      %v1777 = vsel %vm1615, %v1548, -inf
      %v1778 = vrot.slane %v1777, 4
      %v1779 = vmax.f32 %v1777, %v1778
      %v1780 = vrot.slane %v1779, 2
      %v1781 = vmax.f32 %v1779, %v1780
      %v1782 = vrot.slane %v1781, 1
      %v1783 = vmax.f32 %v1781, %v1782
      %v1784 = vsel %vm1615, %v1556, -inf
      %v1785 = vrot.slane %v1784, 4
      %v1786 = vmax.f32 %v1784, %v1785
      %v1787 = vrot.slane %v1786, 2
      %v1788 = vmax.f32 %v1786, %v1787
      %v1789 = vrot.slane %v1788, 1
      %v1790 = vmax.f32 %v1788, %v1789
      %v1791 = vsel %vm1615, %v1564, -inf
      %v1792 = vrot.slane %v1791, 4
      %v1793 = vmax.f32 %v1791, %v1792
      %v1794 = vrot.slane %v1793, 2
      %v1795 = vmax.f32 %v1793, %v1794
      %v1796 = vrot.slane %v1795, 1
      %v1797 = vmax.f32 %v1795, %v1796
      %v1798 = vsel %vm1615, %v1563, -inf
      %v1799 = vrot.slane %v1798, 4
      %v1800 = vmax.f32 %v1798, %v1799
      %v1801 = vrot.slane %v1800, 2
      %v1802 = vmax.f32 %v1800, %v1801
      %v1803 = vrot.slane %v1802, 1
      %v1804 = vmax.f32 %v1802, %v1803
      %v1805 = vsel %vm1615, %v1565, -inf
      %v1806 = vrot.slane %v1805, 4
      %v1807 = vmax.f32 %v1805, %v1806
      %v1808 = vrot.slane %v1807, 2
      %v1809 = vmax.f32 %v1807, %v1808
      %v1810 = vrot.slane %v1809, 1
      %v1811 = vmax.f32 %v1809, %v1810
      %v1812 = vsel %vm1615, %v1573, -inf
      %v1813 = vrot.slane %v1812, 4
      %v1814 = vmax.f32 %v1812, %v1813
      %v1815 = vrot.slane %v1814, 2
      %v1816 = vmax.f32 %v1814, %v1815
      %v1817 = vrot.slane %v1816, 1
      %v1818 = vmax.f32 %v1816, %v1817
      %v1819 = vsel %vm1615, %v1581, -inf
      %v1820 = vrot.slane %v1819, 4
      %v1821 = vmax.f32 %v1819, %v1820
      %v1822 = vrot.slane %v1821, 2
      %v1823 = vmax.f32 %v1821, %v1822
      %v1824 = vrot.slane %v1823, 1
      %v1825 = vmax.f32 %v1823, %v1824
      %v1826 = vsel %vm1615, %v1580, -inf
      %v1827 = vrot.slane %v1826, 4
      %v1828 = vmax.f32 %v1826, %v1827
      %v1829 = vrot.slane %v1828, 2
      %v1830 = vmax.f32 %v1828, %v1829
      %v1831 = vrot.slane %v1830, 1
      %v1832 = vmax.f32 %v1830, %v1831
      %v1833 = vsel %vm1615, %v1582, -inf
      %v1834 = vrot.slane %v1833, 4
      %v1835 = vmax.f32 %v1833, %v1834
      %v1836 = vrot.slane %v1835, 2
      %v1837 = vmax.f32 %v1835, %v1836
      %v1838 = vrot.slane %v1837, 1
      %v1839 = vmax.f32 %v1837, %v1838
      %v1840 = vmax.f32 %v1622, %v1650
      %v1841 = vmax.f32 %v1629, %v1657
      %v1842 = vmax.f32 %v1636, %v1664
      %v1843 = vmax.f32 %v1643, %v1671
      %v1844 = vmax.f32 %v1678, %v1706
      %v1845 = vmax.f32 %v1685, %v1713
      %v1846 = vmax.f32 %v1692, %v1720
      %v1847 = vmax.f32 %v1699, %v1727
      %v1848 = vmax.f32 %v1734, %v1762
      %v1849 = vmax.f32 %v1741, %v1769
      %v1850 = vmax.f32 %v1748, %v1776
      %v1851 = vmax.f32 %v1755, %v1783
      %v1852 = vmax.f32 %v1790, %v1818
      %v1853 = vmax.f32 %v1797, %v1825
      %v1854 = vmax.f32 %v1804, %v1832
      %v1855 = vmax.f32 %v1811, %v1839
      %v1856 = vpack.c.bf16 %v1840, %v1840
      %v1857 = vpack.c.bf16 %v1841, %v1841
      %v1858 = vpack.c.bf16 %v1842, %v1842
      %v1859 = vpack.c.bf16 %v1843, %v1843
      %v1860 = vpack.c.bf16 %v1844, %v1844
      %v1861 = vpack.c.bf16 %v1845, %v1845
      %v1862 = vpack.c.bf16 %v1846, %v1846
      %v1863 = vpack.c.bf16 %v1847, %v1847
      %v1864 = vpack.c.bf16 %v1848, %v1848
      %v1865 = vpack.c.bf16 %v1849, %v1849
      %v1866 = vpack.c.bf16 %v1850, %v1850
      %v1867 = vpack.c.bf16 %v1851, %v1851
      %v1868 = vpack.c.bf16 %v1852, %v1852
      %v1869 = vpack.c.bf16 %v1853, %v1853
      %v1870 = vpack.c.bf16 %v1854, %v1854
      %v1871 = vpack.c.bf16 %v1855, %v1855
      %v1889 = vunpack.c.l.s4 1983009808
      %v1890 = vunpack.c.0.s8 %v1889
      %v1891 = vlaneseq
      %v1892 = vshrl.u32 %v1891, 7
      %v1893 = vsub.s32 %v1890, %v1892
      %v1894 = vrot.slane %v1856, %v1893
      %v1896 = vunpack.c.l.s4 1983009808
      %v1897 = vunpack.c.0.s8 %v1896
      %v1898 = vlaneseq
      %v1899 = vshrl.u32 %v1898, 7
      %v1900 = vsub.s32 %v1897, %v1899
      %v1901 = vrot.slane %v1857, %v1900
      %v1903 = vunpack.c.l.s4 1983009808
      %v1904 = vunpack.c.0.s8 %v1903
      %v1905 = vlaneseq
      %v1906 = vshrl.u32 %v1905, 7
      %v1907 = vsub.s32 %v1904, %v1906
      %v1908 = vrot.slane %v1858, %v1907
      %v1910 = vunpack.c.l.s4 1983009808
      %v1911 = vunpack.c.0.s8 %v1910
      %v1912 = vlaneseq
      %v1913 = vshrl.u32 %v1912, 7
      %v1914 = vsub.s32 %v1911, %v1913
      %v1915 = vrot.slane %v1859, %v1914
      %v1917 = vunpack.c.l.s4 1983009808
      %v1918 = vunpack.c.0.s8 %v1917
      %v1919 = vlaneseq
      %v1920 = vshrl.u32 %v1919, 7
      %v1921 = vsub.s32 %v1918, %v1920
      %v1922 = vrot.slane %v1860, %v1921
      %v1924 = vunpack.c.l.s4 1983009808
      %v1925 = vunpack.c.0.s8 %v1924
      %v1926 = vlaneseq
      %v1927 = vshrl.u32 %v1926, 7
      %v1928 = vsub.s32 %v1925, %v1927
      %v1929 = vrot.slane %v1861, %v1928
      %v1931 = vunpack.c.l.s4 1983009808
      %v1932 = vunpack.c.0.s8 %v1931
      %v1933 = vlaneseq
      %v1934 = vshrl.u32 %v1933, 7
      %v1935 = vsub.s32 %v1932, %v1934
      %v1936 = vrot.slane %v1862, %v1935
      %v1938 = vunpack.c.l.s4 1983009808
      %v1939 = vunpack.c.0.s8 %v1938
      %v1940 = vlaneseq
      %v1941 = vshrl.u32 %v1940, 7
      %v1942 = vsub.s32 %v1939, %v1941
      %v1943 = vrot.slane %v1863, %v1942
      %v1945 = vunpack.c.l.s4 1983009808
      %v1946 = vunpack.c.0.s8 %v1945
      %v1947 = vlaneseq
      %v1948 = vshrl.u32 %v1947, 7
      %v1949 = vsub.s32 %v1946, %v1948
      %v1950 = vrot.slane %v1864, %v1949
      %v1952 = vunpack.c.l.s4 1983009808
      %v1953 = vunpack.c.0.s8 %v1952
      %v1954 = vlaneseq
      %v1955 = vshrl.u32 %v1954, 7
      %v1956 = vsub.s32 %v1953, %v1955
      %v1957 = vrot.slane %v1865, %v1956
      %v1959 = vunpack.c.l.s4 1983009808
      %v1960 = vunpack.c.0.s8 %v1959
      %v1961 = vlaneseq
      %v1962 = vshrl.u32 %v1961, 7
      %v1963 = vsub.s32 %v1960, %v1962
      %v1964 = vrot.slane %v1866, %v1963
      %v1966 = vunpack.c.l.s4 1983009808
      %v1967 = vunpack.c.0.s8 %v1966
      %v1968 = vlaneseq
      %v1969 = vshrl.u32 %v1968, 7
      %v1970 = vsub.s32 %v1967, %v1969
      %v1971 = vrot.slane %v1867, %v1970
      %v1973 = vunpack.c.l.s4 1983009808
      %v1974 = vunpack.c.0.s8 %v1973
      %v1975 = vlaneseq
      %v1976 = vshrl.u32 %v1975, 7
      %v1977 = vsub.s32 %v1974, %v1976
      %v1978 = vrot.slane %v1868, %v1977
      %v1980 = vunpack.c.l.s4 1983009808
      %v1981 = vunpack.c.0.s8 %v1980
      %v1982 = vlaneseq
      %v1983 = vshrl.u32 %v1982, 7
      %v1984 = vsub.s32 %v1981, %v1983
      %v1985 = vrot.slane %v1869, %v1984
      %v1987 = vunpack.c.l.s4 1983009808
      %v1988 = vunpack.c.0.s8 %v1987
      %v1989 = vlaneseq
      %v1990 = vshrl.u32 %v1989, 7
      %v1991 = vsub.s32 %v1988, %v1990
      %v1992 = vrot.slane %v1870, %v1991
      %v1994 = vunpack.c.l.s4 1983009808
      %v1995 = vunpack.c.0.s8 %v1994
      %v1996 = vlaneseq
      %v1997 = vshrl.u32 %v1996, 7
      %v1998 = vsub.s32 %v1995, %v1997
      %v1999 = vrot.slane %v1871, %v1998
      %v2001 = vunpack.c.l.s4 1983009808
      %v2002 = vunpack.c.0.s8 %v2001
      %v2003 = vlaneseq
      %v2004 = vshrl.u32 %v2003, 7
      %v2005 = vsub.s32 %v2002, %v2004
      %v2006 = vrot.slane %v1894, %v2005
      %v2008 = vunpack.c.l.s4 1983009808
      %v2009 = vunpack.c.0.s8 %v2008
      %v2010 = vlaneseq
      %v2011 = vshrl.u32 %v2010, 7
      %v2012 = vsub.s32 %v2009, %v2011
      %v2013 = vrot.slane %v1901, %v2012
      %v2015 = vunpack.c.l.s4 1983009808
      %v2016 = vunpack.c.0.s8 %v2015
      %v2017 = vlaneseq
      %v2018 = vshrl.u32 %v2017, 7
      %v2019 = vsub.s32 %v2016, %v2018
      %v2020 = vrot.slane %v1908, %v2019
      %v2022 = vunpack.c.l.s4 1983009808
      %v2023 = vunpack.c.0.s8 %v2022
      %v2024 = vlaneseq
      %v2025 = vshrl.u32 %v2024, 7
      %v2026 = vsub.s32 %v2023, %v2025
      %v2027 = vrot.slane %v1915, %v2026
      %v2029 = vunpack.c.l.s4 1983009808
      %v2030 = vunpack.c.0.s8 %v2029
      %v2031 = vlaneseq
      %v2032 = vshrl.u32 %v2031, 7
      %v2033 = vsub.s32 %v2030, %v2032
      %v2034 = vrot.slane %v1922, %v2033
      %v2036 = vunpack.c.l.s4 1983009808
      %v2037 = vunpack.c.0.s8 %v2036
      %v2038 = vlaneseq
      %v2039 = vshrl.u32 %v2038, 7
      %v2040 = vsub.s32 %v2037, %v2039
      %v2041 = vrot.slane %v1929, %v2040
      %v2043 = vunpack.c.l.s4 1983009808
      %v2044 = vunpack.c.0.s8 %v2043
      %v2045 = vlaneseq
      %v2046 = vshrl.u32 %v2045, 7
      %v2047 = vsub.s32 %v2044, %v2046
      %v2048 = vrot.slane %v1936, %v2047
      %v2050 = vunpack.c.l.s4 1983009808
      %v2051 = vunpack.c.0.s8 %v2050
      %v2052 = vlaneseq
      %v2053 = vshrl.u32 %v2052, 7
      %v2054 = vsub.s32 %v2051, %v2053
      %v2055 = vrot.slane %v1943, %v2054
      %v2057 = vunpack.c.l.s4 1983009808
      %v2058 = vunpack.c.0.s8 %v2057
      %v2059 = vlaneseq
      %v2060 = vshrl.u32 %v2059, 7
      %v2061 = vsub.s32 %v2058, %v2060
      %v2062 = vrot.slane %v1950, %v2061
      %v2064 = vunpack.c.l.s4 1983009808
      %v2065 = vunpack.c.0.s8 %v2064
      %v2066 = vlaneseq
      %v2067 = vshrl.u32 %v2066, 7
      %v2068 = vsub.s32 %v2065, %v2067
      %v2069 = vrot.slane %v1957, %v2068
      %v2071 = vunpack.c.l.s4 1983009808
      %v2072 = vunpack.c.0.s8 %v2071
      %v2073 = vlaneseq
      %v2074 = vshrl.u32 %v2073, 7
      %v2075 = vsub.s32 %v2072, %v2074
      %v2076 = vrot.slane %v1964, %v2075
      %v2078 = vunpack.c.l.s4 1983009808
      %v2079 = vunpack.c.0.s8 %v2078
      %v2080 = vlaneseq
      %v2081 = vshrl.u32 %v2080, 7
      %v2082 = vsub.s32 %v2079, %v2081
      %v2083 = vrot.slane %v1971, %v2082
      %v2085 = vunpack.c.l.s4 1983009808
      %v2086 = vunpack.c.0.s8 %v2085
      %v2087 = vlaneseq
      %v2088 = vshrl.u32 %v2087, 7
      %v2089 = vsub.s32 %v2086, %v2088
      %v2090 = vrot.slane %v1978, %v2089
      %v2092 = vunpack.c.l.s4 1983009808
      %v2093 = vunpack.c.0.s8 %v2092
      %v2094 = vlaneseq
      %v2095 = vshrl.u32 %v2094, 7
      %v2096 = vsub.s32 %v2093, %v2095
      %v2097 = vrot.slane %v1985, %v2096
      %v2099 = vunpack.c.l.s4 1983009808
      %v2100 = vunpack.c.0.s8 %v2099
      %v2101 = vlaneseq
      %v2102 = vshrl.u32 %v2101, 7
      %v2103 = vsub.s32 %v2100, %v2102
      %v2104 = vrot.slane %v1992, %v2103
      %v2106 = vunpack.c.l.s4 1983009808
      %v2107 = vunpack.c.0.s8 %v2106
      %v2108 = vlaneseq
      %v2109 = vshrl.u32 %v2108, 7
      %v2110 = vsub.s32 %v2107, %v2109
      %v2111 = vrot.slane %v1999, %v2110
      %v2112 = vunpack.c.l.b16 %v2006
      %v2113 = vunpack.c.l.b16 %v2013
      %v2114 = vunpack.c.l.b16 %v2020
      %v2115 = vunpack.c.l.b16 %v2027
      %v2116 = vunpack.c.l.b16 %v2034
      %v2117 = vunpack.c.l.b16 %v2041
      %v2118 = vunpack.c.l.b16 %v2048
      %v2119 = vunpack.c.l.b16 %v2055
      %v2120 = vunpack.c.l.b16 %v2062
      %v2121 = vunpack.c.l.b16 %v2069
      %v2122 = vunpack.c.l.b16 %v2076
      %v2123 = vunpack.c.l.b16 %v2083
      %v2124 = vunpack.c.l.b16 %v2090
      %v2125 = vunpack.c.l.b16 %v2097
      %v2126 = vunpack.c.l.b16 %v2104
      %v2127 = vunpack.c.l.b16 %v2111
      %v2128 = vrot.slane %v2113, 7
      %vm2129 = vcmask 1041409
      %v2130 = vsel %vm2129, %v2128, %v2112
      %v2131 = vrot.slane %v2114, 6
      %vm2132 = vcmask 1042434
      %v2133 = vsel %vm2132, %v2131, %v2130
      %v2134 = vrot.slane %v2115, 5
      %vm2135 = vcmask 1043459
      %v2136 = vsel %vm2135, %v2134, %v2133
      %v2137 = vrot.slane %v2117, 7
      %v2138 = vsel %vm2129, %v2137, %v2116
      %v2139 = vrot.slane %v2118, 6
      %v2140 = vsel %vm2132, %v2139, %v2138
      %v2141 = vrot.slane %v2119, 5
      %v2142 = vsel %vm2135, %v2141, %v2140
      %v2143 = vrot.slane %v2121, 7
      %v2144 = vsel %vm2129, %v2143, %v2120
      %v2145 = vrot.slane %v2122, 6
      %v2146 = vsel %vm2132, %v2145, %v2144
      %v2147 = vrot.slane %v2123, 5
      %v2148 = vsel %vm2135, %v2147, %v2146
      %v2149 = vrot.slane %v2125, 7
      %v2150 = vsel %vm2129, %v2149, %v2124
      %v2151 = vrot.slane %v2126, 6
      %v2152 = vsel %vm2132, %v2151, %v2150
      %v2153 = vrot.slane %v2127, 5
      %v2154 = vsel %vm2135, %v2153, %v2152
      %v2155 = vpack.c.b16 %v2136, %v2136
      %v2156 = vpack.c.b16 %v2142, %v2142
      %v2157 = vpack.c.b16 %v2148, %v2148
      %v2158 = vpack.c.b16 %v2154, %v2154
      %v2160 = vunpack.c.l.s4 1983009808
      %v2161 = vunpack.c.0.s8 %v2160
      %v2162 = vlaneseq
      %v2163 = vshrl.u32 %v2162, 7
      %v2164 = vsub.s32 %v2161, %v2163
      %v2165 = vrot.slane %v2155, %v2164
      %v2167 = vunpack.c.l.s4 1983009808
      %v2168 = vunpack.c.0.s8 %v2167
      %v2169 = vlaneseq
      %v2170 = vshrl.u32 %v2169, 7
      %v2171 = vsub.s32 %v2168, %v2170
      %v2172 = vrot.slane %v2156, %v2171
      %v2174 = vunpack.c.l.s4 1983009808
      %v2175 = vunpack.c.0.s8 %v2174
      %v2176 = vlaneseq
      %v2177 = vshrl.u32 %v2176, 7
      %v2178 = vsub.s32 %v2175, %v2177
      %v2179 = vrot.slane %v2157, %v2178
      %v2181 = vunpack.c.l.s4 1983009808
      %v2182 = vunpack.c.0.s8 %v2181
      %v2183 = vlaneseq
      %v2184 = vshrl.u32 %v2183, 7
      %v2185 = vsub.s32 %v2182, %v2184
      %v2186 = vrot.slane %v2158, %v2185
      %2191 = vst [vmem:[%s199] sm:$0x3] %v2165
      %2192 = vst [vmem:[%s199 + $0x2] sm:$0x3] %v2172
      %2193 = vst [vmem:[%s199 + $0x4] sm:$0x3] %v2179
      %2194 = vst [vmem:[%s199 + $0x6] sm:$0x3] %v2186
      %s2195 = smul.u32 4, %s19
      %p2196 = scmp.lt.s32.totalorder %s18, 1
      %s2197 = scalar_select %p2196, %s18, 1
      %p2198 = scmp.lt.s32.totalorder %s2195, 3
      %s2199 = scalar_select %p2198, %s2195, 3
      %s2200 = smul.addr %s2197, 4
      %s2201 = sadd.s32 %s2199, %s2200
      %s2202 = smul.addr %s2201, 2
      %s2203 = scalar_lea.vmem %s3, %s2202
      // Predicated region
      $region33: #{_lambda_.4} parent=31 // pred_check
        %p2204 = pneg %p116
      $region34: #{_lambda_.4} parent=31 // pred_check_branch
        %2206 = sbr.rel (%p2204) target = $region36
      $region35: #{_lambda_.4} parent=31 // pred_region
        %s2207 = smul.u32 4, %s19
      $region36: #{_lambda_.4} parent=31 // pred_fallthru
        _
    $region32: #{_lambda_.4} parent=5 // pred_fallthru
      _
    %p2208 = scmp.le.s32.totalorder 2, %s9
    // Predicated region
    $region37: #{_lambda_.4} parent=5 // pred_check
      %p2209 = pneg %p2208
    $region38: #{_lambda_.4} parent=5 // pred_check_branch
      %2211 = sbr.rel (%p2209) target = $region40
    $region39: #{_lambda_.4} parent=5 // pred_region
      %s2212 = ssub.s32 %s9, 2
      // Predicated region
      $region41: #{_lambda_.4} parent=39 // pred_check
        %p2213 = pneg %p122
      $region42: #{_lambda_.4} parent=39 // pred_check_branch
        %2215 = sbr.rel (%p2213) target = $region44
      $region43: #{_lambda_.4} parent=39 // pred_region
        %s2216 = smul.u32 4, %s21
        %p2217 = scmp.lt.s32.totalorder %s20, 1
        %s2218 = scalar_select %p2217, %s20, 1
        %p2219 = scmp.lt.s32.totalorder %s2216, 3
        %s2220 = scalar_select %p2219, %s2216, 3
        %s2221 = smul.addr %s2218, 4
        %s2222 = sadd.s32 %s2220, %s2221
        %s2223 = smul.addr %s2222, 2
        %s2224 = scalar_lea.vmem %s3, %s2223
      $region44: #{_lambda_.4} parent=39 // pred_fallthru
        _
    $region40: #{_lambda_.4} parent=5 // pred_fallthru
      _
  $region6: #{_lambda_.4} parent=0 // loop_footer
    %s13 = sadd.s32 1, %s9
  $region7: #{_lambda_.4} parent=0 // loop_footer_branch
    %8 = sbr.rel target = $region3
  $region8: #{_lambda_.4} parent=0 // loop_exit
    _

// kernel: _lambda_.3
$region0: #{_lambda_.3}
  #allocation0 [shape = 'u32[]', space=smem, size = 0x4, offset = 0x4, fixed_abs, tag = 'smem constant byte address 0x4 - core index']
  #allocation1 [shape = 'u32[144,128]{1,0:T(1,128)}', space=vmem, size = 0x12000, scoped, tag = 'internal scratch']
  %s0 = inlined_call_operand.vmem [shape: bf16[2,18,18,128], index: 0, kind: input, shape index: {}]
  %s1 = inlined_call_operand.vmem [shape: bf16[1152,128], index: 1, kind: input, shape index: {}]
  %s2 = inlined_call_operand.vmem [shape: f32[1,128], index: 2, kind: input, shape index: {}]
  %s3 = inlined_call_operand.vmem [shape: bf16[2,8,8,128], index: 3, kind: output, shape index: {}]
  %s4 = sld [smem:[#allocation0]]
  $region45: #{_lambda_.3} parent=0
    _
  %s6 = ssub.s32 1, %s4
  %s7 = scalar_select 0, %s6, %s4
  loop: start=0, step=1, limit=4
  $region2: #{_lambda_.3} parent=0 // loop_pre_header
    _
  $region3: #{_lambda_.3} parent=0 // loop_header
    %s9 = sphi 0, %s13
    %p10 = scmp.ge.s32.totalorder %s9, 4
    %s16 = sphi 0, %s28
    %s17 = sphi 0, %s24
    %s18 = sphi 0, %s16
    %s19 = sphi 0, %s17
    %s20 = sphi 0, %s18
    %s21 = sphi 0, %s19
    %s33 = sphi 0, %s35
    %s36 = sphi 0, %s33
    %s37 = sphi 0, %s36
    %s53 = sphi 0, %s37
    %s57 = sphi 0, %s57
    %s59 = sphi 0, %s57
    %s60 = sphi 0, %s59
    %s74 = sphi 0, %s60
    %s78 = sphi 0, %s78
    %s80 = sphi 0, %s78
    %s81 = sphi 0, %s80
    %s95 = sphi 0, %s81
    %s103 = sphi 0, %s105
    %s106 = sphi 0, %s103
    %s107 = sphi 0, %s106
    %s123 = sphi 0, %s107
  $region4: #{_lambda_.3} parent=0 // loop_header_branch
    %12 = sbr.rel (%p10) target = $region8
  $region5: #{_lambda_.3} parent=0 // loop_body
    %s14 = ssub.s32 %s9, 1
    %s15 = ssub.s32 %s9, 2
    %s22 = sadd.s32 1, %s17
    %p23 = scmp.ge.s32.totalorder %s22, 1
    %s24 = scalar_select %p23, 0, %s22
    %s25 = sadd.s32 1, %s16
    %s26 = scalar_select %p23, %s25, %s16
    %p27 = scmp.ge.s32.totalorder %s26, 2
    %s28 = scalar_select %p27, 0, %s26
    %s29 = sadd.s32 %s16, %s17
    %s30 = sadd.s32 %s28, %s24
    %s31 = ssub.s32 %s29, %s30
    %p32 = scmp.eq.s32.totalorder %s31, 0
    %s34 = sadd.s32 %s33, 1
    %s35 = scalar_select %p32, %s33, %s34
    %p38 = pneg %p32
    %p39 = scmp.eq.s32.totalorder %s9, 1
    %p40 = por %p38, %p39
    %p41 = scmp.ne.s32.totalorder %s33, %s36
    %p42 = scmp.eq.s32.totalorder %s9, 0
    %p43 = por %p41, %p42
    %p44 = scmp.ne.s32.totalorder %s33, %s36
    %p45 = scmp.eq.s32.totalorder %s14, 1
    %p46 = por %p44, %p45
    %p47 = scmp.ne.s32.totalorder %s36, %s37
    %p48 = scmp.eq.s32.totalorder %s14, 0
    %p49 = por %p47, %p48
    %p50 = scmp.ne.s32.totalorder %s36, %s37
    %p51 = scmp.eq.s32.totalorder %s15, 1
    %p52 = por %p50, %p51
    %p54 = scmp.ne.s32.totalorder %s37, %s53
    %p55 = scmp.eq.s32.totalorder %s15, 0
    %p56 = por %p54, %p55
    %s58 = sadd.s32 %s57, 1
    %p61 = scmp.eq.s32.totalorder %s9, 1
    %p62 = scmp.ne.s32.totalorder %s57, %s59
    %p63 = scmp.eq.s32.totalorder %s9, 0
    %p64 = por %p62, %p63
    %p65 = scmp.ne.s32.totalorder %s57, %s59
    %p66 = scmp.eq.s32.totalorder %s14, 1
    %p67 = por %p65, %p66
    %p68 = scmp.ne.s32.totalorder %s59, %s60
    %p69 = scmp.eq.s32.totalorder %s14, 0
    %p70 = por %p68, %p69
    %p71 = scmp.ne.s32.totalorder %s59, %s60
    %p72 = scmp.eq.s32.totalorder %s15, 1
    %p73 = por %p71, %p72
    %p75 = scmp.ne.s32.totalorder %s60, %s74
    %p76 = scmp.eq.s32.totalorder %s15, 0
    %p77 = por %p75, %p76
    %s79 = sadd.s32 %s78, 1
    %p82 = scmp.eq.s32.totalorder %s9, 1
    %p83 = scmp.ne.s32.totalorder %s78, %s80
    %p84 = scmp.eq.s32.totalorder %s9, 0
    %p85 = por %p83, %p84
    %p86 = scmp.ne.s32.totalorder %s78, %s80
    %p87 = scmp.eq.s32.totalorder %s14, 1
    %p88 = por %p86, %p87
    %p89 = scmp.ne.s32.totalorder %s80, %s81
    %p90 = scmp.eq.s32.totalorder %s14, 0
    %p91 = por %p89, %p90
    %p92 = scmp.ne.s32.totalorder %s80, %s81
    %p93 = scmp.eq.s32.totalorder %s15, 1
    %p94 = por %p92, %p93
    %p96 = scmp.ne.s32.totalorder %s81, %s95
    %p97 = scmp.eq.s32.totalorder %s15, 0
    %p98 = por %p96, %p97
    %s99 = ssub.s32 %s16, %s28
    %s100 = ssub.s32 %s17, %s24
    %s101 = sor.u32 %s99, %s100
    %p102 = scmp.eq.s32.totalorder %s101, 0
    %s104 = sadd.s32 %s103, 1
    %s105 = scalar_select %p102, %s103, %s104
    %p108 = pneg %p102
    %p109 = scmp.eq.s32.totalorder %s9, 1
    %p110 = por %p108, %p109
    %p111 = scmp.ne.s32.totalorder %s103, %s106
    %p112 = scmp.eq.s32.totalorder %s9, 0
    %p113 = por %p111, %p112
    %p114 = scmp.ne.s32.totalorder %s103, %s106
    %p115 = scmp.eq.s32.totalorder %s14, 1
    %p116 = por %p114, %p115
    %p117 = scmp.ne.s32.totalorder %s106, %s107
    %p118 = scmp.eq.s32.totalorder %s14, 0
    %p119 = por %p117, %p118
    %p120 = scmp.ne.s32.totalorder %s106, %s107
    %p121 = scmp.eq.s32.totalorder %s15, 1
    %p122 = por %p120, %p121
    %p124 = scmp.ne.s32.totalorder %s107, %s123
    %p125 = scmp.eq.s32.totalorder %s15, 0
    %p126 = por %p124, %p125
    %p127 = scmp.le.s32.totalorder 1, %s9
    %p128 = scmp.lt.s32.totalorder %s9, 3
    %p129 = pnand %p127, %p128
    %p130 = pneg %p129
    // Predicated region
    $region9: #{_lambda_.3} parent=5 // pred_check
      _
    $region10: #{_lambda_.3} parent=5 // pred_check_branch
      %132 = sbr.rel (%p129) target = $region12
    $region11: #{_lambda_.3} parent=5 // pred_region
      %s133 = ssub.s32 %s9, 1
      // Predicated region
      $region13: #{_lambda_.3} parent=11 // pred_check
        %p134 = pneg %p70
      $region14: #{_lambda_.3} parent=11 // pred_check_branch
        %136 = sbr.rel (%p134) target = $region16
      $region15: #{_lambda_.3} parent=11 // pred_region
        _
      $region16: #{_lambda_.3} parent=11 // pred_fallthru
        _
      // Predicated region
      $region17: #{_lambda_.3} parent=11 // pred_check
        %p137 = pneg %p91
      $region18: #{_lambda_.3} parent=11 // pred_check_branch
        %139 = sbr.rel (%p137) target = $region20
      $region19: #{_lambda_.3} parent=11 // pred_region
        _
      $region20: #{_lambda_.3} parent=11 // pred_fallthru
        _
    $region12: #{_lambda_.3} parent=5 // pred_fallthru
      _
    %p140 = scmp.lt.s32.totalorder %s9, 2
    // Predicated region
    $region21: #{_lambda_.3} parent=5 // pred_check
      %p141 = pneg %p140
    $region22: #{_lambda_.3} parent=5 // pred_check_branch
      %143 = sbr.rel (%p141) target = $region24
    $region23: #{_lambda_.3} parent=5 // pred_region
      // Predicated region
      $region25: #{_lambda_.3} parent=23 // pred_check
        %p144 = pneg %p43
      $region26: #{_lambda_.3} parent=23 // pred_check_branch
        %146 = sbr.rel (%p144) target = $region28
      $region27: #{_lambda_.3} parent=23 // pred_region
        %s147 = sadd.s32 %s16, %s17
        %p148 = scmp.lt.s32.totalorder %s147, 1
        %s149 = scalar_select %p148, %s147, 1
        %s150 = smul.addr %s149, 54
        %s151 = smul.addr %s150, 4
        %s152 = scalar_lea.vmem %s0, %s151
        %s153 = sadd.s32 %s16, %s17
      $region28: #{_lambda_.3} parent=23 // pred_fallthru
        _
    $region24: #{_lambda_.3} parent=5 // pred_fallthru
      _
    %p154 = scmp.le.s32.totalorder 1, %s9
    %p155 = scmp.lt.s32.totalorder %s9, 3
    %p156 = pnand %p154, %p155
    %p157 = pneg %p156
    // Predicated region
    $region29: #{_lambda_.3} parent=5 // pred_check
      _
    $region30: #{_lambda_.3} parent=5 // pred_check_branch
      %159 = sbr.rel (%p156) target = $region32
    $region31: #{_lambda_.3} parent=5 // pred_region
      %s160 = ssub.s32 %s9, 1
      %s161 = sadd.s32 %s18, %s19
      %p162 = scmp.lt.s32.totalorder %s161, 1
      %s163 = scalar_select %p162, %s161, 1
      %s164 = smul.addr %s163, 54
      %s165 = smul.addr %s164, 4
      %s166 = scalar_lea.vmem %s0, %s165
      %p167 = pneg %p49
      %p168 = pneg %p46
      %p169 = pneg %p70
      %p170 = pneg %p67
      %p171 = pneg %p91
      %p172 = pneg %p88
      %p173 = pneg %p119
      %p174 = pneg %p116
      %s175 = smul.u32 8, %s19
      %p176 = scmp.lt.s32.totalorder %s18, 1
      %s177 = scalar_select %p176, %s18, 1
      %p178 = scmp.lt.s32.totalorder %s175, 7
      %s179 = scalar_select %p178, %s175, 7
      %s180 = smul.addr %s177, 8
      %s181 = sadd.s32 %s179, %s180
      %s182 = smul.addr %s181, 4
      %s183 = scalar_lea.vmem %s3, %s182
      %s184 = sadd.s32 %s18, %s19
      %p185 = scmp.lt.s32.totalorder %s184, 1
      %s186 = scalar_select %p185, %s184, 1
      %s187 = smul.addr %s186, 54
      %s188 = smul.addr %s187, 4
      %s189 = scalar_lea.vmem %s0, %s188
      %s190 = sadd.s32 %s18, %s19
      %s191 = smul.u32 8, %s19
      %p192 = scmp.lt.s32.totalorder %s18, 1
      %s193 = scalar_select %p192, %s18, 1
      %p194 = scmp.lt.s32.totalorder %s191, 7
      %s195 = scalar_select %p194, %s191, 7
      %s196 = smul.addr %s193, 8
      %s197 = sadd.s32 %s195, %s196
      %s198 = smul.addr %s197, 4
      %s199 = scalar_lea.vmem %s3, %s198
      %s200 = smul.u32 8, %s19
      %v202 = vld [vmem:[%s189] sm:$0xf]
      %v203 = vld [vmem:[%s189 + $0x4] sm:$0xf]
      %v204 = vld [vmem:[%s189 + $0x8] sm:$0x1]
      %v205 = vld [vmem:[%s189 + $0xc] sm:$0xf]
      %v206 = vld [vmem:[%s189 + $0x10] sm:$0xf]
      %v207 = vld [vmem:[%s189 + $0x14] sm:$0x1]
      %v208 = vld [vmem:[%s189 + $0x18] sm:$0xf]
      %v209 = vld [vmem:[%s189 + $0x1c] sm:$0xf]
      %v210 = vld [vmem:[%s189 + $0x20] sm:$0x1]
      %v211 = vld [vmem:[%s189 + $0x24] sm:$0xf]
      %v212 = vld [vmem:[%s189 + $0x28] sm:$0xf]
      %v213 = vld [vmem:[%s189 + $0x2c] sm:$0x1]
      %v214 = vld [vmem:[%s189 + $0x30] sm:$0xf]
      %v215 = vld [vmem:[%s189 + $0x34] sm:$0xf]
      %v216 = vld [vmem:[%s189 + $0x38] sm:$0x1]
      %v217 = vld [vmem:[%s189 + $0x3c] sm:$0xf]
      %v218 = vld [vmem:[%s189 + $0x40] sm:$0xf]
      %v219 = vld [vmem:[%s189 + $0x44] sm:$0x1]
      %v220 = vld [vmem:[%s189 + $0x48] sm:$0xf]
      %v221 = vld [vmem:[%s189 + $0x4c] sm:$0xf]
      %v222 = vld [vmem:[%s189 + $0x50] sm:$0x1]
      %v223 = vld [vmem:[%s189 + $0x54] sm:$0xf]
      %v224 = vld [vmem:[%s189 + $0x58] sm:$0xf]
      %v225 = vld [vmem:[%s189 + $0x5c] sm:$0x1]
      %v226 = vld [vmem:[%s189 + $0x60] sm:$0xf]
      %v227 = vld [vmem:[%s189 + $0x64] sm:$0xf]
      %v228 = vld [vmem:[%s189 + $0x68] sm:$0x1]
      %v229 = vld [vmem:[%s189 + $0x6c] sm:$0xf]
      %v230 = vld [vmem:[%s189 + $0x70] sm:$0xf]
      %v231 = vld [vmem:[%s189 + $0x74] sm:$0x1]
      %v232 = vld [vmem:[%s189 + $0x78] sm:$0xf]
      %v233 = vld [vmem:[%s189 + $0x7c] sm:$0xf]
      %v234 = vld [vmem:[%s189 + $0x80] sm:$0x1]
      %v235 = vld [vmem:[%s189 + $0x84] sm:$0xf]
      %v236 = vld [vmem:[%s189 + $0x88] sm:$0xf]
      %v237 = vld [vmem:[%s189 + $0x8c] sm:$0x1]
      %v238 = vld [vmem:[%s189 + $0x90] sm:$0xf]
      %v239 = vld [vmem:[%s189 + $0x94] sm:$0xf]
      %v240 = vld [vmem:[%s189 + $0x98] sm:$0x1]
      %v241 = vld [vmem:[%s189 + $0x9c] sm:$0xf]
      %v242 = vld [vmem:[%s189 + $0xa0] sm:$0xf]
      %v243 = vld [vmem:[%s189 + $0xa4] sm:$0x1]
      %v244 = vld [vmem:[%s189 + $0xa8] sm:$0xf]
      %v245 = vld [vmem:[%s189 + $0xac] sm:$0xf]
      %v246 = vld [vmem:[%s189 + $0xb0] sm:$0x1]
      %v247 = vld [vmem:[%s189 + $0xb4] sm:$0xf]
      %v248 = vld [vmem:[%s189 + $0xb8] sm:$0xf]
      %v249 = vld [vmem:[%s189 + $0xbc] sm:$0x1]
      %v250 = vld [vmem:[%s189 + $0xc0] sm:$0xf]
      %v251 = vld [vmem:[%s189 + $0xc4] sm:$0xf]
      %v252 = vld [vmem:[%s189 + $0xc8] sm:$0x1]
      %v253 = vld [vmem:[%s189 + $0xcc] sm:$0xf]
      %v254 = vld [vmem:[%s189 + $0xd0] sm:$0xf]
      %v255 = vld [vmem:[%s189 + $0xd4] sm:$0x1]
      %v288 = vunpack.c.l.b16 %v202
      %v289 = vunpack.c.l.b16 %v203
      %v290 = vunpack.c.l.b16 %v205
      %v291 = vunpack.c.l.b16 %v206
      %v292 = vunpack.c.l.b16 %v208
      %v293 = vunpack.c.l.b16 %v209
      %v294 = vunpack.c.l.b16 %v211
      %v295 = vunpack.c.l.b16 %v212
      %v296 = vunpack.c.l.b16 %v214
      %v297 = vunpack.c.l.b16 %v215
      %v298 = vunpack.c.l.b16 %v217
      %v299 = vunpack.c.l.b16 %v218
      %v300 = vunpack.c.l.b16 %v220
      %v301 = vunpack.c.l.b16 %v221
      %v302 = vunpack.c.l.b16 %v223
      %v303 = vunpack.c.l.b16 %v224
      %v304 = vunpack.c.l.b16 %v226
      %v305 = vunpack.c.l.b16 %v227
      %v306 = vunpack.c.l.b16 %v229
      %v307 = vunpack.c.l.b16 %v230
      %v308 = vunpack.c.l.b16 %v232
      %v309 = vunpack.c.l.b16 %v233
      %v310 = vunpack.c.l.b16 %v235
      %v311 = vunpack.c.l.b16 %v236
      %v312 = vunpack.c.l.b16 %v238
      %v313 = vunpack.c.l.b16 %v239
      %v314 = vunpack.c.l.b16 %v241
      %v315 = vunpack.c.l.b16 %v242
      %v316 = vunpack.c.l.b16 %v244
      %v317 = vunpack.c.l.b16 %v245
      %v318 = vunpack.c.l.b16 %v247
      %v319 = vunpack.c.l.b16 %v248
      %v320 = vpack.c.b16 %v289, %v288
      %v321 = vpack.c.b16 %v291, %v290
      %v322 = vpack.c.b16 %v293, %v292
      %v323 = vpack.c.b16 %v295, %v294
      %v324 = vpack.c.b16 %v297, %v296
      %v325 = vpack.c.b16 %v299, %v298
      %v326 = vpack.c.b16 %v301, %v300
      %v327 = vpack.c.b16 %v303, %v302
      %v328 = vpack.c.b16 %v305, %v304
      %v329 = vpack.c.b16 %v307, %v306
      %v330 = vpack.c.b16 %v309, %v308
      %v331 = vpack.c.b16 %v311, %v310
      %v332 = vpack.c.b16 %v313, %v312
      %v333 = vpack.c.b16 %v315, %v314
      %v334 = vpack.c.b16 %v317, %v316
      %v335 = vpack.c.b16 %v319, %v318
      %v368 = vunpack.c.l.b16 %v204
      %v369 = vunpack.c.l.b16 %v207
      %v370 = vunpack.c.l.b16 %v210
      %v371 = vunpack.c.l.b16 %v213
      %v372 = vunpack.c.l.b16 %v216
      %v373 = vunpack.c.l.b16 %v219
      %v374 = vunpack.c.l.b16 %v222
      %v375 = vunpack.c.l.b16 %v225
      %v376 = vunpack.c.l.b16 %v228
      %v377 = vunpack.c.l.b16 %v231
      %v378 = vunpack.c.l.b16 %v234
      %v379 = vunpack.c.l.b16 %v237
      %v380 = vunpack.c.l.b16 %v240
      %v381 = vunpack.c.l.b16 %v243
      %v382 = vunpack.c.l.b16 %v246
      %v383 = vunpack.c.l.b16 %v249
      %v384 = vpack.c.b16 %v368, %v368
      %v385 = vpack.c.b16 %v369, %v369
      %v386 = vpack.c.b16 %v370, %v370
      %v387 = vpack.c.b16 %v371, %v371
      %v388 = vpack.c.b16 %v372, %v372
      %v389 = vpack.c.b16 %v373, %v373
      %v390 = vpack.c.b16 %v374, %v374
      %v391 = vpack.c.b16 %v375, %v375
      %v392 = vpack.c.b16 %v376, %v376
      %v393 = vpack.c.b16 %v377, %v377
      %v394 = vpack.c.b16 %v378, %v378
      %v395 = vpack.c.b16 %v379, %v379
      %v396 = vpack.c.b16 %v380, %v380
      %v397 = vpack.c.b16 %v381, %v381
      %v398 = vpack.c.b16 %v382, %v382
      %v399 = vpack.c.b16 %v383, %v383
      %vm400 = vsmask.f32 7424
      %v402 = vshrl.u32 %v320, 16
      %v404 = vshll.u32 %v320, 16
      %v406 = vrot.slane %v404, 1
      %v407 = vor.u32 %v402, %v406
      %v409 = vshll.u32 %v384, 16
      %v411 = vrot.slane %v409, 1
      %v412 = vsel %vm400, %v407, %v411
      %v414 = vshrl.u32 %v321, 16
      %v416 = vshll.u32 %v321, 16
      %v418 = vrot.slane %v416, 1
      %v419 = vor.u32 %v414, %v418
      %v421 = vshll.u32 %v385, 16
      %v423 = vrot.slane %v421, 1
      %v424 = vsel %vm400, %v419, %v423
      %v426 = vshrl.u32 %v322, 16
      %v428 = vshll.u32 %v322, 16
      %v430 = vrot.slane %v428, 1
      %v431 = vor.u32 %v426, %v430
      %v433 = vshll.u32 %v386, 16
      %v435 = vrot.slane %v433, 1
      %v436 = vsel %vm400, %v431, %v435
      %v438 = vshrl.u32 %v323, 16
      %v440 = vshll.u32 %v323, 16
      %v442 = vrot.slane %v440, 1
      %v443 = vor.u32 %v438, %v442
      %v445 = vshll.u32 %v387, 16
      %v447 = vrot.slane %v445, 1
      %v448 = vsel %vm400, %v443, %v447
      %v450 = vshrl.u32 %v324, 16
      %v452 = vshll.u32 %v324, 16
      %v454 = vrot.slane %v452, 1
      %v455 = vor.u32 %v450, %v454
      %v457 = vshll.u32 %v388, 16
      %v459 = vrot.slane %v457, 1
      %v460 = vsel %vm400, %v455, %v459
      %v462 = vshrl.u32 %v325, 16
      %v464 = vshll.u32 %v325, 16
      %v466 = vrot.slane %v464, 1
      %v467 = vor.u32 %v462, %v466
      %v469 = vshll.u32 %v389, 16
      %v471 = vrot.slane %v469, 1
      %v472 = vsel %vm400, %v467, %v471
      %v474 = vshrl.u32 %v326, 16
      %v476 = vshll.u32 %v326, 16
      %v478 = vrot.slane %v476, 1
      %v479 = vor.u32 %v474, %v478
      %v481 = vshll.u32 %v390, 16
      %v483 = vrot.slane %v481, 1
      %v484 = vsel %vm400, %v479, %v483
      %v486 = vshrl.u32 %v327, 16
      %v488 = vshll.u32 %v327, 16
      %v490 = vrot.slane %v488, 1
      %v491 = vor.u32 %v486, %v490
      %v493 = vshll.u32 %v391, 16
      %v495 = vrot.slane %v493, 1
      %v496 = vsel %vm400, %v491, %v495
      %v498 = vshrl.u32 %v328, 16
      %v500 = vshll.u32 %v328, 16
      %v502 = vrot.slane %v500, 1
      %v503 = vor.u32 %v498, %v502
      %v505 = vshll.u32 %v392, 16
      %v507 = vrot.slane %v505, 1
      %v508 = vsel %vm400, %v503, %v507
      %v510 = vshrl.u32 %v329, 16
      %v512 = vshll.u32 %v329, 16
      %v514 = vrot.slane %v512, 1
      %v515 = vor.u32 %v510, %v514
      %v517 = vshll.u32 %v393, 16
      %v519 = vrot.slane %v517, 1
      %v520 = vsel %vm400, %v515, %v519
      %v522 = vshrl.u32 %v330, 16
      %v524 = vshll.u32 %v330, 16
      %v526 = vrot.slane %v524, 1
      %v527 = vor.u32 %v522, %v526
      %v529 = vshll.u32 %v394, 16
      %v531 = vrot.slane %v529, 1
      %v532 = vsel %vm400, %v527, %v531
      %v534 = vshrl.u32 %v331, 16
      %v536 = vshll.u32 %v331, 16
      %v538 = vrot.slane %v536, 1
      %v539 = vor.u32 %v534, %v538
      %v541 = vshll.u32 %v395, 16
      %v543 = vrot.slane %v541, 1
      %v544 = vsel %vm400, %v539, %v543
      %v546 = vshrl.u32 %v332, 16
      %v548 = vshll.u32 %v332, 16
      %v550 = vrot.slane %v548, 1
      %v551 = vor.u32 %v546, %v550
      %v553 = vshll.u32 %v396, 16
      %v555 = vrot.slane %v553, 1
      %v556 = vsel %vm400, %v551, %v555
      %v558 = vshrl.u32 %v333, 16
      %v560 = vshll.u32 %v333, 16
      %v562 = vrot.slane %v560, 1
      %v563 = vor.u32 %v558, %v562
      %v565 = vshll.u32 %v397, 16
      %v567 = vrot.slane %v565, 1
      %v568 = vsel %vm400, %v563, %v567
      %v570 = vshrl.u32 %v334, 16
      %v572 = vshll.u32 %v334, 16
      %v574 = vrot.slane %v572, 1
      %v575 = vor.u32 %v570, %v574
      %v577 = vshll.u32 %v398, 16
      %v579 = vrot.slane %v577, 1
      %v580 = vsel %vm400, %v575, %v579
      %v582 = vshrl.u32 %v335, 16
      %v584 = vshll.u32 %v335, 16
      %v586 = vrot.slane %v584, 1
      %v587 = vor.u32 %v582, %v586
      %v589 = vshll.u32 %v399, 16
      %v591 = vrot.slane %v589, 1
      %v592 = vsel %vm400, %v587, %v591
      %vm609 = vcmask 1046528
      %v610 = vrot.slane %v320, 1
      %v611 = vrot.slane %v384, 1
      %v612 = vsel %vm609, %v610, %v611
      %v613 = vrot.slane %v321, 1
      %v614 = vrot.slane %v385, 1
      %v615 = vsel %vm609, %v613, %v614
      %v616 = vrot.slane %v322, 1
      %v617 = vrot.slane %v386, 1
      %v618 = vsel %vm609, %v616, %v617
      %v619 = vrot.slane %v323, 1
      %v620 = vrot.slane %v387, 1
      %v621 = vsel %vm609, %v619, %v620
      %v622 = vrot.slane %v324, 1
      %v623 = vrot.slane %v388, 1
      %v624 = vsel %vm609, %v622, %v623
      %v625 = vrot.slane %v325, 1
      %v626 = vrot.slane %v389, 1
      %v627 = vsel %vm609, %v625, %v626
      %v628 = vrot.slane %v326, 1
      %v629 = vrot.slane %v390, 1
      %v630 = vsel %vm609, %v628, %v629
      %v631 = vrot.slane %v327, 1
      %v632 = vrot.slane %v391, 1
      %v633 = vsel %vm609, %v631, %v632
      %v634 = vrot.slane %v328, 1
      %v635 = vrot.slane %v392, 1
      %v636 = vsel %vm609, %v634, %v635
      %v637 = vrot.slane %v329, 1
      %v638 = vrot.slane %v393, 1
      %v639 = vsel %vm609, %v637, %v638
      %v640 = vrot.slane %v330, 1
      %v641 = vrot.slane %v394, 1
      %v642 = vsel %vm609, %v640, %v641
      %v643 = vrot.slane %v331, 1
      %v644 = vrot.slane %v395, 1
      %v645 = vsel %vm609, %v643, %v644
      %v646 = vrot.slane %v332, 1
      %v647 = vrot.slane %v396, 1
      %v648 = vsel %vm609, %v646, %v647
      %v649 = vrot.slane %v333, 1
      %v650 = vrot.slane %v397, 1
      %v651 = vsel %vm609, %v649, %v650
      %v652 = vrot.slane %v334, 1
      %v653 = vrot.slane %v398, 1
      %v654 = vsel %vm609, %v652, %v653
      %v655 = vrot.slane %v335, 1
      %v656 = vrot.slane %v399, 1
      %v657 = vsel %vm609, %v655, %v656
      %v674 = vld [vmem:[%s1] sm:$0xf]
      %v675 = vld [vmem:[%s1 + $0x4] sm:$0xf]
      %v676 = vld [vmem:[%s1 + $0x8] sm:$0xf]
      %v677 = vld [vmem:[%s1 + $0xc] sm:$0xf]
      %v678 = vld [vmem:[%s1 + $0x10] sm:$0xf]
      %v679 = vld [vmem:[%s1 + $0x14] sm:$0xf]
      %v680 = vld [vmem:[%s1 + $0x18] sm:$0xf]
      %v681 = vld [vmem:[%s1 + $0x1c] sm:$0xf]
      %v682 = vld [vmem:[%s1 + $0x20] sm:$0xf]
      %v683 = vld [vmem:[%s1 + $0x24] sm:$0xf]
      %v684 = vld [vmem:[%s1 + $0x28] sm:$0xf]
      %v685 = vld [vmem:[%s1 + $0x2c] sm:$0xf]
      %v686 = vld [vmem:[%s1 + $0x30] sm:$0xf]
      %v687 = vld [vmem:[%s1 + $0x34] sm:$0xf]
      %v688 = vld [vmem:[%s1 + $0x38] sm:$0xf]
      %v689 = vld [vmem:[%s1 + $0x3c] sm:$0xf]
      %v690 = vld [vmem:[%s1 + $0x40] sm:$0xf]
      %v691 = vld [vmem:[%s1 + $0x44] sm:$0xf]
      %v692 = vld [vmem:[%s1 + $0x48] sm:$0xf]
      %v693 = vld [vmem:[%s1 + $0x4c] sm:$0xf]
      %v694 = vld [vmem:[%s1 + $0x50] sm:$0xf]
      %v695 = vld [vmem:[%s1 + $0x54] sm:$0xf]
      %v696 = vld [vmem:[%s1 + $0x58] sm:$0xf]
      %v697 = vld [vmem:[%s1 + $0x5c] sm:$0xf]
      %v698 = vld [vmem:[%s1 + $0x60] sm:$0xf]
      %v699 = vld [vmem:[%s1 + $0x64] sm:$0xf]
      %v700 = vld [vmem:[%s1 + $0x68] sm:$0xf]
      %v701 = vld [vmem:[%s1 + $0x6c] sm:$0xf]
      %v702 = vld [vmem:[%s1 + $0x70] sm:$0xf]
      %v703 = vld [vmem:[%s1 + $0x74] sm:$0xf]
      %v704 = vld [vmem:[%s1 + $0x78] sm:$0xf]
      %v705 = vld [vmem:[%s1 + $0x7c] sm:$0xf]
      %v706 = vld [vmem:[%s1 + $0x80] sm:$0xf]
      %v707 = vld [vmem:[%s1 + $0x84] sm:$0xf]
      %v708 = vld [vmem:[%s1 + $0x88] sm:$0xf]
      %v709 = vld [vmem:[%s1 + $0x8c] sm:$0xf]
      %v710 = vld [vmem:[%s1 + $0x90] sm:$0xf]
      %v711 = vld [vmem:[%s1 + $0x94] sm:$0xf]
      %v712 = vld [vmem:[%s1 + $0x98] sm:$0xf]
      %v713 = vld [vmem:[%s1 + $0x9c] sm:$0xf]
      %v714 = vld [vmem:[%s1 + $0xa0] sm:$0xf]
      %v715 = vld [vmem:[%s1 + $0xa4] sm:$0xf]
      %v716 = vld [vmem:[%s1 + $0xa8] sm:$0xf]
      %v717 = vld [vmem:[%s1 + $0xac] sm:$0xf]
      %v718 = vld [vmem:[%s1 + $0xb0] sm:$0xf]
      %v719 = vld [vmem:[%s1 + $0xb4] sm:$0xf]
      %v720 = vld [vmem:[%s1 + $0xb8] sm:$0xf]
      %v721 = vld [vmem:[%s1 + $0xbc] sm:$0xf]
      %v724 = vunpack.c.l.b16 %v250
      %v725 = vunpack.c.l.b16 %v251
      %v726 = vpack.c.b16 %v725, %v724
      %v729 = vunpack.c.l.b16 %v252
      %v730 = vpack.c.b16 %v729, %v729
      %v732 = vshrl.u32 %v726, 16
      %v734 = vshll.u32 %v726, 16
      %v736 = vrot.slane %v734, 1
      %v737 = vor.u32 %v732, %v736
      %v739 = vshll.u32 %v730, 16
      %v741 = vrot.slane %v739, 1
      %v742 = vsel %vm400, %v737, %v741
      %v744 = vrot.slane %v726, 1
      %v745 = vrot.slane %v730, 1
      %v746 = vsel %vm609, %v744, %v745
      %v748 = vld [vmem:[%s1 + $0xc0] sm:$0xf]
      %v749 = vld [vmem:[%s1 + $0xc4] sm:$0xf]
      %v750 = vld [vmem:[%s1 + $0xc8] sm:$0xf]
      %v751 = vld [vmem:[%s1 + $0xcc] sm:$0xf]
      %v752 = vld [vmem:[%s1 + $0xd0] sm:$0xf]
      %v753 = vld [vmem:[%s1 + $0xd4] sm:$0xf]
      %v754 = vld [vmem:[%s1 + $0xd8] sm:$0xf]
      %v755 = vld [vmem:[%s1 + $0xdc] sm:$0xf]
      %v756 = vld [vmem:[%s1 + $0xe0] sm:$0xf]
      %v757 = vld [vmem:[%s1 + $0xe4] sm:$0xf]
      %v758 = vld [vmem:[%s1 + $0xe8] sm:$0xf]
      %v759 = vld [vmem:[%s1 + $0xec] sm:$0xf]
      %v760 = vld [vmem:[%s1 + $0xf0] sm:$0xf]
      %v761 = vld [vmem:[%s1 + $0xf4] sm:$0xf]
      %v762 = vld [vmem:[%s1 + $0xf8] sm:$0xf]
      %v763 = vld [vmem:[%s1 + $0xfc] sm:$0xf]
      %v764 = vld [vmem:[%s1 + $0x100] sm:$0xf]
      %v765 = vld [vmem:[%s1 + $0x104] sm:$0xf]
      %v766 = vld [vmem:[%s1 + $0x108] sm:$0xf]
      %v767 = vld [vmem:[%s1 + $0x10c] sm:$0xf]
      %v768 = vld [vmem:[%s1 + $0x110] sm:$0xf]
      %v769 = vld [vmem:[%s1 + $0x114] sm:$0xf]
      %v770 = vld [vmem:[%s1 + $0x118] sm:$0xf]
      %v771 = vld [vmem:[%s1 + $0x11c] sm:$0xf]
      %v772 = vld [vmem:[%s1 + $0x120] sm:$0xf]
      %v773 = vld [vmem:[%s1 + $0x124] sm:$0xf]
      %v774 = vld [vmem:[%s1 + $0x128] sm:$0xf]
      %v775 = vld [vmem:[%s1 + $0x12c] sm:$0xf]
      %v776 = vld [vmem:[%s1 + $0x130] sm:$0xf]
      %v777 = vld [vmem:[%s1 + $0x134] sm:$0xf]
      %v778 = vld [vmem:[%s1 + $0x138] sm:$0xf]
      %v779 = vld [vmem:[%s1 + $0x13c] sm:$0xf]
      %v780 = vld [vmem:[%s1 + $0x140] sm:$0xf]
      %v781 = vld [vmem:[%s1 + $0x144] sm:$0xf]
      %v782 = vld [vmem:[%s1 + $0x148] sm:$0xf]
      %v783 = vld [vmem:[%s1 + $0x14c] sm:$0xf]
      %v784 = vld [vmem:[%s1 + $0x150] sm:$0xf]
      %v785 = vld [vmem:[%s1 + $0x154] sm:$0xf]
      %v786 = vld [vmem:[%s1 + $0x158] sm:$0xf]
      %v787 = vld [vmem:[%s1 + $0x15c] sm:$0xf]
      %v788 = vld [vmem:[%s1 + $0x160] sm:$0xf]
      %v789 = vld [vmem:[%s1 + $0x164] sm:$0xf]
      %v790 = vld [vmem:[%s1 + $0x168] sm:$0xf]
      %v791 = vld [vmem:[%s1 + $0x16c] sm:$0xf]
      %v792 = vld [vmem:[%s1 + $0x170] sm:$0xf]
      %v793 = vld [vmem:[%s1 + $0x174] sm:$0xf]
      %v794 = vld [vmem:[%s1 + $0x178] sm:$0xf]
      %v795 = vld [vmem:[%s1 + $0x17c] sm:$0xf]
      %v844 = vunpack.c.l.b16 %v748
      %v845 = vunpack.c.l.b16 %v749
      %v846 = vunpack.c.l.b16 %v750
      %v847 = vunpack.c.l.b16 %v751
      %v848 = vunpack.c.l.b16 %v752
      %v849 = vunpack.c.l.b16 %v753
      %v850 = vunpack.c.l.b16 %v754
      %v851 = vunpack.c.l.b16 %v755
      %v852 = vunpack.c.l.b16 %v756
      %v853 = vunpack.c.l.b16 %v757
      %v854 = vunpack.c.l.b16 %v758
      %v855 = vunpack.c.l.b16 %v759
      %v856 = vunpack.c.l.b16 %v760
      %v857 = vunpack.c.l.b16 %v761
      %v858 = vunpack.c.l.b16 %v762
      %v859 = vunpack.c.l.b16 %v763
      %v860 = vunpack.c.l.b16 %v764
      %v861 = vunpack.c.l.b16 %v765
      %v862 = vunpack.c.l.b16 %v766
      %v863 = vunpack.c.l.b16 %v767
      %v864 = vunpack.c.l.b16 %v768
      %v865 = vunpack.c.l.b16 %v769
      %v866 = vunpack.c.l.b16 %v770
      %v867 = vunpack.c.l.b16 %v771
      %v868 = vunpack.c.l.b16 %v772
      %v869 = vunpack.c.l.b16 %v773
      %v870 = vunpack.c.l.b16 %v774
      %v871 = vunpack.c.l.b16 %v775
      %v872 = vunpack.c.l.b16 %v776
      %v873 = vunpack.c.l.b16 %v777
      %v874 = vunpack.c.l.b16 %v778
      %v875 = vunpack.c.l.b16 %v779
      %v876 = vunpack.c.l.b16 %v780
      %v877 = vunpack.c.l.b16 %v781
      %v878 = vunpack.c.l.b16 %v782
      %v879 = vunpack.c.l.b16 %v783
      %v880 = vunpack.c.l.b16 %v784
      %v881 = vunpack.c.l.b16 %v785
      %v882 = vunpack.c.l.b16 %v786
      %v883 = vunpack.c.l.b16 %v787
      %v884 = vunpack.c.l.b16 %v788
      %v885 = vunpack.c.l.b16 %v789
      %v886 = vunpack.c.l.b16 %v790
      %v887 = vunpack.c.l.b16 %v791
      %v888 = vunpack.c.l.b16 %v792
      %v889 = vunpack.c.l.b16 %v793
      %v890 = vunpack.c.l.b16 %v794
      %v891 = vunpack.c.l.b16 %v795
      %v892 = vpack.c.b16 %v845, %v844
      %v893 = vpack.c.b16 %v847, %v846
      %v894 = vpack.c.b16 %v849, %v848
      %v895 = vpack.c.b16 %v851, %v850
      %v896 = vpack.c.b16 %v853, %v852
      %v897 = vpack.c.b16 %v855, %v854
      %v898 = vpack.c.b16 %v857, %v856
      %v899 = vpack.c.b16 %v859, %v858
      %v900 = vpack.c.b16 %v861, %v860
      %v901 = vpack.c.b16 %v863, %v862
      %v902 = vpack.c.b16 %v865, %v864
      %v903 = vpack.c.b16 %v867, %v866
      %v904 = vpack.c.b16 %v869, %v868
      %v905 = vpack.c.b16 %v871, %v870
      %v906 = vpack.c.b16 %v873, %v872
      %v907 = vpack.c.b16 %v875, %v874
      %v908 = vpack.c.b16 %v877, %v876
      %v909 = vpack.c.b16 %v879, %v878
      %v910 = vpack.c.b16 %v881, %v880
      %v911 = vpack.c.b16 %v883, %v882
      %v912 = vpack.c.b16 %v885, %v884
      %v913 = vpack.c.b16 %v887, %v886
      %v914 = vpack.c.b16 %v889, %v888
      %v915 = vpack.c.b16 %v891, %v890
      %940 = vmatprep.subr.bf16.mxu0 0
      %941 = vmatpush1.bf16.msra.mxu0 %v892
      %942 = vmatprep.subr.bf16.mxu0 0
      %943 = vmatpush1.bf16.msra.mxu0 %v893
      %944 = vmatprep.subr.bf16.mxu0 0
      %945 = vmatpush1.bf16.msra.mxu0 %v894
      %946 = vmatprep.subr.bf16.mxu0 0
      %947 = vmatpush1.bf16.msra.mxu0 %v895
      %948 = vmatprep.subr.bf16.mxu0 0
      %949 = vmatpush1.bf16.msra.mxu0 %v896
      %950 = vmatprep.subr.bf16.mxu0 0
      %951 = vmatpush1.bf16.msra.mxu0 %v897
      %952 = vmatprep.subr.bf16.mxu0 0
      %953 = vmatpush1.bf16.msra.mxu0 %v898
      %954 = vmatprep.subr.bf16.mxu0 0
      %955 = vmatpush1.bf16.msra.mxu0 %v899
      %956 = vmatprep.subr.bf16.mxu0 0
      %957 = vmatpush1.bf16.msra.mxu0 %v900
      %958 = vmatprep.subr.bf16.mxu0 0
      %959 = vmatpush1.bf16.msra.mxu0 %v901
      %960 = vmatprep.subr.bf16.mxu0 0
      %961 = vmatpush1.bf16.msra.mxu0 %v902
      %962 = vmatprep.subr.bf16.mxu0 0
      %963 = vmatpush1.bf16.msra.mxu0 %v903
      %964 = vmatprep.subr.bf16.mxu0 0
      %965 = vmatpush1.bf16.msra.mxu0 %v904
      %966 = vmatprep.subr.bf16.mxu0 0
      %967 = vmatpush1.bf16.msra.mxu0 %v905
      %968 = vmatprep.subr.bf16.mxu0 0
      %969 = vmatpush1.bf16.msra.mxu0 %v906
      %970 = vmatprep.subr.bf16.mxu0 0
      %971 = vmatpush1.bf16.msra.mxu0 %v907
      %972 = vmatprep.mubr.bf16.mxu0 %v424
      %973 = vmatmul.mubr.bf16.gmra.mrb[0].mxu0 %v321
      %v974 = vpop.f32.mrb[0].mxu0
      %v975 = vadd.f32 0.0, %v974
      %v976 = vpop.f32.mrb[0].mxu0
      %v977 = vpop.f32.mrb[0].mxu0
      %v978 = vadd.f32 0.0, %v977
      %v979 = vpop.f32.mrb[0].mxu0
      %980 = vmatprep.mubr.bf16.mxu0 %v436
      %981 = vmatmul.mubr.bf16.gmra.mrb[0].mxu0 %v322
      %v982 = vpop.f32.mrb[0].mxu0
      %v983 = vadd.f32 0.0, %v982
      %v984 = vpop.f32.mrb[0].mxu0
      %v985 = vpop.f32.mrb[0].mxu0
      %v986 = vadd.f32 0.0, %v985
      %v987 = vpop.f32.mrb[0].mxu0
      %988 = vmatprep.mubr.bf16.mxu0 %v448
      %989 = vmatmul.mubr.bf16.gmra.mrb[0].mxu0 %v323
      %v990 = vpop.f32.mrb[0].mxu0
      %v991 = vadd.f32 0.0, %v990
      %v992 = vpop.f32.mrb[0].mxu0
      %v993 = vpop.f32.mrb[0].mxu0
      %v994 = vadd.f32 0.0, %v993
      %v995 = vpop.f32.mrb[0].mxu0
      %996 = vmatprep.mubr.bf16.mxu0 %v460
      %997 = vmatmul.mubr.bf16.gmra.mrb[0].mxu0 %v324
      %v998 = vpop.f32.mrb[0].mxu0
      %v999 = vadd.f32 0.0, %v998
      %v1000 = vpop.f32.mrb[0].mxu0
      %v1001 = vpop.f32.mrb[0].mxu0
      %v1002 = vadd.f32 0.0, %v1001
      %v1003 = vpop.f32.mrb[0].mxu0
      %1004 = vmatprep.mubr.bf16.mxu0 %v472
      %1005 = vmatmul.mubr.bf16.gmra.mrb[0].mxu0 %v325
      %v1006 = vpop.f32.mrb[0].mxu0
      %v1007 = vadd.f32 0.0, %v1006
      %v1008 = vpop.f32.mrb[0].mxu0
      %v1009 = vpop.f32.mrb[0].mxu0
      %v1010 = vadd.f32 0.0, %v1009
      %v1011 = vpop.f32.mrb[0].mxu0
      %1012 = vmatprep.mubr.bf16.mxu0 %v484
      %1013 = vmatmul.mubr.bf16.gmra.mrb[0].mxu0 %v326
      %v1014 = vpop.f32.mrb[0].mxu0
      %v1015 = vadd.f32 0.0, %v1014
      %v1016 = vpop.f32.mrb[0].mxu0
      %v1017 = vpop.f32.mrb[0].mxu0
      %v1018 = vadd.f32 0.0, %v1017
      %v1019 = vpop.f32.mrb[0].mxu0
      %1020 = vmatprep.mubr.bf16.mxu0 %v496
      %1021 = vmatmul.mubr.bf16.gmra.mrb[0].mxu0 %v327
      %v1022 = vpop.f32.mrb[0].mxu0
      %v1023 = vadd.f32 0.0, %v1022
      %v1024 = vpop.f32.mrb[0].mxu0
      %v1025 = vpop.f32.mrb[0].mxu0
      %v1026 = vadd.f32 0.0, %v1025
      %v1027 = vpop.f32.mrb[0].mxu0
      %1028 = vmatprep.mubr.bf16.mxu0 %v508
      %1029 = vmatmul.mubr.bf16.gmra.mrb[0].mxu0 %v328
      %v1030 = vpop.f32.mrb[0].mxu0
      %v1031 = vadd.f32 0.0, %v1030
      %v1032 = vpop.f32.mrb[0].mxu0
      %v1033 = vpop.f32.mrb[0].mxu0
      %v1034 = vadd.f32 0.0, %v1033
      %v1035 = vpop.f32.mrb[0].mxu0
      %1036 = vmatprep.mubr.bf16.mxu0 %v520
      %1037 = vmatmul.mubr.bf16.gmra.mrb[0].mxu0 %v329
      %v1038 = vpop.f32.mrb[0].mxu0
      %v1039 = vadd.f32 0.0, %v1038
      %v1040 = vpop.f32.mrb[0].mxu0
      %v1041 = vpop.f32.mrb[0].mxu0
      %v1042 = vadd.f32 0.0, %v1041
      %v1043 = vpop.f32.mrb[0].mxu0
      %1044 = vmatprep.mubr.bf16.mxu0 %v532
      %1045 = vmatmul.mubr.bf16.gmra.mrb[0].mxu0 %v330
      %v1046 = vpop.f32.mrb[0].mxu0
      %v1047 = vadd.f32 0.0, %v1046
      %v1048 = vpop.f32.mrb[0].mxu0
      %v1049 = vpop.f32.mrb[0].mxu0
      %v1050 = vadd.f32 0.0, %v1049
      %v1051 = vpop.f32.mrb[0].mxu0
      %1052 = vmatprep.mubr.bf16.mxu0 %v544
      %1053 = vmatmul.mubr.bf16.gmra.mrb[0].mxu0 %v331
      %v1054 = vpop.f32.mrb[0].mxu0
      %v1055 = vadd.f32 0.0, %v1054
      %v1056 = vpop.f32.mrb[0].mxu0
      %v1057 = vpop.f32.mrb[0].mxu0
      %v1058 = vadd.f32 0.0, %v1057
      %v1059 = vpop.f32.mrb[0].mxu0
      %1060 = vmatprep.mubr.bf16.mxu0 %v556
      %1061 = vmatmul.mubr.bf16.gmra.mrb[0].mxu0 %v332
      %v1062 = vpop.f32.mrb[0].mxu0
      %v1063 = vadd.f32 0.0, %v1062
      %v1064 = vpop.f32.mrb[0].mxu0
      %v1065 = vpop.f32.mrb[0].mxu0
      %v1066 = vadd.f32 0.0, %v1065
      %v1067 = vpop.f32.mrb[0].mxu0
      %1068 = vmatprep.mubr.bf16.mxu0 %v568
      %1069 = vmatmul.mubr.bf16.gmra.mrb[0].mxu0 %v333
      %v1070 = vpop.f32.mrb[0].mxu0
      %v1071 = vadd.f32 0.0, %v1070
      %v1072 = vpop.f32.mrb[0].mxu0
      %v1073 = vpop.f32.mrb[0].mxu0
      %v1074 = vadd.f32 0.0, %v1073
      %v1075 = vpop.f32.mrb[0].mxu0
      %1076 = vmatprep.mubr.bf16.mxu0 %v580
      %1077 = vmatmul.mubr.bf16.gmra.mrb[0].mxu0 %v334
      %v1078 = vpop.f32.mrb[0].mxu0
      %v1079 = vadd.f32 0.0, %v1078
      %v1080 = vpop.f32.mrb[0].mxu0
      %v1081 = vpop.f32.mrb[0].mxu0
      %v1082 = vadd.f32 0.0, %v1081
      %v1083 = vpop.f32.mrb[0].mxu0
      %1084 = vmatprep.mubr.bf16.mxu0 %v592
      %1085 = vmatmul.mubr.bf16.gmra.mrb[0].mxu0 %v335
      %v1086 = vpop.f32.mrb[0].mxu0
      %v1087 = vadd.f32 0.0, %v1086
      %v1088 = vpop.f32.mrb[0].mxu0
      %v1089 = vpop.f32.mrb[0].mxu0
      %v1090 = vadd.f32 0.0, %v1089
      %v1091 = vpop.f32.mrb[0].mxu0
      %1092 = vmatprep.mubr.bf16.mxu0 %v742
      %1093 = vmatmul.mubr.bf16.gmra.mrb[0].mxu0 %v726
      %v1094 = vpop.f32.mrb[0].mxu0
      %v1095 = vadd.f32 0.0, %v1094
      %v1096 = vpop.f32.mrb[0].mxu0
      %v1097 = vpop.f32.mrb[0].mxu0
      %v1098 = vadd.f32 0.0, %v1097
      %v1099 = vpop.f32.mrb[0].mxu0
      %1100 = vdwg.mxu0
      %1101 = vmatprep.subr.bf16.mxu0 0
      %1102 = vmatpush1.bf16.msra.mxu0 %v908
      %1103 = vmatprep.subr.bf16.mxu0 0
      %1104 = vmatpush1.bf16.msra.mxu0 %v909
      %1105 = vmatprep.subr.bf16.mxu0 0
      %1106 = vmatpush1.bf16.msra.mxu0 %v910
      %1107 = vmatprep.subr.bf16.mxu0 0
      %1108 = vmatpush1.bf16.msra.mxu0 %v911
      %1109 = vmatprep.subr.bf16.mxu0 0
      %1110 = vmatpush1.bf16.msra.mxu0 %v912
      %1111 = vmatprep.subr.bf16.mxu0 0
      %1112 = vmatpush1.bf16.msra.mxu0 %v913
      %1113 = vmatprep.subr.bf16.mxu0 0
      %1114 = vmatpush1.bf16.msra.mxu0 %v914
      %1115 = vmatprep.subr.bf16.mxu0 0
      %1116 = vmatpush1.bf16.msra.mxu0 %v915
      %1117 = vmatprep.subr.bf16.mxu0 0
      %1118 = vmatpush1.bf16.msra.mxu0 0
      %1119 = vmatprep.subr.bf16.mxu0 0
      %1120 = vmatpush1.bf16.msra.mxu0 0
      %1121 = vmatprep.subr.bf16.mxu0 0
      %1122 = vmatpush1.bf16.msra.mxu0 0
      %1123 = vmatprep.subr.bf16.mxu0 0
      %1124 = vmatpush1.bf16.msra.mxu0 0
      %1125 = vmatprep.subr.bf16.mxu0 0
      %1126 = vmatpush1.bf16.msra.mxu0 0
      %1127 = vmatprep.subr.bf16.mxu0 0
      %1128 = vmatpush1.bf16.msra.mxu0 0
      %1129 = vmatprep.subr.bf16.mxu0 0
      %1130 = vmatpush1.bf16.msra.mxu0 0
      %1131 = vmatprep.subr.bf16.mxu0 0
      %1132 = vmatpush1.bf16.msra.mxu0 0
      %1133 = vmatprep.mubr.bf16.mxu0 0
      %1134 = vmatmul.mubr.bf16.gmra.mrb[0].mxu0 %v615
      %v1135 = vpop.f32.mrb[0].mxu0
      %v1136 = vadd.f32 %v975, %v1135
      %v1137 = vpop.f32.mrb[0].mxu0
      %v1138 = vpop.f32.mrb[0].mxu0
      %v1139 = vadd.f32 %v978, %v1138
      %v1140 = vpop.f32.mrb[0].mxu0
      %1141 = vmatprep.mubr.bf16.mxu0 0
      %1142 = vmatmul.mubr.bf16.gmra.mrb[0].mxu0 %v618
      %v1143 = vpop.f32.mrb[0].mxu0
      %v1144 = vadd.f32 %v983, %v1143
      %v1145 = vpop.f32.mrb[0].mxu0
      %v1146 = vpop.f32.mrb[0].mxu0
      %v1147 = vadd.f32 %v986, %v1146
      %v1148 = vpop.f32.mrb[0].mxu0
      %1149 = vmatprep.mubr.bf16.mxu0 0
      %1150 = vmatmul.mubr.bf16.gmra.mrb[0].mxu0 %v621
      %v1151 = vpop.f32.mrb[0].mxu0
      %v1152 = vadd.f32 %v991, %v1151
      %v1153 = vpop.f32.mrb[0].mxu0
      %v1154 = vpop.f32.mrb[0].mxu0
      %v1155 = vadd.f32 %v994, %v1154
      %v1156 = vpop.f32.mrb[0].mxu0
      %1157 = vmatprep.mubr.bf16.mxu0 0
      %1158 = vmatmul.mubr.bf16.gmra.mrb[0].mxu0 %v624
      %v1159 = vpop.f32.mrb[0].mxu0
      %v1160 = vadd.f32 %v999, %v1159
      %v1161 = vpop.f32.mrb[0].mxu0
      %v1162 = vpop.f32.mrb[0].mxu0
      %v1163 = vadd.f32 %v1002, %v1162
      %v1164 = vpop.f32.mrb[0].mxu0
      %1165 = vmatprep.mubr.bf16.mxu0 0
      %1166 = vmatmul.mubr.bf16.gmra.mrb[0].mxu0 %v627
      %v1167 = vpop.f32.mrb[0].mxu0
      %v1168 = vadd.f32 %v1007, %v1167
      %v1169 = vpop.f32.mrb[0].mxu0
      %v1170 = vpop.f32.mrb[0].mxu0
      %v1171 = vadd.f32 %v1010, %v1170
      %v1172 = vpop.f32.mrb[0].mxu0
      %1173 = vmatprep.mubr.bf16.mxu0 0
      %1174 = vmatmul.mubr.bf16.gmra.mrb[0].mxu0 %v630
      %v1175 = vpop.f32.mrb[0].mxu0
      %v1176 = vadd.f32 %v1015, %v1175
      %v1177 = vpop.f32.mrb[0].mxu0
      %v1178 = vpop.f32.mrb[0].mxu0
      %v1179 = vadd.f32 %v1018, %v1178
      %v1180 = vpop.f32.mrb[0].mxu0
      %1181 = vmatprep.mubr.bf16.mxu0 0
      %1182 = vmatmul.mubr.bf16.gmra.mrb[0].mxu0 %v633
      %v1183 = vpop.f32.mrb[0].mxu0
      %v1184 = vadd.f32 %v1023, %v1183
      %v1185 = vpop.f32.mrb[0].mxu0
      %v1186 = vpop.f32.mrb[0].mxu0
      %v1187 = vadd.f32 %v1026, %v1186
      %v1188 = vpop.f32.mrb[0].mxu0
      %1189 = vmatprep.mubr.bf16.mxu0 0
      %1190 = vmatmul.mubr.bf16.gmra.mrb[0].mxu0 %v636
      %v1191 = vpop.f32.mrb[0].mxu0
      %v1192 = vadd.f32 %v1031, %v1191
      %v1193 = vpop.f32.mrb[0].mxu0
      %v1194 = vpop.f32.mrb[0].mxu0
      %v1195 = vadd.f32 %v1034, %v1194
      %v1196 = vpop.f32.mrb[0].mxu0
      %1197 = vmatprep.mubr.bf16.mxu0 0
      %1198 = vmatmul.mubr.bf16.gmra.mrb[0].mxu0 %v639
      %v1199 = vpop.f32.mrb[0].mxu0
      %v1200 = vadd.f32 %v1039, %v1199
      %v1201 = vpop.f32.mrb[0].mxu0
      %v1202 = vpop.f32.mrb[0].mxu0
      %v1203 = vadd.f32 %v1042, %v1202
      %v1204 = vpop.f32.mrb[0].mxu0
      %1205 = vmatprep.mubr.bf16.mxu0 0
      %1206 = vmatmul.mubr.bf16.gmra.mrb[0].mxu0 %v642
      %v1207 = vpop.f32.mrb[0].mxu0
      %v1208 = vadd.f32 %v1047, %v1207
      %v1209 = vpop.f32.mrb[0].mxu0
      %v1210 = vpop.f32.mrb[0].mxu0
      %v1211 = vadd.f32 %v1050, %v1210
      %v1212 = vpop.f32.mrb[0].mxu0
      %1213 = vmatprep.mubr.bf16.mxu0 0
      %1214 = vmatmul.mubr.bf16.gmra.mrb[0].mxu0 %v645
      %v1215 = vpop.f32.mrb[0].mxu0
      %v1216 = vadd.f32 %v1055, %v1215
      %v1217 = vpop.f32.mrb[0].mxu0
      %v1218 = vpop.f32.mrb[0].mxu0
      %v1219 = vadd.f32 %v1058, %v1218
      %v1220 = vpop.f32.mrb[0].mxu0
      %1221 = vmatprep.mubr.bf16.mxu0 0
      %1222 = vmatmul.mubr.bf16.gmra.mrb[0].mxu0 %v648
      %v1223 = vpop.f32.mrb[0].mxu0
      %v1224 = vadd.f32 %v1063, %v1223
      %v1225 = vpop.f32.mrb[0].mxu0
      %v1226 = vpop.f32.mrb[0].mxu0
      %v1227 = vadd.f32 %v1066, %v1226
      %v1228 = vpop.f32.mrb[0].mxu0
      %1229 = vmatprep.mubr.bf16.mxu0 0
      %1230 = vmatmul.mubr.bf16.gmra.mrb[0].mxu0 %v651
      %v1231 = vpop.f32.mrb[0].mxu0
      %v1232 = vadd.f32 %v1071, %v1231
      %v1233 = vpop.f32.mrb[0].mxu0
      %v1234 = vpop.f32.mrb[0].mxu0
      %v1235 = vadd.f32 %v1074, %v1234
      %v1236 = vpop.f32.mrb[0].mxu0
      %1237 = vmatprep.mubr.bf16.mxu0 0
      %1238 = vmatmul.mubr.bf16.gmra.mrb[0].mxu0 %v654
      %v1239 = vpop.f32.mrb[0].mxu0
      %v1240 = vadd.f32 %v1079, %v1239
      %v1241 = vpop.f32.mrb[0].mxu0
      %v1242 = vpop.f32.mrb[0].mxu0
      %v1243 = vadd.f32 %v1082, %v1242
      %v1244 = vpop.f32.mrb[0].mxu0
      %1245 = vmatprep.mubr.bf16.mxu0 0
      %1246 = vmatmul.mubr.bf16.gmra.mrb[0].mxu0 %v657
      %v1247 = vpop.f32.mrb[0].mxu0
      %v1248 = vadd.f32 %v1087, %v1247
      %v1249 = vpop.f32.mrb[0].mxu0
      %v1250 = vpop.f32.mrb[0].mxu0
      %v1251 = vadd.f32 %v1090, %v1250
      %v1252 = vpop.f32.mrb[0].mxu0
      %1253 = vmatprep.mubr.bf16.mxu0 0
      %1254 = vmatmul.mubr.bf16.gmra.mrb[0].mxu0 %v746
      %v1255 = vpop.f32.mrb[0].mxu0
      %v1256 = vadd.f32 %v1095, %v1255
      %v1257 = vpop.f32.mrb[0].mxu0
      %v1258 = vpop.f32.mrb[0].mxu0
      %v1259 = vadd.f32 %v1098, %v1258
      %v1260 = vpop.f32.mrb[0].mxu0
      %1261 = vdwg.mxu0
      %v1310 = vunpack.c.l.b16 %v674
      %v1311 = vunpack.c.l.b16 %v675
      %v1312 = vunpack.c.l.b16 %v676
      %v1313 = vunpack.c.l.b16 %v677
      %v1314 = vunpack.c.l.b16 %v678
      %v1315 = vunpack.c.l.b16 %v679
      %v1316 = vunpack.c.l.b16 %v680
      %v1317 = vunpack.c.l.b16 %v681
      %v1318 = vunpack.c.l.b16 %v682
      %v1319 = vunpack.c.l.b16 %v683
      %v1320 = vunpack.c.l.b16 %v684
      %v1321 = vunpack.c.l.b16 %v685
      %v1322 = vunpack.c.l.b16 %v686
      %v1323 = vunpack.c.l.b16 %v687
      %v1324 = vunpack.c.l.b16 %v688
      %v1325 = vunpack.c.l.b16 %v689
      %v1326 = vunpack.c.l.b16 %v690
      %v1327 = vunpack.c.l.b16 %v691
      %v1328 = vunpack.c.l.b16 %v692
      %v1329 = vunpack.c.l.b16 %v693
      %v1330 = vunpack.c.l.b16 %v694
      %v1331 = vunpack.c.l.b16 %v695
      %v1332 = vunpack.c.l.b16 %v696
      %v1333 = vunpack.c.l.b16 %v697
      %v1334 = vunpack.c.l.b16 %v698
      %v1335 = vunpack.c.l.b16 %v699
      %v1336 = vunpack.c.l.b16 %v700
      %v1337 = vunpack.c.l.b16 %v701
      %v1338 = vunpack.c.l.b16 %v702
      %v1339 = vunpack.c.l.b16 %v703
      %v1340 = vunpack.c.l.b16 %v704
      %v1341 = vunpack.c.l.b16 %v705
      %v1342 = vunpack.c.l.b16 %v706
      %v1343 = vunpack.c.l.b16 %v707
      %v1344 = vunpack.c.l.b16 %v708
      %v1345 = vunpack.c.l.b16 %v709
      %v1346 = vunpack.c.l.b16 %v710
      %v1347 = vunpack.c.l.b16 %v711
      %v1348 = vunpack.c.l.b16 %v712
      %v1349 = vunpack.c.l.b16 %v713
      %v1350 = vunpack.c.l.b16 %v714
      %v1351 = vunpack.c.l.b16 %v715
      %v1352 = vunpack.c.l.b16 %v716
      %v1353 = vunpack.c.l.b16 %v717
      %v1354 = vunpack.c.l.b16 %v718
      %v1355 = vunpack.c.l.b16 %v719
      %v1356 = vunpack.c.l.b16 %v720
      %v1357 = vunpack.c.l.b16 %v721
      %v1358 = vpack.c.b16 %v1311, %v1310
      %v1359 = vpack.c.b16 %v1313, %v1312
      %v1360 = vpack.c.b16 %v1315, %v1314
      %v1361 = vpack.c.b16 %v1317, %v1316
      %v1362 = vpack.c.b16 %v1319, %v1318
      %v1363 = vpack.c.b16 %v1321, %v1320
      %v1364 = vpack.c.b16 %v1323, %v1322
      %v1365 = vpack.c.b16 %v1325, %v1324
      %v1366 = vpack.c.b16 %v1327, %v1326
      %v1367 = vpack.c.b16 %v1329, %v1328
      %v1368 = vpack.c.b16 %v1331, %v1330
      %v1369 = vpack.c.b16 %v1333, %v1332
      %v1370 = vpack.c.b16 %v1335, %v1334
      %v1371 = vpack.c.b16 %v1337, %v1336
      %v1372 = vpack.c.b16 %v1339, %v1338
      %v1373 = vpack.c.b16 %v1341, %v1340
      %v1374 = vpack.c.b16 %v1343, %v1342
      %v1375 = vpack.c.b16 %v1345, %v1344
      %v1376 = vpack.c.b16 %v1347, %v1346
      %v1377 = vpack.c.b16 %v1349, %v1348
      %v1378 = vpack.c.b16 %v1351, %v1350
      %v1379 = vpack.c.b16 %v1353, %v1352
      %v1380 = vpack.c.b16 %v1355, %v1354
      %v1381 = vpack.c.b16 %v1357, %v1356
      %1406 = vmatprep.subr.bf16.mxu0 0
      %1407 = vmatpush1.bf16.msra.mxu0 %v1358
      %1408 = vmatprep.subr.bf16.mxu0 0
      %1409 = vmatpush1.bf16.msra.mxu0 %v1359
      %1410 = vmatprep.subr.bf16.mxu0 0
      %1411 = vmatpush1.bf16.msra.mxu0 %v1360
      %1412 = vmatprep.subr.bf16.mxu0 0
      %1413 = vmatpush1.bf16.msra.mxu0 %v1361
      %1414 = vmatprep.subr.bf16.mxu0 0
      %1415 = vmatpush1.bf16.msra.mxu0 %v1362
      %1416 = vmatprep.subr.bf16.mxu0 0
      %1417 = vmatpush1.bf16.msra.mxu0 %v1363
      %1418 = vmatprep.subr.bf16.mxu0 0
      %1419 = vmatpush1.bf16.msra.mxu0 %v1364
      %1420 = vmatprep.subr.bf16.mxu0 0
      %1421 = vmatpush1.bf16.msra.mxu0 %v1365
      %1422 = vmatprep.subr.bf16.mxu0 0
      %1423 = vmatpush1.bf16.msra.mxu0 %v1366
      %1424 = vmatprep.subr.bf16.mxu0 0
      %1425 = vmatpush1.bf16.msra.mxu0 %v1367
      %1426 = vmatprep.subr.bf16.mxu0 0
      %1427 = vmatpush1.bf16.msra.mxu0 %v1368
      %1428 = vmatprep.subr.bf16.mxu0 0
      %1429 = vmatpush1.bf16.msra.mxu0 %v1369
      %1430 = vmatprep.subr.bf16.mxu0 0
      %1431 = vmatpush1.bf16.msra.mxu0 %v1370
      %1432 = vmatprep.subr.bf16.mxu0 0
      %1433 = vmatpush1.bf16.msra.mxu0 %v1371
      %1434 = vmatprep.subr.bf16.mxu0 0
      %1435 = vmatpush1.bf16.msra.mxu0 %v1372
      %1436 = vmatprep.subr.bf16.mxu0 0
      %1437 = vmatpush1.bf16.msra.mxu0 %v1373
      %1438 = vmatprep.mubr.bf16.mxu0 %v412
      %1439 = vmatmul.mubr.bf16.gmra.mrb[0].mxu0 %v320
      %v1440 = vpop.f32.mrb[0].mxu0
      %v1441 = vadd.f32 %v1136, %v1440
      %v1442 = vpop.f32.mrb[0].mxu0
      %v1443 = vpop.f32.mrb[0].mxu0
      %v1444 = vadd.f32 %v1139, %v1443
      %v1445 = vpop.f32.mrb[0].mxu0
      %1446 = vmatprep.mubr.bf16.mxu0 %v424
      %1447 = vmatmul.mubr.bf16.gmra.mrb[0].mxu0 %v321
      %v1448 = vpop.f32.mrb[0].mxu0
      %v1449 = vadd.f32 %v1144, %v1448
      %v1450 = vpop.f32.mrb[0].mxu0
      %v1451 = vpop.f32.mrb[0].mxu0
      %v1452 = vadd.f32 %v1147, %v1451
      %v1453 = vpop.f32.mrb[0].mxu0
      %1454 = vmatprep.mubr.bf16.mxu0 %v436
      %1455 = vmatmul.mubr.bf16.gmra.mrb[0].mxu0 %v322
      %v1456 = vpop.f32.mrb[0].mxu0
      %v1457 = vadd.f32 %v1152, %v1456
      %v1458 = vpop.f32.mrb[0].mxu0
      %v1459 = vpop.f32.mrb[0].mxu0
      %v1460 = vadd.f32 %v1155, %v1459
      %v1461 = vpop.f32.mrb[0].mxu0
      %1462 = vmatprep.mubr.bf16.mxu0 %v448
      %1463 = vmatmul.mubr.bf16.gmra.mrb[0].mxu0 %v323
      %v1464 = vpop.f32.mrb[0].mxu0
      %v1465 = vadd.f32 %v1160, %v1464
      %v1466 = vpop.f32.mrb[0].mxu0
      %v1467 = vpop.f32.mrb[0].mxu0
      %v1468 = vadd.f32 %v1163, %v1467
      %v1469 = vpop.f32.mrb[0].mxu0
      %1470 = vmatprep.mubr.bf16.mxu0 %v460
      %1471 = vmatmul.mubr.bf16.gmra.mrb[0].mxu0 %v324
      %v1472 = vpop.f32.mrb[0].mxu0
      %v1473 = vadd.f32 %v1168, %v1472
      %v1474 = vpop.f32.mrb[0].mxu0
      %v1475 = vpop.f32.mrb[0].mxu0
      %v1476 = vadd.f32 %v1171, %v1475
      %v1477 = vpop.f32.mrb[0].mxu0
      %1478 = vmatprep.mubr.bf16.mxu0 %v472
      %1479 = vmatmul.mubr.bf16.gmra.mrb[0].mxu0 %v325
      %v1480 = vpop.f32.mrb[0].mxu0
      %v1481 = vadd.f32 %v1176, %v1480
      %v1482 = vpop.f32.mrb[0].mxu0
      %v1483 = vpop.f32.mrb[0].mxu0
      %v1484 = vadd.f32 %v1179, %v1483
      %v1485 = vpop.f32.mrb[0].mxu0
      %1486 = vmatprep.mubr.bf16.mxu0 %v484
      %1487 = vmatmul.mubr.bf16.gmra.mrb[0].mxu0 %v326
      %v1488 = vpop.f32.mrb[0].mxu0
      %v1489 = vadd.f32 %v1184, %v1488
      %v1490 = vpop.f32.mrb[0].mxu0
      %v1491 = vpop.f32.mrb[0].mxu0
      %v1492 = vadd.f32 %v1187, %v1491
      %v1493 = vpop.f32.mrb[0].mxu0
      %1494 = vmatprep.mubr.bf16.mxu0 %v496
      %1495 = vmatmul.mubr.bf16.gmra.mrb[0].mxu0 %v327
      %v1496 = vpop.f32.mrb[0].mxu0
      %v1497 = vadd.f32 %v1192, %v1496
      %v1498 = vpop.f32.mrb[0].mxu0
      %v1499 = vpop.f32.mrb[0].mxu0
      %v1500 = vadd.f32 %v1195, %v1499
      %v1501 = vpop.f32.mrb[0].mxu0
      %1502 = vmatprep.mubr.bf16.mxu0 %v508
      %1503 = vmatmul.mubr.bf16.gmra.mrb[0].mxu0 %v328
      %v1504 = vpop.f32.mrb[0].mxu0
      %v1505 = vadd.f32 %v1200, %v1504
      %v1506 = vpop.f32.mrb[0].mxu0
      %v1507 = vpop.f32.mrb[0].mxu0
      %v1508 = vadd.f32 %v1203, %v1507
      %v1509 = vpop.f32.mrb[0].mxu0
      %1510 = vmatprep.mubr.bf16.mxu0 %v520
      %1511 = vmatmul.mubr.bf16.gmra.mrb[0].mxu0 %v329
      %v1512 = vpop.f32.mrb[0].mxu0
      %v1513 = vadd.f32 %v1208, %v1512
      %v1514 = vpop.f32.mrb[0].mxu0
      %v1515 = vpop.f32.mrb[0].mxu0
      %v1516 = vadd.f32 %v1211, %v1515
      %v1517 = vpop.f32.mrb[0].mxu0
      %1518 = vmatprep.mubr.bf16.mxu0 %v532
      %1519 = vmatmul.mubr.bf16.gmra.mrb[0].mxu0 %v330
      %v1520 = vpop.f32.mrb[0].mxu0
      %v1521 = vadd.f32 %v1216, %v1520
      %v1522 = vpop.f32.mrb[0].mxu0
      %v1523 = vpop.f32.mrb[0].mxu0
      %v1524 = vadd.f32 %v1219, %v1523
      %v1525 = vpop.f32.mrb[0].mxu0
      %1526 = vmatprep.mubr.bf16.mxu0 %v544
      %1527 = vmatmul.mubr.bf16.gmra.mrb[0].mxu0 %v331
      %v1528 = vpop.f32.mrb[0].mxu0
      %v1529 = vadd.f32 %v1224, %v1528
      %v1530 = vpop.f32.mrb[0].mxu0
      %v1531 = vpop.f32.mrb[0].mxu0
      %v1532 = vadd.f32 %v1227, %v1531
      %v1533 = vpop.f32.mrb[0].mxu0
      %1534 = vmatprep.mubr.bf16.mxu0 %v556
      %1535 = vmatmul.mubr.bf16.gmra.mrb[0].mxu0 %v332
      %v1536 = vpop.f32.mrb[0].mxu0
      %v1537 = vadd.f32 %v1232, %v1536
      %v1538 = vpop.f32.mrb[0].mxu0
      %v1539 = vpop.f32.mrb[0].mxu0
      %v1540 = vadd.f32 %v1235, %v1539
      %v1541 = vpop.f32.mrb[0].mxu0
      %1542 = vmatprep.mubr.bf16.mxu0 %v568
      %1543 = vmatmul.mubr.bf16.gmra.mrb[0].mxu0 %v333
      %v1544 = vpop.f32.mrb[0].mxu0
      %v1545 = vadd.f32 %v1240, %v1544
      %v1546 = vpop.f32.mrb[0].mxu0
      %v1547 = vpop.f32.mrb[0].mxu0
      %v1548 = vadd.f32 %v1243, %v1547
      %v1549 = vpop.f32.mrb[0].mxu0
      %1550 = vmatprep.mubr.bf16.mxu0 %v580
      %1551 = vmatmul.mubr.bf16.gmra.mrb[0].mxu0 %v334
      %v1552 = vpop.f32.mrb[0].mxu0
      %v1553 = vadd.f32 %v1248, %v1552
      %v1554 = vpop.f32.mrb[0].mxu0
      %v1555 = vpop.f32.mrb[0].mxu0
      %v1556 = vadd.f32 %v1251, %v1555
      %v1557 = vpop.f32.mrb[0].mxu0
      %1558 = vmatprep.mubr.bf16.mxu0 %v592
      %1559 = vmatmul.mubr.bf16.gmra.mrb[0].mxu0 %v335
      %v1560 = vpop.f32.mrb[0].mxu0
      %v1561 = vadd.f32 %v1256, %v1560
      %v1562 = vpop.f32.mrb[0].mxu0
      %v1563 = vpop.f32.mrb[0].mxu0
      %v1564 = vadd.f32 %v1259, %v1563
      %v1565 = vpop.f32.mrb[0].mxu0
      %1566 = vdwg.mxu0
      %1567 = vmatprep.subr.bf16.mxu0 0
      %1568 = vmatpush1.bf16.msra.mxu0 %v1374
      %1569 = vmatprep.subr.bf16.mxu0 0
      %1570 = vmatpush1.bf16.msra.mxu0 %v1375
      %1571 = vmatprep.subr.bf16.mxu0 0
      %1572 = vmatpush1.bf16.msra.mxu0 %v1376
      %1573 = vmatprep.subr.bf16.mxu0 0
      %1574 = vmatpush1.bf16.msra.mxu0 %v1377
      %1575 = vmatprep.subr.bf16.mxu0 0
      %1576 = vmatpush1.bf16.msra.mxu0 %v1378
      %1577 = vmatprep.subr.bf16.mxu0 0
      %1578 = vmatpush1.bf16.msra.mxu0 %v1379
      %1579 = vmatprep.subr.bf16.mxu0 0
      %1580 = vmatpush1.bf16.msra.mxu0 %v1380
      %1581 = vmatprep.subr.bf16.mxu0 0
      %1582 = vmatpush1.bf16.msra.mxu0 %v1381
      %1583 = vmatprep.subr.bf16.mxu0 0
      %1584 = vmatpush1.bf16.msra.mxu0 0
      %1585 = vmatprep.subr.bf16.mxu0 0
      %1586 = vmatpush1.bf16.msra.mxu0 0
      %1587 = vmatprep.subr.bf16.mxu0 0
      %1588 = vmatpush1.bf16.msra.mxu0 0
      %1589 = vmatprep.subr.bf16.mxu0 0
      %1590 = vmatpush1.bf16.msra.mxu0 0
      %1591 = vmatprep.subr.bf16.mxu0 0
      %1592 = vmatpush1.bf16.msra.mxu0 0
      %1593 = vmatprep.subr.bf16.mxu0 0
      %1594 = vmatpush1.bf16.msra.mxu0 0
      %1595 = vmatprep.subr.bf16.mxu0 0
      %1596 = vmatpush1.bf16.msra.mxu0 0
      %1597 = vmatprep.subr.bf16.mxu0 0
      %1598 = vmatpush1.bf16.msra.mxu0 0
      %1599 = vmatprep.mubr.bf16.mxu0 0
      %1600 = vmatmul.mubr.bf16.gmra.mrb[0].mxu0 %v612
      %v1601 = vpop.f32.mrb[0].mxu0
      %v1602 = vadd.f32 %v1441, %v1601
      %v1603 = vpop.f32.mrb[0].mxu0
      %v1604 = vpop.f32.mrb[0].mxu0
      %v1605 = vadd.f32 %v1444, %v1604
      %v1606 = vpop.f32.mrb[0].mxu0
      %1607 = vmatprep.mubr.bf16.mxu0 0
      %1608 = vmatmul.mubr.bf16.gmra.mrb[0].mxu0 %v615
      %v1609 = vpop.f32.mrb[0].mxu0
      %v1610 = vadd.f32 %v1449, %v1609
      %v1611 = vpop.f32.mrb[0].mxu0
      %v1612 = vpop.f32.mrb[0].mxu0
      %v1613 = vadd.f32 %v1452, %v1612
      %v1614 = vpop.f32.mrb[0].mxu0
      %1615 = vmatprep.mubr.bf16.mxu0 0
      %1616 = vmatmul.mubr.bf16.gmra.mrb[0].mxu0 %v618
      %v1617 = vpop.f32.mrb[0].mxu0
      %v1618 = vadd.f32 %v1457, %v1617
      %v1619 = vpop.f32.mrb[0].mxu0
      %v1620 = vpop.f32.mrb[0].mxu0
      %v1621 = vadd.f32 %v1460, %v1620
      %v1622 = vpop.f32.mrb[0].mxu0
      %1623 = vmatprep.mubr.bf16.mxu0 0
      %1624 = vmatmul.mubr.bf16.gmra.mrb[0].mxu0 %v621
      %v1625 = vpop.f32.mrb[0].mxu0
      %v1626 = vadd.f32 %v1465, %v1625
      %v1627 = vpop.f32.mrb[0].mxu0
      %v1628 = vpop.f32.mrb[0].mxu0
      %v1629 = vadd.f32 %v1468, %v1628
      %v1630 = vpop.f32.mrb[0].mxu0
      %1631 = vmatprep.mubr.bf16.mxu0 0
      %1632 = vmatmul.mubr.bf16.gmra.mrb[0].mxu0 %v624
      %v1633 = vpop.f32.mrb[0].mxu0
      %v1634 = vadd.f32 %v1473, %v1633
      %v1635 = vpop.f32.mrb[0].mxu0
      %v1636 = vpop.f32.mrb[0].mxu0
      %v1637 = vadd.f32 %v1476, %v1636
      %v1638 = vpop.f32.mrb[0].mxu0
      %1639 = vmatprep.mubr.bf16.mxu0 0
      %1640 = vmatmul.mubr.bf16.gmra.mrb[0].mxu0 %v627
      %v1641 = vpop.f32.mrb[0].mxu0
      %v1642 = vadd.f32 %v1481, %v1641
      %v1643 = vpop.f32.mrb[0].mxu0
      %v1644 = vpop.f32.mrb[0].mxu0
      %v1645 = vadd.f32 %v1484, %v1644
      %v1646 = vpop.f32.mrb[0].mxu0
      %1647 = vmatprep.mubr.bf16.mxu0 0
      %1648 = vmatmul.mubr.bf16.gmra.mrb[0].mxu0 %v630
      %v1649 = vpop.f32.mrb[0].mxu0
      %v1650 = vadd.f32 %v1489, %v1649
      %v1651 = vpop.f32.mrb[0].mxu0
      %v1652 = vpop.f32.mrb[0].mxu0
      %v1653 = vadd.f32 %v1492, %v1652
      %v1654 = vpop.f32.mrb[0].mxu0
      %1655 = vmatprep.mubr.bf16.mxu0 0
      %1656 = vmatmul.mubr.bf16.gmra.mrb[0].mxu0 %v633
      %v1657 = vpop.f32.mrb[0].mxu0
      %v1658 = vadd.f32 %v1497, %v1657
      %v1659 = vpop.f32.mrb[0].mxu0
      %v1660 = vpop.f32.mrb[0].mxu0
      %v1661 = vadd.f32 %v1500, %v1660
      %v1662 = vpop.f32.mrb[0].mxu0
      %1663 = vmatprep.mubr.bf16.mxu0 0
      %1664 = vmatmul.mubr.bf16.gmra.mrb[0].mxu0 %v636
      %v1665 = vpop.f32.mrb[0].mxu0
      %v1666 = vadd.f32 %v1505, %v1665
      %v1667 = vpop.f32.mrb[0].mxu0
      %v1668 = vpop.f32.mrb[0].mxu0
      %v1669 = vadd.f32 %v1508, %v1668
      %v1670 = vpop.f32.mrb[0].mxu0
      %1671 = vmatprep.mubr.bf16.mxu0 0
      %1672 = vmatmul.mubr.bf16.gmra.mrb[0].mxu0 %v639
      %v1673 = vpop.f32.mrb[0].mxu0
      %v1674 = vadd.f32 %v1513, %v1673
      %v1675 = vpop.f32.mrb[0].mxu0
      %v1676 = vpop.f32.mrb[0].mxu0
      %v1677 = vadd.f32 %v1516, %v1676
      %v1678 = vpop.f32.mrb[0].mxu0
      %1679 = vmatprep.mubr.bf16.mxu0 0
      %1680 = vmatmul.mubr.bf16.gmra.mrb[0].mxu0 %v642
      %v1681 = vpop.f32.mrb[0].mxu0
      %v1682 = vadd.f32 %v1521, %v1681
      %v1683 = vpop.f32.mrb[0].mxu0
      %v1684 = vpop.f32.mrb[0].mxu0
      %v1685 = vadd.f32 %v1524, %v1684
      %v1686 = vpop.f32.mrb[0].mxu0
      %1687 = vmatprep.mubr.bf16.mxu0 0
      %1688 = vmatmul.mubr.bf16.gmra.mrb[0].mxu0 %v645
      %v1689 = vpop.f32.mrb[0].mxu0
      %v1690 = vadd.f32 %v1529, %v1689
      %v1691 = vpop.f32.mrb[0].mxu0
      %v1692 = vpop.f32.mrb[0].mxu0
      %v1693 = vadd.f32 %v1532, %v1692
      %v1694 = vpop.f32.mrb[0].mxu0
      %1695 = vmatprep.mubr.bf16.mxu0 0
      %1696 = vmatmul.mubr.bf16.gmra.mrb[0].mxu0 %v648
      %v1697 = vpop.f32.mrb[0].mxu0
      %v1698 = vadd.f32 %v1537, %v1697
      %v1699 = vpop.f32.mrb[0].mxu0
      %v1700 = vpop.f32.mrb[0].mxu0
      %v1701 = vadd.f32 %v1540, %v1700
      %v1702 = vpop.f32.mrb[0].mxu0
      %1703 = vmatprep.mubr.bf16.mxu0 0
      %1704 = vmatmul.mubr.bf16.gmra.mrb[0].mxu0 %v651
      %v1705 = vpop.f32.mrb[0].mxu0
      %v1706 = vadd.f32 %v1545, %v1705
      %v1707 = vpop.f32.mrb[0].mxu0
      %v1708 = vpop.f32.mrb[0].mxu0
      %v1709 = vadd.f32 %v1548, %v1708
      %v1710 = vpop.f32.mrb[0].mxu0
      %1711 = vmatprep.mubr.bf16.mxu0 0
      %1712 = vmatmul.mubr.bf16.gmra.mrb[0].mxu0 %v654
      %v1713 = vpop.f32.mrb[0].mxu0
      %v1714 = vadd.f32 %v1553, %v1713
      %v1715 = vpop.f32.mrb[0].mxu0
      %v1716 = vpop.f32.mrb[0].mxu0
      %v1717 = vadd.f32 %v1556, %v1716
      %v1718 = vpop.f32.mrb[0].mxu0
      %1719 = vmatprep.mubr.bf16.mxu0 0
      %1720 = vmatmul.mubr.bf16.gmra.mrb[0].mxu0 %v657
      %v1721 = vpop.f32.mrb[0].mxu0
      %v1722 = vadd.f32 %v1561, %v1721
      %v1723 = vpop.f32.mrb[0].mxu0
      %v1724 = vpop.f32.mrb[0].mxu0
      %v1725 = vadd.f32 %v1564, %v1724
      %v1726 = vpop.f32.mrb[0].mxu0
      %1727 = vdwg.mxu0
      %v1730 = vunpack.c.l.b16 %v253
      %v1731 = vunpack.c.l.b16 %v254
      %v1732 = vpack.c.b16 %v1731, %v1730
      %v1735 = vunpack.c.l.b16 %v255
      %v1736 = vpack.c.b16 %v1735, %v1735
      %v1738 = vshrl.u32 %v1732, 16
      %v1740 = vshll.u32 %v1732, 16
      %v1742 = vrot.slane %v1740, 1
      %v1743 = vor.u32 %v1738, %v1742
      %v1745 = vshll.u32 %v1736, 16
      %v1747 = vrot.slane %v1745, 1
      %v1748 = vsel %vm400, %v1743, %v1747
      %v1750 = vrot.slane %v1732, 1
      %v1751 = vrot.slane %v1736, 1
      %v1752 = vsel %vm609, %v1750, %v1751
      %v1754 = vld [vmem:[%s1 + $0x180] sm:$0xf]
      %v1755 = vld [vmem:[%s1 + $0x184] sm:$0xf]
      %v1756 = vld [vmem:[%s1 + $0x188] sm:$0xf]
      %v1757 = vld [vmem:[%s1 + $0x18c] sm:$0xf]
      %v1758 = vld [vmem:[%s1 + $0x190] sm:$0xf]
      %v1759 = vld [vmem:[%s1 + $0x194] sm:$0xf]
      %v1760 = vld [vmem:[%s1 + $0x198] sm:$0xf]
      %v1761 = vld [vmem:[%s1 + $0x19c] sm:$0xf]
      %v1762 = vld [vmem:[%s1 + $0x1a0] sm:$0xf]
      %v1763 = vld [vmem:[%s1 + $0x1a4] sm:$0xf]
      %v1764 = vld [vmem:[%s1 + $0x1a8] sm:$0xf]
      %v1765 = vld [vmem:[%s1 + $0x1ac] sm:$0xf]
      %v1766 = vld [vmem:[%s1 + $0x1b0] sm:$0xf]
      %v1767 = vld [vmem:[%s1 + $0x1b4] sm:$0xf]
      %v1768 = vld [vmem:[%s1 + $0x1b8] sm:$0xf]
      %v1769 = vld [vmem:[%s1 + $0x1bc] sm:$0xf]
      %v1770 = vld [vmem:[%s1 + $0x1c0] sm:$0xf]
      %v1771 = vld [vmem:[%s1 + $0x1c4] sm:$0xf]
      %v1772 = vld [vmem:[%s1 + $0x1c8] sm:$0xf]
      %v1773 = vld [vmem:[%s1 + $0x1cc] sm:$0xf]
      %v1774 = vld [vmem:[%s1 + $0x1d0] sm:$0xf]
      %v1775 = vld [vmem:[%s1 + $0x1d4] sm:$0xf]
      %v1776 = vld [vmem:[%s1 + $0x1d8] sm:$0xf]
      %v1777 = vld [vmem:[%s1 + $0x1dc] sm:$0xf]
      %v1778 = vld [vmem:[%s1 + $0x1e0] sm:$0xf]
      %v1779 = vld [vmem:[%s1 + $0x1e4] sm:$0xf]
      %v1780 = vld [vmem:[%s1 + $0x1e8] sm:$0xf]
      %v1781 = vld [vmem:[%s1 + $0x1ec] sm:$0xf]
      %v1782 = vld [vmem:[%s1 + $0x1f0] sm:$0xf]
      %v1783 = vld [vmem:[%s1 + $0x1f4] sm:$0xf]
      %v1784 = vld [vmem:[%s1 + $0x1f8] sm:$0xf]
      %v1785 = vld [vmem:[%s1 + $0x1fc] sm:$0xf]
      %v1786 = vld [vmem:[%s1 + $0x200] sm:$0xf]
      %v1787 = vld [vmem:[%s1 + $0x204] sm:$0xf]
      %v1788 = vld [vmem:[%s1 + $0x208] sm:$0xf]
      %v1789 = vld [vmem:[%s1 + $0x20c] sm:$0xf]
      %v1790 = vld [vmem:[%s1 + $0x210] sm:$0xf]
      %v1791 = vld [vmem:[%s1 + $0x214] sm:$0xf]
      %v1792 = vld [vmem:[%s1 + $0x218] sm:$0xf]
      %v1793 = vld [vmem:[%s1 + $0x21c] sm:$0xf]
      %v1794 = vld [vmem:[%s1 + $0x220] sm:$0xf]
      %v1795 = vld [vmem:[%s1 + $0x224] sm:$0xf]
      %v1796 = vld [vmem:[%s1 + $0x228] sm:$0xf]
      %v1797 = vld [vmem:[%s1 + $0x22c] sm:$0xf]
      %v1798 = vld [vmem:[%s1 + $0x230] sm:$0xf]
      %v1799 = vld [vmem:[%s1 + $0x234] sm:$0xf]
      %v1800 = vld [vmem:[%s1 + $0x238] sm:$0xf]
      %v1801 = vld [vmem:[%s1 + $0x23c] sm:$0xf]
      %v1850 = vunpack.c.l.b16 %v1754
      %v1851 = vunpack.c.l.b16 %v1755
      %v1852 = vunpack.c.l.b16 %v1756
      %v1853 = vunpack.c.l.b16 %v1757
      %v1854 = vunpack.c.l.b16 %v1758
      %v1855 = vunpack.c.l.b16 %v1759
      %v1856 = vunpack.c.l.b16 %v1760
      %v1857 = vunpack.c.l.b16 %v1761
      %v1858 = vunpack.c.l.b16 %v1762
      %v1859 = vunpack.c.l.b16 %v1763
      %v1860 = vunpack.c.l.b16 %v1764
      %v1861 = vunpack.c.l.b16 %v1765
      %v1862 = vunpack.c.l.b16 %v1766
      %v1863 = vunpack.c.l.b16 %v1767
      %v1864 = vunpack.c.l.b16 %v1768
      %v1865 = vunpack.c.l.b16 %v1769
      %v1866 = vunpack.c.l.b16 %v1770
      %v1867 = vunpack.c.l.b16 %v1771
      %v1868 = vunpack.c.l.b16 %v1772
      %v1869 = vunpack.c.l.b16 %v1773
      %v1870 = vunpack.c.l.b16 %v1774
      %v1871 = vunpack.c.l.b16 %v1775
      %v1872 = vunpack.c.l.b16 %v1776
      %v1873 = vunpack.c.l.b16 %v1777
      %v1874 = vunpack.c.l.b16 %v1778
      %v1875 = vunpack.c.l.b16 %v1779
      %v1876 = vunpack.c.l.b16 %v1780
      %v1877 = vunpack.c.l.b16 %v1781
      %v1878 = vunpack.c.l.b16 %v1782
      %v1879 = vunpack.c.l.b16 %v1783
      %v1880 = vunpack.c.l.b16 %v1784
      %v1881 = vunpack.c.l.b16 %v1785
      %v1882 = vunpack.c.l.b16 %v1786
      %v1883 = vunpack.c.l.b16 %v1787
      %v1884 = vunpack.c.l.b16 %v1788
      %v1885 = vunpack.c.l.b16 %v1789
      %v1886 = vunpack.c.l.b16 %v1790
      %v1887 = vunpack.c.l.b16 %v1791
      %v1888 = vunpack.c.l.b16 %v1792
      %v1889 = vunpack.c.l.b16 %v1793
      %v1890 = vunpack.c.l.b16 %v1794
      %v1891 = vunpack.c.l.b16 %v1795
      %v1892 = vunpack.c.l.b16 %v1796
      %v1893 = vunpack.c.l.b16 %v1797
      %v1894 = vunpack.c.l.b16 %v1798
      %v1895 = vunpack.c.l.b16 %v1799
      %v1896 = vunpack.c.l.b16 %v1800
      %v1897 = vunpack.c.l.b16 %v1801
      %v1898 = vpack.c.b16 %v1851, %v1850
      %v1899 = vpack.c.b16 %v1853, %v1852
      %v1900 = vpack.c.b16 %v1855, %v1854
      %v1901 = vpack.c.b16 %v1857, %v1856
      %v1902 = vpack.c.b16 %v1859, %v1858
      %v1903 = vpack.c.b16 %v1861, %v1860
      %v1904 = vpack.c.b16 %v1863, %v1862
      %v1905 = vpack.c.b16 %v1865, %v1864
      %v1906 = vpack.c.b16 %v1867, %v1866
      %v1907 = vpack.c.b16 %v1869, %v1868
      %v1908 = vpack.c.b16 %v1871, %v1870
      %v1909 = vpack.c.b16 %v1873, %v1872
      %v1910 = vpack.c.b16 %v1875, %v1874
      %v1911 = vpack.c.b16 %v1877, %v1876
      %v1912 = vpack.c.b16 %v1879, %v1878
      %v1913 = vpack.c.b16 %v1881, %v1880
      %v1914 = vpack.c.b16 %v1883, %v1882
      %v1915 = vpack.c.b16 %v1885, %v1884
      %v1916 = vpack.c.b16 %v1887, %v1886
      %v1917 = vpack.c.b16 %v1889, %v1888
      %v1918 = vpack.c.b16 %v1891, %v1890
      %v1919 = vpack.c.b16 %v1893, %v1892
      %v1920 = vpack.c.b16 %v1895, %v1894
      %v1921 = vpack.c.b16 %v1897, %v1896
      %1946 = vmatprep.subr.bf16.mxu0 0
      %1947 = vmatpush1.bf16.msra.mxu0 %v1898
      %1948 = vmatprep.subr.bf16.mxu0 0
      %1949 = vmatpush1.bf16.msra.mxu0 %v1899
      %1950 = vmatprep.subr.bf16.mxu0 0
      %1951 = vmatpush1.bf16.msra.mxu0 %v1900
      %1952 = vmatprep.subr.bf16.mxu0 0
      %1953 = vmatpush1.bf16.msra.mxu0 %v1901
      %1954 = vmatprep.subr.bf16.mxu0 0
      %1955 = vmatpush1.bf16.msra.mxu0 %v1902
      %1956 = vmatprep.subr.bf16.mxu0 0
      %1957 = vmatpush1.bf16.msra.mxu0 %v1903
      %1958 = vmatprep.subr.bf16.mxu0 0
      %1959 = vmatpush1.bf16.msra.mxu0 %v1904
      %1960 = vmatprep.subr.bf16.mxu0 0
      %1961 = vmatpush1.bf16.msra.mxu0 %v1905
      %1962 = vmatprep.subr.bf16.mxu0 0
      %1963 = vmatpush1.bf16.msra.mxu0 %v1906
      %1964 = vmatprep.subr.bf16.mxu0 0
      %1965 = vmatpush1.bf16.msra.mxu0 %v1907
      %1966 = vmatprep.subr.bf16.mxu0 0
      %1967 = vmatpush1.bf16.msra.mxu0 %v1908
      %1968 = vmatprep.subr.bf16.mxu0 0
      %1969 = vmatpush1.bf16.msra.mxu0 %v1909
      %1970 = vmatprep.subr.bf16.mxu0 0
      %1971 = vmatpush1.bf16.msra.mxu0 %v1910
      %1972 = vmatprep.subr.bf16.mxu0 0
      %1973 = vmatpush1.bf16.msra.mxu0 %v1911
      %1974 = vmatprep.subr.bf16.mxu0 0
      %1975 = vmatpush1.bf16.msra.mxu0 %v1912
      %1976 = vmatprep.subr.bf16.mxu0 0
      %1977 = vmatpush1.bf16.msra.mxu0 %v1913
      %1978 = vmatprep.mubr.bf16.mxu0 %v436
      %1979 = vmatmul.mubr.bf16.gmra.mrb[0].mxu0 %v322
      %v1980 = vpop.f32.mrb[0].mxu0
      %v1981 = vadd.f32 0.0, %v1980
      %v1982 = vpop.f32.mrb[0].mxu0
      %v1983 = vpop.f32.mrb[0].mxu0
      %v1984 = vadd.f32 0.0, %v1983
      %v1985 = vpop.f32.mrb[0].mxu0
      %1986 = vmatprep.mubr.bf16.mxu0 %v448
      %1987 = vmatmul.mubr.bf16.gmra.mrb[0].mxu0 %v323
      %v1988 = vpop.f32.mrb[0].mxu0
      %v1989 = vadd.f32 0.0, %v1988
      %v1990 = vpop.f32.mrb[0].mxu0
      %v1991 = vpop.f32.mrb[0].mxu0
      %v1992 = vadd.f32 0.0, %v1991
      %v1993 = vpop.f32.mrb[0].mxu0
      %1994 = vmatprep.mubr.bf16.mxu0 %v460
      %1995 = vmatmul.mubr.bf16.gmra.mrb[0].mxu0 %v324
      %v1996 = vpop.f32.mrb[0].mxu0
      %v1997 = vadd.f32 0.0, %v1996
      %v1998 = vpop.f32.mrb[0].mxu0
      %v1999 = vpop.f32.mrb[0].mxu0
      %v2000 = vadd.f32 0.0, %v1999
      %v2001 = vpop.f32.mrb[0].mxu0
      %2002 = vmatprep.mubr.bf16.mxu0 %v472
      %2003 = vmatmul.mubr.bf16.gmra.mrb[0].mxu0 %v325
      %v2004 = vpop.f32.mrb[0].mxu0
      %v2005 = vadd.f32 0.0, %v2004
      %v2006 = vpop.f32.mrb[0].mxu0
      %v2007 = vpop.f32.mrb[0].mxu0
      %v2008 = vadd.f32 0.0, %v2007
      %v2009 = vpop.f32.mrb[0].mxu0
      %2010 = vmatprep.mubr.bf16.mxu0 %v484
      %2011 = vmatmul.mubr.bf16.gmra.mrb[0].mxu0 %v326
      %v2012 = vpop.f32.mrb[0].mxu0
      %v2013 = vadd.f32 0.0, %v2012
      %v2014 = vpop.f32.mrb[0].mxu0
      %v2015 = vpop.f32.mrb[0].mxu0
      %v2016 = vadd.f32 0.0, %v2015
      %v2017 = vpop.f32.mrb[0].mxu0
      %2018 = vmatprep.mubr.bf16.mxu0 %v496
      %2019 = vmatmul.mubr.bf16.gmra.mrb[0].mxu0 %v327
      %v2020 = vpop.f32.mrb[0].mxu0
      %v2021 = vadd.f32 0.0, %v2020
      %v2022 = vpop.f32.mrb[0].mxu0
      %v2023 = vpop.f32.mrb[0].mxu0
      %v2024 = vadd.f32 0.0, %v2023
      %v2025 = vpop.f32.mrb[0].mxu0
      %2026 = vmatprep.mubr.bf16.mxu0 %v508
      %2027 = vmatmul.mubr.bf16.gmra.mrb[0].mxu0 %v328
      %v2028 = vpop.f32.mrb[0].mxu0
      %v2029 = vadd.f32 0.0, %v2028
      %v2030 = vpop.f32.mrb[0].mxu0
      %v2031 = vpop.f32.mrb[0].mxu0
      %v2032 = vadd.f32 0.0, %v2031
      %v2033 = vpop.f32.mrb[0].mxu0
      %2034 = vmatprep.mubr.bf16.mxu0 %v520
      %2035 = vmatmul.mubr.bf16.gmra.mrb[0].mxu0 %v329
      %v2036 = vpop.f32.mrb[0].mxu0
      %v2037 = vadd.f32 0.0, %v2036
      %v2038 = vpop.f32.mrb[0].mxu0
      %v2039 = vpop.f32.mrb[0].mxu0
      %v2040 = vadd.f32 0.0, %v2039
      %v2041 = vpop.f32.mrb[0].mxu0
      %2042 = vmatprep.mubr.bf16.mxu0 %v532
      %2043 = vmatmul.mubr.bf16.gmra.mrb[0].mxu0 %v330
      %v2044 = vpop.f32.mrb[0].mxu0
      %v2045 = vadd.f32 0.0, %v2044
      %v2046 = vpop.f32.mrb[0].mxu0
      %v2047 = vpop.f32.mrb[0].mxu0
      %v2048 = vadd.f32 0.0, %v2047
      %v2049 = vpop.f32.mrb[0].mxu0
      %2050 = vmatprep.mubr.bf16.mxu0 %v544
      %2051 = vmatmul.mubr.bf16.gmra.mrb[0].mxu0 %v331
      %v2052 = vpop.f32.mrb[0].mxu0
      %v2053 = vadd.f32 0.0, %v2052
      %v2054 = vpop.f32.mrb[0].mxu0
      %v2055 = vpop.f32.mrb[0].mxu0
      %v2056 = vadd.f32 0.0, %v2055
      %v2057 = vpop.f32.mrb[0].mxu0
      %2058 = vmatprep.mubr.bf16.mxu0 %v556
      %2059 = vmatmul.mubr.bf16.gmra.mrb[0].mxu0 %v332
      %v2060 = vpop.f32.mrb[0].mxu0
      %v2061 = vadd.f32 0.0, %v2060
      %v2062 = vpop.f32.mrb[0].mxu0
      %v2063 = vpop.f32.mrb[0].mxu0
      %v2064 = vadd.f32 0.0, %v2063
      %v2065 = vpop.f32.mrb[0].mxu0
      %2066 = vmatprep.mubr.bf16.mxu0 %v568
      %2067 = vmatmul.mubr.bf16.gmra.mrb[0].mxu0 %v333
      %v2068 = vpop.f32.mrb[0].mxu0
      %v2069 = vadd.f32 0.0, %v2068
      %v2070 = vpop.f32.mrb[0].mxu0
      %v2071 = vpop.f32.mrb[0].mxu0
      %v2072 = vadd.f32 0.0, %v2071
      %v2073 = vpop.f32.mrb[0].mxu0
      %2074 = vmatprep.mubr.bf16.mxu0 %v580
      %2075 = vmatmul.mubr.bf16.gmra.mrb[0].mxu0 %v334
      %v2076 = vpop.f32.mrb[0].mxu0
      %v2077 = vadd.f32 0.0, %v2076
      %v2078 = vpop.f32.mrb[0].mxu0
      %v2079 = vpop.f32.mrb[0].mxu0
      %v2080 = vadd.f32 0.0, %v2079
      %v2081 = vpop.f32.mrb[0].mxu0
      %2082 = vmatprep.mubr.bf16.mxu0 %v592
      %2083 = vmatmul.mubr.bf16.gmra.mrb[0].mxu0 %v335
      %v2084 = vpop.f32.mrb[0].mxu0
      %v2085 = vadd.f32 0.0, %v2084
      %v2086 = vpop.f32.mrb[0].mxu0
      %v2087 = vpop.f32.mrb[0].mxu0
      %v2088 = vadd.f32 0.0, %v2087
      %v2089 = vpop.f32.mrb[0].mxu0
      %2090 = vmatprep.mubr.bf16.mxu0 %v742
      %2091 = vmatmul.mubr.bf16.gmra.mrb[0].mxu0 %v726
      %v2092 = vpop.f32.mrb[0].mxu0
      %v2093 = vadd.f32 0.0, %v2092
      %v2094 = vpop.f32.mrb[0].mxu0
      %v2095 = vpop.f32.mrb[0].mxu0
      %v2096 = vadd.f32 0.0, %v2095
      %v2097 = vpop.f32.mrb[0].mxu0
      %2098 = vmatprep.mubr.bf16.mxu0 %v1748
      %2099 = vmatmul.mubr.bf16.gmra.mrb[0].mxu0 %v1732
      %v2100 = vpop.f32.mrb[0].mxu0
      %v2101 = vadd.f32 0.0, %v2100
      %v2102 = vpop.f32.mrb[0].mxu0
      %v2103 = vpop.f32.mrb[0].mxu0
      %v2104 = vadd.f32 0.0, %v2103
      %v2105 = vpop.f32.mrb[0].mxu0
      %2106 = vdwg.mxu0
      %2107 = vmatprep.subr.bf16.mxu0 0
      %2108 = vmatpush1.bf16.msra.mxu0 %v1914
      %2109 = vmatprep.subr.bf16.mxu0 0
      %2110 = vmatpush1.bf16.msra.mxu0 %v1915
      %2111 = vmatprep.subr.bf16.mxu0 0
      %2112 = vmatpush1.bf16.msra.mxu0 %v1916
      %2113 = vmatprep.subr.bf16.mxu0 0
      %2114 = vmatpush1.bf16.msra.mxu0 %v1917
      %2115 = vmatprep.subr.bf16.mxu0 0
      %2116 = vmatpush1.bf16.msra.mxu0 %v1918
      %2117 = vmatprep.subr.bf16.mxu0 0
      %2118 = vmatpush1.bf16.msra.mxu0 %v1919
      %2119 = vmatprep.subr.bf16.mxu0 0
      %2120 = vmatpush1.bf16.msra.mxu0 %v1920
      %2121 = vmatprep.subr.bf16.mxu0 0
      %2122 = vmatpush1.bf16.msra.mxu0 %v1921
      %2123 = vmatprep.subr.bf16.mxu0 0
      %2124 = vmatpush1.bf16.msra.mxu0 0
      %2125 = vmatprep.subr.bf16.mxu0 0
      %2126 = vmatpush1.bf16.msra.mxu0 0
      %2127 = vmatprep.subr.bf16.mxu0 0
      %2128 = vmatpush1.bf16.msra.mxu0 0
      %2129 = vmatprep.subr.bf16.mxu0 0
      %2130 = vmatpush1.bf16.msra.mxu0 0
      %2131 = vmatprep.subr.bf16.mxu0 0
      %2132 = vmatpush1.bf16.msra.mxu0 0
      %2133 = vmatprep.subr.bf16.mxu0 0
      %2134 = vmatpush1.bf16.msra.mxu0 0
      %2135 = vmatprep.subr.bf16.mxu0 0
      %2136 = vmatpush1.bf16.msra.mxu0 0
      %2137 = vmatprep.subr.bf16.mxu0 0
      %2138 = vmatpush1.bf16.msra.mxu0 0
      %2139 = vmatprep.mubr.bf16.mxu0 0
      %2140 = vmatmul.mubr.bf16.gmra.mrb[0].mxu0 %v618
      %v2141 = vpop.f32.mrb[0].mxu0
      %v2142 = vadd.f32 %v1981, %v2141
      %v2143 = vpop.f32.mrb[0].mxu0
      %v2144 = vpop.f32.mrb[0].mxu0
      %v2145 = vadd.f32 %v1984, %v2144
      %v2146 = vpop.f32.mrb[0].mxu0
      %2147 = vmatprep.mubr.bf16.mxu0 0
      %2148 = vmatmul.mubr.bf16.gmra.mrb[0].mxu0 %v621
      %v2149 = vpop.f32.mrb[0].mxu0
      %v2150 = vadd.f32 %v1989, %v2149
      %v2151 = vpop.f32.mrb[0].mxu0
      %v2152 = vpop.f32.mrb[0].mxu0
      %v2153 = vadd.f32 %v1992, %v2152
      %v2154 = vpop.f32.mrb[0].mxu0
      %2155 = vmatprep.mubr.bf16.mxu0 0
      %2156 = vmatmul.mubr.bf16.gmra.mrb[0].mxu0 %v624
      %v2157 = vpop.f32.mrb[0].mxu0
      %v2158 = vadd.f32 %v1997, %v2157
      %v2159 = vpop.f32.mrb[0].mxu0
      %v2160 = vpop.f32.mrb[0].mxu0
      %v2161 = vadd.f32 %v2000, %v2160
      %v2162 = vpop.f32.mrb[0].mxu0
      %2163 = vmatprep.mubr.bf16.mxu0 0
      %2164 = vmatmul.mubr.bf16.gmra.mrb[0].mxu0 %v627
      %v2165 = vpop.f32.mrb[0].mxu0
      %v2166 = vadd.f32 %v2005, %v2165
      %v2167 = vpop.f32.mrb[0].mxu0
      %v2168 = vpop.f32.mrb[0].mxu0
      %v2169 = vadd.f32 %v2008, %v2168
      %v2170 = vpop.f32.mrb[0].mxu0
      %2171 = vmatprep.mubr.bf16.mxu0 0
      %2172 = vmatmul.mubr.bf16.gmra.mrb[0].mxu0 %v630
      %v2173 = vpop.f32.mrb[0].mxu0
      %v2174 = vadd.f32 %v2013, %v2173
      %v2175 = vpop.f32.mrb[0].mxu0
      %v2176 = vpop.f32.mrb[0].mxu0
      %v2177 = vadd.f32 %v2016, %v2176
      %v2178 = vpop.f32.mrb[0].mxu0
      %2179 = vmatprep.mubr.bf16.mxu0 0
      %2180 = vmatmul.mubr.bf16.gmra.mrb[0].mxu0 %v633
      %v2181 = vpop.f32.mrb[0].mxu0
      %v2182 = vadd.f32 %v2021, %v2181
      %v2183 = vpop.f32.mrb[0].mxu0
      %v2184 = vpop.f32.mrb[0].mxu0
      %v2185 = vadd.f32 %v2024, %v2184
      %v2186 = vpop.f32.mrb[0].mxu0
      %2187 = vmatprep.mubr.bf16.mxu0 0
      %2188 = vmatmul.mubr.bf16.gmra.mrb[0].mxu0 %v636
      %v2189 = vpop.f32.mrb[0].mxu0
      %v2190 = vadd.f32 %v2029, %v2189
      %v2191 = vpop.f32.mrb[0].mxu0
      %v2192 = vpop.f32.mrb[0].mxu0
      %v2193 = vadd.f32 %v2032, %v2192
      %v2194 = vpop.f32.mrb[0].mxu0
      %2195 = vmatprep.mubr.bf16.mxu0 0
      %2196 = vmatmul.mubr.bf16.gmra.mrb[0].mxu0 %v639
      %v2197 = vpop.f32.mrb[0].mxu0
      %v2198 = vadd.f32 %v2037, %v2197
      %v2199 = vpop.f32.mrb[0].mxu0
      %v2200 = vpop.f32.mrb[0].mxu0
      %v2201 = vadd.f32 %v2040, %v2200
      %v2202 = vpop.f32.mrb[0].mxu0
      %2203 = vmatprep.mubr.bf16.mxu0 0
      %2204 = vmatmul.mubr.bf16.gmra.mrb[0].mxu0 %v642
      %v2205 = vpop.f32.mrb[0].mxu0
      %v2206 = vadd.f32 %v2045, %v2205
      %v2207 = vpop.f32.mrb[0].mxu0
      %v2208 = vpop.f32.mrb[0].mxu0
      %v2209 = vadd.f32 %v2048, %v2208
      %v2210 = vpop.f32.mrb[0].mxu0
      %2211 = vmatprep.mubr.bf16.mxu0 0
      %2212 = vmatmul.mubr.bf16.gmra.mrb[0].mxu0 %v645
      %v2213 = vpop.f32.mrb[0].mxu0
      %v2214 = vadd.f32 %v2053, %v2213
      %v2215 = vpop.f32.mrb[0].mxu0
      %v2216 = vpop.f32.mrb[0].mxu0
      %v2217 = vadd.f32 %v2056, %v2216
      %v2218 = vpop.f32.mrb[0].mxu0
      %2219 = vmatprep.mubr.bf16.mxu0 0
      %2220 = vmatmul.mubr.bf16.gmra.mrb[0].mxu0 %v648
      %v2221 = vpop.f32.mrb[0].mxu0
      %v2222 = vadd.f32 %v2061, %v2221
      %v2223 = vpop.f32.mrb[0].mxu0
      %v2224 = vpop.f32.mrb[0].mxu0
      %v2225 = vadd.f32 %v2064, %v2224
      %v2226 = vpop.f32.mrb[0].mxu0
      %2227 = vmatprep.mubr.bf16.mxu0 0
      %2228 = vmatmul.mubr.bf16.gmra.mrb[0].mxu0 %v651
      %v2229 = vpop.f32.mrb[0].mxu0
      %v2230 = vadd.f32 %v2069, %v2229
      %v2231 = vpop.f32.mrb[0].mxu0
      %v2232 = vpop.f32.mrb[0].mxu0
      %v2233 = vadd.f32 %v2072, %v2232
      %v2234 = vpop.f32.mrb[0].mxu0
      %2235 = vmatprep.mubr.bf16.mxu0 0
      %2236 = vmatmul.mubr.bf16.gmra.mrb[0].mxu0 %v654
      %v2237 = vpop.f32.mrb[0].mxu0
      %v2238 = vadd.f32 %v2077, %v2237
      %v2239 = vpop.f32.mrb[0].mxu0
      %v2240 = vpop.f32.mrb[0].mxu0
      %v2241 = vadd.f32 %v2080, %v2240
      %v2242 = vpop.f32.mrb[0].mxu0
      %2243 = vmatprep.mubr.bf16.mxu0 0
      %2244 = vmatmul.mubr.bf16.gmra.mrb[0].mxu0 %v657
      %v2245 = vpop.f32.mrb[0].mxu0
      %v2246 = vadd.f32 %v2085, %v2245
      %v2247 = vpop.f32.mrb[0].mxu0
      %v2248 = vpop.f32.mrb[0].mxu0
      %v2249 = vadd.f32 %v2088, %v2248
      %v2250 = vpop.f32.mrb[0].mxu0
      %2251 = vmatprep.mubr.bf16.mxu0 0
      %2252 = vmatmul.mubr.bf16.gmra.mrb[0].mxu0 %v746
      %v2253 = vpop.f32.mrb[0].mxu0
      %v2254 = vadd.f32 %v2093, %v2253
      %v2255 = vpop.f32.mrb[0].mxu0
      %v2256 = vpop.f32.mrb[0].mxu0
      %v2257 = vadd.f32 %v2096, %v2256
      %v2258 = vpop.f32.mrb[0].mxu0
      %2259 = vmatprep.mubr.bf16.mxu0 0
      %2260 = vmatmul.mubr.bf16.gmra.mrb[0].mxu0 %v1752
      %v2261 = vpop.f32.mrb[0].mxu0
      %v2262 = vadd.f32 %v2101, %v2261
      %v2263 = vpop.f32.mrb[0].mxu0
      %v2264 = vpop.f32.mrb[0].mxu0
      %v2265 = vadd.f32 %v2104, %v2264
      %v2266 = vpop.f32.mrb[0].mxu0
      %2267 = vdwg.mxu0
      %v2268 = vadd.f32 %v1602, %v2142
      %v2269 = vadd.f32 %v1605, %v2145
      %v2270 = vadd.f32 %v1610, %v2150
      %v2271 = vadd.f32 %v1613, %v2153
      %v2272 = vadd.f32 %v1618, %v2158
      %v2273 = vadd.f32 %v1621, %v2161
      %v2274 = vadd.f32 %v1626, %v2166
      %v2275 = vadd.f32 %v1629, %v2169
      %v2276 = vadd.f32 %v1634, %v2174
      %v2277 = vadd.f32 %v1637, %v2177
      %v2278 = vadd.f32 %v1642, %v2182
      %v2279 = vadd.f32 %v1645, %v2185
      %v2280 = vadd.f32 %v1650, %v2190
      %v2281 = vadd.f32 %v1653, %v2193
      %v2282 = vadd.f32 %v1658, %v2198
      %v2283 = vadd.f32 %v1661, %v2201
      %v2284 = vadd.f32 %v1666, %v2206
      %v2285 = vadd.f32 %v1669, %v2209
      %v2286 = vadd.f32 %v1674, %v2214
      %v2287 = vadd.f32 %v1677, %v2217
      %v2288 = vadd.f32 %v1682, %v2222
      %v2289 = vadd.f32 %v1685, %v2225
      %v2290 = vadd.f32 %v1690, %v2230
      %v2291 = vadd.f32 %v1693, %v2233
      %v2292 = vadd.f32 %v1698, %v2238
      %v2293 = vadd.f32 %v1701, %v2241
      %v2294 = vadd.f32 %v1706, %v2246
      %v2295 = vadd.f32 %v1709, %v2249
      %v2296 = vadd.f32 %v1714, %v2254
      %v2297 = vadd.f32 %v1717, %v2257
      %v2298 = vadd.f32 %v1722, %v2262
      %v2299 = vadd.f32 %v1725, %v2265
      %v2300 = vld [vmem:[%s2] sm:$0x1]
      %v2302 = vlaneseq
      %v2303 = vshrl.u32 %v2302, 7
      %v2304 = vsub.s32 0, %v2303
      %v2305 = vrot.slane %v2300, %v2304
      %v2307 = vadd.f32 %v2268, %v2305
      %v2308 = vadd.f32 %v2269, %v2305
      %v2309 = vadd.f32 %v2270, %v2305
      %v2310 = vadd.f32 %v2271, %v2305
      %v2311 = vadd.f32 %v2272, %v2305
      %v2312 = vadd.f32 %v2273, %v2305
      %v2313 = vadd.f32 %v2274, %v2305
      %v2314 = vadd.f32 %v2275, %v2305
      %v2315 = vadd.f32 %v2276, %v2305
      %v2316 = vadd.f32 %v2277, %v2305
      %v2317 = vadd.f32 %v2278, %v2305
      %v2318 = vadd.f32 %v2279, %v2305
      %v2319 = vadd.f32 %v2280, %v2305
      %v2320 = vadd.f32 %v2281, %v2305
      %v2321 = vadd.f32 %v2282, %v2305
      %v2322 = vadd.f32 %v2283, %v2305
      %v2323 = vadd.f32 %v2284, %v2305
      %v2324 = vadd.f32 %v2285, %v2305
      %v2325 = vadd.f32 %v2286, %v2305
      %v2326 = vadd.f32 %v2287, %v2305
      %v2327 = vadd.f32 %v2288, %v2305
      %v2328 = vadd.f32 %v2289, %v2305
      %v2329 = vadd.f32 %v2290, %v2305
      %v2330 = vadd.f32 %v2291, %v2305
      %v2331 = vadd.f32 %v2292, %v2305
      %v2332 = vadd.f32 %v2293, %v2305
      %v2333 = vadd.f32 %v2294, %v2305
      %v2334 = vadd.f32 %v2295, %v2305
      %v2335 = vadd.f32 %v2296, %v2305
      %v2336 = vadd.f32 %v2297, %v2305
      %v2337 = vadd.f32 %v2298, %v2305
      %v2338 = vadd.f32 %v2299, %v2305
      %vm2339 = vcmp.gt.f32.partialorder %v2307, 0.0
      %vm2340 = vcmp.gt.f32.partialorder %v2308, 0.0
      %vm2341 = vcmp.gt.f32.partialorder %v2309, 0.0
      %vm2342 = vcmp.gt.f32.partialorder %v2310, 0.0
      %vm2343 = vcmp.gt.f32.partialorder %v2311, 0.0
      %vm2344 = vcmp.gt.f32.partialorder %v2312, 0.0
      %vm2345 = vcmp.gt.f32.partialorder %v2313, 0.0
      %vm2346 = vcmp.gt.f32.partialorder %v2314, 0.0
      %vm2347 = vcmp.gt.f32.partialorder %v2315, 0.0
      %vm2348 = vcmp.gt.f32.partialorder %v2316, 0.0
      %vm2349 = vcmp.gt.f32.partialorder %v2317, 0.0
      %vm2350 = vcmp.gt.f32.partialorder %v2318, 0.0
      %vm2351 = vcmp.gt.f32.partialorder %v2319, 0.0
      %vm2352 = vcmp.gt.f32.partialorder %v2320, 0.0
      %vm2353 = vcmp.gt.f32.partialorder %v2321, 0.0
      %vm2354 = vcmp.gt.f32.partialorder %v2322, 0.0
      %vm2355 = vcmp.gt.f32.partialorder %v2323, 0.0
      %vm2356 = vcmp.gt.f32.partialorder %v2324, 0.0
      %vm2357 = vcmp.gt.f32.partialorder %v2325, 0.0
      %vm2358 = vcmp.gt.f32.partialorder %v2326, 0.0
      %vm2359 = vcmp.gt.f32.partialorder %v2327, 0.0
      %vm2360 = vcmp.gt.f32.partialorder %v2328, 0.0
      %vm2361 = vcmp.gt.f32.partialorder %v2329, 0.0
      %vm2362 = vcmp.gt.f32.partialorder %v2330, 0.0
      %vm2363 = vcmp.gt.f32.partialorder %v2331, 0.0
      %vm2364 = vcmp.gt.f32.partialorder %v2332, 0.0
      %vm2365 = vcmp.gt.f32.partialorder %v2333, 0.0
      %vm2366 = vcmp.gt.f32.partialorder %v2334, 0.0
      %vm2367 = vcmp.gt.f32.partialorder %v2335, 0.0
      %vm2368 = vcmp.gt.f32.partialorder %v2336, 0.0
      %vm2369 = vcmp.gt.f32.partialorder %v2337, 0.0
      %vm2370 = vcmp.gt.f32.partialorder %v2338, 0.0
      %v2371 = vmul.f32 %v2307, 0.1
      %v2372 = vmul.f32 %v2308, 0.1
      %v2373 = vmul.f32 %v2309, 0.1
      %v2374 = vmul.f32 %v2310, 0.1
      %v2375 = vmul.f32 %v2311, 0.1
      %v2376 = vmul.f32 %v2312, 0.1
      %v2377 = vmul.f32 %v2313, 0.1
      %v2378 = vmul.f32 %v2314, 0.1
      %v2379 = vmul.f32 %v2315, 0.1
      %v2380 = vmul.f32 %v2316, 0.1
      %v2381 = vmul.f32 %v2317, 0.1
      %v2382 = vmul.f32 %v2318, 0.1
      %v2383 = vmul.f32 %v2319, 0.1
      %v2384 = vmul.f32 %v2320, 0.1
      %v2385 = vmul.f32 %v2321, 0.1
      %v2386 = vmul.f32 %v2322, 0.1
      %v2387 = vmul.f32 %v2323, 0.1
      %v2388 = vmul.f32 %v2324, 0.1
      %v2389 = vmul.f32 %v2325, 0.1
      %v2390 = vmul.f32 %v2326, 0.1
      %v2391 = vmul.f32 %v2327, 0.1
      %v2392 = vmul.f32 %v2328, 0.1
      %v2393 = vmul.f32 %v2329, 0.1
      %v2394 = vmul.f32 %v2330, 0.1
      %v2395 = vmul.f32 %v2331, 0.1
      %v2396 = vmul.f32 %v2332, 0.1
      %v2397 = vmul.f32 %v2333, 0.1
      %v2398 = vmul.f32 %v2334, 0.1
      %v2399 = vmul.f32 %v2335, 0.1
      %v2400 = vmul.f32 %v2336, 0.1
      %v2401 = vmul.f32 %v2337, 0.1
      %v2402 = vmul.f32 %v2338, 0.1
      %v2403 = vsel %vm2339, %v2307, %v2371
      %v2404 = vsel %vm2340, %v2308, %v2372
      %v2405 = vsel %vm2341, %v2309, %v2373
      %v2406 = vsel %vm2342, %v2310, %v2374
      %v2407 = vsel %vm2343, %v2311, %v2375
      %v2408 = vsel %vm2344, %v2312, %v2376
      %v2409 = vsel %vm2345, %v2313, %v2377
      %v2410 = vsel %vm2346, %v2314, %v2378
      %v2411 = vsel %vm2347, %v2315, %v2379
      %v2412 = vsel %vm2348, %v2316, %v2380
      %v2413 = vsel %vm2349, %v2317, %v2381
      %v2414 = vsel %vm2350, %v2318, %v2382
      %v2415 = vsel %vm2351, %v2319, %v2383
      %v2416 = vsel %vm2352, %v2320, %v2384
      %v2417 = vsel %vm2353, %v2321, %v2385
      %v2418 = vsel %vm2354, %v2322, %v2386
      %v2419 = vsel %vm2355, %v2323, %v2387
      %v2420 = vsel %vm2356, %v2324, %v2388
      %v2421 = vsel %vm2357, %v2325, %v2389
      %v2422 = vsel %vm2358, %v2326, %v2390
      %v2423 = vsel %vm2359, %v2327, %v2391
      %v2424 = vsel %vm2360, %v2328, %v2392
      %v2425 = vsel %vm2361, %v2329, %v2393
      %v2426 = vsel %vm2362, %v2330, %v2394
      %v2427 = vsel %vm2363, %v2331, %v2395
      %v2428 = vsel %vm2364, %v2332, %v2396
      %v2429 = vsel %vm2365, %v2333, %v2397
      %v2430 = vsel %vm2366, %v2334, %v2398
      %v2431 = vsel %vm2367, %v2335, %v2399
      %v2432 = vsel %vm2368, %v2336, %v2400
      %v2433 = vsel %vm2369, %v2337, %v2401
      %v2434 = vsel %vm2370, %v2338, %v2402
      %v2467 = vcombine.high %v2403, %v2403
      %v2469 = vunpack.c.l.s4 1983009808
      %v2470 = vunpack.c.0.s8 %v2469
      %v2471 = vlaneseq
      %v2472 = vshrl.u32 %v2471, 7
      %v2473 = vsub.s32 %v2470, %v2472
      %v2474 = vrot.slane %v2403, %v2473
      %v2476 = vunpack.c.l.s4 1983009808
      %v2477 = vunpack.c.0.s8 %v2476
      %v2478 = vlaneseq
      %v2479 = vshrl.u32 %v2478, 7
      %v2480 = vsub.s32 %v2477, %v2479
      %v2481 = vrot.slane %v2467, %v2480
      %v2482 = vcombine.high %v2474, %v2474
      %v2483 = vcombine.high %v2481, %v2481
      %v2484 = vcombine.high %v2404, %v2404
      %v2486 = vunpack.c.l.s4 1983009808
      %v2487 = vunpack.c.0.s8 %v2486
      %v2488 = vlaneseq
      %v2489 = vshrl.u32 %v2488, 7
      %v2490 = vsub.s32 %v2487, %v2489
      %v2491 = vrot.slane %v2404, %v2490
      %v2493 = vunpack.c.l.s4 1983009808
      %v2494 = vunpack.c.0.s8 %v2493
      %v2495 = vlaneseq
      %v2496 = vshrl.u32 %v2495, 7
      %v2497 = vsub.s32 %v2494, %v2496
      %v2498 = vrot.slane %v2484, %v2497
      %v2499 = vcombine.high %v2491, %v2491
      %v2500 = vcombine.high %v2498, %v2498
      %v2501 = vcombine.high %v2405, %v2405
      %v2503 = vunpack.c.l.s4 1983009808
      %v2504 = vunpack.c.0.s8 %v2503
      %v2505 = vlaneseq
      %v2506 = vshrl.u32 %v2505, 7
      %v2507 = vsub.s32 %v2504, %v2506
      %v2508 = vrot.slane %v2405, %v2507
      %v2510 = vunpack.c.l.s4 1983009808
      %v2511 = vunpack.c.0.s8 %v2510
      %v2512 = vlaneseq
      %v2513 = vshrl.u32 %v2512, 7
      %v2514 = vsub.s32 %v2511, %v2513
      %v2515 = vrot.slane %v2501, %v2514
      %v2516 = vcombine.high %v2508, %v2508
      %v2517 = vcombine.high %v2515, %v2515
      %v2518 = vcombine.high %v2406, %v2406
      %v2520 = vunpack.c.l.s4 1983009808
      %v2521 = vunpack.c.0.s8 %v2520
      %v2522 = vlaneseq
      %v2523 = vshrl.u32 %v2522, 7
      %v2524 = vsub.s32 %v2521, %v2523
      %v2525 = vrot.slane %v2406, %v2524
      %v2527 = vunpack.c.l.s4 1983009808
      %v2528 = vunpack.c.0.s8 %v2527
      %v2529 = vlaneseq
      %v2530 = vshrl.u32 %v2529, 7
      %v2531 = vsub.s32 %v2528, %v2530
      %v2532 = vrot.slane %v2518, %v2531
      %v2533 = vcombine.high %v2525, %v2525
      %v2534 = vcombine.high %v2532, %v2532
      %v2535 = vcombine.high %v2407, %v2407
      %v2537 = vunpack.c.l.s4 1983009808
      %v2538 = vunpack.c.0.s8 %v2537
      %v2539 = vlaneseq
      %v2540 = vshrl.u32 %v2539, 7
      %v2541 = vsub.s32 %v2538, %v2540
      %v2542 = vrot.slane %v2407, %v2541
      %v2544 = vunpack.c.l.s4 1983009808
      %v2545 = vunpack.c.0.s8 %v2544
      %v2546 = vlaneseq
      %v2547 = vshrl.u32 %v2546, 7
      %v2548 = vsub.s32 %v2545, %v2547
      %v2549 = vrot.slane %v2535, %v2548
      %v2550 = vcombine.high %v2542, %v2542
      %v2551 = vcombine.high %v2549, %v2549
      %v2552 = vcombine.high %v2408, %v2408
      %v2554 = vunpack.c.l.s4 1983009808
      %v2555 = vunpack.c.0.s8 %v2554
      %v2556 = vlaneseq
      %v2557 = vshrl.u32 %v2556, 7
      %v2558 = vsub.s32 %v2555, %v2557
      %v2559 = vrot.slane %v2408, %v2558
      %v2561 = vunpack.c.l.s4 1983009808
      %v2562 = vunpack.c.0.s8 %v2561
      %v2563 = vlaneseq
      %v2564 = vshrl.u32 %v2563, 7
      %v2565 = vsub.s32 %v2562, %v2564
      %v2566 = vrot.slane %v2552, %v2565
      %v2567 = vcombine.high %v2559, %v2559
      %v2568 = vcombine.high %v2566, %v2566
      %v2569 = vcombine.high %v2409, %v2409
      %v2571 = vunpack.c.l.s4 1983009808
      %v2572 = vunpack.c.0.s8 %v2571
      %v2573 = vlaneseq
      %v2574 = vshrl.u32 %v2573, 7
      %v2575 = vsub.s32 %v2572, %v2574
      %v2576 = vrot.slane %v2409, %v2575
      %v2578 = vunpack.c.l.s4 1983009808
      %v2579 = vunpack.c.0.s8 %v2578
      %v2580 = vlaneseq
      %v2581 = vshrl.u32 %v2580, 7
      %v2582 = vsub.s32 %v2579, %v2581
      %v2583 = vrot.slane %v2569, %v2582
      %v2584 = vcombine.high %v2576, %v2576
      %v2585 = vcombine.high %v2583, %v2583
      %v2586 = vcombine.high %v2410, %v2410
      %v2588 = vunpack.c.l.s4 1983009808
      %v2589 = vunpack.c.0.s8 %v2588
      %v2590 = vlaneseq
      %v2591 = vshrl.u32 %v2590, 7
      %v2592 = vsub.s32 %v2589, %v2591
      %v2593 = vrot.slane %v2410, %v2592
      %v2595 = vunpack.c.l.s4 1983009808
      %v2596 = vunpack.c.0.s8 %v2595
      %v2597 = vlaneseq
      %v2598 = vshrl.u32 %v2597, 7
      %v2599 = vsub.s32 %v2596, %v2598
      %v2600 = vrot.slane %v2586, %v2599
      %v2601 = vcombine.high %v2593, %v2593
      %v2602 = vcombine.high %v2600, %v2600
      %v2603 = vcombine.high %v2411, %v2411
      %v2605 = vunpack.c.l.s4 1983009808
      %v2606 = vunpack.c.0.s8 %v2605
      %v2607 = vlaneseq
      %v2608 = vshrl.u32 %v2607, 7
      %v2609 = vsub.s32 %v2606, %v2608
      %v2610 = vrot.slane %v2411, %v2609
      %v2612 = vunpack.c.l.s4 1983009808
      %v2613 = vunpack.c.0.s8 %v2612
      %v2614 = vlaneseq
      %v2615 = vshrl.u32 %v2614, 7
      %v2616 = vsub.s32 %v2613, %v2615
      %v2617 = vrot.slane %v2603, %v2616
      %v2618 = vcombine.high %v2610, %v2610
      %v2619 = vcombine.high %v2617, %v2617
      %v2620 = vcombine.high %v2412, %v2412
      %v2622 = vunpack.c.l.s4 1983009808
      %v2623 = vunpack.c.0.s8 %v2622
      %v2624 = vlaneseq
      %v2625 = vshrl.u32 %v2624, 7
      %v2626 = vsub.s32 %v2623, %v2625
      %v2627 = vrot.slane %v2412, %v2626
      %v2629 = vunpack.c.l.s4 1983009808
      %v2630 = vunpack.c.0.s8 %v2629
      %v2631 = vlaneseq
      %v2632 = vshrl.u32 %v2631, 7
      %v2633 = vsub.s32 %v2630, %v2632
      %v2634 = vrot.slane %v2620, %v2633
      %v2635 = vcombine.high %v2627, %v2627
      %v2636 = vcombine.high %v2634, %v2634
      %v2637 = vcombine.high %v2413, %v2413
      %v2639 = vunpack.c.l.s4 1983009808
      %v2640 = vunpack.c.0.s8 %v2639
      %v2641 = vlaneseq
      %v2642 = vshrl.u32 %v2641, 7
      %v2643 = vsub.s32 %v2640, %v2642
      %v2644 = vrot.slane %v2413, %v2643
      %v2646 = vunpack.c.l.s4 1983009808
      %v2647 = vunpack.c.0.s8 %v2646
      %v2648 = vlaneseq
      %v2649 = vshrl.u32 %v2648, 7
      %v2650 = vsub.s32 %v2647, %v2649
      %v2651 = vrot.slane %v2637, %v2650
      %v2652 = vcombine.high %v2644, %v2644
      %v2653 = vcombine.high %v2651, %v2651
      %v2654 = vcombine.high %v2414, %v2414
      %v2656 = vunpack.c.l.s4 1983009808
      %v2657 = vunpack.c.0.s8 %v2656
      %v2658 = vlaneseq
      %v2659 = vshrl.u32 %v2658, 7
      %v2660 = vsub.s32 %v2657, %v2659
      %v2661 = vrot.slane %v2414, %v2660
      %v2663 = vunpack.c.l.s4 1983009808
      %v2664 = vunpack.c.0.s8 %v2663
      %v2665 = vlaneseq
      %v2666 = vshrl.u32 %v2665, 7
      %v2667 = vsub.s32 %v2664, %v2666
      %v2668 = vrot.slane %v2654, %v2667
      %v2669 = vcombine.high %v2661, %v2661
      %v2670 = vcombine.high %v2668, %v2668
      %v2671 = vcombine.high %v2415, %v2415
      %v2673 = vunpack.c.l.s4 1983009808
      %v2674 = vunpack.c.0.s8 %v2673
      %v2675 = vlaneseq
      %v2676 = vshrl.u32 %v2675, 7
      %v2677 = vsub.s32 %v2674, %v2676
      %v2678 = vrot.slane %v2415, %v2677
      %v2680 = vunpack.c.l.s4 1983009808
      %v2681 = vunpack.c.0.s8 %v2680
      %v2682 = vlaneseq
      %v2683 = vshrl.u32 %v2682, 7
      %v2684 = vsub.s32 %v2681, %v2683
      %v2685 = vrot.slane %v2671, %v2684
      %v2686 = vcombine.high %v2678, %v2678
      %v2687 = vcombine.high %v2685, %v2685
      %v2688 = vcombine.high %v2416, %v2416
      %v2690 = vunpack.c.l.s4 1983009808
      %v2691 = vunpack.c.0.s8 %v2690
      %v2692 = vlaneseq
      %v2693 = vshrl.u32 %v2692, 7
      %v2694 = vsub.s32 %v2691, %v2693
      %v2695 = vrot.slane %v2416, %v2694
      %v2697 = vunpack.c.l.s4 1983009808
      %v2698 = vunpack.c.0.s8 %v2697
      %v2699 = vlaneseq
      %v2700 = vshrl.u32 %v2699, 7
      %v2701 = vsub.s32 %v2698, %v2700
      %v2702 = vrot.slane %v2688, %v2701
      %v2703 = vcombine.high %v2695, %v2695
      %v2704 = vcombine.high %v2702, %v2702
      %v2705 = vcombine.high %v2417, %v2417
      %v2707 = vunpack.c.l.s4 1983009808
      %v2708 = vunpack.c.0.s8 %v2707
      %v2709 = vlaneseq
      %v2710 = vshrl.u32 %v2709, 7
      %v2711 = vsub.s32 %v2708, %v2710
      %v2712 = vrot.slane %v2417, %v2711
      %v2714 = vunpack.c.l.s4 1983009808
      %v2715 = vunpack.c.0.s8 %v2714
      %v2716 = vlaneseq
      %v2717 = vshrl.u32 %v2716, 7
      %v2718 = vsub.s32 %v2715, %v2717
      %v2719 = vrot.slane %v2705, %v2718
      %v2720 = vcombine.high %v2712, %v2712
      %v2721 = vcombine.high %v2719, %v2719
      %v2722 = vcombine.high %v2418, %v2418
      %v2724 = vunpack.c.l.s4 1983009808
      %v2725 = vunpack.c.0.s8 %v2724
      %v2726 = vlaneseq
      %v2727 = vshrl.u32 %v2726, 7
      %v2728 = vsub.s32 %v2725, %v2727
      %v2729 = vrot.slane %v2418, %v2728
      %v2731 = vunpack.c.l.s4 1983009808
      %v2732 = vunpack.c.0.s8 %v2731
      %v2733 = vlaneseq
      %v2734 = vshrl.u32 %v2733, 7
      %v2735 = vsub.s32 %v2732, %v2734
      %v2736 = vrot.slane %v2722, %v2735
      %v2737 = vcombine.high %v2729, %v2729
      %v2738 = vcombine.high %v2736, %v2736
      %v2739 = vcombine.high %v2419, %v2419
      %v2741 = vunpack.c.l.s4 1983009808
      %v2742 = vunpack.c.0.s8 %v2741
      %v2743 = vlaneseq
      %v2744 = vshrl.u32 %v2743, 7
      %v2745 = vsub.s32 %v2742, %v2744
      %v2746 = vrot.slane %v2419, %v2745
      %v2748 = vunpack.c.l.s4 1983009808
      %v2749 = vunpack.c.0.s8 %v2748
      %v2750 = vlaneseq
      %v2751 = vshrl.u32 %v2750, 7
      %v2752 = vsub.s32 %v2749, %v2751
      %v2753 = vrot.slane %v2739, %v2752
      %v2754 = vcombine.high %v2746, %v2746
      %v2755 = vcombine.high %v2753, %v2753
      %v2756 = vcombine.high %v2420, %v2420
      %v2758 = vunpack.c.l.s4 1983009808
      %v2759 = vunpack.c.0.s8 %v2758
      %v2760 = vlaneseq
      %v2761 = vshrl.u32 %v2760, 7
      %v2762 = vsub.s32 %v2759, %v2761
      %v2763 = vrot.slane %v2420, %v2762
      %v2765 = vunpack.c.l.s4 1983009808
      %v2766 = vunpack.c.0.s8 %v2765
      %v2767 = vlaneseq
      %v2768 = vshrl.u32 %v2767, 7
      %v2769 = vsub.s32 %v2766, %v2768
      %v2770 = vrot.slane %v2756, %v2769
      %v2771 = vcombine.high %v2763, %v2763
      %v2772 = vcombine.high %v2770, %v2770
      %v2773 = vcombine.high %v2421, %v2421
      %v2775 = vunpack.c.l.s4 1983009808
      %v2776 = vunpack.c.0.s8 %v2775
      %v2777 = vlaneseq
      %v2778 = vshrl.u32 %v2777, 7
      %v2779 = vsub.s32 %v2776, %v2778
      %v2780 = vrot.slane %v2421, %v2779
      %v2782 = vunpack.c.l.s4 1983009808
      %v2783 = vunpack.c.0.s8 %v2782
      %v2784 = vlaneseq
      %v2785 = vshrl.u32 %v2784, 7
      %v2786 = vsub.s32 %v2783, %v2785
      %v2787 = vrot.slane %v2773, %v2786
      %v2788 = vcombine.high %v2780, %v2780
      %v2789 = vcombine.high %v2787, %v2787
      %v2790 = vcombine.high %v2422, %v2422
      %v2792 = vunpack.c.l.s4 1983009808
      %v2793 = vunpack.c.0.s8 %v2792
      %v2794 = vlaneseq
      %v2795 = vshrl.u32 %v2794, 7
      %v2796 = vsub.s32 %v2793, %v2795
      %v2797 = vrot.slane %v2422, %v2796
      %v2799 = vunpack.c.l.s4 1983009808
      %v2800 = vunpack.c.0.s8 %v2799
      %v2801 = vlaneseq
      %v2802 = vshrl.u32 %v2801, 7
      %v2803 = vsub.s32 %v2800, %v2802
      %v2804 = vrot.slane %v2790, %v2803
      %v2805 = vcombine.high %v2797, %v2797
      %v2806 = vcombine.high %v2804, %v2804
      %v2807 = vcombine.high %v2423, %v2423
      %v2809 = vunpack.c.l.s4 1983009808
      %v2810 = vunpack.c.0.s8 %v2809
      %v2811 = vlaneseq
      %v2812 = vshrl.u32 %v2811, 7
      %v2813 = vsub.s32 %v2810, %v2812
      %v2814 = vrot.slane %v2423, %v2813
      %v2816 = vunpack.c.l.s4 1983009808
      %v2817 = vunpack.c.0.s8 %v2816
      %v2818 = vlaneseq
      %v2819 = vshrl.u32 %v2818, 7
      %v2820 = vsub.s32 %v2817, %v2819
      %v2821 = vrot.slane %v2807, %v2820
      %v2822 = vcombine.high %v2814, %v2814
      %v2823 = vcombine.high %v2821, %v2821
      %v2824 = vcombine.high %v2424, %v2424
      %v2826 = vunpack.c.l.s4 1983009808
      %v2827 = vunpack.c.0.s8 %v2826
      %v2828 = vlaneseq
      %v2829 = vshrl.u32 %v2828, 7
      %v2830 = vsub.s32 %v2827, %v2829
      %v2831 = vrot.slane %v2424, %v2830
      %v2833 = vunpack.c.l.s4 1983009808
      %v2834 = vunpack.c.0.s8 %v2833
      %v2835 = vlaneseq
      %v2836 = vshrl.u32 %v2835, 7
      %v2837 = vsub.s32 %v2834, %v2836
      %v2838 = vrot.slane %v2824, %v2837
      %v2839 = vcombine.high %v2831, %v2831
      %v2840 = vcombine.high %v2838, %v2838
      %v2841 = vcombine.high %v2425, %v2425
      %v2843 = vunpack.c.l.s4 1983009808
      %v2844 = vunpack.c.0.s8 %v2843
      %v2845 = vlaneseq
      %v2846 = vshrl.u32 %v2845, 7
      %v2847 = vsub.s32 %v2844, %v2846
      %v2848 = vrot.slane %v2425, %v2847
      %v2850 = vunpack.c.l.s4 1983009808
      %v2851 = vunpack.c.0.s8 %v2850
      %v2852 = vlaneseq
      %v2853 = vshrl.u32 %v2852, 7
      %v2854 = vsub.s32 %v2851, %v2853
      %v2855 = vrot.slane %v2841, %v2854
      %v2856 = vcombine.high %v2848, %v2848
      %v2857 = vcombine.high %v2855, %v2855
      %v2858 = vcombine.high %v2426, %v2426
      %v2860 = vunpack.c.l.s4 1983009808
      %v2861 = vunpack.c.0.s8 %v2860
      %v2862 = vlaneseq
      %v2863 = vshrl.u32 %v2862, 7
      %v2864 = vsub.s32 %v2861, %v2863
      %v2865 = vrot.slane %v2426, %v2864
      %v2867 = vunpack.c.l.s4 1983009808
      %v2868 = vunpack.c.0.s8 %v2867
      %v2869 = vlaneseq
      %v2870 = vshrl.u32 %v2869, 7
      %v2871 = vsub.s32 %v2868, %v2870
      %v2872 = vrot.slane %v2858, %v2871
      %v2873 = vcombine.high %v2865, %v2865
      %v2874 = vcombine.high %v2872, %v2872
      %v2875 = vcombine.high %v2427, %v2427
      %v2877 = vunpack.c.l.s4 1983009808
      %v2878 = vunpack.c.0.s8 %v2877
      %v2879 = vlaneseq
      %v2880 = vshrl.u32 %v2879, 7
      %v2881 = vsub.s32 %v2878, %v2880
      %v2882 = vrot.slane %v2427, %v2881
      %v2884 = vunpack.c.l.s4 1983009808
      %v2885 = vunpack.c.0.s8 %v2884
      %v2886 = vlaneseq
      %v2887 = vshrl.u32 %v2886, 7
      %v2888 = vsub.s32 %v2885, %v2887
      %v2889 = vrot.slane %v2875, %v2888
      %v2890 = vcombine.high %v2882, %v2882
      %v2891 = vcombine.high %v2889, %v2889
      %v2892 = vcombine.high %v2428, %v2428
      %v2894 = vunpack.c.l.s4 1983009808
      %v2895 = vunpack.c.0.s8 %v2894
      %v2896 = vlaneseq
      %v2897 = vshrl.u32 %v2896, 7
      %v2898 = vsub.s32 %v2895, %v2897
      %v2899 = vrot.slane %v2428, %v2898
      %v2901 = vunpack.c.l.s4 1983009808
      %v2902 = vunpack.c.0.s8 %v2901
      %v2903 = vlaneseq
      %v2904 = vshrl.u32 %v2903, 7
      %v2905 = vsub.s32 %v2902, %v2904
      %v2906 = vrot.slane %v2892, %v2905
      %v2907 = vcombine.high %v2899, %v2899
      %v2908 = vcombine.high %v2906, %v2906
      %v2909 = vcombine.high %v2429, %v2429
      %v2911 = vunpack.c.l.s4 1983009808
      %v2912 = vunpack.c.0.s8 %v2911
      %v2913 = vlaneseq
      %v2914 = vshrl.u32 %v2913, 7
      %v2915 = vsub.s32 %v2912, %v2914
      %v2916 = vrot.slane %v2429, %v2915
      %v2918 = vunpack.c.l.s4 1983009808
      %v2919 = vunpack.c.0.s8 %v2918
      %v2920 = vlaneseq
      %v2921 = vshrl.u32 %v2920, 7
      %v2922 = vsub.s32 %v2919, %v2921
      %v2923 = vrot.slane %v2909, %v2922
      %v2924 = vcombine.high %v2916, %v2916
      %v2925 = vcombine.high %v2923, %v2923
      %v2926 = vcombine.high %v2430, %v2430
      %v2928 = vunpack.c.l.s4 1983009808
      %v2929 = vunpack.c.0.s8 %v2928
      %v2930 = vlaneseq
      %v2931 = vshrl.u32 %v2930, 7
      %v2932 = vsub.s32 %v2929, %v2931
      %v2933 = vrot.slane %v2430, %v2932
      %v2935 = vunpack.c.l.s4 1983009808
      %v2936 = vunpack.c.0.s8 %v2935
      %v2937 = vlaneseq
      %v2938 = vshrl.u32 %v2937, 7
      %v2939 = vsub.s32 %v2936, %v2938
      %v2940 = vrot.slane %v2926, %v2939
      %v2941 = vcombine.high %v2933, %v2933
      %v2942 = vcombine.high %v2940, %v2940
      %v2943 = vcombine.high %v2431, %v2431
      %v2945 = vunpack.c.l.s4 1983009808
      %v2946 = vunpack.c.0.s8 %v2945
      %v2947 = vlaneseq
      %v2948 = vshrl.u32 %v2947, 7
      %v2949 = vsub.s32 %v2946, %v2948
      %v2950 = vrot.slane %v2431, %v2949
      %v2952 = vunpack.c.l.s4 1983009808
      %v2953 = vunpack.c.0.s8 %v2952
      %v2954 = vlaneseq
      %v2955 = vshrl.u32 %v2954, 7
      %v2956 = vsub.s32 %v2953, %v2955
      %v2957 = vrot.slane %v2943, %v2956
      %v2958 = vcombine.high %v2950, %v2950
      %v2959 = vcombine.high %v2957, %v2957
      %v2960 = vcombine.high %v2432, %v2432
      %v2962 = vunpack.c.l.s4 1983009808
      %v2963 = vunpack.c.0.s8 %v2962
      %v2964 = vlaneseq
      %v2965 = vshrl.u32 %v2964, 7
      %v2966 = vsub.s32 %v2963, %v2965
      %v2967 = vrot.slane %v2432, %v2966
      %v2969 = vunpack.c.l.s4 1983009808
      %v2970 = vunpack.c.0.s8 %v2969
      %v2971 = vlaneseq
      %v2972 = vshrl.u32 %v2971, 7
      %v2973 = vsub.s32 %v2970, %v2972
      %v2974 = vrot.slane %v2960, %v2973
      %v2975 = vcombine.high %v2967, %v2967
      %v2976 = vcombine.high %v2974, %v2974
      %v2977 = vcombine.high %v2433, %v2433
      %v2979 = vunpack.c.l.s4 1983009808
      %v2980 = vunpack.c.0.s8 %v2979
      %v2981 = vlaneseq
      %v2982 = vshrl.u32 %v2981, 7
      %v2983 = vsub.s32 %v2980, %v2982
      %v2984 = vrot.slane %v2433, %v2983
      %v2986 = vunpack.c.l.s4 1983009808
      %v2987 = vunpack.c.0.s8 %v2986
      %v2988 = vlaneseq
      %v2989 = vshrl.u32 %v2988, 7
      %v2990 = vsub.s32 %v2987, %v2989
      %v2991 = vrot.slane %v2977, %v2990
      %v2992 = vcombine.high %v2984, %v2984
      %v2993 = vcombine.high %v2991, %v2991
      %v2994 = vcombine.high %v2434, %v2434
      %v2996 = vunpack.c.l.s4 1983009808
      %v2997 = vunpack.c.0.s8 %v2996
      %v2998 = vlaneseq
      %v2999 = vshrl.u32 %v2998, 7
      %v3000 = vsub.s32 %v2997, %v2999
      %v3001 = vrot.slane %v2434, %v3000
      %v3003 = vunpack.c.l.s4 1983009808
      %v3004 = vunpack.c.0.s8 %v3003
      %v3005 = vlaneseq
      %v3006 = vshrl.u32 %v3005, 7
      %v3007 = vsub.s32 %v3004, %v3006
      %v3008 = vrot.slane %v2994, %v3007
      %v3009 = vcombine.high %v3001, %v3001
      %v3010 = vcombine.high %v3008, %v3008
      %vm3139 = vcmask 1041408
      %v3140 = vsel %vm3139, %v2474, -inf
      %v3141 = vrot.slane %v3140, 4
      %v3142 = vmax.f32 %v3140, %v3141
      %v3143 = vrot.slane %v3142, 2
      %v3144 = vmax.f32 %v3142, %v3143
      %v3145 = vrot.slane %v3144, 1
      %v3146 = vmax.f32 %v3144, %v3145
      %v3147 = vsel %vm3139, %v2482, -inf
      %v3148 = vrot.slane %v3147, 4
      %v3149 = vmax.f32 %v3147, %v3148
      %v3150 = vrot.slane %v3149, 2
      %v3151 = vmax.f32 %v3149, %v3150
      %v3152 = vrot.slane %v3151, 1
      %v3153 = vmax.f32 %v3151, %v3152
      %v3154 = vsel %vm3139, %v2481, -inf
      %v3155 = vrot.slane %v3154, 4
      %v3156 = vmax.f32 %v3154, %v3155
      %v3157 = vrot.slane %v3156, 2
      %v3158 = vmax.f32 %v3156, %v3157
      %v3159 = vrot.slane %v3158, 1
      %v3160 = vmax.f32 %v3158, %v3159
      %v3161 = vsel %vm3139, %v2483, -inf
      %v3162 = vrot.slane %v3161, 4
      %v3163 = vmax.f32 %v3161, %v3162
      %v3164 = vrot.slane %v3163, 2
      %v3165 = vmax.f32 %v3163, %v3164
      %v3166 = vrot.slane %v3165, 1
      %v3167 = vmax.f32 %v3165, %v3166
      %v3168 = vsel %vm3139, %v2491, -inf
      %v3169 = vrot.slane %v3168, 4
      %v3170 = vmax.f32 %v3168, %v3169
      %v3171 = vrot.slane %v3170, 2
      %v3172 = vmax.f32 %v3170, %v3171
      %v3173 = vrot.slane %v3172, 1
      %v3174 = vmax.f32 %v3172, %v3173
      %v3175 = vsel %vm3139, %v2499, -inf
      %v3176 = vrot.slane %v3175, 4
      %v3177 = vmax.f32 %v3175, %v3176
      %v3178 = vrot.slane %v3177, 2
      %v3179 = vmax.f32 %v3177, %v3178
      %v3180 = vrot.slane %v3179, 1
      %v3181 = vmax.f32 %v3179, %v3180
      %v3182 = vsel %vm3139, %v2498, -inf
      %v3183 = vrot.slane %v3182, 4
      %v3184 = vmax.f32 %v3182, %v3183
      %v3185 = vrot.slane %v3184, 2
      %v3186 = vmax.f32 %v3184, %v3185
      %v3187 = vrot.slane %v3186, 1
      %v3188 = vmax.f32 %v3186, %v3187
      %v3189 = vsel %vm3139, %v2500, -inf
      %v3190 = vrot.slane %v3189, 4
      %v3191 = vmax.f32 %v3189, %v3190
      %v3192 = vrot.slane %v3191, 2
      %v3193 = vmax.f32 %v3191, %v3192
      %v3194 = vrot.slane %v3193, 1
      %v3195 = vmax.f32 %v3193, %v3194
      %v3196 = vsel %vm3139, %v2508, -inf
      %v3197 = vrot.slane %v3196, 4
      %v3198 = vmax.f32 %v3196, %v3197
      %v3199 = vrot.slane %v3198, 2
      %v3200 = vmax.f32 %v3198, %v3199
      %v3201 = vrot.slane %v3200, 1
      %v3202 = vmax.f32 %v3200, %v3201
      %v3203 = vsel %vm3139, %v2516, -inf
      %v3204 = vrot.slane %v3203, 4
      %v3205 = vmax.f32 %v3203, %v3204
      %v3206 = vrot.slane %v3205, 2
      %v3207 = vmax.f32 %v3205, %v3206
      %v3208 = vrot.slane %v3207, 1
      %v3209 = vmax.f32 %v3207, %v3208
      %v3210 = vsel %vm3139, %v2515, -inf
      %v3211 = vrot.slane %v3210, 4
      %v3212 = vmax.f32 %v3210, %v3211
      %v3213 = vrot.slane %v3212, 2
      %v3214 = vmax.f32 %v3212, %v3213
      %v3215 = vrot.slane %v3214, 1
      %v3216 = vmax.f32 %v3214, %v3215
      %v3217 = vsel %vm3139, %v2517, -inf
      %v3218 = vrot.slane %v3217, 4
      %v3219 = vmax.f32 %v3217, %v3218
      %v3220 = vrot.slane %v3219, 2
      %v3221 = vmax.f32 %v3219, %v3220
      %v3222 = vrot.slane %v3221, 1
      %v3223 = vmax.f32 %v3221, %v3222
      %v3224 = vsel %vm3139, %v2525, -inf
      %v3225 = vrot.slane %v3224, 4
      %v3226 = vmax.f32 %v3224, %v3225
      %v3227 = vrot.slane %v3226, 2
      %v3228 = vmax.f32 %v3226, %v3227
      %v3229 = vrot.slane %v3228, 1
      %v3230 = vmax.f32 %v3228, %v3229
      %v3231 = vsel %vm3139, %v2533, -inf
      %v3232 = vrot.slane %v3231, 4
      %v3233 = vmax.f32 %v3231, %v3232
      %v3234 = vrot.slane %v3233, 2
      %v3235 = vmax.f32 %v3233, %v3234
      %v3236 = vrot.slane %v3235, 1
      %v3237 = vmax.f32 %v3235, %v3236
      %v3238 = vsel %vm3139, %v2532, -inf
      %v3239 = vrot.slane %v3238, 4
      %v3240 = vmax.f32 %v3238, %v3239
      %v3241 = vrot.slane %v3240, 2
      %v3242 = vmax.f32 %v3240, %v3241
      %v3243 = vrot.slane %v3242, 1
      %v3244 = vmax.f32 %v3242, %v3243
      %v3245 = vsel %vm3139, %v2534, -inf
      %v3246 = vrot.slane %v3245, 4
      %v3247 = vmax.f32 %v3245, %v3246
      %v3248 = vrot.slane %v3247, 2
      %v3249 = vmax.f32 %v3247, %v3248
      %v3250 = vrot.slane %v3249, 1
      %v3251 = vmax.f32 %v3249, %v3250
      %v3252 = vsel %vm3139, %v2542, -inf
      %v3253 = vrot.slane %v3252, 4
      %v3254 = vmax.f32 %v3252, %v3253
      %v3255 = vrot.slane %v3254, 2
      %v3256 = vmax.f32 %v3254, %v3255
      %v3257 = vrot.slane %v3256, 1
      %v3258 = vmax.f32 %v3256, %v3257
      %v3259 = vsel %vm3139, %v2550, -inf
      %v3260 = vrot.slane %v3259, 4
      %v3261 = vmax.f32 %v3259, %v3260
      %v3262 = vrot.slane %v3261, 2
      %v3263 = vmax.f32 %v3261, %v3262
      %v3264 = vrot.slane %v3263, 1
      %v3265 = vmax.f32 %v3263, %v3264
      %v3266 = vsel %vm3139, %v2549, -inf
      %v3267 = vrot.slane %v3266, 4
      %v3268 = vmax.f32 %v3266, %v3267
      %v3269 = vrot.slane %v3268, 2
      %v3270 = vmax.f32 %v3268, %v3269
      %v3271 = vrot.slane %v3270, 1
      %v3272 = vmax.f32 %v3270, %v3271
      %v3273 = vsel %vm3139, %v2551, -inf
      %v3274 = vrot.slane %v3273, 4
      %v3275 = vmax.f32 %v3273, %v3274
      %v3276 = vrot.slane %v3275, 2
      %v3277 = vmax.f32 %v3275, %v3276
      %v3278 = vrot.slane %v3277, 1
      %v3279 = vmax.f32 %v3277, %v3278
      %v3280 = vsel %vm3139, %v2559, -inf
      %v3281 = vrot.slane %v3280, 4
      %v3282 = vmax.f32 %v3280, %v3281
      %v3283 = vrot.slane %v3282, 2
      %v3284 = vmax.f32 %v3282, %v3283
      %v3285 = vrot.slane %v3284, 1
      %v3286 = vmax.f32 %v3284, %v3285
      %v3287 = vsel %vm3139, %v2567, -inf
      %v3288 = vrot.slane %v3287, 4
      %v3289 = vmax.f32 %v3287, %v3288
      %v3290 = vrot.slane %v3289, 2
      %v3291 = vmax.f32 %v3289, %v3290
      %v3292 = vrot.slane %v3291, 1
      %v3293 = vmax.f32 %v3291, %v3292
      %v3294 = vsel %vm3139, %v2566, -inf
      %v3295 = vrot.slane %v3294, 4
      %v3296 = vmax.f32 %v3294, %v3295
      %v3297 = vrot.slane %v3296, 2
      %v3298 = vmax.f32 %v3296, %v3297
      %v3299 = vrot.slane %v3298, 1
      %v3300 = vmax.f32 %v3298, %v3299
      %v3301 = vsel %vm3139, %v2568, -inf
      %v3302 = vrot.slane %v3301, 4
      %v3303 = vmax.f32 %v3301, %v3302
      %v3304 = vrot.slane %v3303, 2
      %v3305 = vmax.f32 %v3303, %v3304
      %v3306 = vrot.slane %v3305, 1
      %v3307 = vmax.f32 %v3305, %v3306
      %v3308 = vsel %vm3139, %v2576, -inf
      %v3309 = vrot.slane %v3308, 4
      %v3310 = vmax.f32 %v3308, %v3309
      %v3311 = vrot.slane %v3310, 2
      %v3312 = vmax.f32 %v3310, %v3311
      %v3313 = vrot.slane %v3312, 1
      %v3314 = vmax.f32 %v3312, %v3313
      %v3315 = vsel %vm3139, %v2584, -inf
      %v3316 = vrot.slane %v3315, 4
      %v3317 = vmax.f32 %v3315, %v3316
      %v3318 = vrot.slane %v3317, 2
      %v3319 = vmax.f32 %v3317, %v3318
      %v3320 = vrot.slane %v3319, 1
      %v3321 = vmax.f32 %v3319, %v3320
      %v3322 = vsel %vm3139, %v2583, -inf
      %v3323 = vrot.slane %v3322, 4
      %v3324 = vmax.f32 %v3322, %v3323
      %v3325 = vrot.slane %v3324, 2
      %v3326 = vmax.f32 %v3324, %v3325
      %v3327 = vrot.slane %v3326, 1
      %v3328 = vmax.f32 %v3326, %v3327
      %v3329 = vsel %vm3139, %v2585, -inf
      %v3330 = vrot.slane %v3329, 4
      %v3331 = vmax.f32 %v3329, %v3330
      %v3332 = vrot.slane %v3331, 2
      %v3333 = vmax.f32 %v3331, %v3332
      %v3334 = vrot.slane %v3333, 1
      %v3335 = vmax.f32 %v3333, %v3334
      %v3336 = vsel %vm3139, %v2593, -inf
      %v3337 = vrot.slane %v3336, 4
      %v3338 = vmax.f32 %v3336, %v3337
      %v3339 = vrot.slane %v3338, 2
      %v3340 = vmax.f32 %v3338, %v3339
      %v3341 = vrot.slane %v3340, 1
      %v3342 = vmax.f32 %v3340, %v3341
      %v3343 = vsel %vm3139, %v2601, -inf
      %v3344 = vrot.slane %v3343, 4
      %v3345 = vmax.f32 %v3343, %v3344
      %v3346 = vrot.slane %v3345, 2
      %v3347 = vmax.f32 %v3345, %v3346
      %v3348 = vrot.slane %v3347, 1
      %v3349 = vmax.f32 %v3347, %v3348
      %v3350 = vsel %vm3139, %v2600, -inf
      %v3351 = vrot.slane %v3350, 4
      %v3352 = vmax.f32 %v3350, %v3351
      %v3353 = vrot.slane %v3352, 2
      %v3354 = vmax.f32 %v3352, %v3353
      %v3355 = vrot.slane %v3354, 1
      %v3356 = vmax.f32 %v3354, %v3355
      %v3357 = vsel %vm3139, %v2602, -inf
      %v3358 = vrot.slane %v3357, 4
      %v3359 = vmax.f32 %v3357, %v3358
      %v3360 = vrot.slane %v3359, 2
      %v3361 = vmax.f32 %v3359, %v3360
      %v3362 = vrot.slane %v3361, 1
      %v3363 = vmax.f32 %v3361, %v3362
      %v3364 = vsel %vm3139, %v2610, -inf
      %v3365 = vrot.slane %v3364, 4
      %v3366 = vmax.f32 %v3364, %v3365
      %v3367 = vrot.slane %v3366, 2
      %v3368 = vmax.f32 %v3366, %v3367
      %v3369 = vrot.slane %v3368, 1
      %v3370 = vmax.f32 %v3368, %v3369
      %v3371 = vsel %vm3139, %v2618, -inf
      %v3372 = vrot.slane %v3371, 4
      %v3373 = vmax.f32 %v3371, %v3372
      %v3374 = vrot.slane %v3373, 2
      %v3375 = vmax.f32 %v3373, %v3374
      %v3376 = vrot.slane %v3375, 1
      %v3377 = vmax.f32 %v3375, %v3376
      %v3378 = vsel %vm3139, %v2617, -inf
      %v3379 = vrot.slane %v3378, 4
      %v3380 = vmax.f32 %v3378, %v3379
      %v3381 = vrot.slane %v3380, 2
      %v3382 = vmax.f32 %v3380, %v3381
      %v3383 = vrot.slane %v3382, 1
      %v3384 = vmax.f32 %v3382, %v3383
      %v3385 = vsel %vm3139, %v2619, -inf
      %v3386 = vrot.slane %v3385, 4
      %v3387 = vmax.f32 %v3385, %v3386
      %v3388 = vrot.slane %v3387, 2
      %v3389 = vmax.f32 %v3387, %v3388
      %v3390 = vrot.slane %v3389, 1
      %v3391 = vmax.f32 %v3389, %v3390
      %v3392 = vsel %vm3139, %v2627, -inf
      %v3393 = vrot.slane %v3392, 4
      %v3394 = vmax.f32 %v3392, %v3393
      %v3395 = vrot.slane %v3394, 2
      %v3396 = vmax.f32 %v3394, %v3395
      %v3397 = vrot.slane %v3396, 1
      %v3398 = vmax.f32 %v3396, %v3397
      %v3399 = vsel %vm3139, %v2635, -inf
      %v3400 = vrot.slane %v3399, 4
      %v3401 = vmax.f32 %v3399, %v3400
      %v3402 = vrot.slane %v3401, 2
      %v3403 = vmax.f32 %v3401, %v3402
      %v3404 = vrot.slane %v3403, 1
      %v3405 = vmax.f32 %v3403, %v3404
      %v3406 = vsel %vm3139, %v2634, -inf
      %v3407 = vrot.slane %v3406, 4
      %v3408 = vmax.f32 %v3406, %v3407
      %v3409 = vrot.slane %v3408, 2
      %v3410 = vmax.f32 %v3408, %v3409
      %v3411 = vrot.slane %v3410, 1
      %v3412 = vmax.f32 %v3410, %v3411
      %v3413 = vsel %vm3139, %v2636, -inf
      %v3414 = vrot.slane %v3413, 4
      %v3415 = vmax.f32 %v3413, %v3414
      %v3416 = vrot.slane %v3415, 2
      %v3417 = vmax.f32 %v3415, %v3416
      %v3418 = vrot.slane %v3417, 1
      %v3419 = vmax.f32 %v3417, %v3418
      %v3420 = vsel %vm3139, %v2644, -inf
      %v3421 = vrot.slane %v3420, 4
      %v3422 = vmax.f32 %v3420, %v3421
      %v3423 = vrot.slane %v3422, 2
      %v3424 = vmax.f32 %v3422, %v3423
      %v3425 = vrot.slane %v3424, 1
      %v3426 = vmax.f32 %v3424, %v3425
      %v3427 = vsel %vm3139, %v2652, -inf
      %v3428 = vrot.slane %v3427, 4
      %v3429 = vmax.f32 %v3427, %v3428
      %v3430 = vrot.slane %v3429, 2
      %v3431 = vmax.f32 %v3429, %v3430
      %v3432 = vrot.slane %v3431, 1
      %v3433 = vmax.f32 %v3431, %v3432
      %v3434 = vsel %vm3139, %v2651, -inf
      %v3435 = vrot.slane %v3434, 4
      %v3436 = vmax.f32 %v3434, %v3435
      %v3437 = vrot.slane %v3436, 2
      %v3438 = vmax.f32 %v3436, %v3437
      %v3439 = vrot.slane %v3438, 1
      %v3440 = vmax.f32 %v3438, %v3439
      %v3441 = vsel %vm3139, %v2653, -inf
      %v3442 = vrot.slane %v3441, 4
      %v3443 = vmax.f32 %v3441, %v3442
      %v3444 = vrot.slane %v3443, 2
      %v3445 = vmax.f32 %v3443, %v3444
      %v3446 = vrot.slane %v3445, 1
      %v3447 = vmax.f32 %v3445, %v3446
      %v3448 = vsel %vm3139, %v2661, -inf
      %v3449 = vrot.slane %v3448, 4
      %v3450 = vmax.f32 %v3448, %v3449
      %v3451 = vrot.slane %v3450, 2
      %v3452 = vmax.f32 %v3450, %v3451
      %v3453 = vrot.slane %v3452, 1
      %v3454 = vmax.f32 %v3452, %v3453
      %v3455 = vsel %vm3139, %v2669, -inf
      %v3456 = vrot.slane %v3455, 4
      %v3457 = vmax.f32 %v3455, %v3456
      %v3458 = vrot.slane %v3457, 2
      %v3459 = vmax.f32 %v3457, %v3458
      %v3460 = vrot.slane %v3459, 1
      %v3461 = vmax.f32 %v3459, %v3460
      %v3462 = vsel %vm3139, %v2668, -inf
      %v3463 = vrot.slane %v3462, 4
      %v3464 = vmax.f32 %v3462, %v3463
      %v3465 = vrot.slane %v3464, 2
      %v3466 = vmax.f32 %v3464, %v3465
      %v3467 = vrot.slane %v3466, 1
      %v3468 = vmax.f32 %v3466, %v3467
      %v3469 = vsel %vm3139, %v2670, -inf
      %v3470 = vrot.slane %v3469, 4
      %v3471 = vmax.f32 %v3469, %v3470
      %v3472 = vrot.slane %v3471, 2
      %v3473 = vmax.f32 %v3471, %v3472
      %v3474 = vrot.slane %v3473, 1
      %v3475 = vmax.f32 %v3473, %v3474
      %v3476 = vsel %vm3139, %v2678, -inf
      %v3477 = vrot.slane %v3476, 4
      %v3478 = vmax.f32 %v3476, %v3477
      %v3479 = vrot.slane %v3478, 2
      %v3480 = vmax.f32 %v3478, %v3479
      %v3481 = vrot.slane %v3480, 1
      %v3482 = vmax.f32 %v3480, %v3481
      %v3483 = vsel %vm3139, %v2686, -inf
      %v3484 = vrot.slane %v3483, 4
      %v3485 = vmax.f32 %v3483, %v3484
      %v3486 = vrot.slane %v3485, 2
      %v3487 = vmax.f32 %v3485, %v3486
      %v3488 = vrot.slane %v3487, 1
      %v3489 = vmax.f32 %v3487, %v3488
      %v3490 = vsel %vm3139, %v2685, -inf
      %v3491 = vrot.slane %v3490, 4
      %v3492 = vmax.f32 %v3490, %v3491
      %v3493 = vrot.slane %v3492, 2
      %v3494 = vmax.f32 %v3492, %v3493
      %v3495 = vrot.slane %v3494, 1
      %v3496 = vmax.f32 %v3494, %v3495
      %v3497 = vsel %vm3139, %v2687, -inf
      %v3498 = vrot.slane %v3497, 4
      %v3499 = vmax.f32 %v3497, %v3498
      %v3500 = vrot.slane %v3499, 2
      %v3501 = vmax.f32 %v3499, %v3500
      %v3502 = vrot.slane %v3501, 1
      %v3503 = vmax.f32 %v3501, %v3502
      %v3504 = vsel %vm3139, %v2695, -inf
      %v3505 = vrot.slane %v3504, 4
      %v3506 = vmax.f32 %v3504, %v3505
      %v3507 = vrot.slane %v3506, 2
      %v3508 = vmax.f32 %v3506, %v3507
      %v3509 = vrot.slane %v3508, 1
      %v3510 = vmax.f32 %v3508, %v3509
      %v3511 = vsel %vm3139, %v2703, -inf
      %v3512 = vrot.slane %v3511, 4
      %v3513 = vmax.f32 %v3511, %v3512
      %v3514 = vrot.slane %v3513, 2
      %v3515 = vmax.f32 %v3513, %v3514
      %v3516 = vrot.slane %v3515, 1
      %v3517 = vmax.f32 %v3515, %v3516
      %v3518 = vsel %vm3139, %v2702, -inf
      %v3519 = vrot.slane %v3518, 4
      %v3520 = vmax.f32 %v3518, %v3519
      %v3521 = vrot.slane %v3520, 2
      %v3522 = vmax.f32 %v3520, %v3521
      %v3523 = vrot.slane %v3522, 1
      %v3524 = vmax.f32 %v3522, %v3523
      %v3525 = vsel %vm3139, %v2704, -inf
      %v3526 = vrot.slane %v3525, 4
      %v3527 = vmax.f32 %v3525, %v3526
      %v3528 = vrot.slane %v3527, 2
      %v3529 = vmax.f32 %v3527, %v3528
      %v3530 = vrot.slane %v3529, 1
      %v3531 = vmax.f32 %v3529, %v3530
      %v3532 = vsel %vm3139, %v2712, -inf
      %v3533 = vrot.slane %v3532, 4
      %v3534 = vmax.f32 %v3532, %v3533
      %v3535 = vrot.slane %v3534, 2
      %v3536 = vmax.f32 %v3534, %v3535
      %v3537 = vrot.slane %v3536, 1
      %v3538 = vmax.f32 %v3536, %v3537
      %v3539 = vsel %vm3139, %v2720, -inf
      %v3540 = vrot.slane %v3539, 4
      %v3541 = vmax.f32 %v3539, %v3540
      %v3542 = vrot.slane %v3541, 2
      %v3543 = vmax.f32 %v3541, %v3542
      %v3544 = vrot.slane %v3543, 1
      %v3545 = vmax.f32 %v3543, %v3544
      %v3546 = vsel %vm3139, %v2719, -inf
      %v3547 = vrot.slane %v3546, 4
      %v3548 = vmax.f32 %v3546, %v3547
      %v3549 = vrot.slane %v3548, 2
      %v3550 = vmax.f32 %v3548, %v3549
      %v3551 = vrot.slane %v3550, 1
      %v3552 = vmax.f32 %v3550, %v3551
      %v3553 = vsel %vm3139, %v2721, -inf
      %v3554 = vrot.slane %v3553, 4
      %v3555 = vmax.f32 %v3553, %v3554
      %v3556 = vrot.slane %v3555, 2
      %v3557 = vmax.f32 %v3555, %v3556
      %v3558 = vrot.slane %v3557, 1
      %v3559 = vmax.f32 %v3557, %v3558
      %v3560 = vsel %vm3139, %v2729, -inf
      %v3561 = vrot.slane %v3560, 4
      %v3562 = vmax.f32 %v3560, %v3561
      %v3563 = vrot.slane %v3562, 2
      %v3564 = vmax.f32 %v3562, %v3563
      %v3565 = vrot.slane %v3564, 1
      %v3566 = vmax.f32 %v3564, %v3565
      %v3567 = vsel %vm3139, %v2737, -inf
      %v3568 = vrot.slane %v3567, 4
      %v3569 = vmax.f32 %v3567, %v3568
      %v3570 = vrot.slane %v3569, 2
      %v3571 = vmax.f32 %v3569, %v3570
      %v3572 = vrot.slane %v3571, 1
      %v3573 = vmax.f32 %v3571, %v3572
      %v3574 = vsel %vm3139, %v2736, -inf
      %v3575 = vrot.slane %v3574, 4
      %v3576 = vmax.f32 %v3574, %v3575
      %v3577 = vrot.slane %v3576, 2
      %v3578 = vmax.f32 %v3576, %v3577
      %v3579 = vrot.slane %v3578, 1
      %v3580 = vmax.f32 %v3578, %v3579
      %v3581 = vsel %vm3139, %v2738, -inf
      %v3582 = vrot.slane %v3581, 4
      %v3583 = vmax.f32 %v3581, %v3582
      %v3584 = vrot.slane %v3583, 2
      %v3585 = vmax.f32 %v3583, %v3584
      %v3586 = vrot.slane %v3585, 1
      %v3587 = vmax.f32 %v3585, %v3586
      %v3588 = vsel %vm3139, %v2746, -inf
      %v3589 = vrot.slane %v3588, 4
      %v3590 = vmax.f32 %v3588, %v3589
      %v3591 = vrot.slane %v3590, 2
      %v3592 = vmax.f32 %v3590, %v3591
      %v3593 = vrot.slane %v3592, 1
      %v3594 = vmax.f32 %v3592, %v3593
      %v3595 = vsel %vm3139, %v2754, -inf
      %v3596 = vrot.slane %v3595, 4
      %v3597 = vmax.f32 %v3595, %v3596
      %v3598 = vrot.slane %v3597, 2
      %v3599 = vmax.f32 %v3597, %v3598
      %v3600 = vrot.slane %v3599, 1
      %v3601 = vmax.f32 %v3599, %v3600
      %v3602 = vsel %vm3139, %v2753, -inf
      %v3603 = vrot.slane %v3602, 4
      %v3604 = vmax.f32 %v3602, %v3603
      %v3605 = vrot.slane %v3604, 2
      %v3606 = vmax.f32 %v3604, %v3605
      %v3607 = vrot.slane %v3606, 1
      %v3608 = vmax.f32 %v3606, %v3607
      %v3609 = vsel %vm3139, %v2755, -inf
      %v3610 = vrot.slane %v3609, 4
      %v3611 = vmax.f32 %v3609, %v3610
      %v3612 = vrot.slane %v3611, 2
      %v3613 = vmax.f32 %v3611, %v3612
      %v3614 = vrot.slane %v3613, 1
      %v3615 = vmax.f32 %v3613, %v3614
      %v3616 = vsel %vm3139, %v2763, -inf
      %v3617 = vrot.slane %v3616, 4
      %v3618 = vmax.f32 %v3616, %v3617
      %v3619 = vrot.slane %v3618, 2
      %v3620 = vmax.f32 %v3618, %v3619
      %v3621 = vrot.slane %v3620, 1
      %v3622 = vmax.f32 %v3620, %v3621
      %v3623 = vsel %vm3139, %v2771, -inf
      %v3624 = vrot.slane %v3623, 4
      %v3625 = vmax.f32 %v3623, %v3624
      %v3626 = vrot.slane %v3625, 2
      %v3627 = vmax.f32 %v3625, %v3626
      %v3628 = vrot.slane %v3627, 1
      %v3629 = vmax.f32 %v3627, %v3628
      %v3630 = vsel %vm3139, %v2770, -inf
      %v3631 = vrot.slane %v3630, 4
      %v3632 = vmax.f32 %v3630, %v3631
      %v3633 = vrot.slane %v3632, 2
      %v3634 = vmax.f32 %v3632, %v3633
      %v3635 = vrot.slane %v3634, 1
      %v3636 = vmax.f32 %v3634, %v3635
      %v3637 = vsel %vm3139, %v2772, -inf
      %v3638 = vrot.slane %v3637, 4
      %v3639 = vmax.f32 %v3637, %v3638
      %v3640 = vrot.slane %v3639, 2
      %v3641 = vmax.f32 %v3639, %v3640
      %v3642 = vrot.slane %v3641, 1
      %v3643 = vmax.f32 %v3641, %v3642
      %v3644 = vsel %vm3139, %v2780, -inf
      %v3645 = vrot.slane %v3644, 4
      %v3646 = vmax.f32 %v3644, %v3645
      %v3647 = vrot.slane %v3646, 2
      %v3648 = vmax.f32 %v3646, %v3647
      %v3649 = vrot.slane %v3648, 1
      %v3650 = vmax.f32 %v3648, %v3649
      %v3651 = vsel %vm3139, %v2788, -inf
      %v3652 = vrot.slane %v3651, 4
      %v3653 = vmax.f32 %v3651, %v3652
      %v3654 = vrot.slane %v3653, 2
      %v3655 = vmax.f32 %v3653, %v3654
      %v3656 = vrot.slane %v3655, 1
      %v3657 = vmax.f32 %v3655, %v3656
      %v3658 = vsel %vm3139, %v2787, -inf
      %v3659 = vrot.slane %v3658, 4
      %v3660 = vmax.f32 %v3658, %v3659
      %v3661 = vrot.slane %v3660, 2
      %v3662 = vmax.f32 %v3660, %v3661
      %v3663 = vrot.slane %v3662, 1
      %v3664 = vmax.f32 %v3662, %v3663
      %v3665 = vsel %vm3139, %v2789, -inf
      %v3666 = vrot.slane %v3665, 4
      %v3667 = vmax.f32 %v3665, %v3666
      %v3668 = vrot.slane %v3667, 2
      %v3669 = vmax.f32 %v3667, %v3668
      %v3670 = vrot.slane %v3669, 1
      %v3671 = vmax.f32 %v3669, %v3670
      %v3672 = vsel %vm3139, %v2797, -inf
      %v3673 = vrot.slane %v3672, 4
      %v3674 = vmax.f32 %v3672, %v3673
      %v3675 = vrot.slane %v3674, 2
      %v3676 = vmax.f32 %v3674, %v3675
      %v3677 = vrot.slane %v3676, 1
      %v3678 = vmax.f32 %v3676, %v3677
      %v3679 = vsel %vm3139, %v2805, -inf
      %v3680 = vrot.slane %v3679, 4
      %v3681 = vmax.f32 %v3679, %v3680
      %v3682 = vrot.slane %v3681, 2
      %v3683 = vmax.f32 %v3681, %v3682
      %v3684 = vrot.slane %v3683, 1
      %v3685 = vmax.f32 %v3683, %v3684
      %v3686 = vsel %vm3139, %v2804, -inf
      %v3687 = vrot.slane %v3686, 4
      %v3688 = vmax.f32 %v3686, %v3687
      %v3689 = vrot.slane %v3688, 2
      %v3690 = vmax.f32 %v3688, %v3689
      %v3691 = vrot.slane %v3690, 1
      %v3692 = vmax.f32 %v3690, %v3691
      %v3693 = vsel %vm3139, %v2806, -inf
      %v3694 = vrot.slane %v3693, 4
      %v3695 = vmax.f32 %v3693, %v3694
      %v3696 = vrot.slane %v3695, 2
      %v3697 = vmax.f32 %v3695, %v3696
      %v3698 = vrot.slane %v3697, 1
      %v3699 = vmax.f32 %v3697, %v3698
      %v3700 = vsel %vm3139, %v2814, -inf
      %v3701 = vrot.slane %v3700, 4
      %v3702 = vmax.f32 %v3700, %v3701
      %v3703 = vrot.slane %v3702, 2
      %v3704 = vmax.f32 %v3702, %v3703
      %v3705 = vrot.slane %v3704, 1
      %v3706 = vmax.f32 %v3704, %v3705
      %v3707 = vsel %vm3139, %v2822, -inf
      %v3708 = vrot.slane %v3707, 4
      %v3709 = vmax.f32 %v3707, %v3708
      %v3710 = vrot.slane %v3709, 2
      %v3711 = vmax.f32 %v3709, %v3710
      %v3712 = vrot.slane %v3711, 1
      %v3713 = vmax.f32 %v3711, %v3712
      %v3714 = vsel %vm3139, %v2821, -inf
      %v3715 = vrot.slane %v3714, 4
      %v3716 = vmax.f32 %v3714, %v3715
      %v3717 = vrot.slane %v3716, 2
      %v3718 = vmax.f32 %v3716, %v3717
      %v3719 = vrot.slane %v3718, 1
      %v3720 = vmax.f32 %v3718, %v3719
      %v3721 = vsel %vm3139, %v2823, -inf
      %v3722 = vrot.slane %v3721, 4
      %v3723 = vmax.f32 %v3721, %v3722
      %v3724 = vrot.slane %v3723, 2
      %v3725 = vmax.f32 %v3723, %v3724
      %v3726 = vrot.slane %v3725, 1
      %v3727 = vmax.f32 %v3725, %v3726
      %v3728 = vsel %vm3139, %v2831, -inf
      %v3729 = vrot.slane %v3728, 4
      %v3730 = vmax.f32 %v3728, %v3729
      %v3731 = vrot.slane %v3730, 2
      %v3732 = vmax.f32 %v3730, %v3731
      %v3733 = vrot.slane %v3732, 1
      %v3734 = vmax.f32 %v3732, %v3733
      %v3735 = vsel %vm3139, %v2839, -inf
      %v3736 = vrot.slane %v3735, 4
      %v3737 = vmax.f32 %v3735, %v3736
      %v3738 = vrot.slane %v3737, 2
      %v3739 = vmax.f32 %v3737, %v3738
      %v3740 = vrot.slane %v3739, 1
      %v3741 = vmax.f32 %v3739, %v3740
      %v3742 = vsel %vm3139, %v2838, -inf
      %v3743 = vrot.slane %v3742, 4
      %v3744 = vmax.f32 %v3742, %v3743
      %v3745 = vrot.slane %v3744, 2
      %v3746 = vmax.f32 %v3744, %v3745
      %v3747 = vrot.slane %v3746, 1
      %v3748 = vmax.f32 %v3746, %v3747
      %v3749 = vsel %vm3139, %v2840, -inf
      %v3750 = vrot.slane %v3749, 4
      %v3751 = vmax.f32 %v3749, %v3750
      %v3752 = vrot.slane %v3751, 2
      %v3753 = vmax.f32 %v3751, %v3752
      %v3754 = vrot.slane %v3753, 1
      %v3755 = vmax.f32 %v3753, %v3754
      %v3756 = vsel %vm3139, %v2848, -inf
      %v3757 = vrot.slane %v3756, 4
      %v3758 = vmax.f32 %v3756, %v3757
      %v3759 = vrot.slane %v3758, 2
      %v3760 = vmax.f32 %v3758, %v3759
      %v3761 = vrot.slane %v3760, 1
      %v3762 = vmax.f32 %v3760, %v3761
      %v3763 = vsel %vm3139, %v2856, -inf
      %v3764 = vrot.slane %v3763, 4
      %v3765 = vmax.f32 %v3763, %v3764
      %v3766 = vrot.slane %v3765, 2
      %v3767 = vmax.f32 %v3765, %v3766
      %v3768 = vrot.slane %v3767, 1
      %v3769 = vmax.f32 %v3767, %v3768
      %v3770 = vsel %vm3139, %v2855, -inf
      %v3771 = vrot.slane %v3770, 4
      %v3772 = vmax.f32 %v3770, %v3771
      %v3773 = vrot.slane %v3772, 2
      %v3774 = vmax.f32 %v3772, %v3773
      %v3775 = vrot.slane %v3774, 1
      %v3776 = vmax.f32 %v3774, %v3775
      %v3777 = vsel %vm3139, %v2857, -inf
      %v3778 = vrot.slane %v3777, 4
      %v3779 = vmax.f32 %v3777, %v3778
      %v3780 = vrot.slane %v3779, 2
      %v3781 = vmax.f32 %v3779, %v3780
      %v3782 = vrot.slane %v3781, 1
      %v3783 = vmax.f32 %v3781, %v3782
      %v3784 = vsel %vm3139, %v2865, -inf
      %v3785 = vrot.slane %v3784, 4
      %v3786 = vmax.f32 %v3784, %v3785
      %v3787 = vrot.slane %v3786, 2
      %v3788 = vmax.f32 %v3786, %v3787
      %v3789 = vrot.slane %v3788, 1
      %v3790 = vmax.f32 %v3788, %v3789
      %v3791 = vsel %vm3139, %v2873, -inf
      %v3792 = vrot.slane %v3791, 4
      %v3793 = vmax.f32 %v3791, %v3792
      %v3794 = vrot.slane %v3793, 2
      %v3795 = vmax.f32 %v3793, %v3794
      %v3796 = vrot.slane %v3795, 1
      %v3797 = vmax.f32 %v3795, %v3796
      %v3798 = vsel %vm3139, %v2872, -inf
      %v3799 = vrot.slane %v3798, 4
      %v3800 = vmax.f32 %v3798, %v3799
      %v3801 = vrot.slane %v3800, 2
      %v3802 = vmax.f32 %v3800, %v3801
      %v3803 = vrot.slane %v3802, 1
      %v3804 = vmax.f32 %v3802, %v3803
      %v3805 = vsel %vm3139, %v2874, -inf
      %v3806 = vrot.slane %v3805, 4
      %v3807 = vmax.f32 %v3805, %v3806
      %v3808 = vrot.slane %v3807, 2
      %v3809 = vmax.f32 %v3807, %v3808
      %v3810 = vrot.slane %v3809, 1
      %v3811 = vmax.f32 %v3809, %v3810
      %v3812 = vsel %vm3139, %v2882, -inf
      %v3813 = vrot.slane %v3812, 4
      %v3814 = vmax.f32 %v3812, %v3813
      %v3815 = vrot.slane %v3814, 2
      %v3816 = vmax.f32 %v3814, %v3815
      %v3817 = vrot.slane %v3816, 1
      %v3818 = vmax.f32 %v3816, %v3817
      %v3819 = vsel %vm3139, %v2890, -inf
      %v3820 = vrot.slane %v3819, 4
      %v3821 = vmax.f32 %v3819, %v3820
      %v3822 = vrot.slane %v3821, 2
      %v3823 = vmax.f32 %v3821, %v3822
      %v3824 = vrot.slane %v3823, 1
      %v3825 = vmax.f32 %v3823, %v3824
      %v3826 = vsel %vm3139, %v2889, -inf
      %v3827 = vrot.slane %v3826, 4
      %v3828 = vmax.f32 %v3826, %v3827
      %v3829 = vrot.slane %v3828, 2
      %v3830 = vmax.f32 %v3828, %v3829
      %v3831 = vrot.slane %v3830, 1
      %v3832 = vmax.f32 %v3830, %v3831
      %v3833 = vsel %vm3139, %v2891, -inf
      %v3834 = vrot.slane %v3833, 4
      %v3835 = vmax.f32 %v3833, %v3834
      %v3836 = vrot.slane %v3835, 2
      %v3837 = vmax.f32 %v3835, %v3836
      %v3838 = vrot.slane %v3837, 1
      %v3839 = vmax.f32 %v3837, %v3838
      %v3840 = vsel %vm3139, %v2899, -inf
      %v3841 = vrot.slane %v3840, 4
      %v3842 = vmax.f32 %v3840, %v3841
      %v3843 = vrot.slane %v3842, 2
      %v3844 = vmax.f32 %v3842, %v3843
      %v3845 = vrot.slane %v3844, 1
      %v3846 = vmax.f32 %v3844, %v3845
      %v3847 = vsel %vm3139, %v2907, -inf
      %v3848 = vrot.slane %v3847, 4
      %v3849 = vmax.f32 %v3847, %v3848
      %v3850 = vrot.slane %v3849, 2
      %v3851 = vmax.f32 %v3849, %v3850
      %v3852 = vrot.slane %v3851, 1
      %v3853 = vmax.f32 %v3851, %v3852
      %v3854 = vsel %vm3139, %v2906, -inf
      %v3855 = vrot.slane %v3854, 4
      %v3856 = vmax.f32 %v3854, %v3855
      %v3857 = vrot.slane %v3856, 2
      %v3858 = vmax.f32 %v3856, %v3857
      %v3859 = vrot.slane %v3858, 1
      %v3860 = vmax.f32 %v3858, %v3859
      %v3861 = vsel %vm3139, %v2908, -inf
      %v3862 = vrot.slane %v3861, 4
      %v3863 = vmax.f32 %v3861, %v3862
      %v3864 = vrot.slane %v3863, 2
      %v3865 = vmax.f32 %v3863, %v3864
      %v3866 = vrot.slane %v3865, 1
      %v3867 = vmax.f32 %v3865, %v3866
      %v3868 = vsel %vm3139, %v2916, -inf
      %v3869 = vrot.slane %v3868, 4
      %v3870 = vmax.f32 %v3868, %v3869
      %v3871 = vrot.slane %v3870, 2
      %v3872 = vmax.f32 %v3870, %v3871
      %v3873 = vrot.slane %v3872, 1
      %v3874 = vmax.f32 %v3872, %v3873
      %v3875 = vsel %vm3139, %v2924, -inf
      %v3876 = vrot.slane %v3875, 4
      %v3877 = vmax.f32 %v3875, %v3876
      %v3878 = vrot.slane %v3877, 2
      %v3879 = vmax.f32 %v3877, %v3878
      %v3880 = vrot.slane %v3879, 1
      %v3881 = vmax.f32 %v3879, %v3880
      %v3882 = vsel %vm3139, %v2923, -inf
      %v3883 = vrot.slane %v3882, 4
      %v3884 = vmax.f32 %v3882, %v3883
      %v3885 = vrot.slane %v3884, 2
      %v3886 = vmax.f32 %v3884, %v3885
      %v3887 = vrot.slane %v3886, 1
      %v3888 = vmax.f32 %v3886, %v3887
      %v3889 = vsel %vm3139, %v2925, -inf
      %v3890 = vrot.slane %v3889, 4
      %v3891 = vmax.f32 %v3889, %v3890
      %v3892 = vrot.slane %v3891, 2
      %v3893 = vmax.f32 %v3891, %v3892
      %v3894 = vrot.slane %v3893, 1
      %v3895 = vmax.f32 %v3893, %v3894
      %v3896 = vsel %vm3139, %v2933, -inf
      %v3897 = vrot.slane %v3896, 4
      %v3898 = vmax.f32 %v3896, %v3897
      %v3899 = vrot.slane %v3898, 2
      %v3900 = vmax.f32 %v3898, %v3899
      %v3901 = vrot.slane %v3900, 1
      %v3902 = vmax.f32 %v3900, %v3901
      %v3903 = vsel %vm3139, %v2941, -inf
      %v3904 = vrot.slane %v3903, 4
      %v3905 = vmax.f32 %v3903, %v3904
      %v3906 = vrot.slane %v3905, 2
      %v3907 = vmax.f32 %v3905, %v3906
      %v3908 = vrot.slane %v3907, 1
      %v3909 = vmax.f32 %v3907, %v3908
      %v3910 = vsel %vm3139, %v2940, -inf
      %v3911 = vrot.slane %v3910, 4
      %v3912 = vmax.f32 %v3910, %v3911
      %v3913 = vrot.slane %v3912, 2
      %v3914 = vmax.f32 %v3912, %v3913
      %v3915 = vrot.slane %v3914, 1
      %v3916 = vmax.f32 %v3914, %v3915
      %v3917 = vsel %vm3139, %v2942, -inf
      %v3918 = vrot.slane %v3917, 4
      %v3919 = vmax.f32 %v3917, %v3918
      %v3920 = vrot.slane %v3919, 2
      %v3921 = vmax.f32 %v3919, %v3920
      %v3922 = vrot.slane %v3921, 1
      %v3923 = vmax.f32 %v3921, %v3922
      %v3924 = vsel %vm3139, %v2950, -inf
      %v3925 = vrot.slane %v3924, 4
      %v3926 = vmax.f32 %v3924, %v3925
      %v3927 = vrot.slane %v3926, 2
      %v3928 = vmax.f32 %v3926, %v3927
      %v3929 = vrot.slane %v3928, 1
      %v3930 = vmax.f32 %v3928, %v3929
      %v3931 = vsel %vm3139, %v2958, -inf
      %v3932 = vrot.slane %v3931, 4
      %v3933 = vmax.f32 %v3931, %v3932
      %v3934 = vrot.slane %v3933, 2
      %v3935 = vmax.f32 %v3933, %v3934
      %v3936 = vrot.slane %v3935, 1
      %v3937 = vmax.f32 %v3935, %v3936
      %v3938 = vsel %vm3139, %v2957, -inf
      %v3939 = vrot.slane %v3938, 4
      %v3940 = vmax.f32 %v3938, %v3939
      %v3941 = vrot.slane %v3940, 2
      %v3942 = vmax.f32 %v3940, %v3941
      %v3943 = vrot.slane %v3942, 1
      %v3944 = vmax.f32 %v3942, %v3943
      %v3945 = vsel %vm3139, %v2959, -inf
      %v3946 = vrot.slane %v3945, 4
      %v3947 = vmax.f32 %v3945, %v3946
      %v3948 = vrot.slane %v3947, 2
      %v3949 = vmax.f32 %v3947, %v3948
      %v3950 = vrot.slane %v3949, 1
      %v3951 = vmax.f32 %v3949, %v3950
      %v3952 = vsel %vm3139, %v2967, -inf
      %v3953 = vrot.slane %v3952, 4
      %v3954 = vmax.f32 %v3952, %v3953
      %v3955 = vrot.slane %v3954, 2
      %v3956 = vmax.f32 %v3954, %v3955
      %v3957 = vrot.slane %v3956, 1
      %v3958 = vmax.f32 %v3956, %v3957
      %v3959 = vsel %vm3139, %v2975, -inf
      %v3960 = vrot.slane %v3959, 4
      %v3961 = vmax.f32 %v3959, %v3960
      %v3962 = vrot.slane %v3961, 2
      %v3963 = vmax.f32 %v3961, %v3962
      %v3964 = vrot.slane %v3963, 1
      %v3965 = vmax.f32 %v3963, %v3964
      %v3966 = vsel %vm3139, %v2974, -inf
      %v3967 = vrot.slane %v3966, 4
      %v3968 = vmax.f32 %v3966, %v3967
      %v3969 = vrot.slane %v3968, 2
      %v3970 = vmax.f32 %v3968, %v3969
      %v3971 = vrot.slane %v3970, 1
      %v3972 = vmax.f32 %v3970, %v3971
      %v3973 = vsel %vm3139, %v2976, -inf
      %v3974 = vrot.slane %v3973, 4
      %v3975 = vmax.f32 %v3973, %v3974
      %v3976 = vrot.slane %v3975, 2
      %v3977 = vmax.f32 %v3975, %v3976
      %v3978 = vrot.slane %v3977, 1
      %v3979 = vmax.f32 %v3977, %v3978
      %v3980 = vsel %vm3139, %v2984, -inf
      %v3981 = vrot.slane %v3980, 4
      %v3982 = vmax.f32 %v3980, %v3981
      %v3983 = vrot.slane %v3982, 2
      %v3984 = vmax.f32 %v3982, %v3983
      %v3985 = vrot.slane %v3984, 1
      %v3986 = vmax.f32 %v3984, %v3985
      %v3987 = vsel %vm3139, %v2992, -inf
      %v3988 = vrot.slane %v3987, 4
      %v3989 = vmax.f32 %v3987, %v3988
      %v3990 = vrot.slane %v3989, 2
      %v3991 = vmax.f32 %v3989, %v3990
      %v3992 = vrot.slane %v3991, 1
      %v3993 = vmax.f32 %v3991, %v3992
      %v3994 = vsel %vm3139, %v2991, -inf
      %v3995 = vrot.slane %v3994, 4
      %v3996 = vmax.f32 %v3994, %v3995
      %v3997 = vrot.slane %v3996, 2
      %v3998 = vmax.f32 %v3996, %v3997
      %v3999 = vrot.slane %v3998, 1
      %v4000 = vmax.f32 %v3998, %v3999
      %v4001 = vsel %vm3139, %v2993, -inf
      %v4002 = vrot.slane %v4001, 4
      %v4003 = vmax.f32 %v4001, %v4002
      %v4004 = vrot.slane %v4003, 2
      %v4005 = vmax.f32 %v4003, %v4004
      %v4006 = vrot.slane %v4005, 1
      %v4007 = vmax.f32 %v4005, %v4006
      %v4008 = vsel %vm3139, %v3001, -inf
      %v4009 = vrot.slane %v4008, 4
      %v4010 = vmax.f32 %v4008, %v4009
      %v4011 = vrot.slane %v4010, 2
      %v4012 = vmax.f32 %v4010, %v4011
      %v4013 = vrot.slane %v4012, 1
      %v4014 = vmax.f32 %v4012, %v4013
      %v4015 = vsel %vm3139, %v3009, -inf
      %v4016 = vrot.slane %v4015, 4
      %v4017 = vmax.f32 %v4015, %v4016
      %v4018 = vrot.slane %v4017, 2
      %v4019 = vmax.f32 %v4017, %v4018
      %v4020 = vrot.slane %v4019, 1
      %v4021 = vmax.f32 %v4019, %v4020
      %v4022 = vsel %vm3139, %v3008, -inf
      %v4023 = vrot.slane %v4022, 4
      %v4024 = vmax.f32 %v4022, %v4023
      %v4025 = vrot.slane %v4024, 2
      %v4026 = vmax.f32 %v4024, %v4025
      %v4027 = vrot.slane %v4026, 1
      %v4028 = vmax.f32 %v4026, %v4027
      %v4029 = vsel %vm3139, %v3010, -inf
      %v4030 = vrot.slane %v4029, 4
      %v4031 = vmax.f32 %v4029, %v4030
      %v4032 = vrot.slane %v4031, 2
      %v4033 = vmax.f32 %v4031, %v4032
      %v4034 = vrot.slane %v4033, 1
      %v4035 = vmax.f32 %v4033, %v4034
      %v4036 = vmax.f32 %v3146, %v3202
      %v4037 = vmax.f32 %v3153, %v3209
      %v4038 = vmax.f32 %v3160, %v3216
      %v4039 = vmax.f32 %v3167, %v3223
      %v4040 = vmax.f32 %v3174, %v3230
      %v4041 = vmax.f32 %v3181, %v3237
      %v4042 = vmax.f32 %v3188, %v3244
      %v4043 = vmax.f32 %v3195, %v3251
      %v4044 = vmax.f32 %v3258, %v3314
      %v4045 = vmax.f32 %v3265, %v3321
      %v4046 = vmax.f32 %v3272, %v3328
      %v4047 = vmax.f32 %v3279, %v3335
      %v4048 = vmax.f32 %v3286, %v3342
      %v4049 = vmax.f32 %v3293, %v3349
      %v4050 = vmax.f32 %v3300, %v3356
      %v4051 = vmax.f32 %v3307, %v3363
      %v4052 = vmax.f32 %v3370, %v3426
      %v4053 = vmax.f32 %v3377, %v3433
      %v4054 = vmax.f32 %v3384, %v3440
      %v4055 = vmax.f32 %v3391, %v3447
      %v4056 = vmax.f32 %v3398, %v3454
      %v4057 = vmax.f32 %v3405, %v3461
      %v4058 = vmax.f32 %v3412, %v3468
      %v4059 = vmax.f32 %v3419, %v3475
      %v4060 = vmax.f32 %v3482, %v3538
      %v4061 = vmax.f32 %v3489, %v3545
      %v4062 = vmax.f32 %v3496, %v3552
      %v4063 = vmax.f32 %v3503, %v3559
      %v4064 = vmax.f32 %v3510, %v3566
      %v4065 = vmax.f32 %v3517, %v3573
      %v4066 = vmax.f32 %v3524, %v3580
      %v4067 = vmax.f32 %v3531, %v3587
      %v4068 = vmax.f32 %v3594, %v3650
      %v4069 = vmax.f32 %v3601, %v3657
      %v4070 = vmax.f32 %v3608, %v3664
      %v4071 = vmax.f32 %v3615, %v3671
      %v4072 = vmax.f32 %v3622, %v3678
      %v4073 = vmax.f32 %v3629, %v3685
      %v4074 = vmax.f32 %v3636, %v3692
      %v4075 = vmax.f32 %v3643, %v3699
      %v4076 = vmax.f32 %v3706, %v3762
      %v4077 = vmax.f32 %v3713, %v3769
      %v4078 = vmax.f32 %v3720, %v3776
      %v4079 = vmax.f32 %v3727, %v3783
      %v4080 = vmax.f32 %v3734, %v3790
      %v4081 = vmax.f32 %v3741, %v3797
      %v4082 = vmax.f32 %v3748, %v3804
      %v4083 = vmax.f32 %v3755, %v3811
      %v4084 = vmax.f32 %v3818, %v3874
      %v4085 = vmax.f32 %v3825, %v3881
      %v4086 = vmax.f32 %v3832, %v3888
      %v4087 = vmax.f32 %v3839, %v3895
      %v4088 = vmax.f32 %v3846, %v3902
      %v4089 = vmax.f32 %v3853, %v3909
      %v4090 = vmax.f32 %v3860, %v3916
      %v4091 = vmax.f32 %v3867, %v3923
      %v4092 = vmax.f32 %v3930, %v3986
      %v4093 = vmax.f32 %v3937, %v3993
      %v4094 = vmax.f32 %v3944, %v4000
      %v4095 = vmax.f32 %v3951, %v4007
      %v4096 = vmax.f32 %v3958, %v4014
      %v4097 = vmax.f32 %v3965, %v4021
      %v4098 = vmax.f32 %v3972, %v4028
      %v4099 = vmax.f32 %v3979, %v4035
      %v4100 = vpack.c.bf16 %v4036, %v4036
      %v4101 = vpack.c.bf16 %v4037, %v4037
      %v4102 = vpack.c.bf16 %v4038, %v4038
      %v4103 = vpack.c.bf16 %v4039, %v4039
      %v4104 = vpack.c.bf16 %v4040, %v4040
      %v4105 = vpack.c.bf16 %v4041, %v4041
      %v4106 = vpack.c.bf16 %v4042, %v4042
      %v4107 = vpack.c.bf16 %v4043, %v4043
      %v4108 = vpack.c.bf16 %v4044, %v4044
      %v4109 = vpack.c.bf16 %v4045, %v4045
      %v4110 = vpack.c.bf16 %v4046, %v4046
      %v4111 = vpack.c.bf16 %v4047, %v4047
      %v4112 = vpack.c.bf16 %v4048, %v4048
      %v4113 = vpack.c.bf16 %v4049, %v4049
      %v4114 = vpack.c.bf16 %v4050, %v4050
      %v4115 = vpack.c.bf16 %v4051, %v4051
      %v4116 = vpack.c.bf16 %v4052, %v4052
      %v4117 = vpack.c.bf16 %v4053, %v4053
      %v4118 = vpack.c.bf16 %v4054, %v4054
      %v4119 = vpack.c.bf16 %v4055, %v4055
      %v4120 = vpack.c.bf16 %v4056, %v4056
      %v4121 = vpack.c.bf16 %v4057, %v4057
      %v4122 = vpack.c.bf16 %v4058, %v4058
      %v4123 = vpack.c.bf16 %v4059, %v4059
      %v4124 = vpack.c.bf16 %v4060, %v4060
      %v4125 = vpack.c.bf16 %v4061, %v4061
      %v4126 = vpack.c.bf16 %v4062, %v4062
      %v4127 = vpack.c.bf16 %v4063, %v4063
      %v4128 = vpack.c.bf16 %v4064, %v4064
      %v4129 = vpack.c.bf16 %v4065, %v4065
      %v4130 = vpack.c.bf16 %v4066, %v4066
      %v4131 = vpack.c.bf16 %v4067, %v4067
      %v4132 = vpack.c.bf16 %v4068, %v4068
      %v4133 = vpack.c.bf16 %v4069, %v4069
      %v4134 = vpack.c.bf16 %v4070, %v4070
      %v4135 = vpack.c.bf16 %v4071, %v4071
      %v4136 = vpack.c.bf16 %v4072, %v4072
      %v4137 = vpack.c.bf16 %v4073, %v4073
      %v4138 = vpack.c.bf16 %v4074, %v4074
      %v4139 = vpack.c.bf16 %v4075, %v4075
      %v4140 = vpack.c.bf16 %v4076, %v4076
      %v4141 = vpack.c.bf16 %v4077, %v4077
      %v4142 = vpack.c.bf16 %v4078, %v4078
      %v4143 = vpack.c.bf16 %v4079, %v4079
      %v4144 = vpack.c.bf16 %v4080, %v4080
      %v4145 = vpack.c.bf16 %v4081, %v4081
      %v4146 = vpack.c.bf16 %v4082, %v4082
      %v4147 = vpack.c.bf16 %v4083, %v4083
      %v4148 = vpack.c.bf16 %v4084, %v4084
      %v4149 = vpack.c.bf16 %v4085, %v4085
      %v4150 = vpack.c.bf16 %v4086, %v4086
      %v4151 = vpack.c.bf16 %v4087, %v4087
      %v4152 = vpack.c.bf16 %v4088, %v4088
      %v4153 = vpack.c.bf16 %v4089, %v4089
      %v4154 = vpack.c.bf16 %v4090, %v4090
      %v4155 = vpack.c.bf16 %v4091, %v4091
      %v4156 = vpack.c.bf16 %v4092, %v4092
      %v4157 = vpack.c.bf16 %v4093, %v4093
      %v4158 = vpack.c.bf16 %v4094, %v4094
      %v4159 = vpack.c.bf16 %v4095, %v4095
      %v4160 = vpack.c.bf16 %v4096, %v4096
      %v4161 = vpack.c.bf16 %v4097, %v4097
      %v4162 = vpack.c.bf16 %v4098, %v4098
      %v4163 = vpack.c.bf16 %v4099, %v4099
      %v4228 = vunpack.c.l.b16 %v4100
      %v4229 = vunpack.c.l.b16 %v4101
      %v4230 = vunpack.c.l.b16 %v4102
      %v4231 = vunpack.c.l.b16 %v4103
      %v4232 = vunpack.c.l.b16 %v4104
      %v4233 = vunpack.c.l.b16 %v4105
      %v4234 = vunpack.c.l.b16 %v4106
      %v4235 = vunpack.c.l.b16 %v4107
      %v4236 = vunpack.c.l.b16 %v4108
      %v4237 = vunpack.c.l.b16 %v4109
      %v4238 = vunpack.c.l.b16 %v4110
      %v4239 = vunpack.c.l.b16 %v4111
      %v4240 = vunpack.c.l.b16 %v4112
      %v4241 = vunpack.c.l.b16 %v4113
      %v4242 = vunpack.c.l.b16 %v4114
      %v4243 = vunpack.c.l.b16 %v4115
      %v4244 = vunpack.c.l.b16 %v4116
      %v4245 = vunpack.c.l.b16 %v4117
      %v4246 = vunpack.c.l.b16 %v4118
      %v4247 = vunpack.c.l.b16 %v4119
      %v4248 = vunpack.c.l.b16 %v4120
      %v4249 = vunpack.c.l.b16 %v4121
      %v4250 = vunpack.c.l.b16 %v4122
      %v4251 = vunpack.c.l.b16 %v4123
      %v4252 = vunpack.c.l.b16 %v4124
      %v4253 = vunpack.c.l.b16 %v4125
      %v4254 = vunpack.c.l.b16 %v4126
      %v4255 = vunpack.c.l.b16 %v4127
      %v4256 = vunpack.c.l.b16 %v4128
      %v4257 = vunpack.c.l.b16 %v4129
      %v4258 = vunpack.c.l.b16 %v4130
      %v4259 = vunpack.c.l.b16 %v4131
      %v4260 = vunpack.c.l.b16 %v4132
      %v4261 = vunpack.c.l.b16 %v4133
      %v4262 = vunpack.c.l.b16 %v4134
      %v4263 = vunpack.c.l.b16 %v4135
      %v4264 = vunpack.c.l.b16 %v4136
      %v4265 = vunpack.c.l.b16 %v4137
      %v4266 = vunpack.c.l.b16 %v4138
      %v4267 = vunpack.c.l.b16 %v4139
      %v4268 = vunpack.c.l.b16 %v4140
      %v4269 = vunpack.c.l.b16 %v4141
      %v4270 = vunpack.c.l.b16 %v4142
      %v4271 = vunpack.c.l.b16 %v4143
      %v4272 = vunpack.c.l.b16 %v4144
      %v4273 = vunpack.c.l.b16 %v4145
      %v4274 = vunpack.c.l.b16 %v4146
      %v4275 = vunpack.c.l.b16 %v4147
      %v4276 = vunpack.c.l.b16 %v4148
      %v4277 = vunpack.c.l.b16 %v4149
      %v4278 = vunpack.c.l.b16 %v4150
      %v4279 = vunpack.c.l.b16 %v4151
      %v4280 = vunpack.c.l.b16 %v4152
      %v4281 = vunpack.c.l.b16 %v4153
      %v4282 = vunpack.c.l.b16 %v4154
      %v4283 = vunpack.c.l.b16 %v4155
      %v4284 = vunpack.c.l.b16 %v4156
      %v4285 = vunpack.c.l.b16 %v4157
      %v4286 = vunpack.c.l.b16 %v4158
      %v4287 = vunpack.c.l.b16 %v4159
      %v4288 = vunpack.c.l.b16 %v4160
      %v4289 = vunpack.c.l.b16 %v4161
      %v4290 = vunpack.c.l.b16 %v4162
      %v4291 = vunpack.c.l.b16 %v4163
      %v4292 = vpack.c.b16 %v4228, %v4228
      %v4293 = vpack.c.b16 %v4229, %v4229
      %v4294 = vpack.c.b16 %v4230, %v4230
      %v4295 = vpack.c.b16 %v4231, %v4231
      %v4296 = vpack.c.b16 %v4232, %v4232
      %v4297 = vpack.c.b16 %v4233, %v4233
      %v4298 = vpack.c.b16 %v4234, %v4234
      %v4299 = vpack.c.b16 %v4235, %v4235
      %v4300 = vpack.c.b16 %v4236, %v4236
      %v4301 = vpack.c.b16 %v4237, %v4237
      %v4302 = vpack.c.b16 %v4238, %v4238
      %v4303 = vpack.c.b16 %v4239, %v4239
      %v4304 = vpack.c.b16 %v4240, %v4240
      %v4305 = vpack.c.b16 %v4241, %v4241
      %v4306 = vpack.c.b16 %v4242, %v4242
      %v4307 = vpack.c.b16 %v4243, %v4243
      %v4308 = vpack.c.b16 %v4244, %v4244
      %v4309 = vpack.c.b16 %v4245, %v4245
      %v4310 = vpack.c.b16 %v4246, %v4246
      %v4311 = vpack.c.b16 %v4247, %v4247
      %v4312 = vpack.c.b16 %v4248, %v4248
      %v4313 = vpack.c.b16 %v4249, %v4249
      %v4314 = vpack.c.b16 %v4250, %v4250
      %v4315 = vpack.c.b16 %v4251, %v4251
      %v4316 = vpack.c.b16 %v4252, %v4252
      %v4317 = vpack.c.b16 %v4253, %v4253
      %v4318 = vpack.c.b16 %v4254, %v4254
      %v4319 = vpack.c.b16 %v4255, %v4255
      %v4320 = vpack.c.b16 %v4256, %v4256
      %v4321 = vpack.c.b16 %v4257, %v4257
      %v4322 = vpack.c.b16 %v4258, %v4258
      %v4323 = vpack.c.b16 %v4259, %v4259
      %v4324 = vpack.c.b16 %v4260, %v4260
      %v4325 = vpack.c.b16 %v4261, %v4261
      %v4326 = vpack.c.b16 %v4262, %v4262
      %v4327 = vpack.c.b16 %v4263, %v4263
      %v4328 = vpack.c.b16 %v4264, %v4264
      %v4329 = vpack.c.b16 %v4265, %v4265
      %v4330 = vpack.c.b16 %v4266, %v4266
      %v4331 = vpack.c.b16 %v4267, %v4267
      %v4332 = vpack.c.b16 %v4268, %v4268
      %v4333 = vpack.c.b16 %v4269, %v4269
      %v4334 = vpack.c.b16 %v4270, %v4270
      %v4335 = vpack.c.b16 %v4271, %v4271
      %v4336 = vpack.c.b16 %v4272, %v4272
      %v4337 = vpack.c.b16 %v4273, %v4273
      %v4338 = vpack.c.b16 %v4274, %v4274
      %v4339 = vpack.c.b16 %v4275, %v4275
      %v4340 = vpack.c.b16 %v4276, %v4276
      %v4341 = vpack.c.b16 %v4277, %v4277
      %v4342 = vpack.c.b16 %v4278, %v4278
      %v4343 = vpack.c.b16 %v4279, %v4279
      %v4344 = vpack.c.b16 %v4280, %v4280
      %v4345 = vpack.c.b16 %v4281, %v4281
      %v4346 = vpack.c.b16 %v4282, %v4282
      %v4347 = vpack.c.b16 %v4283, %v4283
      %v4348 = vpack.c.b16 %v4284, %v4284
      %v4349 = vpack.c.b16 %v4285, %v4285
      %v4350 = vpack.c.b16 %v4286, %v4286
      %v4351 = vpack.c.b16 %v4287, %v4287
      %v4352 = vpack.c.b16 %v4288, %v4288
      %v4353 = vpack.c.b16 %v4289, %v4289
      %v4354 = vpack.c.b16 %v4290, %v4290
      %v4355 = vpack.c.b16 %v4291, %v4291
      %v4356 = vunpack.c.l.b16 %v4292
      %v4357 = vunpack.c.l.b16 %v4293
      %v4358 = vunpack.c.l.b16 %v4294
      %v4359 = vunpack.c.l.b16 %v4295
      %v4360 = vunpack.c.l.b16 %v4296
      %v4361 = vunpack.c.l.b16 %v4297
      %v4362 = vunpack.c.l.b16 %v4298
      %v4363 = vunpack.c.l.b16 %v4299
      %v4364 = vunpack.c.l.b16 %v4300
      %v4365 = vunpack.c.l.b16 %v4301
      %v4366 = vunpack.c.l.b16 %v4302
      %v4367 = vunpack.c.l.b16 %v4303
      %v4368 = vunpack.c.l.b16 %v4304
      %v4369 = vunpack.c.l.b16 %v4305
      %v4370 = vunpack.c.l.b16 %v4306
      %v4371 = vunpack.c.l.b16 %v4307
      %v4372 = vunpack.c.l.b16 %v4308
      %v4373 = vunpack.c.l.b16 %v4309
      %v4374 = vunpack.c.l.b16 %v4310
      %v4375 = vunpack.c.l.b16 %v4311
      %v4376 = vunpack.c.l.b16 %v4312
      %v4377 = vunpack.c.l.b16 %v4313
      %v4378 = vunpack.c.l.b16 %v4314
      %v4379 = vunpack.c.l.b16 %v4315
      %v4380 = vunpack.c.l.b16 %v4316
      %v4381 = vunpack.c.l.b16 %v4317
      %v4382 = vunpack.c.l.b16 %v4318
      %v4383 = vunpack.c.l.b16 %v4319
      %v4384 = vunpack.c.l.b16 %v4320
      %v4385 = vunpack.c.l.b16 %v4321
      %v4386 = vunpack.c.l.b16 %v4322
      %v4387 = vunpack.c.l.b16 %v4323
      %v4388 = vunpack.c.l.b16 %v4324
      %v4389 = vunpack.c.l.b16 %v4325
      %v4390 = vunpack.c.l.b16 %v4326
      %v4391 = vunpack.c.l.b16 %v4327
      %v4392 = vunpack.c.l.b16 %v4328
      %v4393 = vunpack.c.l.b16 %v4329
      %v4394 = vunpack.c.l.b16 %v4330
      %v4395 = vunpack.c.l.b16 %v4331
      %v4396 = vunpack.c.l.b16 %v4332
      %v4397 = vunpack.c.l.b16 %v4333
      %v4398 = vunpack.c.l.b16 %v4334
      %v4399 = vunpack.c.l.b16 %v4335
      %v4400 = vunpack.c.l.b16 %v4336
      %v4401 = vunpack.c.l.b16 %v4337
      %v4402 = vunpack.c.l.b16 %v4338
      %v4403 = vunpack.c.l.b16 %v4339
      %v4404 = vunpack.c.l.b16 %v4340
      %v4405 = vunpack.c.l.b16 %v4341
      %v4406 = vunpack.c.l.b16 %v4342
      %v4407 = vunpack.c.l.b16 %v4343
      %v4408 = vunpack.c.l.b16 %v4344
      %v4409 = vunpack.c.l.b16 %v4345
      %v4410 = vunpack.c.l.b16 %v4346
      %v4411 = vunpack.c.l.b16 %v4347
      %v4412 = vunpack.c.l.b16 %v4348
      %v4413 = vunpack.c.l.b16 %v4349
      %v4414 = vunpack.c.l.b16 %v4350
      %v4415 = vunpack.c.l.b16 %v4351
      %v4416 = vunpack.c.l.b16 %v4352
      %v4417 = vunpack.c.l.b16 %v4353
      %v4418 = vunpack.c.l.b16 %v4354
      %v4419 = vunpack.c.l.b16 %v4355
      %vm4420 = vcmask 1041409
      %v4421 = vsel %vm4420, %v4357, %v4356
      %vm4422 = vcmask 1042434
      %v4423 = vsel %vm4422, %v4358, %v4421
      %vm4424 = vcmask 1043459
      %v4425 = vsel %vm4424, %v4359, %v4423
      %vm4426 = vcmask 1044484
      %v4427 = vsel %vm4426, %v4360, %v4425
      %vm4428 = vcmask 1045509
      %v4429 = vsel %vm4428, %v4361, %v4427
      %vm4430 = vcmask 1046534
      %v4431 = vsel %vm4430, %v4362, %v4429
      %vm4432 = vcmask 1047559
      %v4433 = vsel %vm4432, %v4363, %v4431
      %v4434 = vsel %vm4420, %v4365, %v4364
      %v4435 = vsel %vm4422, %v4366, %v4434
      %v4436 = vsel %vm4424, %v4367, %v4435
      %v4437 = vsel %vm4426, %v4368, %v4436
      %v4438 = vsel %vm4428, %v4369, %v4437
      %v4439 = vsel %vm4430, %v4370, %v4438
      %v4440 = vsel %vm4432, %v4371, %v4439
      %v4441 = vsel %vm4420, %v4373, %v4372
      %v4442 = vsel %vm4422, %v4374, %v4441
      %v4443 = vsel %vm4424, %v4375, %v4442
      %v4444 = vsel %vm4426, %v4376, %v4443
      %v4445 = vsel %vm4428, %v4377, %v4444
      %v4446 = vsel %vm4430, %v4378, %v4445
      %v4447 = vsel %vm4432, %v4379, %v4446
      %v4448 = vsel %vm4420, %v4381, %v4380
      %v4449 = vsel %vm4422, %v4382, %v4448
      %v4450 = vsel %vm4424, %v4383, %v4449
      %v4451 = vsel %vm4426, %v4384, %v4450
      %v4452 = vsel %vm4428, %v4385, %v4451
      %v4453 = vsel %vm4430, %v4386, %v4452
      %v4454 = vsel %vm4432, %v4387, %v4453
      %v4455 = vsel %vm4420, %v4389, %v4388
      %v4456 = vsel %vm4422, %v4390, %v4455
      %v4457 = vsel %vm4424, %v4391, %v4456
      %v4458 = vsel %vm4426, %v4392, %v4457
      %v4459 = vsel %vm4428, %v4393, %v4458
      %v4460 = vsel %vm4430, %v4394, %v4459
      %v4461 = vsel %vm4432, %v4395, %v4460
      %v4462 = vsel %vm4420, %v4397, %v4396
      %v4463 = vsel %vm4422, %v4398, %v4462
      %v4464 = vsel %vm4424, %v4399, %v4463
      %v4465 = vsel %vm4426, %v4400, %v4464
      %v4466 = vsel %vm4428, %v4401, %v4465
      %v4467 = vsel %vm4430, %v4402, %v4466
      %v4468 = vsel %vm4432, %v4403, %v4467
      %v4469 = vsel %vm4420, %v4405, %v4404
      %v4470 = vsel %vm4422, %v4406, %v4469
      %v4471 = vsel %vm4424, %v4407, %v4470
      %v4472 = vsel %vm4426, %v4408, %v4471
      %v4473 = vsel %vm4428, %v4409, %v4472
      %v4474 = vsel %vm4430, %v4410, %v4473
      %v4475 = vsel %vm4432, %v4411, %v4474
      %v4476 = vsel %vm4420, %v4413, %v4412
      %v4477 = vsel %vm4422, %v4414, %v4476
      %v4478 = vsel %vm4424, %v4415, %v4477
      %v4479 = vsel %vm4426, %v4416, %v4478
      %v4480 = vsel %vm4428, %v4417, %v4479
      %v4481 = vsel %vm4430, %v4418, %v4480
      %v4482 = vsel %vm4432, %v4419, %v4481
      %v4483 = vpack.c.b16 %v4433, %v4433
      %v4484 = vpack.c.b16 %v4440, %v4440
      %v4485 = vpack.c.b16 %v4447, %v4447
      %v4486 = vpack.c.b16 %v4454, %v4454
      %v4487 = vpack.c.b16 %v4461, %v4461
      %v4488 = vpack.c.b16 %v4468, %v4468
      %v4489 = vpack.c.b16 %v4475, %v4475
      %v4490 = vpack.c.b16 %v4482, %v4482
      %4499 = vst [vmem:[%s199] sm:$0xf] %v4483
      %4500 = vst [vmem:[%s199 + $0x4] sm:$0xf] %v4484
      %4501 = vst [vmem:[%s199 + $0x8] sm:$0xf] %v4485
      %4502 = vst [vmem:[%s199 + $0xc] sm:$0xf] %v4486
      %4503 = vst [vmem:[%s199 + $0x10] sm:$0xf] %v4487
      %4504 = vst [vmem:[%s199 + $0x14] sm:$0xf] %v4488
      %4505 = vst [vmem:[%s199 + $0x18] sm:$0xf] %v4489
      %4506 = vst [vmem:[%s199 + $0x1c] sm:$0xf] %v4490
      %s4507 = smul.u32 8, %s19
      %p4508 = scmp.lt.s32.totalorder %s18, 1
      %s4509 = scalar_select %p4508, %s18, 1
      %p4510 = scmp.lt.s32.totalorder %s4507, 7
      %s4511 = scalar_select %p4510, %s4507, 7
      %s4512 = smul.addr %s4509, 8
      %s4513 = sadd.s32 %s4511, %s4512
      %s4514 = smul.addr %s4513, 4
      %s4515 = scalar_lea.vmem %s3, %s4514
      // Predicated region
      $region33: #{_lambda_.3} parent=31 // pred_check
        %p4516 = pneg %p116
      $region34: #{_lambda_.3} parent=31 // pred_check_branch
        %4518 = sbr.rel (%p4516) target = $region36
      $region35: #{_lambda_.3} parent=31 // pred_region
        %s4519 = smul.u32 8, %s19
      $region36: #{_lambda_.3} parent=31 // pred_fallthru
        _
    $region32: #{_lambda_.3} parent=5 // pred_fallthru
      _
    %p4520 = scmp.le.s32.totalorder 2, %s9
    // Predicated region
    $region37: #{_lambda_.3} parent=5 // pred_check
      %p4521 = pneg %p4520
    $region38: #{_lambda_.3} parent=5 // pred_check_branch
      %4523 = sbr.rel (%p4521) target = $region40
    $region39: #{_lambda_.3} parent=5 // pred_region
      %s4524 = ssub.s32 %s9, 2
      // Predicated region
      $region41: #{_lambda_.3} parent=39 // pred_check
        %p4525 = pneg %p122
      $region42: #{_lambda_.3} parent=39 // pred_check_branch
        %4527 = sbr.rel (%p4525) target = $region44
      $region43: #{_lambda_.3} parent=39 // pred_region
        %s4528 = smul.u32 8, %s21
        %p4529 = scmp.lt.s32.totalorder %s20, 1
        %s4530 = scalar_select %p4529, %s20, 1
        %p4531 = scmp.lt.s32.totalorder %s4528, 7
        %s4532 = scalar_select %p4531, %s4528, 7
        %s4533 = smul.addr %s4530, 8
        %s4534 = sadd.s32 %s4532, %s4533
        %s4535 = smul.addr %s4534, 4
        %s4536 = scalar_lea.vmem %s3, %s4535
      $region44: #{_lambda_.3} parent=39 // pred_fallthru
        _
    $region40: #{_lambda_.3} parent=5 // pred_fallthru
      _
  $region6: #{_lambda_.3} parent=0 // loop_footer
    %s13 = sadd.s32 1, %s9
  $region7: #{_lambda_.3} parent=0 // loop_footer_branch
    %8 = sbr.rel target = $region3
  $region8: #{_lambda_.3} parent=0 // loop_exit
    _

</llo_original>
